<compile_context>
chip_gen: v5e
topology: v5e:2x2
jax: 0.10.0
libtpu: 0.0.40
codegen_flags: <defaults>
</compile_context>

<pallas_src>
import functools

import jax
import jax.numpy as jnp
from jax.experimental import pallas as pl
from jax.experimental.pallas import tpu as pltpu

C_IN = 24                  # Header input channels (fixed by the module)
C_MID = 96                 # dilatedconv output channels per head
N_HEADS = 3                # heatmaps, centers, directions
HEAD_OUT = (1, 1, 2)       # head output channels: hm, sl, di
C_DW = N_HEADS * C_IN      # 72   stacked depthwise channels
C_MID_T = N_HEADS * C_MID  # 288  stacked mid channels
C_OUT_T = sum(HEAD_OUT)    # 4    stacked output channels
N_HSIG = 2                 # first 2 output channels use the soft-sigmoid


def _header_kernel(x_ref, wdw_ref, s1_ref, b1_ref, wpw_ref, s2_ref, b2_ref,
                   wh_ref, bh_ref, out_ref, xp_ref, *, B, H, W):
    # x_ref  : [B, H, W, 24]      input (NHWC)
    # wdw_ref: [3, 3, 72]         stacked depthwise kernels (hm | sl | di)
    # s1/b1  : [1, 72]            folded BN1 scale/shift (stacked)
    # wpw_ref: [72, 288]          block-diagonal stacked 1x1 convs (no bias)
    # s2/b2  : [1, 288]           folded BN2 scale/shift (stacked)
    # wh_ref : [288, 4]           block-diagonal stacked head 1x1 convs
    # bh_ref : [1, 4]             stacked head biases
    # out_ref: [B, 4, H*W]        lane-dense output (channels-major)
    # xp_ref : [B, H+4, W+4, 72]  VMEM scratch: zero-padded, channel-stacked x
    x = x_ref[...].astype(jnp.float32)
    x3 = jnp.concatenate([x, x, x], axis=-1)              # (B, H, W, 72)

    # padding=2 of the dilated depthwise conv, done in VMEM (no HBM pad).
    xp_ref[...] = jnp.zeros_like(xp_ref)
    xp_ref[:, 2:2 + H, 2:2 + W, :] = x3

    # Depthwise 3x3 conv, dilation=2 -> same H, W (all three heads at once,
    # 72 channels on the lane axis instead of 3 x 24).
    wdw = wdw_ref[...]
    acc = jnp.zeros((B, H, W, C_DW), jnp.float32)
    for kh in range(3):
        for kw in range(3):
            patch = xp_ref[:, kh * 2:kh * 2 + H, kw * 2:kw * 2 + W, :]
            acc = acc + patch * wdw[kh, kw]

    # BatchNorm2d(24) per head, folded to per-channel scale/shift.
    y = acc * s1_ref[...] + b1_ref[...]

    # 1x1 convs 24 -> 96 (all heads) as one block-diagonal channel matmul.
    y2 = y.reshape(B * H * W, C_DW)                       # (B*H*W, 72)
    z = jnp.dot(y2, wpw_ref[...], preferred_element_type=jnp.float32)

    # BatchNorm2d(96) folded + ReLU.
    z = jnp.maximum(z * s2_ref[...] + b2_ref[...], 0.0)

    # Head 1x1 convs 96 -> out_ch with bias (block-diagonal, all heads).
    o = jnp.dot(z, wh_ref[...], preferred_element_type=jnp.float32) + bh_ref[...]

    # Activations: channels [0,1] use the module's "HardSigmoid" (its forward
    # is literally 0.5*x/(1+|x|)+0.5, a softsign sigmoid), channels [2,3] tanh.
    ch = jax.lax.broadcasted_iota(jnp.int32, o.shape, 1)
    hsig = 0.5 * (o / (1.0 + jnp.abs(o))) + 0.5
    o = jnp.where(ch < N_HSIG, hsig, jnp.tanh(o))

    # Emit lane-dense (B, out_ch, H*W): small per-batch (H*W, 4) -> (4, H*W)
    # transposes ride the otherwise-idle XLU.
    o3 = o.reshape(B, H * W, C_OUT_T)
    for b in range(B):
        out_ref[b] = o3[b].T.astype(out_ref.dtype)


def header_forward(x_nchw, fused):
    """Header.forward: returns (hm, sl, di), each NCHW like PyTorch."""
    B, C, H, W = x_nchw.shape
    assert C == C_IN
    x = jnp.transpose(x_nchw, (0, 2, 3, 1))  # NCHW -> NHWC (layout glue only)

    kern = functools.partial(_header_kernel, B=B, H=H, W=W)
    out = pl.pallas_call(
        kern,
        out_shape=jax.ShapeDtypeStruct((B, C_OUT_T, H * W), jnp.float32),
        grid=(1,),
        in_specs=[
            pl.BlockSpec((B, H, W, C_IN), lambda i: (0, 0, 0, 0)),
            pl.BlockSpec((3, 3, C_DW), lambda i: (0, 0, 0)),
            pl.BlockSpec((1, C_DW), lambda i: (0, 0)),
            pl.BlockSpec((1, C_DW), lambda i: (0, 0)),
            pl.BlockSpec((C_DW, C_MID_T), lambda i: (0, 0)),
            pl.BlockSpec((1, C_MID_T), lambda i: (0, 0)),
            pl.BlockSpec((1, C_MID_T), lambda i: (0, 0)),
            pl.BlockSpec((C_MID_T, C_OUT_T), lambda i: (0, 0)),
            pl.BlockSpec((1, C_OUT_T), lambda i: (0, 0)),
        ],
        out_specs=pl.BlockSpec((B, C_OUT_T, H * W), lambda i: (0, 0, 0)),
        scratch_shapes=[pltpu.VMEM((B, H + 4, W + 4, C_DW), jnp.float32)],
        compiler_params=pltpu.CompilerParams(
            dimension_semantics=("parallel",)),
    )(x, fused["wdw"], fused["s1"], fused["b1"], fused["wpw"],
      fused["s2"], fused["b2"], fused["wh"], fused["bh"])

    out = out.reshape(B, C_OUT_T, H, W)   # already NCHW-ordered, no transpose
    hm = out[:, 0:1]
    sl = out[:, 1:2]
    di = out[:, 2:4]
    return hm, sl, di


def _fold_bn(gamma, beta, mean, var, eps=1e-5):
    scale = gamma / jnp.sqrt(var + eps)
    shift = beta - mean * scale
    return scale, shift


def _init_branch_params(key, out_ch):
    """Deterministic synthetic parameters for one dilatedconv + head branch."""
    ks = jax.random.split(key, 12)
    # depthwise Conv2d(24,24,3,groups=24): torch weight [24,1,3,3] -> ours [3,3,24]
    wdw = jax.random.normal(ks[0], (3, 3, C_IN), jnp.float32) * 0.2
    # BatchNorm2d(24) (inference-mode folded)
    g1 = 1.0 + 0.1 * jax.random.normal(ks[1], (C_IN,), jnp.float32)
    be1 = 0.1 * jax.random.normal(ks[2], (C_IN,), jnp.float32)
    m1 = 0.1 * jax.random.normal(ks[3], (C_IN,), jnp.float32)
    v1 = 0.5 + jnp.abs(jax.random.normal(ks[4], (C_IN,), jnp.float32))
    s1, b1 = _fold_bn(g1, be1, m1, v1)
    # Conv2d(24, 96, 1, bias=False): torch weight [96,24,1,1] -> ours [24,96]
    wpw = jax.random.normal(ks[5], (C_IN, C_MID), jnp.float32) / jnp.sqrt(float(C_IN))
    # BatchNorm2d(96)
    g2 = 1.0 + 0.1 * jax.random.normal(ks[6], (C_MID,), jnp.float32)
    be2 = 0.1 * jax.random.normal(ks[7], (C_MID,), jnp.float32)
    m2 = 0.1 * jax.random.normal(ks[8], (C_MID,), jnp.float32)
    v2 = 0.5 + jnp.abs(jax.random.normal(ks[9], (C_MID,), jnp.float32))
    s2, b2 = _fold_bn(g2, be2, m2, v2)
    # head Conv2d(96, out_ch, 1, bias=True): torch weight [out_ch,96,1,1] -> [96,out_ch]
    wh = jax.random.normal(ks[10], (C_MID, out_ch), jnp.float32) / jnp.sqrt(float(C_MID))
    bh = 0.1 * jax.random.normal(ks[11], (out_ch,), jnp.float32)
    return dict(
        wdw=wdw,
        s1=s1.reshape(1, C_IN), b1=b1.reshape(1, C_IN),
        wpw=wpw,
        s2=s2.reshape(1, C_MID), b2=b2.reshape(1, C_MID),
        wh=wh, bh=bh.reshape(1, out_ch),
    )


def _fuse_params(p_hm, p_sl, p_di):
    """Stack the three head branches into one channel-fused parameter set."""
    heads = (p_hm, p_sl, p_di)
    wdw = jnp.concatenate([p["wdw"] for p in heads], axis=-1)   # (3,3,72)
    s1 = jnp.concatenate([p["s1"] for p in heads], axis=-1)     # (1,72)
    b1 = jnp.concatenate([p["b1"] for p in heads], axis=-1)
    s2 = jnp.concatenate([p["s2"] for p in heads], axis=-1)     # (1,288)
    b2 = jnp.concatenate([p["b2"] for p in heads], axis=-1)
    bh = jnp.concatenate([p["bh"] for p in heads], axis=-1)     # (1,4)
    wpw = jnp.zeros((C_DW, C_MID_T), jnp.float32)               # block-diagonal
    wh = jnp.zeros((C_MID_T, C_OUT_T), jnp.float32)             # block-diagonal
    oc = 0
    for i, p in enumerate(heads):
        wpw = wpw.at[i * C_IN:(i + 1) * C_IN,
                     i * C_MID:(i + 1) * C_MID].set(p["wpw"])
        wh = wh.at[i * C_MID:(i + 1) * C_MID,
                   oc:oc + HEAD_OUT[i]].set(p["wh"])
        oc += HEAD_OUT[i]
    return dict(wdw=wdw, s1=s1, b1=b1, wpw=wpw, s2=s2, b2=b2, wh=wh, bh=bh)


if __name__ == "__main__":
    key = jax.random.PRNGKey(0)
    kx, kh, kc, kd = jax.random.split(key, 4)
    params = {
        "heatmaps": _init_branch_params(kh, 1),
        "centers": _init_branch_params(kc, 1),
        "directions": _init_branch_params(kd, 2),
    }
    fused = _fuse_params(params["heatmaps"], params["centers"],
                         params["directions"])

    # Small shapes consistent with the module: NCHW input with 24 channels.
    B, H, W = 2, 16, 16
    x = jax.random.normal(kx, (B, C_IN, H, W), jnp.float32)

    hm, sl, di = header_forward(x, fused)
    jax.block_until_ready((hm, sl, di))

    assert hm.shape == (B, 1, H, W)
    assert sl.shape == (B, 1, H, W)
    assert di.shape == (B, 2, H, W)
    assert bool(jnp.all(jnp.isfinite(hm)))
    assert bool(jnp.all(jnp.isfinite(sl)))
    assert bool(jnp.all(jnp.isfinite(di)))
    # activation ranges: soft-sigmoid in (0,1), tanh in (-1,1)
    assert bool(jnp.all((hm > 0.0) & (hm < 1.0)))
    assert bool(jnp.all((sl > 0.0) & (sl < 1.0)))
    assert bool(jnp.all((di > -1.0) & (di < 1.0)))

    print("KERNEL_OK")
</pallas_src>

<mosaic_0001>
module attributes {stable_mosaic.version = 11 : i64} {
  func.func @_header_kernel(%arg0: i32, %arg1: memref<2x16x16x24xf32, #tpu.memory_space<vmem>>, %arg2: memref<3x3x72xf32, #tpu.memory_space<vmem>>, %arg3: memref<1x72xf32, #tpu.memory_space<vmem>>, %arg4: memref<1x72xf32, #tpu.memory_space<vmem>>, %arg5: memref<72x288xf32, #tpu.memory_space<vmem>>, %arg6: memref<1x288xf32, #tpu.memory_space<vmem>>, %arg7: memref<1x288xf32, #tpu.memory_space<vmem>>, %arg8: memref<288x4xf32, #tpu.memory_space<vmem>>, %arg9: memref<1x4xf32, #tpu.memory_space<vmem>>, %arg10: memref<2x4x256xf32, #tpu.memory_space<vmem>>, %arg11: memref<2x20x20x72xf32, #tpu.memory_space<vmem>>) attributes {dimension_semantics = [#tpu.dimension_semantics<parallel>], iteration_bounds = array<i64: 1>, scalar_prefetch = 0 : i64, scratch_operands = 1 : i64, tpu.core_type = #tpu.core_type<tc>, window_params = [{pipeline_mode = #tpu.pipeline_mode<synchronous>, transform_indices = @transform_0, window_bounds = array<i64: 2, 16, 16, 24>}, {pipeline_mode = #tpu.pipeline_mode<synchronous>, transform_indices = @transform_1, window_bounds = array<i64: 3, 3, 72>}, {pipeline_mode = #tpu.pipeline_mode<synchronous>, transform_indices = @transform_2, window_bounds = array<i64: 1, 72>}, {pipeline_mode = #tpu.pipeline_mode<synchronous>, transform_indices = @transform_3, window_bounds = array<i64: 1, 72>}, {pipeline_mode = #tpu.pipeline_mode<synchronous>, transform_indices = @transform_4, window_bounds = array<i64: 72, 288>}, {pipeline_mode = #tpu.pipeline_mode<synchronous>, transform_indices = @transform_5, window_bounds = array<i64: 1, 288>}, {pipeline_mode = #tpu.pipeline_mode<synchronous>, transform_indices = @transform_6, window_bounds = array<i64: 1, 288>}, {pipeline_mode = #tpu.pipeline_mode<synchronous>, transform_indices = @transform_7, window_bounds = array<i64: 288, 4>}, {pipeline_mode = #tpu.pipeline_mode<synchronous>, transform_indices = @transform_8, window_bounds = array<i64: 1, 4>}, {pipeline_mode = #tpu.pipeline_mode<synchronous>, transform_indices = @transform_9, window_bounds = array<i64: 2, 4, 256>}]} {
    %c0 = arith.constant 0 : index
    %c0_0 = arith.constant 0 : index
    %c0_1 = arith.constant 0 : index
    %c0_2 = arith.constant 0 : index
    %0 = vector.load %arg1[%c0, %c0_0, %c0_1, %c0_2] : memref<2x16x16x24xf32, #tpu.memory_space<vmem>>, vector<2x16x16x24xf32>
    %1 = tpu.concatenate %0, %0, %0 in 3 : vector<2x16x16x24xf32>, vector<2x16x16x24xf32>, vector<2x16x16x24xf32> -> vector<2x16x16x72xf32>
    %cst = arith.constant 0.000000e+00 : f32
    %2 = vector.broadcast %cst : f32 to vector<2x20x20x72xf32>
    %c0_3 = arith.constant 0 : index
    %c0_4 = arith.constant 0 : index
    %c0_5 = arith.constant 0 : index
    %c0_6 = arith.constant 0 : index
    %3 = vector.load %arg11[%c0_3, %c0_4, %c0_5, %c0_6] : memref<2x20x20x72xf32, #tpu.memory_space<vmem>>, vector<2x20x20x72xf32>
    tpu.vector_store %arg11[%c0_3, %c0_4, %c0_5, %c0_6], %2 {strides = array<i32>} : memref<2x20x20x72xf32, #tpu.memory_space<vmem>>, vector<2x20x20x72xf32>,
    %c0_7 = arith.constant 0 : index
    %c2 = arith.constant 2 : index
    %c2_8 = arith.constant 2 : index
    %c0_9 = arith.constant 0 : index
    %4 = vector.load %arg11[%c0_7, %c2, %c2_8, %c0_9] : memref<2x20x20x72xf32, #tpu.memory_space<vmem>>, vector<2x16x16x72xf32>
    tpu.vector_store %arg11[%c0_7, %c2, %c2_8, %c0_9], %1 {strides = array<i32>} : memref<2x20x20x72xf32, #tpu.memory_space<vmem>>, vector<2x16x16x72xf32>,
    %c0_10 = arith.constant 0 : index
    %c0_11 = arith.constant 0 : index
    %c0_12 = arith.constant 0 : index
    %5 = vector.load %arg2[%c0_10, %c0_11, %c0_12] : memref<3x3x72xf32, #tpu.memory_space<vmem>>, vector<3x3x72xf32>
    %cst_13 = arith.constant 0.000000e+00 : f32
    %6 = vector.broadcast %cst_13 : f32 to vector<2x16x16x72xf32>
    %c0_14 = arith.constant 0 : index
    %c0_15 = arith.constant 0 : index
    %c0_16 = arith.constant 0 : index
    %c0_17 = arith.constant 0 : index
    %7 = vector.load %arg11[%c0_14, %c0_15, %c0_16, %c0_17] : memref<2x20x20x72xf32, #tpu.memory_space<vmem>>, vector<2x16x16x72xf32>
    %8 = vector.extract_strided_slice %5 {offsets = [0, 0, 0], sizes = [1, 1, 72], strides = [1, 1, 1]} : vector<3x3x72xf32> to vector<1x1x72xf32>
    %9 = vector.shape_cast %8 : vector<1x1x72xf32> to vector<72xf32>
    %10 = vector.shape_cast %9 : vector<72xf32> to vector<1x1x1x72xf32>
    %11 = vector.broadcast %10 : vector<1x1x1x72xf32> to vector<2x16x16x72xf32>
    %12 = arith.mulf %7, %11 : vector<2x16x16x72xf32>
    %13 = arith.addf %6, %12 : vector<2x16x16x72xf32>
    %c0_18 = arith.constant 0 : index
    %c0_19 = arith.constant 0 : index
    %c2_20 = arith.constant 2 : index
    %c0_21 = arith.constant 0 : index
    %14 = vector.load %arg11[%c0_18, %c0_19, %c2_20, %c0_21] : memref<2x20x20x72xf32, #tpu.memory_space<vmem>>, vector<2x16x16x72xf32>
    %15 = vector.extract_strided_slice %5 {offsets = [0, 1, 0], sizes = [1, 1, 72], strides = [1, 1, 1]} : vector<3x3x72xf32> to vector<1x1x72xf32>
    %16 = vector.shape_cast %15 : vector<1x1x72xf32> to vector<72xf32>
    %17 = vector.shape_cast %16 : vector<72xf32> to vector<1x1x1x72xf32>
    %18 = vector.broadcast %17 : vector<1x1x1x72xf32> to vector<2x16x16x72xf32>
    %19 = arith.mulf %14, %18 : vector<2x16x16x72xf32>
    %20 = arith.addf %13, %19 : vector<2x16x16x72xf32>
    %c0_22 = arith.constant 0 : index
    %c0_23 = arith.constant 0 : index
    %c4 = arith.constant 4 : index
    %c0_24 = arith.constant 0 : index
    %21 = vector.load %arg11[%c0_22, %c0_23, %c4, %c0_24] : memref<2x20x20x72xf32, #tpu.memory_space<vmem>>, vector<2x16x16x72xf32>
    %22 = vector.extract_strided_slice %5 {offsets = [0, 2, 0], sizes = [1, 1, 72], strides = [1, 1, 1]} : vector<3x3x72xf32> to vector<1x1x72xf32>
    %23 = vector.shape_cast %22 : vector<1x1x72xf32> to vector<72xf32>
    %24 = vector.shape_cast %23 : vector<72xf32> to vector<1x1x1x72xf32>
    %25 = vector.broadcast %24 : vector<1x1x1x72xf32> to vector<2x16x16x72xf32>
    %26 = arith.mulf %21, %25 : vector<2x16x16x72xf32>
    %27 = arith.addf %20, %26 : vector<2x16x16x72xf32>
    %c0_25 = arith.constant 0 : index
    %c2_26 = arith.constant 2 : index
    %c0_27 = arith.constant 0 : index
    %c0_28 = arith.constant 0 : index
    %28 = vector.load %arg11[%c0_25, %c2_26, %c0_27, %c0_28] : memref<2x20x20x72xf32, #tpu.memory_space<vmem>>, vector<2x16x16x72xf32>
    %29 = vector.extract_strided_slice %5 {offsets = [1, 0, 0], sizes = [1, 1, 72], strides = [1, 1, 1]} : vector<3x3x72xf32> to vector<1x1x72xf32>
    %30 = vector.shape_cast %29 : vector<1x1x72xf32> to vector<72xf32>
    %31 = vector.shape_cast %30 : vector<72xf32> to vector<1x1x1x72xf32>
    %32 = vector.broadcast %31 : vector<1x1x1x72xf32> to vector<2x16x16x72xf32>
    %33 = arith.mulf %28, %32 : vector<2x16x16x72xf32>
    %34 = arith.addf %27, %33 : vector<2x16x16x72xf32>
    %c0_29 = arith.constant 0 : index
    %c2_30 = arith.constant 2 : index
    %c2_31 = arith.constant 2 : index
    %c0_32 = arith.constant 0 : index
    %35 = vector.load %arg11[%c0_29, %c2_30, %c2_31, %c0_32] : memref<2x20x20x72xf32, #tpu.memory_space<vmem>>, vector<2x16x16x72xf32>
    %36 = vector.extract_strided_slice %5 {offsets = [1, 1, 0], sizes = [1, 1, 72], strides = [1, 1, 1]} : vector<3x3x72xf32> to vector<1x1x72xf32>
    %37 = vector.shape_cast %36 : vector<1x1x72xf32> to vector<72xf32>
    %38 = vector.shape_cast %37 : vector<72xf32> to vector<1x1x1x72xf32>
    %39 = vector.broadcast %38 : vector<1x1x1x72xf32> to vector<2x16x16x72xf32>
    %40 = arith.mulf %35, %39 : vector<2x16x16x72xf32>
    %41 = arith.addf %34, %40 : vector<2x16x16x72xf32>
    %c0_33 = arith.constant 0 : index
    %c2_34 = arith.constant 2 : index
    %c4_35 = arith.constant 4 : index
    %c0_36 = arith.constant 0 : index
    %42 = vector.load %arg11[%c0_33, %c2_34, %c4_35, %c0_36] : memref<2x20x20x72xf32, #tpu.memory_space<vmem>>, vector<2x16x16x72xf32>
    %43 = vector.extract_strided_slice %5 {offsets = [1, 2, 0], sizes = [1, 1, 72], strides = [1, 1, 1]} : vector<3x3x72xf32> to vector<1x1x72xf32>
    %44 = vector.shape_cast %43 : vector<1x1x72xf32> to vector<72xf32>
    %45 = vector.shape_cast %44 : vector<72xf32> to vector<1x1x1x72xf32>
    %46 = vector.broadcast %45 : vector<1x1x1x72xf32> to vector<2x16x16x72xf32>
    %47 = arith.mulf %42, %46 : vector<2x16x16x72xf32>
    %48 = arith.addf %41, %47 : vector<2x16x16x72xf32>
    %c0_37 = arith.constant 0 : index
    %c4_38 = arith.constant 4 : index
    %c0_39 = arith.constant 0 : index
    %c0_40 = arith.constant 0 : index
    %49 = vector.load %arg11[%c0_37, %c4_38, %c0_39, %c0_40] : memref<2x20x20x72xf32, #tpu.memory_space<vmem>>, vector<2x16x16x72xf32>
    %50 = vector.extract_strided_slice %5 {offsets = [2, 0, 0], sizes = [1, 1, 72], strides = [1, 1, 1]} : vector<3x3x72xf32> to vector<1x1x72xf32>
    %51 = vector.shape_cast %50 : vector<1x1x72xf32> to vector<72xf32>
    %52 = vector.shape_cast %51 : vector<72xf32> to vector<1x1x1x72xf32>
    %53 = vector.broadcast %52 : vector<1x1x1x72xf32> to vector<2x16x16x72xf32>
    %54 = arith.mulf %49, %53 : vector<2x16x16x72xf32>
    %55 = arith.addf %48, %54 : vector<2x16x16x72xf32>
    %c0_41 = arith.constant 0 : index
    %c4_42 = arith.constant 4 : index
    %c2_43 = arith.constant 2 : index
    %c0_44 = arith.constant 0 : index
    %56 = vector.load %arg11[%c0_41, %c4_42, %c2_43, %c0_44] : memref<2x20x20x72xf32, #tpu.memory_space<vmem>>, vector<2x16x16x72xf32>
    %57 = vector.extract_strided_slice %5 {offsets = [2, 1, 0], sizes = [1, 1, 72], strides = [1, 1, 1]} : vector<3x3x72xf32> to vector<1x1x72xf32>
    %58 = vector.shape_cast %57 : vector<1x1x72xf32> to vector<72xf32>
    %59 = vector.shape_cast %58 : vector<72xf32> to vector<1x1x1x72xf32>
    %60 = vector.broadcast %59 : vector<1x1x1x72xf32> to vector<2x16x16x72xf32>
    %61 = arith.mulf %56, %60 : vector<2x16x16x72xf32>
    %62 = arith.addf %55, %61 : vector<2x16x16x72xf32>
    %c0_45 = arith.constant 0 : index
    %c4_46 = arith.constant 4 : index
    %c4_47 = arith.constant 4 : index
    %c0_48 = arith.constant 0 : index
    %63 = vector.load %arg11[%c0_45, %c4_46, %c4_47, %c0_48] : memref<2x20x20x72xf32, #tpu.memory_space<vmem>>, vector<2x16x16x72xf32>
    %64 = vector.extract_strided_slice %5 {offsets = [2, 2, 0], sizes = [1, 1, 72], strides = [1, 1, 1]} : vector<3x3x72xf32> to vector<1x1x72xf32>
    %65 = vector.shape_cast %64 : vector<1x1x72xf32> to vector<72xf32>
    %66 = vector.shape_cast %65 : vector<72xf32> to vector<1x1x1x72xf32>
    %67 = vector.broadcast %66 : vector<1x1x1x72xf32> to vector<2x16x16x72xf32>
    %68 = arith.mulf %63, %67 : vector<2x16x16x72xf32>
    %69 = arith.addf %62, %68 : vector<2x16x16x72xf32>
    %c0_49 = arith.constant 0 : index
    %c0_50 = arith.constant 0 : index
    %70 = vector.load %arg3[%c0_49, %c0_50] : memref<1x72xf32, #tpu.memory_space<vmem>>, vector<1x72xf32>
    %71 = vector.shape_cast %70 : vector<1x72xf32> to vector<1x1x1x72xf32>
    %72 = vector.broadcast %71 : vector<1x1x1x72xf32> to vector<2x16x16x72xf32>
    %73 = arith.mulf %69, %72 : vector<2x16x16x72xf32>
    %c0_51 = arith.constant 0 : index
    %c0_52 = arith.constant 0 : index
    %74 = vector.load %arg4[%c0_51, %c0_52] : memref<1x72xf32, #tpu.memory_space<vmem>>, vector<1x72xf32>
    %75 = vector.shape_cast %74 : vector<1x72xf32> to vector<1x1x1x72xf32>
    %76 = vector.broadcast %75 : vector<1x1x1x72xf32> to vector<2x16x16x72xf32>
    %77 = arith.addf %73, %76 : vector<2x16x16x72xf32>
    %78 = vector.shape_cast %77 : vector<2x16x16x72xf32> to vector<512x72xf32>
    %c0_53 = arith.constant 0 : index
    %c0_54 = arith.constant 0 : index
    %79 = vector.load %arg5[%c0_53, %c0_54] : memref<72x288xf32, #tpu.memory_space<vmem>>, vector<72x288xf32>
    %cst_55 = arith.constant dense<0.000000e+00> : vector<512x288xf32>
    %80 = tpu.matmul %78, %79, %cst_55 {dimension_numbers = #tpu.dot_dimension_numbers<[1], [0], [0], [1], [0, 0, 1, 1], [], []>} : vector<512x72xf32>, vector<72x288xf32>, vector<512x288xf32> -> vector<512x288xf32>
    %c0_56 = arith.constant 0 : index
    %c0_57 = arith.constant 0 : index
    %81 = vector.load %arg6[%c0_56, %c0_57] : memref<1x288xf32, #tpu.memory_space<vmem>>, vector<1x288xf32>
    %82 = vector.broadcast %81 : vector<1x288xf32> to vector<512x288xf32>
    %83 = arith.mulf %80, %82 : vector<512x288xf32>
    %c0_58 = arith.constant 0 : index
    %c0_59 = arith.constant 0 : index
    %84 = vector.load %arg7[%c0_58, %c0_59] : memref<1x288xf32, #tpu.memory_space<vmem>>, vector<1x288xf32>
    %85 = vector.broadcast %84 : vector<1x288xf32> to vector<512x288xf32>
    %86 = arith.addf %83, %85 : vector<512x288xf32>
    %cst_60 = arith.constant 0.000000e+00 : f32
    %87 = vector.broadcast %cst_60 : f32 to vector<512x288xf32>
    %88 = arith.maximumf %86, %87 : vector<512x288xf32>
    %c0_61 = arith.constant 0 : index
    %c0_62 = arith.constant 0 : index
    %89 = vector.load %arg8[%c0_61, %c0_62] : memref<288x4xf32, #tpu.memory_space<vmem>>, vector<288x4xf32>
    %cst_63 = arith.constant dense<0.000000e+00> : vector<512x4xf32>
    %90 = tpu.matmul %88, %89, %cst_63 {dimension_numbers = #tpu.dot_dimension_numbers<[1], [0], [0], [1], [0, 0, 1, 1], [], []>} : vector<512x288xf32>, vector<288x4xf32>, vector<512x4xf32> -> vector<512x4xf32>
    %c0_64 = arith.constant 0 : index
    %c0_65 = arith.constant 0 : index
    %91 = vector.load %arg9[%c0_64, %c0_65] : memref<1x4xf32, #tpu.memory_space<vmem>>, vector<1x4xf32>
    %92 = vector.broadcast %91 : vector<1x4xf32> to vector<512x4xf32>
    %93 = arith.addf %90, %92 : vector<512x4xf32>
    %94 = tpu.iota {dimensions = array<i32: 1>} : vector<512x4xi32>
    %95 = math.absf %93 : vector<512x4xf32>
    %cst_66 = arith.constant 1.000000e+00 : f32
    %96 = vector.broadcast %cst_66 : f32 to vector<512x4xf32>
    %97 = arith.addf %96, %95 : vector<512x4xf32>
    %98 = arith.divf %93, %97 : vector<512x4xf32>
    %cst_67 = arith.constant 5.000000e-01 : f32
    %99 = vector.broadcast %cst_67 : f32 to vector<512x4xf32>
    %100 = arith.mulf %99, %98 : vector<512x4xf32>
    %cst_68 = arith.constant 5.000000e-01 : f32
    %101 = vector.broadcast %cst_68 : f32 to vector<512x4xf32>
    %102 = arith.addf %100, %101 : vector<512x4xf32>
    %c2_i32 = arith.constant 2 : i32
    %103 = vector.broadcast %c2_i32 : i32 to vector<512x4xi32>
    %104 = arith.cmpi slt, %94, %103 : vector<512x4xi32>
    %105 = math.tanh %93 : vector<512x4xf32>
    %106 = arith.select %104, %102, %105 : vector<512x4xi1>, vector<512x4xf32>
    %107 = vector.shape_cast %106 : vector<512x4xf32> to vector<2x256x4xf32>
    %108 = vector.extract_strided_slice %107 {offsets = [0, 0, 0], sizes = [1, 256, 4], strides = [1, 1, 1]} : vector<2x256x4xf32> to vector<1x256x4xf32>
    %109 = vector.shape_cast %108 : vector<1x256x4xf32> to vector<256x4xf32>
    %110 = tpu.transpose %109, [1, 0] : vector<256x4xf32> -> vector<4x256xf32>
    %c0_69 = arith.constant 0 : index
    %c0_70 = arith.constant 0 : index
    %c0_71 = arith.constant 0 : index
    %111 = vector.load %arg10[%c0_69, %c0_70, %c0_71] : memref<2x4x256xf32, #tpu.memory_space<vmem>>, vector<1x4x256xf32>
    %112 = vector.shape_cast %111 : vector<1x4x256xf32> to vector<4x256xf32>
    %113 = vector.shape_cast %110 : vector<4x256xf32> to vector<1x4x256xf32>
    tpu.vector_store %arg10[%c0_69, %c0_70, %c0_71], %113 {strides = array<i32>} : memref<2x4x256xf32, #tpu.memory_space<vmem>>, vector<1x4x256xf32>,
    %114 = vector.extract_strided_slice %107 {offsets = [1, 0, 0], sizes = [1, 256, 4], strides = [1, 1, 1]} : vector<2x256x4xf32> to vector<1x256x4xf32>
    %115 = vector.shape_cast %114 : vector<1x256x4xf32> to vector<256x4xf32>
    %116 = tpu.transpose %115, [1, 0] : vector<256x4xf32> -> vector<4x256xf32>
    %c1 = arith.constant 1 : index
    %c0_72 = arith.constant 0 : index
    %c0_73 = arith.constant 0 : index
    %117 = vector.load %arg10[%c1, %c0_72, %c0_73] : memref<2x4x256xf32, #tpu.memory_space<vmem>>, vector<1x4x256xf32>
    %118 = vector.shape_cast %117 : vector<1x4x256xf32> to vector<4x256xf32>
    %119 = vector.shape_cast %116 : vector<4x256xf32> to vector<1x4x256xf32>
    tpu.vector_store %arg10[%c1, %c0_72, %c0_73], %119 {strides = array<i32>} : memref<2x4x256xf32, #tpu.memory_space<vmem>>, vector<1x4x256xf32>,
    return
  }
  func.func @transform_0(%arg0: i32) -> (i32, i32, i32, i32) {
    %c0_i32 = arith.constant 0 : i32
    %c0_i32_0 = arith.constant 0 : i32
    %c0_i32_1 = arith.constant 0 : i32
    %c0_i32_2 = arith.constant 0 : i32
    %c0_i32_3 = arith.constant 0 : i32
    return %c0_i32, %c0_i32_0, %c0_i32_1, %c0_i32_2 : i32, i32, i32, i32
  }
  func.func @transform_1(%arg0: i32) -> (i32, i32, i32) {
    %c0_i32 = arith.constant 0 : i32
    %c0_i32_0 = arith.constant 0 : i32
    %c0_i32_1 = arith.constant 0 : i32
    %c0_i32_2 = arith.constant 0 : i32
    return %c0_i32, %c0_i32_0, %c0_i32_1 : i32, i32, i32
  }
  func.func @transform_2(%arg0: i32) -> (i32, i32) {
    %c0_i32 = arith.constant 0 : i32
    %c0_i32_0 = arith.constant 0 : i32
    %c0_i32_1 = arith.constant 0 : i32
    return %c0_i32, %c0_i32_0 : i32, i32
  }
  func.func @transform_3(%arg0: i32) -> (i32, i32) {
    %c0_i32 = arith.constant 0 : i32
    %c0_i32_0 = arith.constant 0 : i32
    %c0_i32_1 = arith.constant 0 : i32
    return %c0_i32, %c0_i32_0 : i32, i32
  }
  func.func @transform_4(%arg0: i32) -> (i32, i32) {
    %c0_i32 = arith.constant 0 : i32
    %c0_i32_0 = arith.constant 0 : i32
    %c0_i32_1 = arith.constant 0 : i32
    return %c0_i32, %c0_i32_0 : i32, i32
  }
  func.func @transform_5(%arg0: i32) -> (i32, i32) {
    %c0_i32 = arith.constant 0 : i32
    %c0_i32_0 = arith.constant 0 : i32
    %c0_i32_1 = arith.constant 0 : i32
    return %c0_i32, %c0_i32_0 : i32, i32
  }
  func.func @transform_6(%arg0: i32) -> (i32, i32) {
    %c0_i32 = arith.constant 0 : i32
    %c0_i32_0 = arith.constant 0 : i32
    %c0_i32_1 = arith.constant 0 : i32
    return %c0_i32, %c0_i32_0 : i32, i32
  }
  func.func @transform_7(%arg0: i32) -> (i32, i32) {
    %c0_i32 = arith.constant 0 : i32
    %c0_i32_0 = arith.constant 0 : i32
    %c0_i32_1 = arith.constant 0 : i32
    return %c0_i32, %c0_i32_0 : i32, i32
  }
  func.func @transform_8(%arg0: i32) -> (i32, i32) {
    %c0_i32 = arith.constant 0 : i32
    %c0_i32_0 = arith.constant 0 : i32
    %c0_i32_1 = arith.constant 0 : i32
    return %c0_i32, %c0_i32_0 : i32, i32
  }
  func.func @transform_9(%arg0: i32) -> (i32, i32, i32) {
    %c0_i32 = arith.constant 0 : i32
    %c0_i32_0 = arith.constant 0 : i32
    %c0_i32_1 = arith.constant 0 : i32
    %c0_i32_2 = arith.constant 0 : i32
    return %c0_i32, %c0_i32_0, %c0_i32_1 : i32, i32, i32
  }
}

</mosaic_0001>

<llo_original>
// kernel: tpu_custom_call.1
$region0: #{tpu_custom_call.1}
  #allocation0 [shape = 'u32[]', space=smem, size = 0x4, offset = 0x4, fixed_abs, tag = 'smem constant byte address 0x4 - core index']
  #allocation1 [shape = 'u32[72,128]{1,0:T(1,128)}', space=vmem, size = 0x9000, scoped, tag = 'internal scratch']
  #allocation2 [shape = 'f32[2,20,20,72]{3,2,1,0:T(8,128)}', space=vmem, size = 0x78000, scoped, tag = 'scratch operand']
  %s0 = inlined_call_operand.hbm [shape: f32[2,16,16,24], index: 0, kind: input, shape index: {}]
  %s1 = inlined_call_operand.vmem [shape: f32[3,3,72], index: 1, kind: input, shape index: {}]
  %s2 = inlined_call_operand.vmem [shape: f32[1,72], index: 2, kind: input, shape index: {}]
  %s3 = inlined_call_operand.vmem [shape: f32[1,72], index: 3, kind: input, shape index: {}]
  %s4 = inlined_call_operand.vmem [shape: f32[72,288], index: 4, kind: input, shape index: {}]
  %s5 = inlined_call_operand.vmem [shape: f32[1,288], index: 5, kind: input, shape index: {}]
  %s6 = inlined_call_operand.vmem [shape: f32[1,288], index: 6, kind: input, shape index: {}]
  %s7 = inlined_call_operand.vmem [shape: f32[288,4], index: 7, kind: input, shape index: {}]
  %s8 = inlined_call_operand.vmem [shape: f32[1,4], index: 8, kind: input, shape index: {}]
  %s9 = inlined_call_operand.hbm [shape: f32[2,4,256], index: 9, kind: output, shape index: {}]
  %s10 = sld [smem:[#allocation0]]
  $region50: #{tpu_custom_call.1} parent=0
    _
  %s12 = ssub.s32 1, %s10
  %s13 = scalar_select 0, %s12, %s10
  $region1: #{tpu_custom_call.1} parent=0
    #allocation3 [shape = 'u8[262144]{0}', space=vmem, size = 0x40000, scoped, tag = 'input window, operand 0, single buffered']
    #allocation4 [shape = 's32[1]{0}', space=sflag, size = 0x4, scoped, tag = 'scoped memory for tpu_custom_call.1']
    #allocation5 [shape = 's32[1]{0}', space=sflag, size = 0x4, scoped, tag = 'scoped memory for tpu_custom_call.1']
    #allocation6 [shape = 'u8[8192]{0}', space=vmem, size = 0x2000, scoped, tag = 'output window, operand 0, single buffered']
    %14 = vsyncpa [#allocation4], 0
    %15 = vsyncpa [#allocation5], 0
    // Predicated region
    $region2: #{tpu_custom_call.1} parent=1 // pred_check
      _
    $region3: #{tpu_custom_call.1} parent=1 // pred_check_branch
      %17 = sbr.rel (0) target = $region5
    $region4: #{tpu_custom_call.1} parent=1 // pred_region
      %19 = vsyncadd [#allocation4], 0
      %s20 = sshll.u32 %s0, 4
      %s21 = int_to_ptr.hbm [resolvable:$true] %s20
      %s22 = sshll.u32 [#allocation3], 4
      %s23 = int_to_ptr.vmem [resolvable:$true] %s22
      %28 = dma.hbm_to_vmem [thread:$0]  %s21, 8192, %s23, [#allocation4], 128, 128, 8
    $region5: #{tpu_custom_call.1} parent=1 // pred_fallthru
      _
    // Predicated region
    $region6: #{tpu_custom_call.1} parent=1 // pred_check
      _
    $region7: #{tpu_custom_call.1} parent=1 // pred_check_branch
      %30 = sbr.rel (0) target = $region9
    $region8: #{tpu_custom_call.1} parent=1 // pred_region
      _
    $region9: #{tpu_custom_call.1} parent=1 // pred_fallthru
      _
    // Predicated region
    $region10: #{tpu_custom_call.1} parent=1 // pred_check
      _
    $region11: #{tpu_custom_call.1} parent=1 // pred_check_branch
      %32 = sbr.rel (0) target = $region13
    $region12: #{tpu_custom_call.1} parent=1 // pred_region
      _
    $region13: #{tpu_custom_call.1} parent=1 // pred_fallthru
      _
    // Predicated region
    $region14: #{tpu_custom_call.1} parent=1 // pred_check
      _
    $region15: #{tpu_custom_call.1} parent=1 // pred_check_branch
      %34 = sbr.rel (0) target = $region17
    $region16: #{tpu_custom_call.1} parent=1 // pred_region
      _
    $region17: #{tpu_custom_call.1} parent=1 // pred_fallthru
      _
    // Predicated region
    $region18: #{tpu_custom_call.1} parent=1 // pred_check
      _
    $region19: #{tpu_custom_call.1} parent=1 // pred_check_branch
      %36 = sbr.rel (0) target = $region21
    $region20: #{tpu_custom_call.1} parent=1 // pred_region
      _
    $region21: #{tpu_custom_call.1} parent=1 // pred_fallthru
      _
    // Predicated region
    $region22: #{tpu_custom_call.1} parent=1 // pred_check
      _
    $region23: #{tpu_custom_call.1} parent=1 // pred_check_branch
      %38 = sbr.rel (0) target = $region25
    $region24: #{tpu_custom_call.1} parent=1 // pred_region
      _
    $region25: #{tpu_custom_call.1} parent=1 // pred_fallthru
      _
    // Predicated region
    $region26: #{tpu_custom_call.1} parent=1 // pred_check
      _
    $region27: #{tpu_custom_call.1} parent=1 // pred_check_branch
      %40 = sbr.rel (0) target = $region29
    $region28: #{tpu_custom_call.1} parent=1 // pred_region
      _
    $region29: #{tpu_custom_call.1} parent=1 // pred_fallthru
      _
    // Predicated region
    $region30: #{tpu_custom_call.1} parent=1 // pred_check
      _
    $region31: #{tpu_custom_call.1} parent=1 // pred_check_branch
      %42 = sbr.rel (0) target = $region33
    $region32: #{tpu_custom_call.1} parent=1 // pred_region
      _
    $region33: #{tpu_custom_call.1} parent=1 // pred_fallthru
      _
    // Predicated region
    $region34: #{tpu_custom_call.1} parent=1 // pred_check
      _
    $region35: #{tpu_custom_call.1} parent=1 // pred_check_branch
      %44 = sbr.rel (0) target = $region37
    $region36: #{tpu_custom_call.1} parent=1 // pred_region
      _
    $region37: #{tpu_custom_call.1} parent=1 // pred_fallthru
      _
    // Predicated region
    $region38: #{tpu_custom_call.1} parent=1 // pred_check
      _
    $region39: #{tpu_custom_call.1} parent=1 // pred_check_branch
      %46 = sbr.rel (0) target = $region41
    $region40: #{tpu_custom_call.1} parent=1 // pred_region
      %48 = dma.done [#allocation4], 8192
    $region41: #{tpu_custom_call.1} parent=1 // pred_fallthru
      _
    %v49 = vld [vmem:[#allocation3] sm:$0xff]
    %v50 = vld [vmem:[#allocation3 + $0x8] sm:$0xff]
    %v51 = vld [vmem:[#allocation3 + $0x10] sm:$0xff]
    %v52 = vld [vmem:[#allocation3 + $0x18] sm:$0xff]
    %v53 = vld [vmem:[#allocation3 + $0x20] sm:$0xff]
    %v54 = vld [vmem:[#allocation3 + $0x28] sm:$0xff]
    %v55 = vld [vmem:[#allocation3 + $0x30] sm:$0xff]
    %v56 = vld [vmem:[#allocation3 + $0x38] sm:$0xff]
    %v57 = vld [vmem:[#allocation3 + $0x40] sm:$0xff]
    %v58 = vld [vmem:[#allocation3 + $0x48] sm:$0xff]
    %v59 = vld [vmem:[#allocation3 + $0x50] sm:$0xff]
    %v60 = vld [vmem:[#allocation3 + $0x58] sm:$0xff]
    %v61 = vld [vmem:[#allocation3 + $0x60] sm:$0xff]
    %v62 = vld [vmem:[#allocation3 + $0x68] sm:$0xff]
    %v63 = vld [vmem:[#allocation3 + $0x70] sm:$0xff]
    %v64 = vld [vmem:[#allocation3 + $0x78] sm:$0xff]
    %v65 = vld [vmem:[#allocation3 + $0x80] sm:$0xff]
    %v66 = vld [vmem:[#allocation3 + $0x88] sm:$0xff]
    %v67 = vld [vmem:[#allocation3 + $0x90] sm:$0xff]
    %v68 = vld [vmem:[#allocation3 + $0x98] sm:$0xff]
    %v69 = vld [vmem:[#allocation3 + $0xa0] sm:$0xff]
    %v70 = vld [vmem:[#allocation3 + $0xa8] sm:$0xff]
    %v71 = vld [vmem:[#allocation3 + $0xb0] sm:$0xff]
    %v72 = vld [vmem:[#allocation3 + $0xb8] sm:$0xff]
    %v73 = vld [vmem:[#allocation3 + $0xc0] sm:$0xff]
    %v74 = vld [vmem:[#allocation3 + $0xc8] sm:$0xff]
    %v75 = vld [vmem:[#allocation3 + $0xd0] sm:$0xff]
    %v76 = vld [vmem:[#allocation3 + $0xd8] sm:$0xff]
    %v77 = vld [vmem:[#allocation3 + $0xe0] sm:$0xff]
    %v78 = vld [vmem:[#allocation3 + $0xe8] sm:$0xff]
    %v79 = vld [vmem:[#allocation3 + $0xf0] sm:$0xff]
    %v80 = vld [vmem:[#allocation3 + $0xf8] sm:$0xff]
    %v81 = vld [vmem:[#allocation3 + $0x100] sm:$0xff]
    %v82 = vld [vmem:[#allocation3 + $0x108] sm:$0xff]
    %v83 = vld [vmem:[#allocation3 + $0x110] sm:$0xff]
    %v84 = vld [vmem:[#allocation3 + $0x118] sm:$0xff]
    %v85 = vld [vmem:[#allocation3 + $0x120] sm:$0xff]
    %v86 = vld [vmem:[#allocation3 + $0x128] sm:$0xff]
    %v87 = vld [vmem:[#allocation3 + $0x130] sm:$0xff]
    %v88 = vld [vmem:[#allocation3 + $0x138] sm:$0xff]
    %v89 = vld [vmem:[#allocation3 + $0x140] sm:$0xff]
    %v90 = vld [vmem:[#allocation3 + $0x148] sm:$0xff]
    %v91 = vld [vmem:[#allocation3 + $0x150] sm:$0xff]
    %v92 = vld [vmem:[#allocation3 + $0x158] sm:$0xff]
    %v93 = vld [vmem:[#allocation3 + $0x160] sm:$0xff]
    %v94 = vld [vmem:[#allocation3 + $0x168] sm:$0xff]
    %v95 = vld [vmem:[#allocation3 + $0x170] sm:$0xff]
    %v96 = vld [vmem:[#allocation3 + $0x178] sm:$0xff]
    %v97 = vld [vmem:[#allocation3 + $0x180] sm:$0xff]
    %v98 = vld [vmem:[#allocation3 + $0x188] sm:$0xff]
    %v99 = vld [vmem:[#allocation3 + $0x190] sm:$0xff]
    %v100 = vld [vmem:[#allocation3 + $0x198] sm:$0xff]
    %v101 = vld [vmem:[#allocation3 + $0x1a0] sm:$0xff]
    %v102 = vld [vmem:[#allocation3 + $0x1a8] sm:$0xff]
    %v103 = vld [vmem:[#allocation3 + $0x1b0] sm:$0xff]
    %v104 = vld [vmem:[#allocation3 + $0x1b8] sm:$0xff]
    %v105 = vld [vmem:[#allocation3 + $0x1c0] sm:$0xff]
    %v106 = vld [vmem:[#allocation3 + $0x1c8] sm:$0xff]
    %v107 = vld [vmem:[#allocation3 + $0x1d0] sm:$0xff]
    %v108 = vld [vmem:[#allocation3 + $0x1d8] sm:$0xff]
    %v109 = vld [vmem:[#allocation3 + $0x1e0] sm:$0xff]
    %v110 = vld [vmem:[#allocation3 + $0x1e8] sm:$0xff]
    %v111 = vld [vmem:[#allocation3 + $0x1f0] sm:$0xff]
    %v112 = vld [vmem:[#allocation3 + $0x1f8] sm:$0xff]
    %177 = vrot.lane.b32.xlu0 %v49, 24
    %v178 = vpop.permute.xlu0 %177
    %179 = vrot.lane.b32.xlu0 %v50, 24
    %v180 = vpop.permute.xlu0 %179
    %181 = vrot.lane.b32.xlu0 %v51, 24
    %v182 = vpop.permute.xlu0 %181
    %183 = vrot.lane.b32.xlu0 %v52, 24
    %v184 = vpop.permute.xlu0 %183
    %185 = vrot.lane.b32.xlu0 %v53, 24
    %v186 = vpop.permute.xlu0 %185
    %187 = vrot.lane.b32.xlu0 %v54, 24
    %v188 = vpop.permute.xlu0 %187
    %189 = vrot.lane.b32.xlu0 %v55, 24
    %v190 = vpop.permute.xlu0 %189
    %191 = vrot.lane.b32.xlu0 %v56, 24
    %v192 = vpop.permute.xlu0 %191
    %193 = vrot.lane.b32.xlu0 %v57, 24
    %v194 = vpop.permute.xlu0 %193
    %195 = vrot.lane.b32.xlu0 %v58, 24
    %v196 = vpop.permute.xlu0 %195
    %197 = vrot.lane.b32.xlu0 %v59, 24
    %v198 = vpop.permute.xlu0 %197
    %199 = vrot.lane.b32.xlu0 %v60, 24
    %v200 = vpop.permute.xlu0 %199
    %201 = vrot.lane.b32.xlu0 %v61, 24
    %v202 = vpop.permute.xlu0 %201
    %203 = vrot.lane.b32.xlu0 %v62, 24
    %v204 = vpop.permute.xlu0 %203
    %205 = vrot.lane.b32.xlu0 %v63, 24
    %v206 = vpop.permute.xlu0 %205
    %207 = vrot.lane.b32.xlu0 %v64, 24
    %v208 = vpop.permute.xlu0 %207
    %209 = vrot.lane.b32.xlu0 %v65, 24
    %v210 = vpop.permute.xlu0 %209
    %211 = vrot.lane.b32.xlu0 %v66, 24
    %v212 = vpop.permute.xlu0 %211
    %213 = vrot.lane.b32.xlu0 %v67, 24
    %v214 = vpop.permute.xlu0 %213
    %215 = vrot.lane.b32.xlu0 %v68, 24
    %v216 = vpop.permute.xlu0 %215
    %217 = vrot.lane.b32.xlu0 %v69, 24
    %v218 = vpop.permute.xlu0 %217
    %219 = vrot.lane.b32.xlu0 %v70, 24
    %v220 = vpop.permute.xlu0 %219
    %221 = vrot.lane.b32.xlu0 %v71, 24
    %v222 = vpop.permute.xlu0 %221
    %223 = vrot.lane.b32.xlu0 %v72, 24
    %v224 = vpop.permute.xlu0 %223
    %225 = vrot.lane.b32.xlu0 %v73, 24
    %v226 = vpop.permute.xlu0 %225
    %227 = vrot.lane.b32.xlu0 %v74, 24
    %v228 = vpop.permute.xlu0 %227
    %229 = vrot.lane.b32.xlu0 %v75, 24
    %v230 = vpop.permute.xlu0 %229
    %231 = vrot.lane.b32.xlu0 %v76, 24
    %v232 = vpop.permute.xlu0 %231
    %233 = vrot.lane.b32.xlu0 %v77, 24
    %v234 = vpop.permute.xlu0 %233
    %235 = vrot.lane.b32.xlu0 %v78, 24
    %v236 = vpop.permute.xlu0 %235
    %237 = vrot.lane.b32.xlu0 %v79, 24
    %v238 = vpop.permute.xlu0 %237
    %239 = vrot.lane.b32.xlu0 %v80, 24
    %v240 = vpop.permute.xlu0 %239
    %241 = vrot.lane.b32.xlu0 %v81, 24
    %v242 = vpop.permute.xlu0 %241
    %243 = vrot.lane.b32.xlu0 %v82, 24
    %v244 = vpop.permute.xlu0 %243
    %245 = vrot.lane.b32.xlu0 %v83, 24
    %v246 = vpop.permute.xlu0 %245
    %247 = vrot.lane.b32.xlu0 %v84, 24
    %v248 = vpop.permute.xlu0 %247
    %249 = vrot.lane.b32.xlu0 %v85, 24
    %v250 = vpop.permute.xlu0 %249
    %251 = vrot.lane.b32.xlu0 %v86, 24
    %v252 = vpop.permute.xlu0 %251
    %253 = vrot.lane.b32.xlu0 %v87, 24
    %v254 = vpop.permute.xlu0 %253
    %255 = vrot.lane.b32.xlu0 %v88, 24
    %v256 = vpop.permute.xlu0 %255
    %257 = vrot.lane.b32.xlu0 %v89, 24
    %v258 = vpop.permute.xlu0 %257
    %259 = vrot.lane.b32.xlu0 %v90, 24
    %v260 = vpop.permute.xlu0 %259
    %261 = vrot.lane.b32.xlu0 %v91, 24
    %v262 = vpop.permute.xlu0 %261
    %263 = vrot.lane.b32.xlu0 %v92, 24
    %v264 = vpop.permute.xlu0 %263
    %265 = vrot.lane.b32.xlu0 %v93, 24
    %v266 = vpop.permute.xlu0 %265
    %267 = vrot.lane.b32.xlu0 %v94, 24
    %v268 = vpop.permute.xlu0 %267
    %269 = vrot.lane.b32.xlu0 %v95, 24
    %v270 = vpop.permute.xlu0 %269
    %271 = vrot.lane.b32.xlu0 %v96, 24
    %v272 = vpop.permute.xlu0 %271
    %273 = vrot.lane.b32.xlu0 %v97, 24
    %v274 = vpop.permute.xlu0 %273
    %275 = vrot.lane.b32.xlu0 %v98, 24
    %v276 = vpop.permute.xlu0 %275
    %277 = vrot.lane.b32.xlu0 %v99, 24
    %v278 = vpop.permute.xlu0 %277
    %279 = vrot.lane.b32.xlu0 %v100, 24
    %v280 = vpop.permute.xlu0 %279
    %281 = vrot.lane.b32.xlu0 %v101, 24
    %v282 = vpop.permute.xlu0 %281
    %283 = vrot.lane.b32.xlu0 %v102, 24
    %v284 = vpop.permute.xlu0 %283
    %285 = vrot.lane.b32.xlu0 %v103, 24
    %v286 = vpop.permute.xlu0 %285
    %287 = vrot.lane.b32.xlu0 %v104, 24
    %v288 = vpop.permute.xlu0 %287
    %289 = vrot.lane.b32.xlu0 %v105, 24
    %v290 = vpop.permute.xlu0 %289
    %291 = vrot.lane.b32.xlu0 %v106, 24
    %v292 = vpop.permute.xlu0 %291
    %293 = vrot.lane.b32.xlu0 %v107, 24
    %v294 = vpop.permute.xlu0 %293
    %295 = vrot.lane.b32.xlu0 %v108, 24
    %v296 = vpop.permute.xlu0 %295
    %297 = vrot.lane.b32.xlu0 %v109, 24
    %v298 = vpop.permute.xlu0 %297
    %299 = vrot.lane.b32.xlu0 %v110, 24
    %v300 = vpop.permute.xlu0 %299
    %301 = vrot.lane.b32.xlu0 %v111, 24
    %v302 = vpop.permute.xlu0 %301
    %303 = vrot.lane.b32.xlu0 %v112, 24
    %v304 = vpop.permute.xlu0 %303
    %369 = vrot.lane.b32.xlu0 %v49, 48
    %v370 = vpop.permute.xlu0 %369
    %371 = vrot.lane.b32.xlu0 %v50, 48
    %v372 = vpop.permute.xlu0 %371
    %373 = vrot.lane.b32.xlu0 %v51, 48
    %v374 = vpop.permute.xlu0 %373
    %375 = vrot.lane.b32.xlu0 %v52, 48
    %v376 = vpop.permute.xlu0 %375
    %377 = vrot.lane.b32.xlu0 %v53, 48
    %v378 = vpop.permute.xlu0 %377
    %379 = vrot.lane.b32.xlu0 %v54, 48
    %v380 = vpop.permute.xlu0 %379
    %381 = vrot.lane.b32.xlu0 %v55, 48
    %v382 = vpop.permute.xlu0 %381
    %383 = vrot.lane.b32.xlu0 %v56, 48
    %v384 = vpop.permute.xlu0 %383
    %385 = vrot.lane.b32.xlu0 %v57, 48
    %v386 = vpop.permute.xlu0 %385
    %387 = vrot.lane.b32.xlu0 %v58, 48
    %v388 = vpop.permute.xlu0 %387
    %389 = vrot.lane.b32.xlu0 %v59, 48
    %v390 = vpop.permute.xlu0 %389
    %391 = vrot.lane.b32.xlu0 %v60, 48
    %v392 = vpop.permute.xlu0 %391
    %393 = vrot.lane.b32.xlu0 %v61, 48
    %v394 = vpop.permute.xlu0 %393
    %395 = vrot.lane.b32.xlu0 %v62, 48
    %v396 = vpop.permute.xlu0 %395
    %397 = vrot.lane.b32.xlu0 %v63, 48
    %v398 = vpop.permute.xlu0 %397
    %399 = vrot.lane.b32.xlu0 %v64, 48
    %v400 = vpop.permute.xlu0 %399
    %401 = vrot.lane.b32.xlu0 %v65, 48
    %v402 = vpop.permute.xlu0 %401
    %403 = vrot.lane.b32.xlu0 %v66, 48
    %v404 = vpop.permute.xlu0 %403
    %405 = vrot.lane.b32.xlu0 %v67, 48
    %v406 = vpop.permute.xlu0 %405
    %407 = vrot.lane.b32.xlu0 %v68, 48
    %v408 = vpop.permute.xlu0 %407
    %409 = vrot.lane.b32.xlu0 %v69, 48
    %v410 = vpop.permute.xlu0 %409
    %411 = vrot.lane.b32.xlu0 %v70, 48
    %v412 = vpop.permute.xlu0 %411
    %413 = vrot.lane.b32.xlu0 %v71, 48
    %v414 = vpop.permute.xlu0 %413
    %415 = vrot.lane.b32.xlu0 %v72, 48
    %v416 = vpop.permute.xlu0 %415
    %417 = vrot.lane.b32.xlu0 %v73, 48
    %v418 = vpop.permute.xlu0 %417
    %419 = vrot.lane.b32.xlu0 %v74, 48
    %v420 = vpop.permute.xlu0 %419
    %421 = vrot.lane.b32.xlu0 %v75, 48
    %v422 = vpop.permute.xlu0 %421
    %423 = vrot.lane.b32.xlu0 %v76, 48
    %v424 = vpop.permute.xlu0 %423
    %425 = vrot.lane.b32.xlu0 %v77, 48
    %v426 = vpop.permute.xlu0 %425
    %427 = vrot.lane.b32.xlu0 %v78, 48
    %v428 = vpop.permute.xlu0 %427
    %429 = vrot.lane.b32.xlu0 %v79, 48
    %v430 = vpop.permute.xlu0 %429
    %431 = vrot.lane.b32.xlu0 %v80, 48
    %v432 = vpop.permute.xlu0 %431
    %433 = vrot.lane.b32.xlu0 %v81, 48
    %v434 = vpop.permute.xlu0 %433
    %435 = vrot.lane.b32.xlu0 %v82, 48
    %v436 = vpop.permute.xlu0 %435
    %437 = vrot.lane.b32.xlu0 %v83, 48
    %v438 = vpop.permute.xlu0 %437
    %439 = vrot.lane.b32.xlu0 %v84, 48
    %v440 = vpop.permute.xlu0 %439
    %441 = vrot.lane.b32.xlu0 %v85, 48
    %v442 = vpop.permute.xlu0 %441
    %443 = vrot.lane.b32.xlu0 %v86, 48
    %v444 = vpop.permute.xlu0 %443
    %445 = vrot.lane.b32.xlu0 %v87, 48
    %v446 = vpop.permute.xlu0 %445
    %447 = vrot.lane.b32.xlu0 %v88, 48
    %v448 = vpop.permute.xlu0 %447
    %449 = vrot.lane.b32.xlu0 %v89, 48
    %v450 = vpop.permute.xlu0 %449
    %451 = vrot.lane.b32.xlu0 %v90, 48
    %v452 = vpop.permute.xlu0 %451
    %453 = vrot.lane.b32.xlu0 %v91, 48
    %v454 = vpop.permute.xlu0 %453
    %455 = vrot.lane.b32.xlu0 %v92, 48
    %v456 = vpop.permute.xlu0 %455
    %457 = vrot.lane.b32.xlu0 %v93, 48
    %v458 = vpop.permute.xlu0 %457
    %459 = vrot.lane.b32.xlu0 %v94, 48
    %v460 = vpop.permute.xlu0 %459
    %461 = vrot.lane.b32.xlu0 %v95, 48
    %v462 = vpop.permute.xlu0 %461
    %463 = vrot.lane.b32.xlu0 %v96, 48
    %v464 = vpop.permute.xlu0 %463
    %465 = vrot.lane.b32.xlu0 %v97, 48
    %v466 = vpop.permute.xlu0 %465
    %467 = vrot.lane.b32.xlu0 %v98, 48
    %v468 = vpop.permute.xlu0 %467
    %469 = vrot.lane.b32.xlu0 %v99, 48
    %v470 = vpop.permute.xlu0 %469
    %471 = vrot.lane.b32.xlu0 %v100, 48
    %v472 = vpop.permute.xlu0 %471
    %473 = vrot.lane.b32.xlu0 %v101, 48
    %v474 = vpop.permute.xlu0 %473
    %475 = vrot.lane.b32.xlu0 %v102, 48
    %v476 = vpop.permute.xlu0 %475
    %477 = vrot.lane.b32.xlu0 %v103, 48
    %v478 = vpop.permute.xlu0 %477
    %479 = vrot.lane.b32.xlu0 %v104, 48
    %v480 = vpop.permute.xlu0 %479
    %481 = vrot.lane.b32.xlu0 %v105, 48
    %v482 = vpop.permute.xlu0 %481
    %483 = vrot.lane.b32.xlu0 %v106, 48
    %v484 = vpop.permute.xlu0 %483
    %485 = vrot.lane.b32.xlu0 %v107, 48
    %v486 = vpop.permute.xlu0 %485
    %487 = vrot.lane.b32.xlu0 %v108, 48
    %v488 = vpop.permute.xlu0 %487
    %489 = vrot.lane.b32.xlu0 %v109, 48
    %v490 = vpop.permute.xlu0 %489
    %491 = vrot.lane.b32.xlu0 %v110, 48
    %v492 = vpop.permute.xlu0 %491
    %493 = vrot.lane.b32.xlu0 %v111, 48
    %v494 = vpop.permute.xlu0 %493
    %495 = vrot.lane.b32.xlu0 %v112, 48
    %v496 = vpop.permute.xlu0 %495
    %vm561 = vcmask 195584
    %v562 = vsel %vm561, %v49, %v178
    %v563 = vsel %vm561, %v50, %v180
    %v564 = vsel %vm561, %v51, %v182
    %v565 = vsel %vm561, %v52, %v184
    %v566 = vsel %vm561, %v53, %v186
    %v567 = vsel %vm561, %v54, %v188
    %v568 = vsel %vm561, %v55, %v190
    %v569 = vsel %vm561, %v56, %v192
    %v570 = vsel %vm561, %v57, %v194
    %v571 = vsel %vm561, %v58, %v196
    %v572 = vsel %vm561, %v59, %v198
    %v573 = vsel %vm561, %v60, %v200
    %v574 = vsel %vm561, %v61, %v202
    %v575 = vsel %vm561, %v62, %v204
    %v576 = vsel %vm561, %v63, %v206
    %v577 = vsel %vm561, %v64, %v208
    %v578 = vsel %vm561, %v65, %v210
    %v579 = vsel %vm561, %v66, %v212
    %v580 = vsel %vm561, %v67, %v214
    %v581 = vsel %vm561, %v68, %v216
    %v582 = vsel %vm561, %v69, %v218
    %v583 = vsel %vm561, %v70, %v220
    %v584 = vsel %vm561, %v71, %v222
    %v585 = vsel %vm561, %v72, %v224
    %v586 = vsel %vm561, %v73, %v226
    %v587 = vsel %vm561, %v74, %v228
    %v588 = vsel %vm561, %v75, %v230
    %v589 = vsel %vm561, %v76, %v232
    %v590 = vsel %vm561, %v77, %v234
    %v591 = vsel %vm561, %v78, %v236
    %v592 = vsel %vm561, %v79, %v238
    %v593 = vsel %vm561, %v80, %v240
    %v594 = vsel %vm561, %v81, %v242
    %v595 = vsel %vm561, %v82, %v244
    %v596 = vsel %vm561, %v83, %v246
    %v597 = vsel %vm561, %v84, %v248
    %v598 = vsel %vm561, %v85, %v250
    %v599 = vsel %vm561, %v86, %v252
    %v600 = vsel %vm561, %v87, %v254
    %v601 = vsel %vm561, %v88, %v256
    %v602 = vsel %vm561, %v89, %v258
    %v603 = vsel %vm561, %v90, %v260
    %v604 = vsel %vm561, %v91, %v262
    %v605 = vsel %vm561, %v92, %v264
    %v606 = vsel %vm561, %v93, %v266
    %v607 = vsel %vm561, %v94, %v268
    %v608 = vsel %vm561, %v95, %v270
    %v609 = vsel %vm561, %v96, %v272
    %v610 = vsel %vm561, %v97, %v274
    %v611 = vsel %vm561, %v98, %v276
    %v612 = vsel %vm561, %v99, %v278
    %v613 = vsel %vm561, %v100, %v280
    %v614 = vsel %vm561, %v101, %v282
    %v615 = vsel %vm561, %v102, %v284
    %v616 = vsel %vm561, %v103, %v286
    %v617 = vsel %vm561, %v104, %v288
    %v618 = vsel %vm561, %v105, %v290
    %v619 = vsel %vm561, %v106, %v292
    %v620 = vsel %vm561, %v107, %v294
    %v621 = vsel %vm561, %v108, %v296
    %v622 = vsel %vm561, %v109, %v298
    %v623 = vsel %vm561, %v110, %v300
    %v624 = vsel %vm561, %v111, %v302
    %v625 = vsel %vm561, %v112, %v304
    %vm626 = vcmask 392192
    %v627 = vsel %vm626, %v562, %v370
    %v628 = vsel %vm626, %v563, %v372
    %v629 = vsel %vm626, %v564, %v374
    %v630 = vsel %vm626, %v565, %v376
    %v631 = vsel %vm626, %v566, %v378
    %v632 = vsel %vm626, %v567, %v380
    %v633 = vsel %vm626, %v568, %v382
    %v634 = vsel %vm626, %v569, %v384
    %v635 = vsel %vm626, %v570, %v386
    %v636 = vsel %vm626, %v571, %v388
    %v637 = vsel %vm626, %v572, %v390
    %v638 = vsel %vm626, %v573, %v392
    %v639 = vsel %vm626, %v574, %v394
    %v640 = vsel %vm626, %v575, %v396
    %v641 = vsel %vm626, %v576, %v398
    %v642 = vsel %vm626, %v577, %v400
    %v643 = vsel %vm626, %v578, %v402
    %v644 = vsel %vm626, %v579, %v404
    %v645 = vsel %vm626, %v580, %v406
    %v646 = vsel %vm626, %v581, %v408
    %v647 = vsel %vm626, %v582, %v410
    %v648 = vsel %vm626, %v583, %v412
    %v649 = vsel %vm626, %v584, %v414
    %v650 = vsel %vm626, %v585, %v416
    %v651 = vsel %vm626, %v586, %v418
    %v652 = vsel %vm626, %v587, %v420
    %v653 = vsel %vm626, %v588, %v422
    %v654 = vsel %vm626, %v589, %v424
    %v655 = vsel %vm626, %v590, %v426
    %v656 = vsel %vm626, %v591, %v428
    %v657 = vsel %vm626, %v592, %v430
    %v658 = vsel %vm626, %v593, %v432
    %v659 = vsel %vm626, %v594, %v434
    %v660 = vsel %vm626, %v595, %v436
    %v661 = vsel %vm626, %v596, %v438
    %v662 = vsel %vm626, %v597, %v440
    %v663 = vsel %vm626, %v598, %v442
    %v664 = vsel %vm626, %v599, %v444
    %v665 = vsel %vm626, %v600, %v446
    %v666 = vsel %vm626, %v601, %v448
    %v667 = vsel %vm626, %v602, %v450
    %v668 = vsel %vm626, %v603, %v452
    %v669 = vsel %vm626, %v604, %v454
    %v670 = vsel %vm626, %v605, %v456
    %v671 = vsel %vm626, %v606, %v458
    %v672 = vsel %vm626, %v607, %v460
    %v673 = vsel %vm626, %v608, %v462
    %v674 = vsel %vm626, %v609, %v464
    %v675 = vsel %vm626, %v610, %v466
    %v676 = vsel %vm626, %v611, %v468
    %v677 = vsel %vm626, %v612, %v470
    %v678 = vsel %vm626, %v613, %v472
    %v679 = vsel %vm626, %v614, %v474
    %v680 = vsel %vm626, %v615, %v476
    %v681 = vsel %vm626, %v616, %v478
    %v682 = vsel %vm626, %v617, %v480
    %v683 = vsel %vm626, %v618, %v482
    %v684 = vsel %vm626, %v619, %v484
    %v685 = vsel %vm626, %v620, %v486
    %v686 = vsel %vm626, %v621, %v488
    %v687 = vsel %vm626, %v622, %v490
    %v688 = vsel %vm626, %v623, %v492
    %v689 = vsel %vm626, %v624, %v494
    %v690 = vsel %vm626, %v625, %v496
    %vm691 = vcmask 588800
    %692 = vst.msk [vmem:[#allocation2] sm:$0xff] %vm691, 0.0
    %693 = vst.msk [vmem:[#allocation2 + $0x8] sm:$0xff] %vm691, 0.0
    %vm694 = vcmask 584704
    %695 = vst.msk [vmem:[#allocation2 + $0x10] sm:$0xf] %vm694, 0.0
    %696 = vst.msk [vmem:[#allocation2 + $0x18] sm:$0xff] %vm691, 0.0
    %697 = vst.msk [vmem:[#allocation2 + $0x20] sm:$0xff] %vm691, 0.0
    %698 = vst.msk [vmem:[#allocation2 + $0x28] sm:$0xf] %vm694, 0.0
    %699 = vst.msk [vmem:[#allocation2 + $0x30] sm:$0xff] %vm691, 0.0
    %700 = vst.msk [vmem:[#allocation2 + $0x38] sm:$0xff] %vm691, 0.0
    %701 = vst.msk [vmem:[#allocation2 + $0x40] sm:$0xf] %vm694, 0.0
    %702 = vst.msk [vmem:[#allocation2 + $0x48] sm:$0xff] %vm691, 0.0
    %703 = vst.msk [vmem:[#allocation2 + $0x50] sm:$0xff] %vm691, 0.0
    %704 = vst.msk [vmem:[#allocation2 + $0x58] sm:$0xf] %vm694, 0.0
    %705 = vst.msk [vmem:[#allocation2 + $0x60] sm:$0xff] %vm691, 0.0
    %706 = vst.msk [vmem:[#allocation2 + $0x68] sm:$0xff] %vm691, 0.0
    %707 = vst.msk [vmem:[#allocation2 + $0x70] sm:$0xf] %vm694, 0.0
    %708 = vst.msk [vmem:[#allocation2 + $0x78] sm:$0xff] %vm691, 0.0
    %709 = vst.msk [vmem:[#allocation2 + $0x80] sm:$0xff] %vm691, 0.0
    %710 = vst.msk [vmem:[#allocation2 + $0x88] sm:$0xf] %vm694, 0.0
    %711 = vst.msk [vmem:[#allocation2 + $0x90] sm:$0xff] %vm691, 0.0
    %712 = vst.msk [vmem:[#allocation2 + $0x98] sm:$0xff] %vm691, 0.0
    %713 = vst.msk [vmem:[#allocation2 + $0xa0] sm:$0xf] %vm694, 0.0
    %714 = vst.msk [vmem:[#allocation2 + $0xa8] sm:$0xff] %vm691, 0.0
    %715 = vst.msk [vmem:[#allocation2 + $0xb0] sm:$0xff] %vm691, 0.0
    %716 = vst.msk [vmem:[#allocation2 + $0xb8] sm:$0xf] %vm694, 0.0
    %717 = vst.msk [vmem:[#allocation2 + $0xc0] sm:$0xff] %vm691, 0.0
    %718 = vst.msk [vmem:[#allocation2 + $0xc8] sm:$0xff] %vm691, 0.0
    %719 = vst.msk [vmem:[#allocation2 + $0xd0] sm:$0xf] %vm694, 0.0
    %720 = vst.msk [vmem:[#allocation2 + $0xd8] sm:$0xff] %vm691, 0.0
    %721 = vst.msk [vmem:[#allocation2 + $0xe0] sm:$0xff] %vm691, 0.0
    %722 = vst.msk [vmem:[#allocation2 + $0xe8] sm:$0xf] %vm694, 0.0
    %723 = vst.msk [vmem:[#allocation2 + $0xf0] sm:$0xff] %vm691, 0.0
    %724 = vst.msk [vmem:[#allocation2 + $0xf8] sm:$0xff] %vm691, 0.0
    %725 = vst.msk [vmem:[#allocation2 + $0x100] sm:$0xf] %vm694, 0.0
    %726 = vst.msk [vmem:[#allocation2 + $0x108] sm:$0xff] %vm691, 0.0
    %727 = vst.msk [vmem:[#allocation2 + $0x110] sm:$0xff] %vm691, 0.0
    %728 = vst.msk [vmem:[#allocation2 + $0x118] sm:$0xf] %vm694, 0.0
    %729 = vst.msk [vmem:[#allocation2 + $0x120] sm:$0xff] %vm691, 0.0
    %730 = vst.msk [vmem:[#allocation2 + $0x128] sm:$0xff] %vm691, 0.0
    %731 = vst.msk [vmem:[#allocation2 + $0x130] sm:$0xf] %vm694, 0.0
    %732 = vst.msk [vmem:[#allocation2 + $0x138] sm:$0xff] %vm691, 0.0
    %733 = vst.msk [vmem:[#allocation2 + $0x140] sm:$0xff] %vm691, 0.0
    %734 = vst.msk [vmem:[#allocation2 + $0x148] sm:$0xf] %vm694, 0.0
    %735 = vst.msk [vmem:[#allocation2 + $0x150] sm:$0xff] %vm691, 0.0
    %736 = vst.msk [vmem:[#allocation2 + $0x158] sm:$0xff] %vm691, 0.0
    %737 = vst.msk [vmem:[#allocation2 + $0x160] sm:$0xf] %vm694, 0.0
    %738 = vst.msk [vmem:[#allocation2 + $0x168] sm:$0xff] %vm691, 0.0
    %739 = vst.msk [vmem:[#allocation2 + $0x170] sm:$0xff] %vm691, 0.0
    %740 = vst.msk [vmem:[#allocation2 + $0x178] sm:$0xf] %vm694, 0.0
    %741 = vst.msk [vmem:[#allocation2 + $0x180] sm:$0xff] %vm691, 0.0
    %742 = vst.msk [vmem:[#allocation2 + $0x188] sm:$0xff] %vm691, 0.0
    %743 = vst.msk [vmem:[#allocation2 + $0x190] sm:$0xf] %vm694, 0.0
    %744 = vst.msk [vmem:[#allocation2 + $0x198] sm:$0xff] %vm691, 0.0
    %745 = vst.msk [vmem:[#allocation2 + $0x1a0] sm:$0xff] %vm691, 0.0
    %746 = vst.msk [vmem:[#allocation2 + $0x1a8] sm:$0xf] %vm694, 0.0
    %747 = vst.msk [vmem:[#allocation2 + $0x1b0] sm:$0xff] %vm691, 0.0
    %748 = vst.msk [vmem:[#allocation2 + $0x1b8] sm:$0xff] %vm691, 0.0
    %749 = vst.msk [vmem:[#allocation2 + $0x1c0] sm:$0xf] %vm694, 0.0
    %750 = vst.msk [vmem:[#allocation2 + $0x1c8] sm:$0xff] %vm691, 0.0
    %751 = vst.msk [vmem:[#allocation2 + $0x1d0] sm:$0xff] %vm691, 0.0
    %752 = vst.msk [vmem:[#allocation2 + $0x1d8] sm:$0xf] %vm694, 0.0
    %753 = vst.msk [vmem:[#allocation2 + $0x1e0] sm:$0xff] %vm691, 0.0
    %754 = vst.msk [vmem:[#allocation2 + $0x1e8] sm:$0xff] %vm691, 0.0
    %755 = vst.msk [vmem:[#allocation2 + $0x1f0] sm:$0xf] %vm694, 0.0
    %756 = vst.msk [vmem:[#allocation2 + $0x1f8] sm:$0xff] %vm691, 0.0
    %757 = vst.msk [vmem:[#allocation2 + $0x200] sm:$0xff] %vm691, 0.0
    %758 = vst.msk [vmem:[#allocation2 + $0x208] sm:$0xf] %vm694, 0.0
    %759 = vst.msk [vmem:[#allocation2 + $0x210] sm:$0xff] %vm691, 0.0
    %760 = vst.msk [vmem:[#allocation2 + $0x218] sm:$0xff] %vm691, 0.0
    %761 = vst.msk [vmem:[#allocation2 + $0x220] sm:$0xf] %vm694, 0.0
    %762 = vst.msk [vmem:[#allocation2 + $0x228] sm:$0xff] %vm691, 0.0
    %763 = vst.msk [vmem:[#allocation2 + $0x230] sm:$0xff] %vm691, 0.0
    %764 = vst.msk [vmem:[#allocation2 + $0x238] sm:$0xf] %vm694, 0.0
    %765 = vst.msk [vmem:[#allocation2 + $0x240] sm:$0xff] %vm691, 0.0
    %766 = vst.msk [vmem:[#allocation2 + $0x248] sm:$0xff] %vm691, 0.0
    %767 = vst.msk [vmem:[#allocation2 + $0x250] sm:$0xf] %vm694, 0.0
    %768 = vst.msk [vmem:[#allocation2 + $0x258] sm:$0xff] %vm691, 0.0
    %769 = vst.msk [vmem:[#allocation2 + $0x260] sm:$0xff] %vm691, 0.0
    %770 = vst.msk [vmem:[#allocation2 + $0x268] sm:$0xf] %vm694, 0.0
    %771 = vst.msk [vmem:[#allocation2 + $0x270] sm:$0xff] %vm691, 0.0
    %772 = vst.msk [vmem:[#allocation2 + $0x278] sm:$0xff] %vm691, 0.0
    %773 = vst.msk [vmem:[#allocation2 + $0x280] sm:$0xf] %vm694, 0.0
    %774 = vst.msk [vmem:[#allocation2 + $0x288] sm:$0xff] %vm691, 0.0
    %775 = vst.msk [vmem:[#allocation2 + $0x290] sm:$0xff] %vm691, 0.0
    %776 = vst.msk [vmem:[#allocation2 + $0x298] sm:$0xf] %vm694, 0.0
    %777 = vst.msk [vmem:[#allocation2 + $0x2a0] sm:$0xff] %vm691, 0.0
    %778 = vst.msk [vmem:[#allocation2 + $0x2a8] sm:$0xff] %vm691, 0.0
    %779 = vst.msk [vmem:[#allocation2 + $0x2b0] sm:$0xf] %vm694, 0.0
    %780 = vst.msk [vmem:[#allocation2 + $0x2b8] sm:$0xff] %vm691, 0.0
    %781 = vst.msk [vmem:[#allocation2 + $0x2c0] sm:$0xff] %vm691, 0.0
    %782 = vst.msk [vmem:[#allocation2 + $0x2c8] sm:$0xf] %vm694, 0.0
    %783 = vst.msk [vmem:[#allocation2 + $0x2d0] sm:$0xff] %vm691, 0.0
    %784 = vst.msk [vmem:[#allocation2 + $0x2d8] sm:$0xff] %vm691, 0.0
    %785 = vst.msk [vmem:[#allocation2 + $0x2e0] sm:$0xf] %vm694, 0.0
    %786 = vst.msk [vmem:[#allocation2 + $0x2e8] sm:$0xff] %vm691, 0.0
    %787 = vst.msk [vmem:[#allocation2 + $0x2f0] sm:$0xff] %vm691, 0.0
    %788 = vst.msk [vmem:[#allocation2 + $0x2f8] sm:$0xf] %vm694, 0.0
    %789 = vst.msk [vmem:[#allocation2 + $0x300] sm:$0xff] %vm691, 0.0
    %790 = vst.msk [vmem:[#allocation2 + $0x308] sm:$0xff] %vm691, 0.0
    %791 = vst.msk [vmem:[#allocation2 + $0x310] sm:$0xf] %vm694, 0.0
    %792 = vst.msk [vmem:[#allocation2 + $0x318] sm:$0xff] %vm691, 0.0
    %793 = vst.msk [vmem:[#allocation2 + $0x320] sm:$0xff] %vm691, 0.0
    %794 = vst.msk [vmem:[#allocation2 + $0x328] sm:$0xf] %vm694, 0.0
    %795 = vst.msk [vmem:[#allocation2 + $0x330] sm:$0xff] %vm691, 0.0
    %796 = vst.msk [vmem:[#allocation2 + $0x338] sm:$0xff] %vm691, 0.0
    %797 = vst.msk [vmem:[#allocation2 + $0x340] sm:$0xf] %vm694, 0.0
    %798 = vst.msk [vmem:[#allocation2 + $0x348] sm:$0xff] %vm691, 0.0
    %799 = vst.msk [vmem:[#allocation2 + $0x350] sm:$0xff] %vm691, 0.0
    %800 = vst.msk [vmem:[#allocation2 + $0x358] sm:$0xf] %vm694, 0.0
    %801 = vst.msk [vmem:[#allocation2 + $0x360] sm:$0xff] %vm691, 0.0
    %802 = vst.msk [vmem:[#allocation2 + $0x368] sm:$0xff] %vm691, 0.0
    %803 = vst.msk [vmem:[#allocation2 + $0x370] sm:$0xf] %vm694, 0.0
    %804 = vst.msk [vmem:[#allocation2 + $0x378] sm:$0xff] %vm691, 0.0
    %805 = vst.msk [vmem:[#allocation2 + $0x380] sm:$0xff] %vm691, 0.0
    %806 = vst.msk [vmem:[#allocation2 + $0x388] sm:$0xf] %vm694, 0.0
    %807 = vst.msk [vmem:[#allocation2 + $0x390] sm:$0xff] %vm691, 0.0
    %808 = vst.msk [vmem:[#allocation2 + $0x398] sm:$0xff] %vm691, 0.0
    %809 = vst.msk [vmem:[#allocation2 + $0x3a0] sm:$0xf] %vm694, 0.0
    %810 = vst.msk [vmem:[#allocation2 + $0x3a8] sm:$0xff] %vm691, 0.0
    %811 = vst.msk [vmem:[#allocation2 + $0x3b0] sm:$0xff] %vm691, 0.0
    %812 = vst.msk [vmem:[#allocation2 + $0x3b8] sm:$0xf] %vm694, 0.0
    %s813 = scalar_lea.vmem [#allocation2], 48
    %814 = vst.msk [vmem:[%s813 + $0x2] sm:$0xff] %vm691, %v627
    %815 = vst.msk [vmem:[%s813 + $0xa] sm:$0xff] %vm691, %v628
    %816 = vst.msk [vmem:[%s813 + $0x1a] sm:$0xff] %vm691, %v629
    %817 = vst.msk [vmem:[%s813 + $0x22] sm:$0xff] %vm691, %v630
    %818 = vst.msk [vmem:[%s813 + $0x32] sm:$0xff] %vm691, %v631
    %819 = vst.msk [vmem:[%s813 + $0x3a] sm:$0xff] %vm691, %v632
    %820 = vst.msk [vmem:[%s813 + $0x4a] sm:$0xff] %vm691, %v633
    %821 = vst.msk [vmem:[%s813 + $0x52] sm:$0xff] %vm691, %v634
    %822 = vst.msk [vmem:[%s813 + $0x62] sm:$0xff] %vm691, %v635
    %823 = vst.msk [vmem:[%s813 + $0x6a] sm:$0xff] %vm691, %v636
    %824 = vst.msk [vmem:[%s813 + $0x7a] sm:$0xff] %vm691, %v637
    %825 = vst.msk [vmem:[%s813 + $0x82] sm:$0xff] %vm691, %v638
    %826 = vst.msk [vmem:[%s813 + $0x92] sm:$0xff] %vm691, %v639
    %827 = vst.msk [vmem:[%s813 + $0x9a] sm:$0xff] %vm691, %v640
    %828 = vst.msk [vmem:[%s813 + $0xaa] sm:$0xff] %vm691, %v641
    %829 = vst.msk [vmem:[%s813 + $0xb2] sm:$0xff] %vm691, %v642
    %830 = vst.msk [vmem:[%s813 + $0xc2] sm:$0xff] %vm691, %v643
    %831 = vst.msk [vmem:[%s813 + $0xca] sm:$0xff] %vm691, %v644
    %832 = vst.msk [vmem:[%s813 + $0xda] sm:$0xff] %vm691, %v645
    %833 = vst.msk [vmem:[%s813 + $0xe2] sm:$0xff] %vm691, %v646
    %834 = vst.msk [vmem:[%s813 + $0xf2] sm:$0xff] %vm691, %v647
    %835 = vst.msk [vmem:[%s813 + $0xfa] sm:$0xff] %vm691, %v648
    %836 = vst.msk [vmem:[%s813 + $0x10a] sm:$0xff] %vm691, %v649
    %837 = vst.msk [vmem:[%s813 + $0x112] sm:$0xff] %vm691, %v650
    %838 = vst.msk [vmem:[%s813 + $0x122] sm:$0xff] %vm691, %v651
    %839 = vst.msk [vmem:[%s813 + $0x12a] sm:$0xff] %vm691, %v652
    %840 = vst.msk [vmem:[%s813 + $0x13a] sm:$0xff] %vm691, %v653
    %841 = vst.msk [vmem:[%s813 + $0x142] sm:$0xff] %vm691, %v654
    %842 = vst.msk [vmem:[%s813 + $0x152] sm:$0xff] %vm691, %v655
    %843 = vst.msk [vmem:[%s813 + $0x15a] sm:$0xff] %vm691, %v656
    %844 = vst.msk [vmem:[%s813 + $0x16a] sm:$0xff] %vm691, %v657
    %845 = vst.msk [vmem:[%s813 + $0x172] sm:$0xff] %vm691, %v658
    %846 = vst.msk [vmem:[%s813 + $0x1e2] sm:$0xff] %vm691, %v659
    %847 = vst.msk [vmem:[%s813 + $0x1ea] sm:$0xff] %vm691, %v660
    %848 = vst.msk [vmem:[%s813 + $0x1fa] sm:$0xff] %vm691, %v661
    %849 = vst.msk [vmem:[%s813 + $0x202] sm:$0xff] %vm691, %v662
    %850 = vst.msk [vmem:[%s813 + $0x212] sm:$0xff] %vm691, %v663
    %851 = vst.msk [vmem:[%s813 + $0x21a] sm:$0xff] %vm691, %v664
    %852 = vst.msk [vmem:[%s813 + $0x22a] sm:$0xff] %vm691, %v665
    %853 = vst.msk [vmem:[%s813 + $0x232] sm:$0xff] %vm691, %v666
    %854 = vst.msk [vmem:[%s813 + $0x242] sm:$0xff] %vm691, %v667
    %855 = vst.msk [vmem:[%s813 + $0x24a] sm:$0xff] %vm691, %v668
    %856 = vst.msk [vmem:[%s813 + $0x25a] sm:$0xff] %vm691, %v669
    %857 = vst.msk [vmem:[%s813 + $0x262] sm:$0xff] %vm691, %v670
    %858 = vst.msk [vmem:[%s813 + $0x272] sm:$0xff] %vm691, %v671
    %859 = vst.msk [vmem:[%s813 + $0x27a] sm:$0xff] %vm691, %v672
    %860 = vst.msk [vmem:[%s813 + $0x28a] sm:$0xff] %vm691, %v673
    %861 = vst.msk [vmem:[%s813 + $0x292] sm:$0xff] %vm691, %v674
    %862 = vst.msk [vmem:[%s813 + $0x2a2] sm:$0xff] %vm691, %v675
    %863 = vst.msk [vmem:[%s813 + $0x2aa] sm:$0xff] %vm691, %v676
    %864 = vst.msk [vmem:[%s813 + $0x2ba] sm:$0xff] %vm691, %v677
    %865 = vst.msk [vmem:[%s813 + $0x2c2] sm:$0xff] %vm691, %v678
    %866 = vst.msk [vmem:[%s813 + $0x2d2] sm:$0xff] %vm691, %v679
    %867 = vst.msk [vmem:[%s813 + $0x2da] sm:$0xff] %vm691, %v680
    %868 = vst.msk [vmem:[%s813 + $0x2ea] sm:$0xff] %vm691, %v681
    %869 = vst.msk [vmem:[%s813 + $0x2f2] sm:$0xff] %vm691, %v682
    %870 = vst.msk [vmem:[%s813 + $0x302] sm:$0xff] %vm691, %v683
    %871 = vst.msk [vmem:[%s813 + $0x30a] sm:$0xff] %vm691, %v684
    %872 = vst.msk [vmem:[%s813 + $0x31a] sm:$0xff] %vm691, %v685
    %873 = vst.msk [vmem:[%s813 + $0x322] sm:$0xff] %vm691, %v686
    %874 = vst.msk [vmem:[%s813 + $0x332] sm:$0xff] %vm691, %v687
    %875 = vst.msk [vmem:[%s813 + $0x33a] sm:$0xff] %vm691, %v688
    %876 = vst.msk [vmem:[%s813 + $0x34a] sm:$0xff] %vm691, %v689
    %877 = vst.msk [vmem:[%s813 + $0x352] sm:$0xff] %vm691, %v690
    %v878 = vld [vmem:[%s1] sm:$0x7]
    %v879 = vld [vmem:[%s1 + $0x4] sm:$0x7]
    %v880 = vld [vmem:[%s1 + $0x8] sm:$0x7]
    %v881 = vld [vmem:[#allocation2] sm:$0xff]
    %v882 = vld [vmem:[#allocation2 + $0x8] sm:$0xff]
    %v883 = vld [vmem:[#allocation2 + $0x18] sm:$0xff]
    %v884 = vld [vmem:[#allocation2 + $0x20] sm:$0xff]
    %v885 = vld [vmem:[#allocation2 + $0x30] sm:$0xff]
    %v886 = vld [vmem:[#allocation2 + $0x38] sm:$0xff]
    %v887 = vld [vmem:[#allocation2 + $0x48] sm:$0xff]
    %v888 = vld [vmem:[#allocation2 + $0x50] sm:$0xff]
    %v889 = vld [vmem:[#allocation2 + $0x60] sm:$0xff]
    %v890 = vld [vmem:[#allocation2 + $0x68] sm:$0xff]
    %v891 = vld [vmem:[#allocation2 + $0x78] sm:$0xff]
    %v892 = vld [vmem:[#allocation2 + $0x80] sm:$0xff]
    %v893 = vld [vmem:[#allocation2 + $0x90] sm:$0xff]
    %v894 = vld [vmem:[#allocation2 + $0x98] sm:$0xff]
    %v895 = vld [vmem:[#allocation2 + $0xa8] sm:$0xff]
    %v896 = vld [vmem:[#allocation2 + $0xb0] sm:$0xff]
    %v897 = vld [vmem:[#allocation2 + $0xc0] sm:$0xff]
    %v898 = vld [vmem:[#allocation2 + $0xc8] sm:$0xff]
    %v899 = vld [vmem:[#allocation2 + $0xd8] sm:$0xff]
    %v900 = vld [vmem:[#allocation2 + $0xe0] sm:$0xff]
    %v901 = vld [vmem:[#allocation2 + $0xf0] sm:$0xff]
    %v902 = vld [vmem:[#allocation2 + $0xf8] sm:$0xff]
    %v903 = vld [vmem:[#allocation2 + $0x108] sm:$0xff]
    %v904 = vld [vmem:[#allocation2 + $0x110] sm:$0xff]
    %v905 = vld [vmem:[#allocation2 + $0x120] sm:$0xff]
    %v906 = vld [vmem:[#allocation2 + $0x128] sm:$0xff]
    %v907 = vld [vmem:[#allocation2 + $0x138] sm:$0xff]
    %v908 = vld [vmem:[#allocation2 + $0x140] sm:$0xff]
    %v909 = vld [vmem:[#allocation2 + $0x150] sm:$0xff]
    %v910 = vld [vmem:[#allocation2 + $0x158] sm:$0xff]
    %v911 = vld [vmem:[#allocation2 + $0x168] sm:$0xff]
    %v912 = vld [vmem:[#allocation2 + $0x170] sm:$0xff]
    %v913 = vld [vmem:[#allocation2 + $0x1e0] sm:$0xff]
    %v914 = vld [vmem:[#allocation2 + $0x1e8] sm:$0xff]
    %v915 = vld [vmem:[#allocation2 + $0x1f8] sm:$0xff]
    %v916 = vld [vmem:[#allocation2 + $0x200] sm:$0xff]
    %v917 = vld [vmem:[#allocation2 + $0x210] sm:$0xff]
    %v918 = vld [vmem:[#allocation2 + $0x218] sm:$0xff]
    %v919 = vld [vmem:[#allocation2 + $0x228] sm:$0xff]
    %v920 = vld [vmem:[#allocation2 + $0x230] sm:$0xff]
    %v921 = vld [vmem:[#allocation2 + $0x240] sm:$0xff]
    %v922 = vld [vmem:[#allocation2 + $0x248] sm:$0xff]
    %v923 = vld [vmem:[#allocation2 + $0x258] sm:$0xff]
    %v924 = vld [vmem:[#allocation2 + $0x260] sm:$0xff]
    %v925 = vld [vmem:[#allocation2 + $0x270] sm:$0xff]
    %v926 = vld [vmem:[#allocation2 + $0x278] sm:$0xff]
    %v927 = vld [vmem:[#allocation2 + $0x288] sm:$0xff]
    %v928 = vld [vmem:[#allocation2 + $0x290] sm:$0xff]
    %v929 = vld [vmem:[#allocation2 + $0x2a0] sm:$0xff]
    %v930 = vld [vmem:[#allocation2 + $0x2a8] sm:$0xff]
    %v931 = vld [vmem:[#allocation2 + $0x2b8] sm:$0xff]
    %v932 = vld [vmem:[#allocation2 + $0x2c0] sm:$0xff]
    %v933 = vld [vmem:[#allocation2 + $0x2d0] sm:$0xff]
    %v934 = vld [vmem:[#allocation2 + $0x2d8] sm:$0xff]
    %v935 = vld [vmem:[#allocation2 + $0x2e8] sm:$0xff]
    %v936 = vld [vmem:[#allocation2 + $0x2f0] sm:$0xff]
    %v937 = vld [vmem:[#allocation2 + $0x300] sm:$0xff]
    %v938 = vld [vmem:[#allocation2 + $0x308] sm:$0xff]
    %v939 = vld [vmem:[#allocation2 + $0x318] sm:$0xff]
    %v940 = vld [vmem:[#allocation2 + $0x320] sm:$0xff]
    %v941 = vld [vmem:[#allocation2 + $0x330] sm:$0xff]
    %v942 = vld [vmem:[#allocation2 + $0x338] sm:$0xff]
    %v943 = vld [vmem:[#allocation2 + $0x348] sm:$0xff]
    %v944 = vld [vmem:[#allocation2 + $0x350] sm:$0xff]
    %v945 = vperm.slane %v878, 0
    %v946 = vmul.f32 %v881, %v945
    %v947 = vmul.f32 %v882, %v945
    %v948 = vmul.f32 %v883, %v945
    %v949 = vmul.f32 %v884, %v945
    %v950 = vmul.f32 %v885, %v945
    %v951 = vmul.f32 %v886, %v945
    %v952 = vmul.f32 %v887, %v945
    %v953 = vmul.f32 %v888, %v945
    %v954 = vmul.f32 %v889, %v945
    %v955 = vmul.f32 %v890, %v945
    %v956 = vmul.f32 %v891, %v945
    %v957 = vmul.f32 %v892, %v945
    %v958 = vmul.f32 %v893, %v945
    %v959 = vmul.f32 %v894, %v945
    %v960 = vmul.f32 %v895, %v945
    %v961 = vmul.f32 %v896, %v945
    %v962 = vmul.f32 %v897, %v945
    %v963 = vmul.f32 %v898, %v945
    %v964 = vmul.f32 %v899, %v945
    %v965 = vmul.f32 %v900, %v945
    %v966 = vmul.f32 %v901, %v945
    %v967 = vmul.f32 %v902, %v945
    %v968 = vmul.f32 %v903, %v945
    %v969 = vmul.f32 %v904, %v945
    %v970 = vmul.f32 %v905, %v945
    %v971 = vmul.f32 %v906, %v945
    %v972 = vmul.f32 %v907, %v945
    %v973 = vmul.f32 %v908, %v945
    %v974 = vmul.f32 %v909, %v945
    %v975 = vmul.f32 %v910, %v945
    %v976 = vmul.f32 %v911, %v945
    %v977 = vmul.f32 %v912, %v945
    %v978 = vmul.f32 %v913, %v945
    %v979 = vmul.f32 %v914, %v945
    %v980 = vmul.f32 %v915, %v945
    %v981 = vmul.f32 %v916, %v945
    %v982 = vmul.f32 %v917, %v945
    %v983 = vmul.f32 %v918, %v945
    %v984 = vmul.f32 %v919, %v945
    %v985 = vmul.f32 %v920, %v945
    %v986 = vmul.f32 %v921, %v945
    %v987 = vmul.f32 %v922, %v945
    %v988 = vmul.f32 %v923, %v945
    %v989 = vmul.f32 %v924, %v945
    %v990 = vmul.f32 %v925, %v945
    %v991 = vmul.f32 %v926, %v945
    %v992 = vmul.f32 %v927, %v945
    %v993 = vmul.f32 %v928, %v945
    %v994 = vmul.f32 %v929, %v945
    %v995 = vmul.f32 %v930, %v945
    %v996 = vmul.f32 %v931, %v945
    %v997 = vmul.f32 %v932, %v945
    %v998 = vmul.f32 %v933, %v945
    %v999 = vmul.f32 %v934, %v945
    %v1000 = vmul.f32 %v935, %v945
    %v1001 = vmul.f32 %v936, %v945
    %v1002 = vmul.f32 %v937, %v945
    %v1003 = vmul.f32 %v938, %v945
    %v1004 = vmul.f32 %v939, %v945
    %v1005 = vmul.f32 %v940, %v945
    %v1006 = vmul.f32 %v941, %v945
    %v1007 = vmul.f32 %v942, %v945
    %v1008 = vmul.f32 %v943, %v945
    %v1009 = vmul.f32 %v944, %v945
    %v1010 = vadd.f32 %v946, 0.0
    %v1011 = vadd.f32 %v947, 0.0
    %v1012 = vadd.f32 %v948, 0.0
    %v1013 = vadd.f32 %v949, 0.0
    %v1014 = vadd.f32 %v950, 0.0
    %v1015 = vadd.f32 %v951, 0.0
    %v1016 = vadd.f32 %v952, 0.0
    %v1017 = vadd.f32 %v953, 0.0
    %v1018 = vadd.f32 %v954, 0.0
    %v1019 = vadd.f32 %v955, 0.0
    %v1020 = vadd.f32 %v956, 0.0
    %v1021 = vadd.f32 %v957, 0.0
    %v1022 = vadd.f32 %v958, 0.0
    %v1023 = vadd.f32 %v959, 0.0
    %v1024 = vadd.f32 %v960, 0.0
    %v1025 = vadd.f32 %v961, 0.0
    %v1026 = vadd.f32 %v962, 0.0
    %v1027 = vadd.f32 %v963, 0.0
    %v1028 = vadd.f32 %v964, 0.0
    %v1029 = vadd.f32 %v965, 0.0
    %v1030 = vadd.f32 %v966, 0.0
    %v1031 = vadd.f32 %v967, 0.0
    %v1032 = vadd.f32 %v968, 0.0
    %v1033 = vadd.f32 %v969, 0.0
    %v1034 = vadd.f32 %v970, 0.0
    %v1035 = vadd.f32 %v971, 0.0
    %v1036 = vadd.f32 %v972, 0.0
    %v1037 = vadd.f32 %v973, 0.0
    %v1038 = vadd.f32 %v974, 0.0
    %v1039 = vadd.f32 %v975, 0.0
    %v1040 = vadd.f32 %v976, 0.0
    %v1041 = vadd.f32 %v977, 0.0
    %v1042 = vadd.f32 %v978, 0.0
    %v1043 = vadd.f32 %v979, 0.0
    %v1044 = vadd.f32 %v980, 0.0
    %v1045 = vadd.f32 %v981, 0.0
    %v1046 = vadd.f32 %v982, 0.0
    %v1047 = vadd.f32 %v983, 0.0
    %v1048 = vadd.f32 %v984, 0.0
    %v1049 = vadd.f32 %v985, 0.0
    %v1050 = vadd.f32 %v986, 0.0
    %v1051 = vadd.f32 %v987, 0.0
    %v1052 = vadd.f32 %v988, 0.0
    %v1053 = vadd.f32 %v989, 0.0
    %v1054 = vadd.f32 %v990, 0.0
    %v1055 = vadd.f32 %v991, 0.0
    %v1056 = vadd.f32 %v992, 0.0
    %v1057 = vadd.f32 %v993, 0.0
    %v1058 = vadd.f32 %v994, 0.0
    %v1059 = vadd.f32 %v995, 0.0
    %v1060 = vadd.f32 %v996, 0.0
    %v1061 = vadd.f32 %v997, 0.0
    %v1062 = vadd.f32 %v998, 0.0
    %v1063 = vadd.f32 %v999, 0.0
    %v1064 = vadd.f32 %v1000, 0.0
    %v1065 = vadd.f32 %v1001, 0.0
    %v1066 = vadd.f32 %v1002, 0.0
    %v1067 = vadd.f32 %v1003, 0.0
    %v1068 = vadd.f32 %v1004, 0.0
    %v1069 = vadd.f32 %v1005, 0.0
    %v1070 = vadd.f32 %v1006, 0.0
    %v1071 = vadd.f32 %v1007, 0.0
    %v1072 = vadd.f32 %v1008, 0.0
    %v1073 = vadd.f32 %v1009, 0.0
    %v1074 = vld [vmem:[#allocation2 + $0x2] sm:$0xff]
    %v1075 = vld [vmem:[#allocation2 + $0xa] sm:$0xff]
    %v1076 = vld [vmem:[#allocation2 + $0x1a] sm:$0xff]
    %v1077 = vld [vmem:[#allocation2 + $0x22] sm:$0xff]
    %v1078 = vld [vmem:[#allocation2 + $0x32] sm:$0xff]
    %v1079 = vld [vmem:[#allocation2 + $0x3a] sm:$0xff]
    %v1080 = vld [vmem:[#allocation2 + $0x4a] sm:$0xff]
    %v1081 = vld [vmem:[#allocation2 + $0x52] sm:$0xff]
    %v1082 = vld [vmem:[#allocation2 + $0x62] sm:$0xff]
    %v1083 = vld [vmem:[#allocation2 + $0x6a] sm:$0xff]
    %v1084 = vld [vmem:[#allocation2 + $0x7a] sm:$0xff]
    %v1085 = vld [vmem:[#allocation2 + $0x82] sm:$0xff]
    %v1086 = vld [vmem:[#allocation2 + $0x92] sm:$0xff]
    %v1087 = vld [vmem:[#allocation2 + $0x9a] sm:$0xff]
    %v1088 = vld [vmem:[#allocation2 + $0xaa] sm:$0xff]
    %v1089 = vld [vmem:[#allocation2 + $0xb2] sm:$0xff]
    %v1090 = vld [vmem:[#allocation2 + $0xc2] sm:$0xff]
    %v1091 = vld [vmem:[#allocation2 + $0xca] sm:$0xff]
    %v1092 = vld [vmem:[#allocation2 + $0xda] sm:$0xff]
    %v1093 = vld [vmem:[#allocation2 + $0xe2] sm:$0xff]
    %v1094 = vld [vmem:[#allocation2 + $0xf2] sm:$0xff]
    %v1095 = vld [vmem:[#allocation2 + $0xfa] sm:$0xff]
    %v1096 = vld [vmem:[#allocation2 + $0x10a] sm:$0xff]
    %v1097 = vld [vmem:[#allocation2 + $0x112] sm:$0xff]
    %v1098 = vld [vmem:[#allocation2 + $0x122] sm:$0xff]
    %v1099 = vld [vmem:[#allocation2 + $0x12a] sm:$0xff]
    %v1100 = vld [vmem:[#allocation2 + $0x13a] sm:$0xff]
    %v1101 = vld [vmem:[#allocation2 + $0x142] sm:$0xff]
    %v1102 = vld [vmem:[#allocation2 + $0x152] sm:$0xff]
    %v1103 = vld [vmem:[#allocation2 + $0x15a] sm:$0xff]
    %v1104 = vld [vmem:[#allocation2 + $0x16a] sm:$0xff]
    %v1105 = vld [vmem:[#allocation2 + $0x172] sm:$0xff]
    %v1106 = vld [vmem:[#allocation2 + $0x1e2] sm:$0xff]
    %v1107 = vld [vmem:[#allocation2 + $0x1ea] sm:$0xff]
    %v1108 = vld [vmem:[#allocation2 + $0x1fa] sm:$0xff]
    %v1109 = vld [vmem:[#allocation2 + $0x202] sm:$0xff]
    %v1110 = vld [vmem:[#allocation2 + $0x212] sm:$0xff]
    %v1111 = vld [vmem:[#allocation2 + $0x21a] sm:$0xff]
    %v1112 = vld [vmem:[#allocation2 + $0x22a] sm:$0xff]
    %v1113 = vld [vmem:[#allocation2 + $0x232] sm:$0xff]
    %v1114 = vld [vmem:[#allocation2 + $0x242] sm:$0xff]
    %v1115 = vld [vmem:[#allocation2 + $0x24a] sm:$0xff]
    %v1116 = vld [vmem:[#allocation2 + $0x25a] sm:$0xff]
    %v1117 = vld [vmem:[#allocation2 + $0x262] sm:$0xff]
    %v1118 = vld [vmem:[#allocation2 + $0x272] sm:$0xff]
    %v1119 = vld [vmem:[#allocation2 + $0x27a] sm:$0xff]
    %v1120 = vld [vmem:[#allocation2 + $0x28a] sm:$0xff]
    %v1121 = vld [vmem:[#allocation2 + $0x292] sm:$0xff]
    %v1122 = vld [vmem:[#allocation2 + $0x2a2] sm:$0xff]
    %v1123 = vld [vmem:[#allocation2 + $0x2aa] sm:$0xff]
    %v1124 = vld [vmem:[#allocation2 + $0x2ba] sm:$0xff]
    %v1125 = vld [vmem:[#allocation2 + $0x2c2] sm:$0xff]
    %v1126 = vld [vmem:[#allocation2 + $0x2d2] sm:$0xff]
    %v1127 = vld [vmem:[#allocation2 + $0x2da] sm:$0xff]
    %v1128 = vld [vmem:[#allocation2 + $0x2ea] sm:$0xff]
    %v1129 = vld [vmem:[#allocation2 + $0x2f2] sm:$0xff]
    %v1130 = vld [vmem:[#allocation2 + $0x302] sm:$0xff]
    %v1131 = vld [vmem:[#allocation2 + $0x30a] sm:$0xff]
    %v1132 = vld [vmem:[#allocation2 + $0x31a] sm:$0xff]
    %v1133 = vld [vmem:[#allocation2 + $0x322] sm:$0xff]
    %v1134 = vld [vmem:[#allocation2 + $0x332] sm:$0xff]
    %v1135 = vld [vmem:[#allocation2 + $0x33a] sm:$0xff]
    %v1136 = vld [vmem:[#allocation2 + $0x34a] sm:$0xff]
    %v1137 = vld [vmem:[#allocation2 + $0x352] sm:$0xff]
    %v1138 = vperm.slane %v878, 1
    %v1139 = vmul.f32 %v1074, %v1138
    %v1140 = vmul.f32 %v1075, %v1138
    %v1141 = vmul.f32 %v1076, %v1138
    %v1142 = vmul.f32 %v1077, %v1138
    %v1143 = vmul.f32 %v1078, %v1138
    %v1144 = vmul.f32 %v1079, %v1138
    %v1145 = vmul.f32 %v1080, %v1138
    %v1146 = vmul.f32 %v1081, %v1138
    %v1147 = vmul.f32 %v1082, %v1138
    %v1148 = vmul.f32 %v1083, %v1138
    %v1149 = vmul.f32 %v1084, %v1138
    %v1150 = vmul.f32 %v1085, %v1138
    %v1151 = vmul.f32 %v1086, %v1138
    %v1152 = vmul.f32 %v1087, %v1138
    %v1153 = vmul.f32 %v1088, %v1138
    %v1154 = vmul.f32 %v1089, %v1138
    %v1155 = vmul.f32 %v1090, %v1138
    %v1156 = vmul.f32 %v1091, %v1138
    %v1157 = vmul.f32 %v1092, %v1138
    %v1158 = vmul.f32 %v1093, %v1138
    %v1159 = vmul.f32 %v1094, %v1138
    %v1160 = vmul.f32 %v1095, %v1138
    %v1161 = vmul.f32 %v1096, %v1138
    %v1162 = vmul.f32 %v1097, %v1138
    %v1163 = vmul.f32 %v1098, %v1138
    %v1164 = vmul.f32 %v1099, %v1138
    %v1165 = vmul.f32 %v1100, %v1138
    %v1166 = vmul.f32 %v1101, %v1138
    %v1167 = vmul.f32 %v1102, %v1138
    %v1168 = vmul.f32 %v1103, %v1138
    %v1169 = vmul.f32 %v1104, %v1138
    %v1170 = vmul.f32 %v1105, %v1138
    %v1171 = vmul.f32 %v1106, %v1138
    %v1172 = vmul.f32 %v1107, %v1138
    %v1173 = vmul.f32 %v1108, %v1138
    %v1174 = vmul.f32 %v1109, %v1138
    %v1175 = vmul.f32 %v1110, %v1138
    %v1176 = vmul.f32 %v1111, %v1138
    %v1177 = vmul.f32 %v1112, %v1138
    %v1178 = vmul.f32 %v1113, %v1138
    %v1179 = vmul.f32 %v1114, %v1138
    %v1180 = vmul.f32 %v1115, %v1138
    %v1181 = vmul.f32 %v1116, %v1138
    %v1182 = vmul.f32 %v1117, %v1138
    %v1183 = vmul.f32 %v1118, %v1138
    %v1184 = vmul.f32 %v1119, %v1138
    %v1185 = vmul.f32 %v1120, %v1138
    %v1186 = vmul.f32 %v1121, %v1138
    %v1187 = vmul.f32 %v1122, %v1138
    %v1188 = vmul.f32 %v1123, %v1138
    %v1189 = vmul.f32 %v1124, %v1138
    %v1190 = vmul.f32 %v1125, %v1138
    %v1191 = vmul.f32 %v1126, %v1138
    %v1192 = vmul.f32 %v1127, %v1138
    %v1193 = vmul.f32 %v1128, %v1138
    %v1194 = vmul.f32 %v1129, %v1138
    %v1195 = vmul.f32 %v1130, %v1138
    %v1196 = vmul.f32 %v1131, %v1138
    %v1197 = vmul.f32 %v1132, %v1138
    %v1198 = vmul.f32 %v1133, %v1138
    %v1199 = vmul.f32 %v1134, %v1138
    %v1200 = vmul.f32 %v1135, %v1138
    %v1201 = vmul.f32 %v1136, %v1138
    %v1202 = vmul.f32 %v1137, %v1138
    %v1203 = vadd.f32 %v1010, %v1139
    %v1204 = vadd.f32 %v1011, %v1140
    %v1205 = vadd.f32 %v1012, %v1141
    %v1206 = vadd.f32 %v1013, %v1142
    %v1207 = vadd.f32 %v1014, %v1143
    %v1208 = vadd.f32 %v1015, %v1144
    %v1209 = vadd.f32 %v1016, %v1145
    %v1210 = vadd.f32 %v1017, %v1146
    %v1211 = vadd.f32 %v1018, %v1147
    %v1212 = vadd.f32 %v1019, %v1148
    %v1213 = vadd.f32 %v1020, %v1149
    %v1214 = vadd.f32 %v1021, %v1150
    %v1215 = vadd.f32 %v1022, %v1151
    %v1216 = vadd.f32 %v1023, %v1152
    %v1217 = vadd.f32 %v1024, %v1153
    %v1218 = vadd.f32 %v1025, %v1154
    %v1219 = vadd.f32 %v1026, %v1155
    %v1220 = vadd.f32 %v1027, %v1156
    %v1221 = vadd.f32 %v1028, %v1157
    %v1222 = vadd.f32 %v1029, %v1158
    %v1223 = vadd.f32 %v1030, %v1159
    %v1224 = vadd.f32 %v1031, %v1160
    %v1225 = vadd.f32 %v1032, %v1161
    %v1226 = vadd.f32 %v1033, %v1162
    %v1227 = vadd.f32 %v1034, %v1163
    %v1228 = vadd.f32 %v1035, %v1164
    %v1229 = vadd.f32 %v1036, %v1165
    %v1230 = vadd.f32 %v1037, %v1166
    %v1231 = vadd.f32 %v1038, %v1167
    %v1232 = vadd.f32 %v1039, %v1168
    %v1233 = vadd.f32 %v1040, %v1169
    %v1234 = vadd.f32 %v1041, %v1170
    %v1235 = vadd.f32 %v1042, %v1171
    %v1236 = vadd.f32 %v1043, %v1172
    %v1237 = vadd.f32 %v1044, %v1173
    %v1238 = vadd.f32 %v1045, %v1174
    %v1239 = vadd.f32 %v1046, %v1175
    %v1240 = vadd.f32 %v1047, %v1176
    %v1241 = vadd.f32 %v1048, %v1177
    %v1242 = vadd.f32 %v1049, %v1178
    %v1243 = vadd.f32 %v1050, %v1179
    %v1244 = vadd.f32 %v1051, %v1180
    %v1245 = vadd.f32 %v1052, %v1181
    %v1246 = vadd.f32 %v1053, %v1182
    %v1247 = vadd.f32 %v1054, %v1183
    %v1248 = vadd.f32 %v1055, %v1184
    %v1249 = vadd.f32 %v1056, %v1185
    %v1250 = vadd.f32 %v1057, %v1186
    %v1251 = vadd.f32 %v1058, %v1187
    %v1252 = vadd.f32 %v1059, %v1188
    %v1253 = vadd.f32 %v1060, %v1189
    %v1254 = vadd.f32 %v1061, %v1190
    %v1255 = vadd.f32 %v1062, %v1191
    %v1256 = vadd.f32 %v1063, %v1192
    %v1257 = vadd.f32 %v1064, %v1193
    %v1258 = vadd.f32 %v1065, %v1194
    %v1259 = vadd.f32 %v1066, %v1195
    %v1260 = vadd.f32 %v1067, %v1196
    %v1261 = vadd.f32 %v1068, %v1197
    %v1262 = vadd.f32 %v1069, %v1198
    %v1263 = vadd.f32 %v1070, %v1199
    %v1264 = vadd.f32 %v1071, %v1200
    %v1265 = vadd.f32 %v1072, %v1201
    %v1266 = vadd.f32 %v1073, %v1202
    %v1267 = vld [vmem:[#allocation2 + $0x4] sm:$0xff]
    %v1268 = vld [vmem:[#allocation2 + $0xc] sm:$0xff]
    %v1269 = vld [vmem:[#allocation2 + $0x1c] sm:$0xff]
    %v1270 = vld [vmem:[#allocation2 + $0x24] sm:$0xff]
    %v1271 = vld [vmem:[#allocation2 + $0x34] sm:$0xff]
    %v1272 = vld [vmem:[#allocation2 + $0x3c] sm:$0xff]
    %v1273 = vld [vmem:[#allocation2 + $0x4c] sm:$0xff]
    %v1274 = vld [vmem:[#allocation2 + $0x54] sm:$0xff]
    %v1275 = vld [vmem:[#allocation2 + $0x64] sm:$0xff]
    %v1276 = vld [vmem:[#allocation2 + $0x6c] sm:$0xff]
    %v1277 = vld [vmem:[#allocation2 + $0x7c] sm:$0xff]
    %v1278 = vld [vmem:[#allocation2 + $0x84] sm:$0xff]
    %v1279 = vld [vmem:[#allocation2 + $0x94] sm:$0xff]
    %v1280 = vld [vmem:[#allocation2 + $0x9c] sm:$0xff]
    %v1281 = vld [vmem:[#allocation2 + $0xac] sm:$0xff]
    %v1282 = vld [vmem:[#allocation2 + $0xb4] sm:$0xff]
    %v1283 = vld [vmem:[#allocation2 + $0xc4] sm:$0xff]
    %v1284 = vld [vmem:[#allocation2 + $0xcc] sm:$0xff]
    %v1285 = vld [vmem:[#allocation2 + $0xdc] sm:$0xff]
    %v1286 = vld [vmem:[#allocation2 + $0xe4] sm:$0xff]
    %v1287 = vld [vmem:[#allocation2 + $0xf4] sm:$0xff]
    %v1288 = vld [vmem:[#allocation2 + $0xfc] sm:$0xff]
    %v1289 = vld [vmem:[#allocation2 + $0x10c] sm:$0xff]
    %v1290 = vld [vmem:[#allocation2 + $0x114] sm:$0xff]
    %v1291 = vld [vmem:[#allocation2 + $0x124] sm:$0xff]
    %v1292 = vld [vmem:[#allocation2 + $0x12c] sm:$0xff]
    %v1293 = vld [vmem:[#allocation2 + $0x13c] sm:$0xff]
    %v1294 = vld [vmem:[#allocation2 + $0x144] sm:$0xff]
    %v1295 = vld [vmem:[#allocation2 + $0x154] sm:$0xff]
    %v1296 = vld [vmem:[#allocation2 + $0x15c] sm:$0xff]
    %v1297 = vld [vmem:[#allocation2 + $0x16c] sm:$0xff]
    %v1298 = vld [vmem:[#allocation2 + $0x174] sm:$0xff]
    %v1299 = vld [vmem:[#allocation2 + $0x1e4] sm:$0xff]
    %v1300 = vld [vmem:[#allocation2 + $0x1ec] sm:$0xff]
    %v1301 = vld [vmem:[#allocation2 + $0x1fc] sm:$0xff]
    %v1302 = vld [vmem:[#allocation2 + $0x204] sm:$0xff]
    %v1303 = vld [vmem:[#allocation2 + $0x214] sm:$0xff]
    %v1304 = vld [vmem:[#allocation2 + $0x21c] sm:$0xff]
    %v1305 = vld [vmem:[#allocation2 + $0x22c] sm:$0xff]
    %v1306 = vld [vmem:[#allocation2 + $0x234] sm:$0xff]
    %v1307 = vld [vmem:[#allocation2 + $0x244] sm:$0xff]
    %v1308 = vld [vmem:[#allocation2 + $0x24c] sm:$0xff]
    %v1309 = vld [vmem:[#allocation2 + $0x25c] sm:$0xff]
    %v1310 = vld [vmem:[#allocation2 + $0x264] sm:$0xff]
    %v1311 = vld [vmem:[#allocation2 + $0x274] sm:$0xff]
    %v1312 = vld [vmem:[#allocation2 + $0x27c] sm:$0xff]
    %v1313 = vld [vmem:[#allocation2 + $0x28c] sm:$0xff]
    %v1314 = vld [vmem:[#allocation2 + $0x294] sm:$0xff]
    %v1315 = vld [vmem:[#allocation2 + $0x2a4] sm:$0xff]
    %v1316 = vld [vmem:[#allocation2 + $0x2ac] sm:$0xff]
    %v1317 = vld [vmem:[#allocation2 + $0x2bc] sm:$0xff]
    %v1318 = vld [vmem:[#allocation2 + $0x2c4] sm:$0xff]
    %v1319 = vld [vmem:[#allocation2 + $0x2d4] sm:$0xff]
    %v1320 = vld [vmem:[#allocation2 + $0x2dc] sm:$0xff]
    %v1321 = vld [vmem:[#allocation2 + $0x2ec] sm:$0xff]
    %v1322 = vld [vmem:[#allocation2 + $0x2f4] sm:$0xff]
    %v1323 = vld [vmem:[#allocation2 + $0x304] sm:$0xff]
    %v1324 = vld [vmem:[#allocation2 + $0x30c] sm:$0xff]
    %v1325 = vld [vmem:[#allocation2 + $0x31c] sm:$0xff]
    %v1326 = vld [vmem:[#allocation2 + $0x324] sm:$0xff]
    %v1327 = vld [vmem:[#allocation2 + $0x334] sm:$0xff]
    %v1328 = vld [vmem:[#allocation2 + $0x33c] sm:$0xff]
    %v1329 = vld [vmem:[#allocation2 + $0x34c] sm:$0xff]
    %v1330 = vld [vmem:[#allocation2 + $0x354] sm:$0xff]
    %v1331 = vperm.slane %v878, 2
    %v1332 = vmul.f32 %v1267, %v1331
    %v1333 = vmul.f32 %v1268, %v1331
    %v1334 = vmul.f32 %v1269, %v1331
    %v1335 = vmul.f32 %v1270, %v1331
    %v1336 = vmul.f32 %v1271, %v1331
    %v1337 = vmul.f32 %v1272, %v1331
    %v1338 = vmul.f32 %v1273, %v1331
    %v1339 = vmul.f32 %v1274, %v1331
    %v1340 = vmul.f32 %v1275, %v1331
    %v1341 = vmul.f32 %v1276, %v1331
    %v1342 = vmul.f32 %v1277, %v1331
    %v1343 = vmul.f32 %v1278, %v1331
    %v1344 = vmul.f32 %v1279, %v1331
    %v1345 = vmul.f32 %v1280, %v1331
    %v1346 = vmul.f32 %v1281, %v1331
    %v1347 = vmul.f32 %v1282, %v1331
    %v1348 = vmul.f32 %v1283, %v1331
    %v1349 = vmul.f32 %v1284, %v1331
    %v1350 = vmul.f32 %v1285, %v1331
    %v1351 = vmul.f32 %v1286, %v1331
    %v1352 = vmul.f32 %v1287, %v1331
    %v1353 = vmul.f32 %v1288, %v1331
    %v1354 = vmul.f32 %v1289, %v1331
    %v1355 = vmul.f32 %v1290, %v1331
    %v1356 = vmul.f32 %v1291, %v1331
    %v1357 = vmul.f32 %v1292, %v1331
    %v1358 = vmul.f32 %v1293, %v1331
    %v1359 = vmul.f32 %v1294, %v1331
    %v1360 = vmul.f32 %v1295, %v1331
    %v1361 = vmul.f32 %v1296, %v1331
    %v1362 = vmul.f32 %v1297, %v1331
    %v1363 = vmul.f32 %v1298, %v1331
    %v1364 = vmul.f32 %v1299, %v1331
    %v1365 = vmul.f32 %v1300, %v1331
    %v1366 = vmul.f32 %v1301, %v1331
    %v1367 = vmul.f32 %v1302, %v1331
    %v1368 = vmul.f32 %v1303, %v1331
    %v1369 = vmul.f32 %v1304, %v1331
    %v1370 = vmul.f32 %v1305, %v1331
    %v1371 = vmul.f32 %v1306, %v1331
    %v1372 = vmul.f32 %v1307, %v1331
    %v1373 = vmul.f32 %v1308, %v1331
    %v1374 = vmul.f32 %v1309, %v1331
    %v1375 = vmul.f32 %v1310, %v1331
    %v1376 = vmul.f32 %v1311, %v1331
    %v1377 = vmul.f32 %v1312, %v1331
    %v1378 = vmul.f32 %v1313, %v1331
    %v1379 = vmul.f32 %v1314, %v1331
    %v1380 = vmul.f32 %v1315, %v1331
    %v1381 = vmul.f32 %v1316, %v1331
    %v1382 = vmul.f32 %v1317, %v1331
    %v1383 = vmul.f32 %v1318, %v1331
    %v1384 = vmul.f32 %v1319, %v1331
    %v1385 = vmul.f32 %v1320, %v1331
    %v1386 = vmul.f32 %v1321, %v1331
    %v1387 = vmul.f32 %v1322, %v1331
    %v1388 = vmul.f32 %v1323, %v1331
    %v1389 = vmul.f32 %v1324, %v1331
    %v1390 = vmul.f32 %v1325, %v1331
    %v1391 = vmul.f32 %v1326, %v1331
    %v1392 = vmul.f32 %v1327, %v1331
    %v1393 = vmul.f32 %v1328, %v1331
    %v1394 = vmul.f32 %v1329, %v1331
    %v1395 = vmul.f32 %v1330, %v1331
    %v1396 = vadd.f32 %v1203, %v1332
    %v1397 = vadd.f32 %v1204, %v1333
    %v1398 = vadd.f32 %v1205, %v1334
    %v1399 = vadd.f32 %v1206, %v1335
    %v1400 = vadd.f32 %v1207, %v1336
    %v1401 = vadd.f32 %v1208, %v1337
    %v1402 = vadd.f32 %v1209, %v1338
    %v1403 = vadd.f32 %v1210, %v1339
    %v1404 = vadd.f32 %v1211, %v1340
    %v1405 = vadd.f32 %v1212, %v1341
    %v1406 = vadd.f32 %v1213, %v1342
    %v1407 = vadd.f32 %v1214, %v1343
    %v1408 = vadd.f32 %v1215, %v1344
    %v1409 = vadd.f32 %v1216, %v1345
    %v1410 = vadd.f32 %v1217, %v1346
    %v1411 = vadd.f32 %v1218, %v1347
    %v1412 = vadd.f32 %v1219, %v1348
    %v1413 = vadd.f32 %v1220, %v1349
    %v1414 = vadd.f32 %v1221, %v1350
    %v1415 = vadd.f32 %v1222, %v1351
    %v1416 = vadd.f32 %v1223, %v1352
    %v1417 = vadd.f32 %v1224, %v1353
    %v1418 = vadd.f32 %v1225, %v1354
    %v1419 = vadd.f32 %v1226, %v1355
    %v1420 = vadd.f32 %v1227, %v1356
    %v1421 = vadd.f32 %v1228, %v1357
    %v1422 = vadd.f32 %v1229, %v1358
    %v1423 = vadd.f32 %v1230, %v1359
    %v1424 = vadd.f32 %v1231, %v1360
    %v1425 = vadd.f32 %v1232, %v1361
    %v1426 = vadd.f32 %v1233, %v1362
    %v1427 = vadd.f32 %v1234, %v1363
    %v1428 = vadd.f32 %v1235, %v1364
    %v1429 = vadd.f32 %v1236, %v1365
    %v1430 = vadd.f32 %v1237, %v1366
    %v1431 = vadd.f32 %v1238, %v1367
    %v1432 = vadd.f32 %v1239, %v1368
    %v1433 = vadd.f32 %v1240, %v1369
    %v1434 = vadd.f32 %v1241, %v1370
    %v1435 = vadd.f32 %v1242, %v1371
    %v1436 = vadd.f32 %v1243, %v1372
    %v1437 = vadd.f32 %v1244, %v1373
    %v1438 = vadd.f32 %v1245, %v1374
    %v1439 = vadd.f32 %v1246, %v1375
    %v1440 = vadd.f32 %v1247, %v1376
    %v1441 = vadd.f32 %v1248, %v1377
    %v1442 = vadd.f32 %v1249, %v1378
    %v1443 = vadd.f32 %v1250, %v1379
    %v1444 = vadd.f32 %v1251, %v1380
    %v1445 = vadd.f32 %v1252, %v1381
    %v1446 = vadd.f32 %v1253, %v1382
    %v1447 = vadd.f32 %v1254, %v1383
    %v1448 = vadd.f32 %v1255, %v1384
    %v1449 = vadd.f32 %v1256, %v1385
    %v1450 = vadd.f32 %v1257, %v1386
    %v1451 = vadd.f32 %v1258, %v1387
    %v1452 = vadd.f32 %v1259, %v1388
    %v1453 = vadd.f32 %v1260, %v1389
    %v1454 = vadd.f32 %v1261, %v1390
    %v1455 = vadd.f32 %v1262, %v1391
    %v1456 = vadd.f32 %v1263, %v1392
    %v1457 = vadd.f32 %v1264, %v1393
    %v1458 = vadd.f32 %v1265, %v1394
    %v1459 = vadd.f32 %v1266, %v1395
    %v1460 = vld [vmem:[%s813] sm:$0xff]
    %v1461 = vld [vmem:[%s813 + $0x8] sm:$0xff]
    %v1462 = vld [vmem:[%s813 + $0x18] sm:$0xff]
    %v1463 = vld [vmem:[%s813 + $0x20] sm:$0xff]
    %v1464 = vld [vmem:[%s813 + $0x30] sm:$0xff]
    %v1465 = vld [vmem:[%s813 + $0x38] sm:$0xff]
    %v1466 = vld [vmem:[%s813 + $0x48] sm:$0xff]
    %v1467 = vld [vmem:[%s813 + $0x50] sm:$0xff]
    %v1468 = vld [vmem:[%s813 + $0x60] sm:$0xff]
    %v1469 = vld [vmem:[%s813 + $0x68] sm:$0xff]
    %v1470 = vld [vmem:[%s813 + $0x78] sm:$0xff]
    %v1471 = vld [vmem:[%s813 + $0x80] sm:$0xff]
    %v1472 = vld [vmem:[%s813 + $0x90] sm:$0xff]
    %v1473 = vld [vmem:[%s813 + $0x98] sm:$0xff]
    %v1474 = vld [vmem:[%s813 + $0xa8] sm:$0xff]
    %v1475 = vld [vmem:[%s813 + $0xb0] sm:$0xff]
    %v1476 = vld [vmem:[%s813 + $0xc0] sm:$0xff]
    %v1477 = vld [vmem:[%s813 + $0xc8] sm:$0xff]
    %v1478 = vld [vmem:[%s813 + $0xd8] sm:$0xff]
    %v1479 = vld [vmem:[%s813 + $0xe0] sm:$0xff]
    %v1480 = vld [vmem:[%s813 + $0xf0] sm:$0xff]
    %v1481 = vld [vmem:[%s813 + $0xf8] sm:$0xff]
    %v1482 = vld [vmem:[%s813 + $0x108] sm:$0xff]
    %v1483 = vld [vmem:[%s813 + $0x110] sm:$0xff]
    %v1484 = vld [vmem:[%s813 + $0x120] sm:$0xff]
    %v1485 = vld [vmem:[%s813 + $0x128] sm:$0xff]
    %v1486 = vld [vmem:[%s813 + $0x138] sm:$0xff]
    %v1487 = vld [vmem:[%s813 + $0x140] sm:$0xff]
    %v1488 = vld [vmem:[%s813 + $0x150] sm:$0xff]
    %v1489 = vld [vmem:[%s813 + $0x158] sm:$0xff]
    %v1490 = vld [vmem:[%s813 + $0x168] sm:$0xff]
    %v1491 = vld [vmem:[%s813 + $0x170] sm:$0xff]
    %v1492 = vld [vmem:[%s813 + $0x1e0] sm:$0xff]
    %v1493 = vld [vmem:[%s813 + $0x1e8] sm:$0xff]
    %v1494 = vld [vmem:[%s813 + $0x1f8] sm:$0xff]
    %v1495 = vld [vmem:[%s813 + $0x200] sm:$0xff]
    %v1496 = vld [vmem:[%s813 + $0x210] sm:$0xff]
    %v1497 = vld [vmem:[%s813 + $0x218] sm:$0xff]
    %v1498 = vld [vmem:[%s813 + $0x228] sm:$0xff]
    %v1499 = vld [vmem:[%s813 + $0x230] sm:$0xff]
    %v1500 = vld [vmem:[%s813 + $0x240] sm:$0xff]
    %v1501 = vld [vmem:[%s813 + $0x248] sm:$0xff]
    %v1502 = vld [vmem:[%s813 + $0x258] sm:$0xff]
    %v1503 = vld [vmem:[%s813 + $0x260] sm:$0xff]
    %v1504 = vld [vmem:[%s813 + $0x270] sm:$0xff]
    %v1505 = vld [vmem:[%s813 + $0x278] sm:$0xff]
    %v1506 = vld [vmem:[%s813 + $0x288] sm:$0xff]
    %v1507 = vld [vmem:[%s813 + $0x290] sm:$0xff]
    %v1508 = vld [vmem:[%s813 + $0x2a0] sm:$0xff]
    %v1509 = vld [vmem:[%s813 + $0x2a8] sm:$0xff]
    %v1510 = vld [vmem:[%s813 + $0x2b8] sm:$0xff]
    %v1511 = vld [vmem:[%s813 + $0x2c0] sm:$0xff]
    %v1512 = vld [vmem:[%s813 + $0x2d0] sm:$0xff]
    %v1513 = vld [vmem:[%s813 + $0x2d8] sm:$0xff]
    %v1514 = vld [vmem:[%s813 + $0x2e8] sm:$0xff]
    %v1515 = vld [vmem:[%s813 + $0x2f0] sm:$0xff]
    %v1516 = vld [vmem:[%s813 + $0x300] sm:$0xff]
    %v1517 = vld [vmem:[%s813 + $0x308] sm:$0xff]
    %v1518 = vld [vmem:[%s813 + $0x318] sm:$0xff]
    %v1519 = vld [vmem:[%s813 + $0x320] sm:$0xff]
    %v1520 = vld [vmem:[%s813 + $0x330] sm:$0xff]
    %v1521 = vld [vmem:[%s813 + $0x338] sm:$0xff]
    %v1522 = vld [vmem:[%s813 + $0x348] sm:$0xff]
    %v1523 = vld [vmem:[%s813 + $0x350] sm:$0xff]
    %v1524 = vperm.slane %v879, 0
    %v1525 = vmul.f32 %v1460, %v1524
    %v1526 = vmul.f32 %v1461, %v1524
    %v1527 = vmul.f32 %v1462, %v1524
    %v1528 = vmul.f32 %v1463, %v1524
    %v1529 = vmul.f32 %v1464, %v1524
    %v1530 = vmul.f32 %v1465, %v1524
    %v1531 = vmul.f32 %v1466, %v1524
    %v1532 = vmul.f32 %v1467, %v1524
    %v1533 = vmul.f32 %v1468, %v1524
    %v1534 = vmul.f32 %v1469, %v1524
    %v1535 = vmul.f32 %v1470, %v1524
    %v1536 = vmul.f32 %v1471, %v1524
    %v1537 = vmul.f32 %v1472, %v1524
    %v1538 = vmul.f32 %v1473, %v1524
    %v1539 = vmul.f32 %v1474, %v1524
    %v1540 = vmul.f32 %v1475, %v1524
    %v1541 = vmul.f32 %v1476, %v1524
    %v1542 = vmul.f32 %v1477, %v1524
    %v1543 = vmul.f32 %v1478, %v1524
    %v1544 = vmul.f32 %v1479, %v1524
    %v1545 = vmul.f32 %v1480, %v1524
    %v1546 = vmul.f32 %v1481, %v1524
    %v1547 = vmul.f32 %v1482, %v1524
    %v1548 = vmul.f32 %v1483, %v1524
    %v1549 = vmul.f32 %v1484, %v1524
    %v1550 = vmul.f32 %v1485, %v1524
    %v1551 = vmul.f32 %v1486, %v1524
    %v1552 = vmul.f32 %v1487, %v1524
    %v1553 = vmul.f32 %v1488, %v1524
    %v1554 = vmul.f32 %v1489, %v1524
    %v1555 = vmul.f32 %v1490, %v1524
    %v1556 = vmul.f32 %v1491, %v1524
    %v1557 = vmul.f32 %v1492, %v1524
    %v1558 = vmul.f32 %v1493, %v1524
    %v1559 = vmul.f32 %v1494, %v1524
    %v1560 = vmul.f32 %v1495, %v1524
    %v1561 = vmul.f32 %v1496, %v1524
    %v1562 = vmul.f32 %v1497, %v1524
    %v1563 = vmul.f32 %v1498, %v1524
    %v1564 = vmul.f32 %v1499, %v1524
    %v1565 = vmul.f32 %v1500, %v1524
    %v1566 = vmul.f32 %v1501, %v1524
    %v1567 = vmul.f32 %v1502, %v1524
    %v1568 = vmul.f32 %v1503, %v1524
    %v1569 = vmul.f32 %v1504, %v1524
    %v1570 = vmul.f32 %v1505, %v1524
    %v1571 = vmul.f32 %v1506, %v1524
    %v1572 = vmul.f32 %v1507, %v1524
    %v1573 = vmul.f32 %v1508, %v1524
    %v1574 = vmul.f32 %v1509, %v1524
    %v1575 = vmul.f32 %v1510, %v1524
    %v1576 = vmul.f32 %v1511, %v1524
    %v1577 = vmul.f32 %v1512, %v1524
    %v1578 = vmul.f32 %v1513, %v1524
    %v1579 = vmul.f32 %v1514, %v1524
    %v1580 = vmul.f32 %v1515, %v1524
    %v1581 = vmul.f32 %v1516, %v1524
    %v1582 = vmul.f32 %v1517, %v1524
    %v1583 = vmul.f32 %v1518, %v1524
    %v1584 = vmul.f32 %v1519, %v1524
    %v1585 = vmul.f32 %v1520, %v1524
    %v1586 = vmul.f32 %v1521, %v1524
    %v1587 = vmul.f32 %v1522, %v1524
    %v1588 = vmul.f32 %v1523, %v1524
    %v1589 = vadd.f32 %v1396, %v1525
    %v1590 = vadd.f32 %v1397, %v1526
    %v1591 = vadd.f32 %v1398, %v1527
    %v1592 = vadd.f32 %v1399, %v1528
    %v1593 = vadd.f32 %v1400, %v1529
    %v1594 = vadd.f32 %v1401, %v1530
    %v1595 = vadd.f32 %v1402, %v1531
    %v1596 = vadd.f32 %v1403, %v1532
    %v1597 = vadd.f32 %v1404, %v1533
    %v1598 = vadd.f32 %v1405, %v1534
    %v1599 = vadd.f32 %v1406, %v1535
    %v1600 = vadd.f32 %v1407, %v1536
    %v1601 = vadd.f32 %v1408, %v1537
    %v1602 = vadd.f32 %v1409, %v1538
    %v1603 = vadd.f32 %v1410, %v1539
    %v1604 = vadd.f32 %v1411, %v1540
    %v1605 = vadd.f32 %v1412, %v1541
    %v1606 = vadd.f32 %v1413, %v1542
    %v1607 = vadd.f32 %v1414, %v1543
    %v1608 = vadd.f32 %v1415, %v1544
    %v1609 = vadd.f32 %v1416, %v1545
    %v1610 = vadd.f32 %v1417, %v1546
    %v1611 = vadd.f32 %v1418, %v1547
    %v1612 = vadd.f32 %v1419, %v1548
    %v1613 = vadd.f32 %v1420, %v1549
    %v1614 = vadd.f32 %v1421, %v1550
    %v1615 = vadd.f32 %v1422, %v1551
    %v1616 = vadd.f32 %v1423, %v1552
    %v1617 = vadd.f32 %v1424, %v1553
    %v1618 = vadd.f32 %v1425, %v1554
    %v1619 = vadd.f32 %v1426, %v1555
    %v1620 = vadd.f32 %v1427, %v1556
    %v1621 = vadd.f32 %v1428, %v1557
    %v1622 = vadd.f32 %v1429, %v1558
    %v1623 = vadd.f32 %v1430, %v1559
    %v1624 = vadd.f32 %v1431, %v1560
    %v1625 = vadd.f32 %v1432, %v1561
    %v1626 = vadd.f32 %v1433, %v1562
    %v1627 = vadd.f32 %v1434, %v1563
    %v1628 = vadd.f32 %v1435, %v1564
    %v1629 = vadd.f32 %v1436, %v1565
    %v1630 = vadd.f32 %v1437, %v1566
    %v1631 = vadd.f32 %v1438, %v1567
    %v1632 = vadd.f32 %v1439, %v1568
    %v1633 = vadd.f32 %v1440, %v1569
    %v1634 = vadd.f32 %v1441, %v1570
    %v1635 = vadd.f32 %v1442, %v1571
    %v1636 = vadd.f32 %v1443, %v1572
    %v1637 = vadd.f32 %v1444, %v1573
    %v1638 = vadd.f32 %v1445, %v1574
    %v1639 = vadd.f32 %v1446, %v1575
    %v1640 = vadd.f32 %v1447, %v1576
    %v1641 = vadd.f32 %v1448, %v1577
    %v1642 = vadd.f32 %v1449, %v1578
    %v1643 = vadd.f32 %v1450, %v1579
    %v1644 = vadd.f32 %v1451, %v1580
    %v1645 = vadd.f32 %v1452, %v1581
    %v1646 = vadd.f32 %v1453, %v1582
    %v1647 = vadd.f32 %v1454, %v1583
    %v1648 = vadd.f32 %v1455, %v1584
    %v1649 = vadd.f32 %v1456, %v1585
    %v1650 = vadd.f32 %v1457, %v1586
    %v1651 = vadd.f32 %v1458, %v1587
    %v1652 = vadd.f32 %v1459, %v1588
    %v1653 = vld [vmem:[%s813 + $0x2] sm:$0xff]
    %v1654 = vld [vmem:[%s813 + $0xa] sm:$0xff]
    %v1655 = vld [vmem:[%s813 + $0x1a] sm:$0xff]
    %v1656 = vld [vmem:[%s813 + $0x22] sm:$0xff]
    %v1657 = vld [vmem:[%s813 + $0x32] sm:$0xff]
    %v1658 = vld [vmem:[%s813 + $0x3a] sm:$0xff]
    %v1659 = vld [vmem:[%s813 + $0x4a] sm:$0xff]
    %v1660 = vld [vmem:[%s813 + $0x52] sm:$0xff]
    %v1661 = vld [vmem:[%s813 + $0x62] sm:$0xff]
    %v1662 = vld [vmem:[%s813 + $0x6a] sm:$0xff]
    %v1663 = vld [vmem:[%s813 + $0x7a] sm:$0xff]
    %v1664 = vld [vmem:[%s813 + $0x82] sm:$0xff]
    %v1665 = vld [vmem:[%s813 + $0x92] sm:$0xff]
    %v1666 = vld [vmem:[%s813 + $0x9a] sm:$0xff]
    %v1667 = vld [vmem:[%s813 + $0xaa] sm:$0xff]
    %v1668 = vld [vmem:[%s813 + $0xb2] sm:$0xff]
    %v1669 = vld [vmem:[%s813 + $0xc2] sm:$0xff]
    %v1670 = vld [vmem:[%s813 + $0xca] sm:$0xff]
    %v1671 = vld [vmem:[%s813 + $0xda] sm:$0xff]
    %v1672 = vld [vmem:[%s813 + $0xe2] sm:$0xff]
    %v1673 = vld [vmem:[%s813 + $0xf2] sm:$0xff]
    %v1674 = vld [vmem:[%s813 + $0xfa] sm:$0xff]
    %v1675 = vld [vmem:[%s813 + $0x10a] sm:$0xff]
    %v1676 = vld [vmem:[%s813 + $0x112] sm:$0xff]
    %v1677 = vld [vmem:[%s813 + $0x122] sm:$0xff]
    %v1678 = vld [vmem:[%s813 + $0x12a] sm:$0xff]
    %v1679 = vld [vmem:[%s813 + $0x13a] sm:$0xff]
    %v1680 = vld [vmem:[%s813 + $0x142] sm:$0xff]
    %v1681 = vld [vmem:[%s813 + $0x152] sm:$0xff]
    %v1682 = vld [vmem:[%s813 + $0x15a] sm:$0xff]
    %v1683 = vld [vmem:[%s813 + $0x16a] sm:$0xff]
    %v1684 = vld [vmem:[%s813 + $0x172] sm:$0xff]
    %v1685 = vld [vmem:[%s813 + $0x1e2] sm:$0xff]
    %v1686 = vld [vmem:[%s813 + $0x1ea] sm:$0xff]
    %v1687 = vld [vmem:[%s813 + $0x1fa] sm:$0xff]
    %v1688 = vld [vmem:[%s813 + $0x202] sm:$0xff]
    %v1689 = vld [vmem:[%s813 + $0x212] sm:$0xff]
    %v1690 = vld [vmem:[%s813 + $0x21a] sm:$0xff]
    %v1691 = vld [vmem:[%s813 + $0x22a] sm:$0xff]
    %v1692 = vld [vmem:[%s813 + $0x232] sm:$0xff]
    %v1693 = vld [vmem:[%s813 + $0x242] sm:$0xff]
    %v1694 = vld [vmem:[%s813 + $0x24a] sm:$0xff]
    %v1695 = vld [vmem:[%s813 + $0x25a] sm:$0xff]
    %v1696 = vld [vmem:[%s813 + $0x262] sm:$0xff]
    %v1697 = vld [vmem:[%s813 + $0x272] sm:$0xff]
    %v1698 = vld [vmem:[%s813 + $0x27a] sm:$0xff]
    %v1699 = vld [vmem:[%s813 + $0x28a] sm:$0xff]
    %v1700 = vld [vmem:[%s813 + $0x292] sm:$0xff]
    %v1701 = vld [vmem:[%s813 + $0x2a2] sm:$0xff]
    %v1702 = vld [vmem:[%s813 + $0x2aa] sm:$0xff]
    %v1703 = vld [vmem:[%s813 + $0x2ba] sm:$0xff]
    %v1704 = vld [vmem:[%s813 + $0x2c2] sm:$0xff]
    %v1705 = vld [vmem:[%s813 + $0x2d2] sm:$0xff]
    %v1706 = vld [vmem:[%s813 + $0x2da] sm:$0xff]
    %v1707 = vld [vmem:[%s813 + $0x2ea] sm:$0xff]
    %v1708 = vld [vmem:[%s813 + $0x2f2] sm:$0xff]
    %v1709 = vld [vmem:[%s813 + $0x302] sm:$0xff]
    %v1710 = vld [vmem:[%s813 + $0x30a] sm:$0xff]
    %v1711 = vld [vmem:[%s813 + $0x31a] sm:$0xff]
    %v1712 = vld [vmem:[%s813 + $0x322] sm:$0xff]
    %v1713 = vld [vmem:[%s813 + $0x332] sm:$0xff]
    %v1714 = vld [vmem:[%s813 + $0x33a] sm:$0xff]
    %v1715 = vld [vmem:[%s813 + $0x34a] sm:$0xff]
    %v1716 = vld [vmem:[%s813 + $0x352] sm:$0xff]
    %v1717 = vperm.slane %v879, 1
    %v1718 = vmul.f32 %v1653, %v1717
    %v1719 = vmul.f32 %v1654, %v1717
    %v1720 = vmul.f32 %v1655, %v1717
    %v1721 = vmul.f32 %v1656, %v1717
    %v1722 = vmul.f32 %v1657, %v1717
    %v1723 = vmul.f32 %v1658, %v1717
    %v1724 = vmul.f32 %v1659, %v1717
    %v1725 = vmul.f32 %v1660, %v1717
    %v1726 = vmul.f32 %v1661, %v1717
    %v1727 = vmul.f32 %v1662, %v1717
    %v1728 = vmul.f32 %v1663, %v1717
    %v1729 = vmul.f32 %v1664, %v1717
    %v1730 = vmul.f32 %v1665, %v1717
    %v1731 = vmul.f32 %v1666, %v1717
    %v1732 = vmul.f32 %v1667, %v1717
    %v1733 = vmul.f32 %v1668, %v1717
    %v1734 = vmul.f32 %v1669, %v1717
    %v1735 = vmul.f32 %v1670, %v1717
    %v1736 = vmul.f32 %v1671, %v1717
    %v1737 = vmul.f32 %v1672, %v1717
    %v1738 = vmul.f32 %v1673, %v1717
    %v1739 = vmul.f32 %v1674, %v1717
    %v1740 = vmul.f32 %v1675, %v1717
    %v1741 = vmul.f32 %v1676, %v1717
    %v1742 = vmul.f32 %v1677, %v1717
    %v1743 = vmul.f32 %v1678, %v1717
    %v1744 = vmul.f32 %v1679, %v1717
    %v1745 = vmul.f32 %v1680, %v1717
    %v1746 = vmul.f32 %v1681, %v1717
    %v1747 = vmul.f32 %v1682, %v1717
    %v1748 = vmul.f32 %v1683, %v1717
    %v1749 = vmul.f32 %v1684, %v1717
    %v1750 = vmul.f32 %v1685, %v1717
    %v1751 = vmul.f32 %v1686, %v1717
    %v1752 = vmul.f32 %v1687, %v1717
    %v1753 = vmul.f32 %v1688, %v1717
    %v1754 = vmul.f32 %v1689, %v1717
    %v1755 = vmul.f32 %v1690, %v1717
    %v1756 = vmul.f32 %v1691, %v1717
    %v1757 = vmul.f32 %v1692, %v1717
    %v1758 = vmul.f32 %v1693, %v1717
    %v1759 = vmul.f32 %v1694, %v1717
    %v1760 = vmul.f32 %v1695, %v1717
    %v1761 = vmul.f32 %v1696, %v1717
    %v1762 = vmul.f32 %v1697, %v1717
    %v1763 = vmul.f32 %v1698, %v1717
    %v1764 = vmul.f32 %v1699, %v1717
    %v1765 = vmul.f32 %v1700, %v1717
    %v1766 = vmul.f32 %v1701, %v1717
    %v1767 = vmul.f32 %v1702, %v1717
    %v1768 = vmul.f32 %v1703, %v1717
    %v1769 = vmul.f32 %v1704, %v1717
    %v1770 = vmul.f32 %v1705, %v1717
    %v1771 = vmul.f32 %v1706, %v1717
    %v1772 = vmul.f32 %v1707, %v1717
    %v1773 = vmul.f32 %v1708, %v1717
    %v1774 = vmul.f32 %v1709, %v1717
    %v1775 = vmul.f32 %v1710, %v1717
    %v1776 = vmul.f32 %v1711, %v1717
    %v1777 = vmul.f32 %v1712, %v1717
    %v1778 = vmul.f32 %v1713, %v1717
    %v1779 = vmul.f32 %v1714, %v1717
    %v1780 = vmul.f32 %v1715, %v1717
    %v1781 = vmul.f32 %v1716, %v1717
    %v1782 = vadd.f32 %v1589, %v1718
    %v1783 = vadd.f32 %v1590, %v1719
    %v1784 = vadd.f32 %v1591, %v1720
    %v1785 = vadd.f32 %v1592, %v1721
    %v1786 = vadd.f32 %v1593, %v1722
    %v1787 = vadd.f32 %v1594, %v1723
    %v1788 = vadd.f32 %v1595, %v1724
    %v1789 = vadd.f32 %v1596, %v1725
    %v1790 = vadd.f32 %v1597, %v1726
    %v1791 = vadd.f32 %v1598, %v1727
    %v1792 = vadd.f32 %v1599, %v1728
    %v1793 = vadd.f32 %v1600, %v1729
    %v1794 = vadd.f32 %v1601, %v1730
    %v1795 = vadd.f32 %v1602, %v1731
    %v1796 = vadd.f32 %v1603, %v1732
    %v1797 = vadd.f32 %v1604, %v1733
    %v1798 = vadd.f32 %v1605, %v1734
    %v1799 = vadd.f32 %v1606, %v1735
    %v1800 = vadd.f32 %v1607, %v1736
    %v1801 = vadd.f32 %v1608, %v1737
    %v1802 = vadd.f32 %v1609, %v1738
    %v1803 = vadd.f32 %v1610, %v1739
    %v1804 = vadd.f32 %v1611, %v1740
    %v1805 = vadd.f32 %v1612, %v1741
    %v1806 = vadd.f32 %v1613, %v1742
    %v1807 = vadd.f32 %v1614, %v1743
    %v1808 = vadd.f32 %v1615, %v1744
    %v1809 = vadd.f32 %v1616, %v1745
    %v1810 = vadd.f32 %v1617, %v1746
    %v1811 = vadd.f32 %v1618, %v1747
    %v1812 = vadd.f32 %v1619, %v1748
    %v1813 = vadd.f32 %v1620, %v1749
    %v1814 = vadd.f32 %v1621, %v1750
    %v1815 = vadd.f32 %v1622, %v1751
    %v1816 = vadd.f32 %v1623, %v1752
    %v1817 = vadd.f32 %v1624, %v1753
    %v1818 = vadd.f32 %v1625, %v1754
    %v1819 = vadd.f32 %v1626, %v1755
    %v1820 = vadd.f32 %v1627, %v1756
    %v1821 = vadd.f32 %v1628, %v1757
    %v1822 = vadd.f32 %v1629, %v1758
    %v1823 = vadd.f32 %v1630, %v1759
    %v1824 = vadd.f32 %v1631, %v1760
    %v1825 = vadd.f32 %v1632, %v1761
    %v1826 = vadd.f32 %v1633, %v1762
    %v1827 = vadd.f32 %v1634, %v1763
    %v1828 = vadd.f32 %v1635, %v1764
    %v1829 = vadd.f32 %v1636, %v1765
    %v1830 = vadd.f32 %v1637, %v1766
    %v1831 = vadd.f32 %v1638, %v1767
    %v1832 = vadd.f32 %v1639, %v1768
    %v1833 = vadd.f32 %v1640, %v1769
    %v1834 = vadd.f32 %v1641, %v1770
    %v1835 = vadd.f32 %v1642, %v1771
    %v1836 = vadd.f32 %v1643, %v1772
    %v1837 = vadd.f32 %v1644, %v1773
    %v1838 = vadd.f32 %v1645, %v1774
    %v1839 = vadd.f32 %v1646, %v1775
    %v1840 = vadd.f32 %v1647, %v1776
    %v1841 = vadd.f32 %v1648, %v1777
    %v1842 = vadd.f32 %v1649, %v1778
    %v1843 = vadd.f32 %v1650, %v1779
    %v1844 = vadd.f32 %v1651, %v1780
    %v1845 = vadd.f32 %v1652, %v1781
    %v1846 = vld [vmem:[%s813 + $0x4] sm:$0xff]
    %v1847 = vld [vmem:[%s813 + $0xc] sm:$0xff]
    %v1848 = vld [vmem:[%s813 + $0x1c] sm:$0xff]
    %v1849 = vld [vmem:[%s813 + $0x24] sm:$0xff]
    %v1850 = vld [vmem:[%s813 + $0x34] sm:$0xff]
    %v1851 = vld [vmem:[%s813 + $0x3c] sm:$0xff]
    %v1852 = vld [vmem:[%s813 + $0x4c] sm:$0xff]
    %v1853 = vld [vmem:[%s813 + $0x54] sm:$0xff]
    %v1854 = vld [vmem:[%s813 + $0x64] sm:$0xff]
    %v1855 = vld [vmem:[%s813 + $0x6c] sm:$0xff]
    %v1856 = vld [vmem:[%s813 + $0x7c] sm:$0xff]
    %v1857 = vld [vmem:[%s813 + $0x84] sm:$0xff]
    %v1858 = vld [vmem:[%s813 + $0x94] sm:$0xff]
    %v1859 = vld [vmem:[%s813 + $0x9c] sm:$0xff]
    %v1860 = vld [vmem:[%s813 + $0xac] sm:$0xff]
    %v1861 = vld [vmem:[%s813 + $0xb4] sm:$0xff]
    %v1862 = vld [vmem:[%s813 + $0xc4] sm:$0xff]
    %v1863 = vld [vmem:[%s813 + $0xcc] sm:$0xff]
    %v1864 = vld [vmem:[%s813 + $0xdc] sm:$0xff]
    %v1865 = vld [vmem:[%s813 + $0xe4] sm:$0xff]
    %v1866 = vld [vmem:[%s813 + $0xf4] sm:$0xff]
    %v1867 = vld [vmem:[%s813 + $0xfc] sm:$0xff]
    %v1868 = vld [vmem:[%s813 + $0x10c] sm:$0xff]
    %v1869 = vld [vmem:[%s813 + $0x114] sm:$0xff]
    %v1870 = vld [vmem:[%s813 + $0x124] sm:$0xff]
    %v1871 = vld [vmem:[%s813 + $0x12c] sm:$0xff]
    %v1872 = vld [vmem:[%s813 + $0x13c] sm:$0xff]
    %v1873 = vld [vmem:[%s813 + $0x144] sm:$0xff]
    %v1874 = vld [vmem:[%s813 + $0x154] sm:$0xff]
    %v1875 = vld [vmem:[%s813 + $0x15c] sm:$0xff]
    %v1876 = vld [vmem:[%s813 + $0x16c] sm:$0xff]
    %v1877 = vld [vmem:[%s813 + $0x174] sm:$0xff]
    %v1878 = vld [vmem:[%s813 + $0x1e4] sm:$0xff]
    %v1879 = vld [vmem:[%s813 + $0x1ec] sm:$0xff]
    %v1880 = vld [vmem:[%s813 + $0x1fc] sm:$0xff]
    %v1881 = vld [vmem:[%s813 + $0x204] sm:$0xff]
    %v1882 = vld [vmem:[%s813 + $0x214] sm:$0xff]
    %v1883 = vld [vmem:[%s813 + $0x21c] sm:$0xff]
    %v1884 = vld [vmem:[%s813 + $0x22c] sm:$0xff]
    %v1885 = vld [vmem:[%s813 + $0x234] sm:$0xff]
    %v1886 = vld [vmem:[%s813 + $0x244] sm:$0xff]
    %v1887 = vld [vmem:[%s813 + $0x24c] sm:$0xff]
    %v1888 = vld [vmem:[%s813 + $0x25c] sm:$0xff]
    %v1889 = vld [vmem:[%s813 + $0x264] sm:$0xff]
    %v1890 = vld [vmem:[%s813 + $0x274] sm:$0xff]
    %v1891 = vld [vmem:[%s813 + $0x27c] sm:$0xff]
    %v1892 = vld [vmem:[%s813 + $0x28c] sm:$0xff]
    %v1893 = vld [vmem:[%s813 + $0x294] sm:$0xff]
    %v1894 = vld [vmem:[%s813 + $0x2a4] sm:$0xff]
    %v1895 = vld [vmem:[%s813 + $0x2ac] sm:$0xff]
    %v1896 = vld [vmem:[%s813 + $0x2bc] sm:$0xff]
    %v1897 = vld [vmem:[%s813 + $0x2c4] sm:$0xff]
    %v1898 = vld [vmem:[%s813 + $0x2d4] sm:$0xff]
    %v1899 = vld [vmem:[%s813 + $0x2dc] sm:$0xff]
    %v1900 = vld [vmem:[%s813 + $0x2ec] sm:$0xff]
    %v1901 = vld [vmem:[%s813 + $0x2f4] sm:$0xff]
    %v1902 = vld [vmem:[%s813 + $0x304] sm:$0xff]
    %v1903 = vld [vmem:[%s813 + $0x30c] sm:$0xff]
    %v1904 = vld [vmem:[%s813 + $0x31c] sm:$0xff]
    %v1905 = vld [vmem:[%s813 + $0x324] sm:$0xff]
    %v1906 = vld [vmem:[%s813 + $0x334] sm:$0xff]
    %v1907 = vld [vmem:[%s813 + $0x33c] sm:$0xff]
    %v1908 = vld [vmem:[%s813 + $0x34c] sm:$0xff]
    %v1909 = vld [vmem:[%s813 + $0x354] sm:$0xff]
    %v1910 = vperm.slane %v879, 2
    %v1911 = vmul.f32 %v1846, %v1910
    %v1912 = vmul.f32 %v1847, %v1910
    %v1913 = vmul.f32 %v1848, %v1910
    %v1914 = vmul.f32 %v1849, %v1910
    %v1915 = vmul.f32 %v1850, %v1910
    %v1916 = vmul.f32 %v1851, %v1910
    %v1917 = vmul.f32 %v1852, %v1910
    %v1918 = vmul.f32 %v1853, %v1910
    %v1919 = vmul.f32 %v1854, %v1910
    %v1920 = vmul.f32 %v1855, %v1910
    %v1921 = vmul.f32 %v1856, %v1910
    %v1922 = vmul.f32 %v1857, %v1910
    %v1923 = vmul.f32 %v1858, %v1910
    %v1924 = vmul.f32 %v1859, %v1910
    %v1925 = vmul.f32 %v1860, %v1910
    %v1926 = vmul.f32 %v1861, %v1910
    %v1927 = vmul.f32 %v1862, %v1910
    %v1928 = vmul.f32 %v1863, %v1910
    %v1929 = vmul.f32 %v1864, %v1910
    %v1930 = vmul.f32 %v1865, %v1910
    %v1931 = vmul.f32 %v1866, %v1910
    %v1932 = vmul.f32 %v1867, %v1910
    %v1933 = vmul.f32 %v1868, %v1910
    %v1934 = vmul.f32 %v1869, %v1910
    %v1935 = vmul.f32 %v1870, %v1910
    %v1936 = vmul.f32 %v1871, %v1910
    %v1937 = vmul.f32 %v1872, %v1910
    %v1938 = vmul.f32 %v1873, %v1910
    %v1939 = vmul.f32 %v1874, %v1910
    %v1940 = vmul.f32 %v1875, %v1910
    %v1941 = vmul.f32 %v1876, %v1910
    %v1942 = vmul.f32 %v1877, %v1910
    %v1943 = vmul.f32 %v1878, %v1910
    %v1944 = vmul.f32 %v1879, %v1910
    %v1945 = vmul.f32 %v1880, %v1910
    %v1946 = vmul.f32 %v1881, %v1910
    %v1947 = vmul.f32 %v1882, %v1910
    %v1948 = vmul.f32 %v1883, %v1910
    %v1949 = vmul.f32 %v1884, %v1910
    %v1950 = vmul.f32 %v1885, %v1910
    %v1951 = vmul.f32 %v1886, %v1910
    %v1952 = vmul.f32 %v1887, %v1910
    %v1953 = vmul.f32 %v1888, %v1910
    %v1954 = vmul.f32 %v1889, %v1910
    %v1955 = vmul.f32 %v1890, %v1910
    %v1956 = vmul.f32 %v1891, %v1910
    %v1957 = vmul.f32 %v1892, %v1910
    %v1958 = vmul.f32 %v1893, %v1910
    %v1959 = vmul.f32 %v1894, %v1910
    %v1960 = vmul.f32 %v1895, %v1910
    %v1961 = vmul.f32 %v1896, %v1910
    %v1962 = vmul.f32 %v1897, %v1910
    %v1963 = vmul.f32 %v1898, %v1910
    %v1964 = vmul.f32 %v1899, %v1910
    %v1965 = vmul.f32 %v1900, %v1910
    %v1966 = vmul.f32 %v1901, %v1910
    %v1967 = vmul.f32 %v1902, %v1910
    %v1968 = vmul.f32 %v1903, %v1910
    %v1969 = vmul.f32 %v1904, %v1910
    %v1970 = vmul.f32 %v1905, %v1910
    %v1971 = vmul.f32 %v1906, %v1910
    %v1972 = vmul.f32 %v1907, %v1910
    %v1973 = vmul.f32 %v1908, %v1910
    %v1974 = vmul.f32 %v1909, %v1910
    %v1975 = vadd.f32 %v1782, %v1911
    %v1976 = vadd.f32 %v1783, %v1912
    %v1977 = vadd.f32 %v1784, %v1913
    %v1978 = vadd.f32 %v1785, %v1914
    %v1979 = vadd.f32 %v1786, %v1915
    %v1980 = vadd.f32 %v1787, %v1916
    %v1981 = vadd.f32 %v1788, %v1917
    %v1982 = vadd.f32 %v1789, %v1918
    %v1983 = vadd.f32 %v1790, %v1919
    %v1984 = vadd.f32 %v1791, %v1920
    %v1985 = vadd.f32 %v1792, %v1921
    %v1986 = vadd.f32 %v1793, %v1922
    %v1987 = vadd.f32 %v1794, %v1923
    %v1988 = vadd.f32 %v1795, %v1924
    %v1989 = vadd.f32 %v1796, %v1925
    %v1990 = vadd.f32 %v1797, %v1926
    %v1991 = vadd.f32 %v1798, %v1927
    %v1992 = vadd.f32 %v1799, %v1928
    %v1993 = vadd.f32 %v1800, %v1929
    %v1994 = vadd.f32 %v1801, %v1930
    %v1995 = vadd.f32 %v1802, %v1931
    %v1996 = vadd.f32 %v1803, %v1932
    %v1997 = vadd.f32 %v1804, %v1933
    %v1998 = vadd.f32 %v1805, %v1934
    %v1999 = vadd.f32 %v1806, %v1935
    %v2000 = vadd.f32 %v1807, %v1936
    %v2001 = vadd.f32 %v1808, %v1937
    %v2002 = vadd.f32 %v1809, %v1938
    %v2003 = vadd.f32 %v1810, %v1939
    %v2004 = vadd.f32 %v1811, %v1940
    %v2005 = vadd.f32 %v1812, %v1941
    %v2006 = vadd.f32 %v1813, %v1942
    %v2007 = vadd.f32 %v1814, %v1943
    %v2008 = vadd.f32 %v1815, %v1944
    %v2009 = vadd.f32 %v1816, %v1945
    %v2010 = vadd.f32 %v1817, %v1946
    %v2011 = vadd.f32 %v1818, %v1947
    %v2012 = vadd.f32 %v1819, %v1948
    %v2013 = vadd.f32 %v1820, %v1949
    %v2014 = vadd.f32 %v1821, %v1950
    %v2015 = vadd.f32 %v1822, %v1951
    %v2016 = vadd.f32 %v1823, %v1952
    %v2017 = vadd.f32 %v1824, %v1953
    %v2018 = vadd.f32 %v1825, %v1954
    %v2019 = vadd.f32 %v1826, %v1955
    %v2020 = vadd.f32 %v1827, %v1956
    %v2021 = vadd.f32 %v1828, %v1957
    %v2022 = vadd.f32 %v1829, %v1958
    %v2023 = vadd.f32 %v1830, %v1959
    %v2024 = vadd.f32 %v1831, %v1960
    %v2025 = vadd.f32 %v1832, %v1961
    %v2026 = vadd.f32 %v1833, %v1962
    %v2027 = vadd.f32 %v1834, %v1963
    %v2028 = vadd.f32 %v1835, %v1964
    %v2029 = vadd.f32 %v1836, %v1965
    %v2030 = vadd.f32 %v1837, %v1966
    %v2031 = vadd.f32 %v1838, %v1967
    %v2032 = vadd.f32 %v1839, %v1968
    %v2033 = vadd.f32 %v1840, %v1969
    %v2034 = vadd.f32 %v1841, %v1970
    %v2035 = vadd.f32 %v1842, %v1971
    %v2036 = vadd.f32 %v1843, %v1972
    %v2037 = vadd.f32 %v1844, %v1973
    %v2038 = vadd.f32 %v1845, %v1974
    %s2039 = scalar_lea.vmem [#allocation2], 96
    %v2040 = vld [vmem:[%s2039] sm:$0xff]
    %v2041 = vld [vmem:[%s2039 + $0x8] sm:$0xff]
    %v2042 = vld [vmem:[%s2039 + $0x18] sm:$0xff]
    %v2043 = vld [vmem:[%s2039 + $0x20] sm:$0xff]
    %v2044 = vld [vmem:[%s2039 + $0x30] sm:$0xff]
    %v2045 = vld [vmem:[%s2039 + $0x38] sm:$0xff]
    %v2046 = vld [vmem:[%s2039 + $0x48] sm:$0xff]
    %v2047 = vld [vmem:[%s2039 + $0x50] sm:$0xff]
    %v2048 = vld [vmem:[%s2039 + $0x60] sm:$0xff]
    %v2049 = vld [vmem:[%s2039 + $0x68] sm:$0xff]
    %v2050 = vld [vmem:[%s2039 + $0x78] sm:$0xff]
    %v2051 = vld [vmem:[%s2039 + $0x80] sm:$0xff]
    %v2052 = vld [vmem:[%s2039 + $0x90] sm:$0xff]
    %v2053 = vld [vmem:[%s2039 + $0x98] sm:$0xff]
    %v2054 = vld [vmem:[%s2039 + $0xa8] sm:$0xff]
    %v2055 = vld [vmem:[%s2039 + $0xb0] sm:$0xff]
    %v2056 = vld [vmem:[%s2039 + $0xc0] sm:$0xff]
    %v2057 = vld [vmem:[%s2039 + $0xc8] sm:$0xff]
    %v2058 = vld [vmem:[%s2039 + $0xd8] sm:$0xff]
    %v2059 = vld [vmem:[%s2039 + $0xe0] sm:$0xff]
    %v2060 = vld [vmem:[%s2039 + $0xf0] sm:$0xff]
    %v2061 = vld [vmem:[%s2039 + $0xf8] sm:$0xff]
    %v2062 = vld [vmem:[%s2039 + $0x108] sm:$0xff]
    %v2063 = vld [vmem:[%s2039 + $0x110] sm:$0xff]
    %v2064 = vld [vmem:[%s2039 + $0x120] sm:$0xff]
    %v2065 = vld [vmem:[%s2039 + $0x128] sm:$0xff]
    %v2066 = vld [vmem:[%s2039 + $0x138] sm:$0xff]
    %v2067 = vld [vmem:[%s2039 + $0x140] sm:$0xff]
    %v2068 = vld [vmem:[%s2039 + $0x150] sm:$0xff]
    %v2069 = vld [vmem:[%s2039 + $0x158] sm:$0xff]
    %v2070 = vld [vmem:[%s2039 + $0x168] sm:$0xff]
    %v2071 = vld [vmem:[%s2039 + $0x170] sm:$0xff]
    %v2072 = vld [vmem:[%s2039 + $0x1e0] sm:$0xff]
    %v2073 = vld [vmem:[%s2039 + $0x1e8] sm:$0xff]
    %v2074 = vld [vmem:[%s2039 + $0x1f8] sm:$0xff]
    %v2075 = vld [vmem:[%s2039 + $0x200] sm:$0xff]
    %v2076 = vld [vmem:[%s2039 + $0x210] sm:$0xff]
    %v2077 = vld [vmem:[%s2039 + $0x218] sm:$0xff]
    %v2078 = vld [vmem:[%s2039 + $0x228] sm:$0xff]
    %v2079 = vld [vmem:[%s2039 + $0x230] sm:$0xff]
    %v2080 = vld [vmem:[%s2039 + $0x240] sm:$0xff]
    %v2081 = vld [vmem:[%s2039 + $0x248] sm:$0xff]
    %v2082 = vld [vmem:[%s2039 + $0x258] sm:$0xff]
    %v2083 = vld [vmem:[%s2039 + $0x260] sm:$0xff]
    %v2084 = vld [vmem:[%s2039 + $0x270] sm:$0xff]
    %v2085 = vld [vmem:[%s2039 + $0x278] sm:$0xff]
    %v2086 = vld [vmem:[%s2039 + $0x288] sm:$0xff]
    %v2087 = vld [vmem:[%s2039 + $0x290] sm:$0xff]
    %v2088 = vld [vmem:[%s2039 + $0x2a0] sm:$0xff]
    %v2089 = vld [vmem:[%s2039 + $0x2a8] sm:$0xff]
    %v2090 = vld [vmem:[%s2039 + $0x2b8] sm:$0xff]
    %v2091 = vld [vmem:[%s2039 + $0x2c0] sm:$0xff]
    %v2092 = vld [vmem:[%s2039 + $0x2d0] sm:$0xff]
    %v2093 = vld [vmem:[%s2039 + $0x2d8] sm:$0xff]
    %v2094 = vld [vmem:[%s2039 + $0x2e8] sm:$0xff]
    %v2095 = vld [vmem:[%s2039 + $0x2f0] sm:$0xff]
    %v2096 = vld [vmem:[%s2039 + $0x300] sm:$0xff]
    %v2097 = vld [vmem:[%s2039 + $0x308] sm:$0xff]
    %v2098 = vld [vmem:[%s2039 + $0x318] sm:$0xff]
    %v2099 = vld [vmem:[%s2039 + $0x320] sm:$0xff]
    %v2100 = vld [vmem:[%s2039 + $0x330] sm:$0xff]
    %v2101 = vld [vmem:[%s2039 + $0x338] sm:$0xff]
    %v2102 = vld [vmem:[%s2039 + $0x348] sm:$0xff]
    %v2103 = vld [vmem:[%s2039 + $0x350] sm:$0xff]
    %v2104 = vperm.slane %v880, 0
    %v2105 = vmul.f32 %v2040, %v2104
    %v2106 = vmul.f32 %v2041, %v2104
    %v2107 = vmul.f32 %v2042, %v2104
    %v2108 = vmul.f32 %v2043, %v2104
    %v2109 = vmul.f32 %v2044, %v2104
    %v2110 = vmul.f32 %v2045, %v2104
    %v2111 = vmul.f32 %v2046, %v2104
    %v2112 = vmul.f32 %v2047, %v2104
    %v2113 = vmul.f32 %v2048, %v2104
    %v2114 = vmul.f32 %v2049, %v2104
    %v2115 = vmul.f32 %v2050, %v2104
    %v2116 = vmul.f32 %v2051, %v2104
    %v2117 = vmul.f32 %v2052, %v2104
    %v2118 = vmul.f32 %v2053, %v2104
    %v2119 = vmul.f32 %v2054, %v2104
    %v2120 = vmul.f32 %v2055, %v2104
    %v2121 = vmul.f32 %v2056, %v2104
    %v2122 = vmul.f32 %v2057, %v2104
    %v2123 = vmul.f32 %v2058, %v2104
    %v2124 = vmul.f32 %v2059, %v2104
    %v2125 = vmul.f32 %v2060, %v2104
    %v2126 = vmul.f32 %v2061, %v2104
    %v2127 = vmul.f32 %v2062, %v2104
    %v2128 = vmul.f32 %v2063, %v2104
    %v2129 = vmul.f32 %v2064, %v2104
    %v2130 = vmul.f32 %v2065, %v2104
    %v2131 = vmul.f32 %v2066, %v2104
    %v2132 = vmul.f32 %v2067, %v2104
    %v2133 = vmul.f32 %v2068, %v2104
    %v2134 = vmul.f32 %v2069, %v2104
    %v2135 = vmul.f32 %v2070, %v2104
    %v2136 = vmul.f32 %v2071, %v2104
    %v2137 = vmul.f32 %v2072, %v2104
    %v2138 = vmul.f32 %v2073, %v2104
    %v2139 = vmul.f32 %v2074, %v2104
    %v2140 = vmul.f32 %v2075, %v2104
    %v2141 = vmul.f32 %v2076, %v2104
    %v2142 = vmul.f32 %v2077, %v2104
    %v2143 = vmul.f32 %v2078, %v2104
    %v2144 = vmul.f32 %v2079, %v2104
    %v2145 = vmul.f32 %v2080, %v2104
    %v2146 = vmul.f32 %v2081, %v2104
    %v2147 = vmul.f32 %v2082, %v2104
    %v2148 = vmul.f32 %v2083, %v2104
    %v2149 = vmul.f32 %v2084, %v2104
    %v2150 = vmul.f32 %v2085, %v2104
    %v2151 = vmul.f32 %v2086, %v2104
    %v2152 = vmul.f32 %v2087, %v2104
    %v2153 = vmul.f32 %v2088, %v2104
    %v2154 = vmul.f32 %v2089, %v2104
    %v2155 = vmul.f32 %v2090, %v2104
    %v2156 = vmul.f32 %v2091, %v2104
    %v2157 = vmul.f32 %v2092, %v2104
    %v2158 = vmul.f32 %v2093, %v2104
    %v2159 = vmul.f32 %v2094, %v2104
    %v2160 = vmul.f32 %v2095, %v2104
    %v2161 = vmul.f32 %v2096, %v2104
    %v2162 = vmul.f32 %v2097, %v2104
    %v2163 = vmul.f32 %v2098, %v2104
    %v2164 = vmul.f32 %v2099, %v2104
    %v2165 = vmul.f32 %v2100, %v2104
    %v2166 = vmul.f32 %v2101, %v2104
    %v2167 = vmul.f32 %v2102, %v2104
    %v2168 = vmul.f32 %v2103, %v2104
    %v2169 = vadd.f32 %v1975, %v2105
    %v2170 = vadd.f32 %v1976, %v2106
    %v2171 = vadd.f32 %v1977, %v2107
    %v2172 = vadd.f32 %v1978, %v2108
    %v2173 = vadd.f32 %v1979, %v2109
    %v2174 = vadd.f32 %v1980, %v2110
    %v2175 = vadd.f32 %v1981, %v2111
    %v2176 = vadd.f32 %v1982, %v2112
    %v2177 = vadd.f32 %v1983, %v2113
    %v2178 = vadd.f32 %v1984, %v2114
    %v2179 = vadd.f32 %v1985, %v2115
    %v2180 = vadd.f32 %v1986, %v2116
    %v2181 = vadd.f32 %v1987, %v2117
    %v2182 = vadd.f32 %v1988, %v2118
    %v2183 = vadd.f32 %v1989, %v2119
    %v2184 = vadd.f32 %v1990, %v2120
    %v2185 = vadd.f32 %v1991, %v2121
    %v2186 = vadd.f32 %v1992, %v2122
    %v2187 = vadd.f32 %v1993, %v2123
    %v2188 = vadd.f32 %v1994, %v2124
    %v2189 = vadd.f32 %v1995, %v2125
    %v2190 = vadd.f32 %v1996, %v2126
    %v2191 = vadd.f32 %v1997, %v2127
    %v2192 = vadd.f32 %v1998, %v2128
    %v2193 = vadd.f32 %v1999, %v2129
    %v2194 = vadd.f32 %v2000, %v2130
    %v2195 = vadd.f32 %v2001, %v2131
    %v2196 = vadd.f32 %v2002, %v2132
    %v2197 = vadd.f32 %v2003, %v2133
    %v2198 = vadd.f32 %v2004, %v2134
    %v2199 = vadd.f32 %v2005, %v2135
    %v2200 = vadd.f32 %v2006, %v2136
    %v2201 = vadd.f32 %v2007, %v2137
    %v2202 = vadd.f32 %v2008, %v2138
    %v2203 = vadd.f32 %v2009, %v2139
    %v2204 = vadd.f32 %v2010, %v2140
    %v2205 = vadd.f32 %v2011, %v2141
    %v2206 = vadd.f32 %v2012, %v2142
    %v2207 = vadd.f32 %v2013, %v2143
    %v2208 = vadd.f32 %v2014, %v2144
    %v2209 = vadd.f32 %v2015, %v2145
    %v2210 = vadd.f32 %v2016, %v2146
    %v2211 = vadd.f32 %v2017, %v2147
    %v2212 = vadd.f32 %v2018, %v2148
    %v2213 = vadd.f32 %v2019, %v2149
    %v2214 = vadd.f32 %v2020, %v2150
    %v2215 = vadd.f32 %v2021, %v2151
    %v2216 = vadd.f32 %v2022, %v2152
    %v2217 = vadd.f32 %v2023, %v2153
    %v2218 = vadd.f32 %v2024, %v2154
    %v2219 = vadd.f32 %v2025, %v2155
    %v2220 = vadd.f32 %v2026, %v2156
    %v2221 = vadd.f32 %v2027, %v2157
    %v2222 = vadd.f32 %v2028, %v2158
    %v2223 = vadd.f32 %v2029, %v2159
    %v2224 = vadd.f32 %v2030, %v2160
    %v2225 = vadd.f32 %v2031, %v2161
    %v2226 = vadd.f32 %v2032, %v2162
    %v2227 = vadd.f32 %v2033, %v2163
    %v2228 = vadd.f32 %v2034, %v2164
    %v2229 = vadd.f32 %v2035, %v2165
    %v2230 = vadd.f32 %v2036, %v2166
    %v2231 = vadd.f32 %v2037, %v2167
    %v2232 = vadd.f32 %v2038, %v2168
    %v2233 = vld [vmem:[%s2039 + $0x2] sm:$0xff]
    %v2234 = vld [vmem:[%s2039 + $0xa] sm:$0xff]
    %v2235 = vld [vmem:[%s2039 + $0x1a] sm:$0xff]
    %v2236 = vld [vmem:[%s2039 + $0x22] sm:$0xff]
    %v2237 = vld [vmem:[%s2039 + $0x32] sm:$0xff]
    %v2238 = vld [vmem:[%s2039 + $0x3a] sm:$0xff]
    %v2239 = vld [vmem:[%s2039 + $0x4a] sm:$0xff]
    %v2240 = vld [vmem:[%s2039 + $0x52] sm:$0xff]
    %v2241 = vld [vmem:[%s2039 + $0x62] sm:$0xff]
    %v2242 = vld [vmem:[%s2039 + $0x6a] sm:$0xff]
    %v2243 = vld [vmem:[%s2039 + $0x7a] sm:$0xff]
    %v2244 = vld [vmem:[%s2039 + $0x82] sm:$0xff]
    %v2245 = vld [vmem:[%s2039 + $0x92] sm:$0xff]
    %v2246 = vld [vmem:[%s2039 + $0x9a] sm:$0xff]
    %v2247 = vld [vmem:[%s2039 + $0xaa] sm:$0xff]
    %v2248 = vld [vmem:[%s2039 + $0xb2] sm:$0xff]
    %v2249 = vld [vmem:[%s2039 + $0xc2] sm:$0xff]
    %v2250 = vld [vmem:[%s2039 + $0xca] sm:$0xff]
    %v2251 = vld [vmem:[%s2039 + $0xda] sm:$0xff]
    %v2252 = vld [vmem:[%s2039 + $0xe2] sm:$0xff]
    %v2253 = vld [vmem:[%s2039 + $0xf2] sm:$0xff]
    %v2254 = vld [vmem:[%s2039 + $0xfa] sm:$0xff]
    %v2255 = vld [vmem:[%s2039 + $0x10a] sm:$0xff]
    %v2256 = vld [vmem:[%s2039 + $0x112] sm:$0xff]
    %v2257 = vld [vmem:[%s2039 + $0x122] sm:$0xff]
    %v2258 = vld [vmem:[%s2039 + $0x12a] sm:$0xff]
    %v2259 = vld [vmem:[%s2039 + $0x13a] sm:$0xff]
    %v2260 = vld [vmem:[%s2039 + $0x142] sm:$0xff]
    %v2261 = vld [vmem:[%s2039 + $0x152] sm:$0xff]
    %v2262 = vld [vmem:[%s2039 + $0x15a] sm:$0xff]
    %v2263 = vld [vmem:[%s2039 + $0x16a] sm:$0xff]
    %v2264 = vld [vmem:[%s2039 + $0x172] sm:$0xff]
    %v2265 = vld [vmem:[%s2039 + $0x1e2] sm:$0xff]
    %v2266 = vld [vmem:[%s2039 + $0x1ea] sm:$0xff]
    %v2267 = vld [vmem:[%s2039 + $0x1fa] sm:$0xff]
    %v2268 = vld [vmem:[%s2039 + $0x202] sm:$0xff]
    %v2269 = vld [vmem:[%s2039 + $0x212] sm:$0xff]
    %v2270 = vld [vmem:[%s2039 + $0x21a] sm:$0xff]
    %v2271 = vld [vmem:[%s2039 + $0x22a] sm:$0xff]
    %v2272 = vld [vmem:[%s2039 + $0x232] sm:$0xff]
    %v2273 = vld [vmem:[%s2039 + $0x242] sm:$0xff]
    %v2274 = vld [vmem:[%s2039 + $0x24a] sm:$0xff]
    %v2275 = vld [vmem:[%s2039 + $0x25a] sm:$0xff]
    %v2276 = vld [vmem:[%s2039 + $0x262] sm:$0xff]
    %v2277 = vld [vmem:[%s2039 + $0x272] sm:$0xff]
    %v2278 = vld [vmem:[%s2039 + $0x27a] sm:$0xff]
    %v2279 = vld [vmem:[%s2039 + $0x28a] sm:$0xff]
    %v2280 = vld [vmem:[%s2039 + $0x292] sm:$0xff]
    %v2281 = vld [vmem:[%s2039 + $0x2a2] sm:$0xff]
    %v2282 = vld [vmem:[%s2039 + $0x2aa] sm:$0xff]
    %v2283 = vld [vmem:[%s2039 + $0x2ba] sm:$0xff]
    %v2284 = vld [vmem:[%s2039 + $0x2c2] sm:$0xff]
    %v2285 = vld [vmem:[%s2039 + $0x2d2] sm:$0xff]
    %v2286 = vld [vmem:[%s2039 + $0x2da] sm:$0xff]
    %v2287 = vld [vmem:[%s2039 + $0x2ea] sm:$0xff]
    %v2288 = vld [vmem:[%s2039 + $0x2f2] sm:$0xff]
    %v2289 = vld [vmem:[%s2039 + $0x302] sm:$0xff]
    %v2290 = vld [vmem:[%s2039 + $0x30a] sm:$0xff]
    %v2291 = vld [vmem:[%s2039 + $0x31a] sm:$0xff]
    %v2292 = vld [vmem:[%s2039 + $0x322] sm:$0xff]
    %v2293 = vld [vmem:[%s2039 + $0x332] sm:$0xff]
    %v2294 = vld [vmem:[%s2039 + $0x33a] sm:$0xff]
    %v2295 = vld [vmem:[%s2039 + $0x34a] sm:$0xff]
    %v2296 = vld [vmem:[%s2039 + $0x352] sm:$0xff]
    %v2297 = vperm.slane %v880, 1
    %v2298 = vmul.f32 %v2233, %v2297
    %v2299 = vmul.f32 %v2234, %v2297
    %v2300 = vmul.f32 %v2235, %v2297
    %v2301 = vmul.f32 %v2236, %v2297
    %v2302 = vmul.f32 %v2237, %v2297
    %v2303 = vmul.f32 %v2238, %v2297
    %v2304 = vmul.f32 %v2239, %v2297
    %v2305 = vmul.f32 %v2240, %v2297
    %v2306 = vmul.f32 %v2241, %v2297
    %v2307 = vmul.f32 %v2242, %v2297
    %v2308 = vmul.f32 %v2243, %v2297
    %v2309 = vmul.f32 %v2244, %v2297
    %v2310 = vmul.f32 %v2245, %v2297
    %v2311 = vmul.f32 %v2246, %v2297
    %v2312 = vmul.f32 %v2247, %v2297
    %v2313 = vmul.f32 %v2248, %v2297
    %v2314 = vmul.f32 %v2249, %v2297
    %v2315 = vmul.f32 %v2250, %v2297
    %v2316 = vmul.f32 %v2251, %v2297
    %v2317 = vmul.f32 %v2252, %v2297
    %v2318 = vmul.f32 %v2253, %v2297
    %v2319 = vmul.f32 %v2254, %v2297
    %v2320 = vmul.f32 %v2255, %v2297
    %v2321 = vmul.f32 %v2256, %v2297
    %v2322 = vmul.f32 %v2257, %v2297
    %v2323 = vmul.f32 %v2258, %v2297
    %v2324 = vmul.f32 %v2259, %v2297
    %v2325 = vmul.f32 %v2260, %v2297
    %v2326 = vmul.f32 %v2261, %v2297
    %v2327 = vmul.f32 %v2262, %v2297
    %v2328 = vmul.f32 %v2263, %v2297
    %v2329 = vmul.f32 %v2264, %v2297
    %v2330 = vmul.f32 %v2265, %v2297
    %v2331 = vmul.f32 %v2266, %v2297
    %v2332 = vmul.f32 %v2267, %v2297
    %v2333 = vmul.f32 %v2268, %v2297
    %v2334 = vmul.f32 %v2269, %v2297
    %v2335 = vmul.f32 %v2270, %v2297
    %v2336 = vmul.f32 %v2271, %v2297
    %v2337 = vmul.f32 %v2272, %v2297
    %v2338 = vmul.f32 %v2273, %v2297
    %v2339 = vmul.f32 %v2274, %v2297
    %v2340 = vmul.f32 %v2275, %v2297
    %v2341 = vmul.f32 %v2276, %v2297
    %v2342 = vmul.f32 %v2277, %v2297
    %v2343 = vmul.f32 %v2278, %v2297
    %v2344 = vmul.f32 %v2279, %v2297
    %v2345 = vmul.f32 %v2280, %v2297
    %v2346 = vmul.f32 %v2281, %v2297
    %v2347 = vmul.f32 %v2282, %v2297
    %v2348 = vmul.f32 %v2283, %v2297
    %v2349 = vmul.f32 %v2284, %v2297
    %v2350 = vmul.f32 %v2285, %v2297
    %v2351 = vmul.f32 %v2286, %v2297
    %v2352 = vmul.f32 %v2287, %v2297
    %v2353 = vmul.f32 %v2288, %v2297
    %v2354 = vmul.f32 %v2289, %v2297
    %v2355 = vmul.f32 %v2290, %v2297
    %v2356 = vmul.f32 %v2291, %v2297
    %v2357 = vmul.f32 %v2292, %v2297
    %v2358 = vmul.f32 %v2293, %v2297
    %v2359 = vmul.f32 %v2294, %v2297
    %v2360 = vmul.f32 %v2295, %v2297
    %v2361 = vmul.f32 %v2296, %v2297
    %v2362 = vadd.f32 %v2169, %v2298
    %v2363 = vadd.f32 %v2170, %v2299
    %v2364 = vadd.f32 %v2171, %v2300
    %v2365 = vadd.f32 %v2172, %v2301
    %v2366 = vadd.f32 %v2173, %v2302
    %v2367 = vadd.f32 %v2174, %v2303
    %v2368 = vadd.f32 %v2175, %v2304
    %v2369 = vadd.f32 %v2176, %v2305
    %v2370 = vadd.f32 %v2177, %v2306
    %v2371 = vadd.f32 %v2178, %v2307
    %v2372 = vadd.f32 %v2179, %v2308
    %v2373 = vadd.f32 %v2180, %v2309
    %v2374 = vadd.f32 %v2181, %v2310
    %v2375 = vadd.f32 %v2182, %v2311
    %v2376 = vadd.f32 %v2183, %v2312
    %v2377 = vadd.f32 %v2184, %v2313
    %v2378 = vadd.f32 %v2185, %v2314
    %v2379 = vadd.f32 %v2186, %v2315
    %v2380 = vadd.f32 %v2187, %v2316
    %v2381 = vadd.f32 %v2188, %v2317
    %v2382 = vadd.f32 %v2189, %v2318
    %v2383 = vadd.f32 %v2190, %v2319
    %v2384 = vadd.f32 %v2191, %v2320
    %v2385 = vadd.f32 %v2192, %v2321
    %v2386 = vadd.f32 %v2193, %v2322
    %v2387 = vadd.f32 %v2194, %v2323
    %v2388 = vadd.f32 %v2195, %v2324
    %v2389 = vadd.f32 %v2196, %v2325
    %v2390 = vadd.f32 %v2197, %v2326
    %v2391 = vadd.f32 %v2198, %v2327
    %v2392 = vadd.f32 %v2199, %v2328
    %v2393 = vadd.f32 %v2200, %v2329
    %v2394 = vadd.f32 %v2201, %v2330
    %v2395 = vadd.f32 %v2202, %v2331
    %v2396 = vadd.f32 %v2203, %v2332
    %v2397 = vadd.f32 %v2204, %v2333
    %v2398 = vadd.f32 %v2205, %v2334
    %v2399 = vadd.f32 %v2206, %v2335
    %v2400 = vadd.f32 %v2207, %v2336
    %v2401 = vadd.f32 %v2208, %v2337
    %v2402 = vadd.f32 %v2209, %v2338
    %v2403 = vadd.f32 %v2210, %v2339
    %v2404 = vadd.f32 %v2211, %v2340
    %v2405 = vadd.f32 %v2212, %v2341
    %v2406 = vadd.f32 %v2213, %v2342
    %v2407 = vadd.f32 %v2214, %v2343
    %v2408 = vadd.f32 %v2215, %v2344
    %v2409 = vadd.f32 %v2216, %v2345
    %v2410 = vadd.f32 %v2217, %v2346
    %v2411 = vadd.f32 %v2218, %v2347
    %v2412 = vadd.f32 %v2219, %v2348
    %v2413 = vadd.f32 %v2220, %v2349
    %v2414 = vadd.f32 %v2221, %v2350
    %v2415 = vadd.f32 %v2222, %v2351
    %v2416 = vadd.f32 %v2223, %v2352
    %v2417 = vadd.f32 %v2224, %v2353
    %v2418 = vadd.f32 %v2225, %v2354
    %v2419 = vadd.f32 %v2226, %v2355
    %v2420 = vadd.f32 %v2227, %v2356
    %v2421 = vadd.f32 %v2228, %v2357
    %v2422 = vadd.f32 %v2229, %v2358
    %v2423 = vadd.f32 %v2230, %v2359
    %v2424 = vadd.f32 %v2231, %v2360
    %v2425 = vadd.f32 %v2232, %v2361
    %v2426 = vld [vmem:[%s2039 + $0x4] sm:$0xff]
    %v2427 = vld [vmem:[%s2039 + $0xc] sm:$0xff]
    %v2428 = vld [vmem:[%s2039 + $0x1c] sm:$0xff]
    %v2429 = vld [vmem:[%s2039 + $0x24] sm:$0xff]
    %v2430 = vld [vmem:[%s2039 + $0x34] sm:$0xff]
    %v2431 = vld [vmem:[%s2039 + $0x3c] sm:$0xff]
    %v2432 = vld [vmem:[%s2039 + $0x4c] sm:$0xff]
    %v2433 = vld [vmem:[%s2039 + $0x54] sm:$0xff]
    %v2434 = vld [vmem:[%s2039 + $0x64] sm:$0xff]
    %v2435 = vld [vmem:[%s2039 + $0x6c] sm:$0xff]
    %v2436 = vld [vmem:[%s2039 + $0x7c] sm:$0xff]
    %v2437 = vld [vmem:[%s2039 + $0x84] sm:$0xff]
    %v2438 = vld [vmem:[%s2039 + $0x94] sm:$0xff]
    %v2439 = vld [vmem:[%s2039 + $0x9c] sm:$0xff]
    %v2440 = vld [vmem:[%s2039 + $0xac] sm:$0xff]
    %v2441 = vld [vmem:[%s2039 + $0xb4] sm:$0xff]
    %v2442 = vld [vmem:[%s2039 + $0xc4] sm:$0xff]
    %v2443 = vld [vmem:[%s2039 + $0xcc] sm:$0xff]
    %v2444 = vld [vmem:[%s2039 + $0xdc] sm:$0xff]
    %v2445 = vld [vmem:[%s2039 + $0xe4] sm:$0xff]
    %v2446 = vld [vmem:[%s2039 + $0xf4] sm:$0xff]
    %v2447 = vld [vmem:[%s2039 + $0xfc] sm:$0xff]
    %v2448 = vld [vmem:[%s2039 + $0x10c] sm:$0xff]
    %v2449 = vld [vmem:[%s2039 + $0x114] sm:$0xff]
    %v2450 = vld [vmem:[%s2039 + $0x124] sm:$0xff]
    %v2451 = vld [vmem:[%s2039 + $0x12c] sm:$0xff]
    %v2452 = vld [vmem:[%s2039 + $0x13c] sm:$0xff]
    %v2453 = vld [vmem:[%s2039 + $0x144] sm:$0xff]
    %v2454 = vld [vmem:[%s2039 + $0x154] sm:$0xff]
    %v2455 = vld [vmem:[%s2039 + $0x15c] sm:$0xff]
    %v2456 = vld [vmem:[%s2039 + $0x16c] sm:$0xff]
    %v2457 = vld [vmem:[%s2039 + $0x174] sm:$0xff]
    %v2458 = vld [vmem:[%s2039 + $0x1e4] sm:$0xff]
    %v2459 = vld [vmem:[%s2039 + $0x1ec] sm:$0xff]
    %v2460 = vld [vmem:[%s2039 + $0x1fc] sm:$0xff]
    %v2461 = vld [vmem:[%s2039 + $0x204] sm:$0xff]
    %v2462 = vld [vmem:[%s2039 + $0x214] sm:$0xff]
    %v2463 = vld [vmem:[%s2039 + $0x21c] sm:$0xff]
    %v2464 = vld [vmem:[%s2039 + $0x22c] sm:$0xff]
    %v2465 = vld [vmem:[%s2039 + $0x234] sm:$0xff]
    %v2466 = vld [vmem:[%s2039 + $0x244] sm:$0xff]
    %v2467 = vld [vmem:[%s2039 + $0x24c] sm:$0xff]
    %v2468 = vld [vmem:[%s2039 + $0x25c] sm:$0xff]
    %v2469 = vld [vmem:[%s2039 + $0x264] sm:$0xff]
    %v2470 = vld [vmem:[%s2039 + $0x274] sm:$0xff]
    %v2471 = vld [vmem:[%s2039 + $0x27c] sm:$0xff]
    %v2472 = vld [vmem:[%s2039 + $0x28c] sm:$0xff]
    %v2473 = vld [vmem:[%s2039 + $0x294] sm:$0xff]
    %v2474 = vld [vmem:[%s2039 + $0x2a4] sm:$0xff]
    %v2475 = vld [vmem:[%s2039 + $0x2ac] sm:$0xff]
    %v2476 = vld [vmem:[%s2039 + $0x2bc] sm:$0xff]
    %v2477 = vld [vmem:[%s2039 + $0x2c4] sm:$0xff]
    %v2478 = vld [vmem:[%s2039 + $0x2d4] sm:$0xff]
    %v2479 = vld [vmem:[%s2039 + $0x2dc] sm:$0xff]
    %v2480 = vld [vmem:[%s2039 + $0x2ec] sm:$0xff]
    %v2481 = vld [vmem:[%s2039 + $0x2f4] sm:$0xff]
    %v2482 = vld [vmem:[%s2039 + $0x304] sm:$0xff]
    %v2483 = vld [vmem:[%s2039 + $0x30c] sm:$0xff]
    %v2484 = vld [vmem:[%s2039 + $0x31c] sm:$0xff]
    %v2485 = vld [vmem:[%s2039 + $0x324] sm:$0xff]
    %v2486 = vld [vmem:[%s2039 + $0x334] sm:$0xff]
    %v2487 = vld [vmem:[%s2039 + $0x33c] sm:$0xff]
    %v2488 = vld [vmem:[%s2039 + $0x34c] sm:$0xff]
    %v2489 = vld [vmem:[%s2039 + $0x354] sm:$0xff]
    %v2490 = vperm.slane %v880, 2
    %v2491 = vmul.f32 %v2426, %v2490
    %v2492 = vmul.f32 %v2427, %v2490
    %v2493 = vmul.f32 %v2428, %v2490
    %v2494 = vmul.f32 %v2429, %v2490
    %v2495 = vmul.f32 %v2430, %v2490
    %v2496 = vmul.f32 %v2431, %v2490
    %v2497 = vmul.f32 %v2432, %v2490
    %v2498 = vmul.f32 %v2433, %v2490
    %v2499 = vmul.f32 %v2434, %v2490
    %v2500 = vmul.f32 %v2435, %v2490
    %v2501 = vmul.f32 %v2436, %v2490
    %v2502 = vmul.f32 %v2437, %v2490
    %v2503 = vmul.f32 %v2438, %v2490
    %v2504 = vmul.f32 %v2439, %v2490
    %v2505 = vmul.f32 %v2440, %v2490
    %v2506 = vmul.f32 %v2441, %v2490
    %v2507 = vmul.f32 %v2442, %v2490
    %v2508 = vmul.f32 %v2443, %v2490
    %v2509 = vmul.f32 %v2444, %v2490
    %v2510 = vmul.f32 %v2445, %v2490
    %v2511 = vmul.f32 %v2446, %v2490
    %v2512 = vmul.f32 %v2447, %v2490
    %v2513 = vmul.f32 %v2448, %v2490
    %v2514 = vmul.f32 %v2449, %v2490
    %v2515 = vmul.f32 %v2450, %v2490
    %v2516 = vmul.f32 %v2451, %v2490
    %v2517 = vmul.f32 %v2452, %v2490
    %v2518 = vmul.f32 %v2453, %v2490
    %v2519 = vmul.f32 %v2454, %v2490
    %v2520 = vmul.f32 %v2455, %v2490
    %v2521 = vmul.f32 %v2456, %v2490
    %v2522 = vmul.f32 %v2457, %v2490
    %v2523 = vmul.f32 %v2458, %v2490
    %v2524 = vmul.f32 %v2459, %v2490
    %v2525 = vmul.f32 %v2460, %v2490
    %v2526 = vmul.f32 %v2461, %v2490
    %v2527 = vmul.f32 %v2462, %v2490
    %v2528 = vmul.f32 %v2463, %v2490
    %v2529 = vmul.f32 %v2464, %v2490
    %v2530 = vmul.f32 %v2465, %v2490
    %v2531 = vmul.f32 %v2466, %v2490
    %v2532 = vmul.f32 %v2467, %v2490
    %v2533 = vmul.f32 %v2468, %v2490
    %v2534 = vmul.f32 %v2469, %v2490
    %v2535 = vmul.f32 %v2470, %v2490
    %v2536 = vmul.f32 %v2471, %v2490
    %v2537 = vmul.f32 %v2472, %v2490
    %v2538 = vmul.f32 %v2473, %v2490
    %v2539 = vmul.f32 %v2474, %v2490
    %v2540 = vmul.f32 %v2475, %v2490
    %v2541 = vmul.f32 %v2476, %v2490
    %v2542 = vmul.f32 %v2477, %v2490
    %v2543 = vmul.f32 %v2478, %v2490
    %v2544 = vmul.f32 %v2479, %v2490
    %v2545 = vmul.f32 %v2480, %v2490
    %v2546 = vmul.f32 %v2481, %v2490
    %v2547 = vmul.f32 %v2482, %v2490
    %v2548 = vmul.f32 %v2483, %v2490
    %v2549 = vmul.f32 %v2484, %v2490
    %v2550 = vmul.f32 %v2485, %v2490
    %v2551 = vmul.f32 %v2486, %v2490
    %v2552 = vmul.f32 %v2487, %v2490
    %v2553 = vmul.f32 %v2488, %v2490
    %v2554 = vmul.f32 %v2489, %v2490
    %v2555 = vadd.f32 %v2362, %v2491
    %v2556 = vadd.f32 %v2363, %v2492
    %v2557 = vadd.f32 %v2364, %v2493
    %v2558 = vadd.f32 %v2365, %v2494
    %v2559 = vadd.f32 %v2366, %v2495
    %v2560 = vadd.f32 %v2367, %v2496
    %v2561 = vadd.f32 %v2368, %v2497
    %v2562 = vadd.f32 %v2369, %v2498
    %v2563 = vadd.f32 %v2370, %v2499
    %v2564 = vadd.f32 %v2371, %v2500
    %v2565 = vadd.f32 %v2372, %v2501
    %v2566 = vadd.f32 %v2373, %v2502
    %v2567 = vadd.f32 %v2374, %v2503
    %v2568 = vadd.f32 %v2375, %v2504
    %v2569 = vadd.f32 %v2376, %v2505
    %v2570 = vadd.f32 %v2377, %v2506
    %v2571 = vadd.f32 %v2378, %v2507
    %v2572 = vadd.f32 %v2379, %v2508
    %v2573 = vadd.f32 %v2380, %v2509
    %v2574 = vadd.f32 %v2381, %v2510
    %v2575 = vadd.f32 %v2382, %v2511
    %v2576 = vadd.f32 %v2383, %v2512
    %v2577 = vadd.f32 %v2384, %v2513
    %v2578 = vadd.f32 %v2385, %v2514
    %v2579 = vadd.f32 %v2386, %v2515
    %v2580 = vadd.f32 %v2387, %v2516
    %v2581 = vadd.f32 %v2388, %v2517
    %v2582 = vadd.f32 %v2389, %v2518
    %v2583 = vadd.f32 %v2390, %v2519
    %v2584 = vadd.f32 %v2391, %v2520
    %v2585 = vadd.f32 %v2392, %v2521
    %v2586 = vadd.f32 %v2393, %v2522
    %v2587 = vadd.f32 %v2394, %v2523
    %v2588 = vadd.f32 %v2395, %v2524
    %v2589 = vadd.f32 %v2396, %v2525
    %v2590 = vadd.f32 %v2397, %v2526
    %v2591 = vadd.f32 %v2398, %v2527
    %v2592 = vadd.f32 %v2399, %v2528
    %v2593 = vadd.f32 %v2400, %v2529
    %v2594 = vadd.f32 %v2401, %v2530
    %v2595 = vadd.f32 %v2402, %v2531
    %v2596 = vadd.f32 %v2403, %v2532
    %v2597 = vadd.f32 %v2404, %v2533
    %v2598 = vadd.f32 %v2405, %v2534
    %v2599 = vadd.f32 %v2406, %v2535
    %v2600 = vadd.f32 %v2407, %v2536
    %v2601 = vadd.f32 %v2408, %v2537
    %v2602 = vadd.f32 %v2409, %v2538
    %v2603 = vadd.f32 %v2410, %v2539
    %v2604 = vadd.f32 %v2411, %v2540
    %v2605 = vadd.f32 %v2412, %v2541
    %v2606 = vadd.f32 %v2413, %v2542
    %v2607 = vadd.f32 %v2414, %v2543
    %v2608 = vadd.f32 %v2415, %v2544
    %v2609 = vadd.f32 %v2416, %v2545
    %v2610 = vadd.f32 %v2417, %v2546
    %v2611 = vadd.f32 %v2418, %v2547
    %v2612 = vadd.f32 %v2419, %v2548
    %v2613 = vadd.f32 %v2420, %v2549
    %v2614 = vadd.f32 %v2421, %v2550
    %v2615 = vadd.f32 %v2422, %v2551
    %v2616 = vadd.f32 %v2423, %v2552
    %v2617 = vadd.f32 %v2424, %v2553
    %v2618 = vadd.f32 %v2425, %v2554
    %v2619 = vld [vmem:[%s2] sm:$0x1]
    %v2621 = vperm.slane %v2619, 0
    %v2623 = vmul.f32 %v2555, %v2621
    %v2624 = vmul.f32 %v2556, %v2621
    %v2625 = vmul.f32 %v2557, %v2621
    %v2626 = vmul.f32 %v2558, %v2621
    %v2627 = vmul.f32 %v2559, %v2621
    %v2628 = vmul.f32 %v2560, %v2621
    %v2629 = vmul.f32 %v2561, %v2621
    %v2630 = vmul.f32 %v2562, %v2621
    %v2631 = vmul.f32 %v2563, %v2621
    %v2632 = vmul.f32 %v2564, %v2621
    %v2633 = vmul.f32 %v2565, %v2621
    %v2634 = vmul.f32 %v2566, %v2621
    %v2635 = vmul.f32 %v2567, %v2621
    %v2636 = vmul.f32 %v2568, %v2621
    %v2637 = vmul.f32 %v2569, %v2621
    %v2638 = vmul.f32 %v2570, %v2621
    %v2639 = vmul.f32 %v2571, %v2621
    %v2640 = vmul.f32 %v2572, %v2621
    %v2641 = vmul.f32 %v2573, %v2621
    %v2642 = vmul.f32 %v2574, %v2621
    %v2643 = vmul.f32 %v2575, %v2621
    %v2644 = vmul.f32 %v2576, %v2621
    %v2645 = vmul.f32 %v2577, %v2621
    %v2646 = vmul.f32 %v2578, %v2621
    %v2647 = vmul.f32 %v2579, %v2621
    %v2648 = vmul.f32 %v2580, %v2621
    %v2649 = vmul.f32 %v2581, %v2621
    %v2650 = vmul.f32 %v2582, %v2621
    %v2651 = vmul.f32 %v2583, %v2621
    %v2652 = vmul.f32 %v2584, %v2621
    %v2653 = vmul.f32 %v2585, %v2621
    %v2654 = vmul.f32 %v2586, %v2621
    %v2655 = vmul.f32 %v2587, %v2621
    %v2656 = vmul.f32 %v2588, %v2621
    %v2657 = vmul.f32 %v2589, %v2621
    %v2658 = vmul.f32 %v2590, %v2621
    %v2659 = vmul.f32 %v2591, %v2621
    %v2660 = vmul.f32 %v2592, %v2621
    %v2661 = vmul.f32 %v2593, %v2621
    %v2662 = vmul.f32 %v2594, %v2621
    %v2663 = vmul.f32 %v2595, %v2621
    %v2664 = vmul.f32 %v2596, %v2621
    %v2665 = vmul.f32 %v2597, %v2621
    %v2666 = vmul.f32 %v2598, %v2621
    %v2667 = vmul.f32 %v2599, %v2621
    %v2668 = vmul.f32 %v2600, %v2621
    %v2669 = vmul.f32 %v2601, %v2621
    %v2670 = vmul.f32 %v2602, %v2621
    %v2671 = vmul.f32 %v2603, %v2621
    %v2672 = vmul.f32 %v2604, %v2621
    %v2673 = vmul.f32 %v2605, %v2621
    %v2674 = vmul.f32 %v2606, %v2621
    %v2675 = vmul.f32 %v2607, %v2621
    %v2676 = vmul.f32 %v2608, %v2621
    %v2677 = vmul.f32 %v2609, %v2621
    %v2678 = vmul.f32 %v2610, %v2621
    %v2679 = vmul.f32 %v2611, %v2621
    %v2680 = vmul.f32 %v2612, %v2621
    %v2681 = vmul.f32 %v2613, %v2621
    %v2682 = vmul.f32 %v2614, %v2621
    %v2683 = vmul.f32 %v2615, %v2621
    %v2684 = vmul.f32 %v2616, %v2621
    %v2685 = vmul.f32 %v2617, %v2621
    %v2686 = vmul.f32 %v2618, %v2621
    %v2687 = vld [vmem:[%s3] sm:$0x1]
    %v2689 = vperm.slane %v2687, 0
    %v2691 = vadd.f32 %v2623, %v2689
    %v2692 = vadd.f32 %v2624, %v2689
    %v2693 = vadd.f32 %v2625, %v2689
    %v2694 = vadd.f32 %v2626, %v2689
    %v2695 = vadd.f32 %v2627, %v2689
    %v2696 = vadd.f32 %v2628, %v2689
    %v2697 = vadd.f32 %v2629, %v2689
    %v2698 = vadd.f32 %v2630, %v2689
    %v2699 = vadd.f32 %v2631, %v2689
    %v2700 = vadd.f32 %v2632, %v2689
    %v2701 = vadd.f32 %v2633, %v2689
    %v2702 = vadd.f32 %v2634, %v2689
    %v2703 = vadd.f32 %v2635, %v2689
    %v2704 = vadd.f32 %v2636, %v2689
    %v2705 = vadd.f32 %v2637, %v2689
    %v2706 = vadd.f32 %v2638, %v2689
    %v2707 = vadd.f32 %v2639, %v2689
    %v2708 = vadd.f32 %v2640, %v2689
    %v2709 = vadd.f32 %v2641, %v2689
    %v2710 = vadd.f32 %v2642, %v2689
    %v2711 = vadd.f32 %v2643, %v2689
    %v2712 = vadd.f32 %v2644, %v2689
    %v2713 = vadd.f32 %v2645, %v2689
    %v2714 = vadd.f32 %v2646, %v2689
    %v2715 = vadd.f32 %v2647, %v2689
    %v2716 = vadd.f32 %v2648, %v2689
    %v2717 = vadd.f32 %v2649, %v2689
    %v2718 = vadd.f32 %v2650, %v2689
    %v2719 = vadd.f32 %v2651, %v2689
    %v2720 = vadd.f32 %v2652, %v2689
    %v2721 = vadd.f32 %v2653, %v2689
    %v2722 = vadd.f32 %v2654, %v2689
    %v2723 = vadd.f32 %v2655, %v2689
    %v2724 = vadd.f32 %v2656, %v2689
    %v2725 = vadd.f32 %v2657, %v2689
    %v2726 = vadd.f32 %v2658, %v2689
    %v2727 = vadd.f32 %v2659, %v2689
    %v2728 = vadd.f32 %v2660, %v2689
    %v2729 = vadd.f32 %v2661, %v2689
    %v2730 = vadd.f32 %v2662, %v2689
    %v2731 = vadd.f32 %v2663, %v2689
    %v2732 = vadd.f32 %v2664, %v2689
    %v2733 = vadd.f32 %v2665, %v2689
    %v2734 = vadd.f32 %v2666, %v2689
    %v2735 = vadd.f32 %v2667, %v2689
    %v2736 = vadd.f32 %v2668, %v2689
    %v2737 = vadd.f32 %v2669, %v2689
    %v2738 = vadd.f32 %v2670, %v2689
    %v2739 = vadd.f32 %v2671, %v2689
    %v2740 = vadd.f32 %v2672, %v2689
    %v2741 = vadd.f32 %v2673, %v2689
    %v2742 = vadd.f32 %v2674, %v2689
    %v2743 = vadd.f32 %v2675, %v2689
    %v2744 = vadd.f32 %v2676, %v2689
    %v2745 = vadd.f32 %v2677, %v2689
    %v2746 = vadd.f32 %v2678, %v2689
    %v2747 = vadd.f32 %v2679, %v2689
    %v2748 = vadd.f32 %v2680, %v2689
    %v2749 = vadd.f32 %v2681, %v2689
    %v2750 = vadd.f32 %v2682, %v2689
    %v2751 = vadd.f32 %v2683, %v2689
    %v2752 = vadd.f32 %v2684, %v2689
    %v2753 = vadd.f32 %v2685, %v2689
    %v2754 = vadd.f32 %v2686, %v2689
    %v2755 = vld [vmem:[%s4] sm:$0xff]
    %v2756 = vld [vmem:[%s4 + $0x8] sm:$0xff]
    %v2757 = vld [vmem:[%s4 + $0x10] sm:$0xff]
    %v2758 = vld [vmem:[%s4 + $0x18] sm:$0xff]
    %v2759 = vld [vmem:[%s4 + $0x20] sm:$0xff]
    %v2760 = vld [vmem:[%s4 + $0x28] sm:$0xff]
    %v2761 = vld [vmem:[%s4 + $0x30] sm:$0xff]
    %v2762 = vld [vmem:[%s4 + $0x38] sm:$0xff]
    %v2763 = vld [vmem:[%s4 + $0x40] sm:$0xff]
    %v2764 = vld [vmem:[%s4 + $0x48] sm:$0xff]
    %v2765 = vld [vmem:[%s4 + $0x50] sm:$0xff]
    %v2766 = vld [vmem:[%s4 + $0x58] sm:$0xff]
    %v2767 = vld [vmem:[%s4 + $0x60] sm:$0xff]
    %v2768 = vld [vmem:[%s4 + $0x68] sm:$0xff]
    %v2769 = vld [vmem:[%s4 + $0x70] sm:$0xff]
    %v2770 = vld [vmem:[%s4 + $0x78] sm:$0xff]
    %v2771 = vld [vmem:[%s4 + $0x80] sm:$0xff]
    %v2772 = vld [vmem:[%s4 + $0x88] sm:$0xff]
    %v2773 = vld [vmem:[%s4 + $0x90] sm:$0xff]
    %v2774 = vld [vmem:[%s4 + $0x98] sm:$0xff]
    %v2775 = vld [vmem:[%s4 + $0xa0] sm:$0xff]
    %v2776 = vld [vmem:[%s4 + $0xa8] sm:$0xff]
    %v2777 = vld [vmem:[%s4 + $0xb0] sm:$0xff]
    %v2778 = vld [vmem:[%s4 + $0xb8] sm:$0xff]
    %v2779 = vld [vmem:[%s4 + $0xc0] sm:$0xff]
    %v2780 = vld [vmem:[%s4 + $0xc8] sm:$0xff]
    %v2781 = vld [vmem:[%s4 + $0xd0] sm:$0xff]
    %v2783 = vsel %vm691, %v2691, 0
    %v2786 = vsel %vm691, %v2692, 0
    %v2789 = vsel %vm691, %v2693, 0
    %v2792 = vsel %vm691, %v2694, 0
    %v2795 = vsel %vm691, %v2695, 0
    %v2798 = vsel %vm691, %v2696, 0
    %v2801 = vsel %vm691, %v2697, 0
    %v2804 = vsel %vm691, %v2698, 0
    %v2807 = vsel %vm691, %v2699, 0
    %v2810 = vsel %vm691, %v2700, 0
    %v2813 = vsel %vm691, %v2701, 0
    %v2816 = vsel %vm691, %v2702, 0
    %v2819 = vsel %vm691, %v2703, 0
    %v2822 = vsel %vm691, %v2704, 0
    %v2825 = vsel %vm691, %v2705, 0
    %v2828 = vsel %vm691, %v2706, 0
    %v2831 = vsel %vm691, %v2707, 0
    %v2834 = vsel %vm691, %v2708, 0
    %v2837 = vsel %vm691, %v2709, 0
    %v2840 = vsel %vm691, %v2710, 0
    %v2843 = vsel %vm691, %v2711, 0
    %v2846 = vsel %vm691, %v2712, 0
    %v2849 = vsel %vm691, %v2713, 0
    %v2852 = vsel %vm691, %v2714, 0
    %v2855 = vsel %vm691, %v2715, 0
    %v2858 = vsel %vm691, %v2716, 0
    %v2861 = vsel %vm691, %v2717, 0
    %v2864 = vsel %vm691, %v2718, 0
    %v2867 = vsel %vm691, %v2719, 0
    %v2870 = vsel %vm691, %v2720, 0
    %v2873 = vsel %vm691, %v2721, 0
    %v2876 = vsel %vm691, %v2722, 0
    %v2879 = vsel %vm691, %v2723, 0
    %v2882 = vsel %vm691, %v2724, 0
    %v2885 = vsel %vm691, %v2725, 0
    %v2888 = vsel %vm691, %v2726, 0
    %v2891 = vsel %vm691, %v2727, 0
    %v2894 = vsel %vm691, %v2728, 0
    %v2897 = vsel %vm691, %v2729, 0
    %v2900 = vsel %vm691, %v2730, 0
    %v2903 = vsel %vm691, %v2731, 0
    %v2906 = vsel %vm691, %v2732, 0
    %v2909 = vsel %vm691, %v2733, 0
    %v2912 = vsel %vm691, %v2734, 0
    %v2915 = vsel %vm691, %v2735, 0
    %v2918 = vsel %vm691, %v2736, 0
    %v2921 = vsel %vm691, %v2737, 0
    %v2924 = vsel %vm691, %v2738, 0
    %v2927 = vsel %vm691, %v2739, 0
    %v2930 = vsel %vm691, %v2740, 0
    %v2933 = vsel %vm691, %v2741, 0
    %v2936 = vsel %vm691, %v2742, 0
    %v2939 = vsel %vm691, %v2743, 0
    %v2942 = vsel %vm691, %v2744, 0
    %v2945 = vsel %vm691, %v2745, 0
    %v2948 = vsel %vm691, %v2746, 0
    %v2951 = vsel %vm691, %v2747, 0
    %v2954 = vsel %vm691, %v2748, 0
    %v2957 = vsel %vm691, %v2749, 0
    %v2960 = vsel %vm691, %v2750, 0
    %v2963 = vsel %vm691, %v2751, 0
    %v2966 = vsel %vm691, %v2752, 0
    %v2969 = vsel %vm691, %v2753, 0
    %v2972 = vsel %vm691, %v2754, 0
    %2974 = vmatpush.msra.mxu0 0.0
    %2975 = vmatpush.msra.mxu0 0.0
    %2976 = vmatpush.msra.mxu0 0.0
    %2977 = vmatpush.msra.mxu0 0.0
    %2978 = vmatpush.msra.mxu0 0.0
    %2979 = vmatpush.msra.mxu0 0.0
    %2980 = vmatpush.msra.mxu0 0.0
    %2981 = vmatpush.msra.mxu0 %v2779
    %2982 = vmatpush.msra.mxu0 %v2776
    %2983 = vmatpush.msra.mxu0 %v2773
    %2984 = vmatpush.msra.mxu0 %v2770
    %2985 = vmatpush.msra.mxu0 %v2767
    %2986 = vmatpush.msra.mxu0 %v2764
    %2987 = vmatpush.msra.mxu0 %v2761
    %2988 = vmatpush.msra.mxu0 %v2758
    %2989 = vmatpush.msra.mxu0 %v2755
    %2990 = vmatmul.f32.gmra.mxu0 %v2783
    %v2991 = vpop.f32.mrf.mxu0
    %v2992 = vadd.f32 0.0, %v2991
    %2993 = vmatmul.f32.gmra.mxu0 %v2786
    %v2994 = vpop.f32.mrf.mxu0
    %v2995 = vadd.f32 0.0, %v2994
    %2996 = vmatmul.f32.gmra.mxu0 %v2789
    %v2997 = vpop.f32.mrf.mxu0
    %v2998 = vadd.f32 0.0, %v2997
    %2999 = vmatmul.f32.gmra.mxu0 %v2792
    %v3000 = vpop.f32.mrf.mxu0
    %v3001 = vadd.f32 0.0, %v3000
    %3002 = vmatmul.f32.gmra.mxu0 %v2795
    %v3003 = vpop.f32.mrf.mxu0
    %v3004 = vadd.f32 0.0, %v3003
    %3005 = vmatmul.f32.gmra.mxu0 %v2798
    %v3006 = vpop.f32.mrf.mxu0
    %v3007 = vadd.f32 0.0, %v3006
    %3008 = vmatmul.f32.gmra.mxu0 %v2801
    %v3009 = vpop.f32.mrf.mxu0
    %v3010 = vadd.f32 0.0, %v3009
    %3011 = vmatmul.f32.gmra.mxu0 %v2804
    %v3012 = vpop.f32.mrf.mxu0
    %v3013 = vadd.f32 0.0, %v3012
    %3014 = vmatmul.f32.gmra.mxu0 %v2807
    %v3015 = vpop.f32.mrf.mxu0
    %v3016 = vadd.f32 0.0, %v3015
    %3017 = vmatmul.f32.gmra.mxu0 %v2810
    %v3018 = vpop.f32.mrf.mxu0
    %v3019 = vadd.f32 0.0, %v3018
    %3020 = vmatmul.f32.gmra.mxu0 %v2813
    %v3021 = vpop.f32.mrf.mxu0
    %v3022 = vadd.f32 0.0, %v3021
    %3023 = vmatmul.f32.gmra.mxu0 %v2816
    %v3024 = vpop.f32.mrf.mxu0
    %v3025 = vadd.f32 0.0, %v3024
    %3026 = vmatmul.f32.gmra.mxu0 %v2819
    %v3027 = vpop.f32.mrf.mxu0
    %v3028 = vadd.f32 0.0, %v3027
    %3029 = vmatmul.f32.gmra.mxu0 %v2822
    %v3030 = vpop.f32.mrf.mxu0
    %v3031 = vadd.f32 0.0, %v3030
    %3032 = vmatmul.f32.gmra.mxu0 %v2825
    %v3033 = vpop.f32.mrf.mxu0
    %v3034 = vadd.f32 0.0, %v3033
    %3035 = vmatmul.f32.gmra.mxu0 %v2828
    %v3036 = vpop.f32.mrf.mxu0
    %v3037 = vadd.f32 0.0, %v3036
    %3038 = vmatmul.f32.gmra.mxu0 %v2831
    %v3039 = vpop.f32.mrf.mxu0
    %v3040 = vadd.f32 0.0, %v3039
    %3041 = vmatmul.f32.gmra.mxu0 %v2834
    %v3042 = vpop.f32.mrf.mxu0
    %v3043 = vadd.f32 0.0, %v3042
    %3044 = vmatmul.f32.gmra.mxu0 %v2837
    %v3045 = vpop.f32.mrf.mxu0
    %v3046 = vadd.f32 0.0, %v3045
    %3047 = vmatmul.f32.gmra.mxu0 %v2840
    %v3048 = vpop.f32.mrf.mxu0
    %v3049 = vadd.f32 0.0, %v3048
    %3050 = vmatmul.f32.gmra.mxu0 %v2843
    %v3051 = vpop.f32.mrf.mxu0
    %v3052 = vadd.f32 0.0, %v3051
    %3053 = vmatmul.f32.gmra.mxu0 %v2846
    %v3054 = vpop.f32.mrf.mxu0
    %v3055 = vadd.f32 0.0, %v3054
    %3056 = vmatmul.f32.gmra.mxu0 %v2849
    %v3057 = vpop.f32.mrf.mxu0
    %v3058 = vadd.f32 0.0, %v3057
    %3059 = vmatmul.f32.gmra.mxu0 %v2852
    %v3060 = vpop.f32.mrf.mxu0
    %v3061 = vadd.f32 0.0, %v3060
    %3062 = vmatmul.f32.gmra.mxu0 %v2855
    %v3063 = vpop.f32.mrf.mxu0
    %v3064 = vadd.f32 0.0, %v3063
    %3065 = vmatmul.f32.gmra.mxu0 %v2858
    %v3066 = vpop.f32.mrf.mxu0
    %v3067 = vadd.f32 0.0, %v3066
    %3068 = vmatmul.f32.gmra.mxu0 %v2861
    %v3069 = vpop.f32.mrf.mxu0
    %v3070 = vadd.f32 0.0, %v3069
    %3071 = vmatmul.f32.gmra.mxu0 %v2864
    %v3072 = vpop.f32.mrf.mxu0
    %v3073 = vadd.f32 0.0, %v3072
    %3074 = vmatmul.f32.gmra.mxu0 %v2867
    %v3075 = vpop.f32.mrf.mxu0
    %v3076 = vadd.f32 0.0, %v3075
    %3077 = vmatmul.f32.gmra.mxu0 %v2870
    %v3078 = vpop.f32.mrf.mxu0
    %v3079 = vadd.f32 0.0, %v3078
    %3080 = vmatmul.f32.gmra.mxu0 %v2873
    %v3081 = vpop.f32.mrf.mxu0
    %v3082 = vadd.f32 0.0, %v3081
    %3083 = vmatmul.f32.gmra.mxu0 %v2876
    %v3084 = vpop.f32.mrf.mxu0
    %v3085 = vadd.f32 0.0, %v3084
    %3086 = vmatmul.f32.gmra.mxu0 %v2879
    %v3087 = vpop.f32.mrf.mxu0
    %v3088 = vadd.f32 0.0, %v3087
    %3089 = vmatmul.f32.gmra.mxu0 %v2882
    %v3090 = vpop.f32.mrf.mxu0
    %v3091 = vadd.f32 0.0, %v3090
    %3092 = vmatmul.f32.gmra.mxu0 %v2885
    %v3093 = vpop.f32.mrf.mxu0
    %v3094 = vadd.f32 0.0, %v3093
    %3095 = vmatmul.f32.gmra.mxu0 %v2888
    %v3096 = vpop.f32.mrf.mxu0
    %v3097 = vadd.f32 0.0, %v3096
    %3098 = vmatmul.f32.gmra.mxu0 %v2891
    %v3099 = vpop.f32.mrf.mxu0
    %v3100 = vadd.f32 0.0, %v3099
    %3101 = vmatmul.f32.gmra.mxu0 %v2894
    %v3102 = vpop.f32.mrf.mxu0
    %v3103 = vadd.f32 0.0, %v3102
    %3104 = vmatmul.f32.gmra.mxu0 %v2897
    %v3105 = vpop.f32.mrf.mxu0
    %v3106 = vadd.f32 0.0, %v3105
    %3107 = vmatmul.f32.gmra.mxu0 %v2900
    %v3108 = vpop.f32.mrf.mxu0
    %v3109 = vadd.f32 0.0, %v3108
    %3110 = vmatmul.f32.gmra.mxu0 %v2903
    %v3111 = vpop.f32.mrf.mxu0
    %v3112 = vadd.f32 0.0, %v3111
    %3113 = vmatmul.f32.gmra.mxu0 %v2906
    %v3114 = vpop.f32.mrf.mxu0
    %v3115 = vadd.f32 0.0, %v3114
    %3116 = vmatmul.f32.gmra.mxu0 %v2909
    %v3117 = vpop.f32.mrf.mxu0
    %v3118 = vadd.f32 0.0, %v3117
    %3119 = vmatmul.f32.gmra.mxu0 %v2912
    %v3120 = vpop.f32.mrf.mxu0
    %v3121 = vadd.f32 0.0, %v3120
    %3122 = vmatmul.f32.gmra.mxu0 %v2915
    %v3123 = vpop.f32.mrf.mxu0
    %v3124 = vadd.f32 0.0, %v3123
    %3125 = vmatmul.f32.gmra.mxu0 %v2918
    %v3126 = vpop.f32.mrf.mxu0
    %v3127 = vadd.f32 0.0, %v3126
    %3128 = vmatmul.f32.gmra.mxu0 %v2921
    %v3129 = vpop.f32.mrf.mxu0
    %v3130 = vadd.f32 0.0, %v3129
    %3131 = vmatmul.f32.gmra.mxu0 %v2924
    %v3132 = vpop.f32.mrf.mxu0
    %v3133 = vadd.f32 0.0, %v3132
    %3134 = vmatmul.f32.gmra.mxu0 %v2927
    %v3135 = vpop.f32.mrf.mxu0
    %v3136 = vadd.f32 0.0, %v3135
    %3137 = vmatmul.f32.gmra.mxu0 %v2930
    %v3138 = vpop.f32.mrf.mxu0
    %v3139 = vadd.f32 0.0, %v3138
    %3140 = vmatmul.f32.gmra.mxu0 %v2933
    %v3141 = vpop.f32.mrf.mxu0
    %v3142 = vadd.f32 0.0, %v3141
    %3143 = vmatmul.f32.gmra.mxu0 %v2936
    %v3144 = vpop.f32.mrf.mxu0
    %v3145 = vadd.f32 0.0, %v3144
    %3146 = vmatmul.f32.gmra.mxu0 %v2939
    %v3147 = vpop.f32.mrf.mxu0
    %v3148 = vadd.f32 0.0, %v3147
    %3149 = vmatmul.f32.gmra.mxu0 %v2942
    %v3150 = vpop.f32.mrf.mxu0
    %v3151 = vadd.f32 0.0, %v3150
    %3152 = vmatmul.f32.gmra.mxu0 %v2945
    %v3153 = vpop.f32.mrf.mxu0
    %v3154 = vadd.f32 0.0, %v3153
    %3155 = vmatmul.f32.gmra.mxu0 %v2948
    %v3156 = vpop.f32.mrf.mxu0
    %v3157 = vadd.f32 0.0, %v3156
    %3158 = vmatmul.f32.gmra.mxu0 %v2951
    %v3159 = vpop.f32.mrf.mxu0
    %v3160 = vadd.f32 0.0, %v3159
    %3161 = vmatmul.f32.gmra.mxu0 %v2954
    %v3162 = vpop.f32.mrf.mxu0
    %v3163 = vadd.f32 0.0, %v3162
    %3164 = vmatmul.f32.gmra.mxu0 %v2957
    %v3165 = vpop.f32.mrf.mxu0
    %v3166 = vadd.f32 0.0, %v3165
    %3167 = vmatmul.f32.gmra.mxu0 %v2960
    %v3168 = vpop.f32.mrf.mxu0
    %v3169 = vadd.f32 0.0, %v3168
    %3170 = vmatmul.f32.gmra.mxu0 %v2963
    %v3171 = vpop.f32.mrf.mxu0
    %v3172 = vadd.f32 0.0, %v3171
    %3173 = vmatmul.f32.gmra.mxu0 %v2966
    %v3174 = vpop.f32.mrf.mxu0
    %v3175 = vadd.f32 0.0, %v3174
    %3176 = vmatmul.f32.gmra.mxu0 %v2969
    %v3177 = vpop.f32.mrf.mxu0
    %v3178 = vadd.f32 0.0, %v3177
    %3179 = vmatmul.f32.gmra.mxu0 %v2972
    %v3180 = vpop.f32.mrf.mxu0
    %v3181 = vadd.f32 0.0, %v3180
    %3182 = vdwg.mxu0
    %3183 = vmatpush.msra.mxu0 0.0
    %3184 = vmatpush.msra.mxu0 0.0
    %3185 = vmatpush.msra.mxu0 0.0
    %3186 = vmatpush.msra.mxu0 0.0
    %3187 = vmatpush.msra.mxu0 0.0
    %3188 = vmatpush.msra.mxu0 0.0
    %3189 = vmatpush.msra.mxu0 0.0
    %3190 = vmatpush.msra.mxu0 %v2780
    %3191 = vmatpush.msra.mxu0 %v2777
    %3192 = vmatpush.msra.mxu0 %v2774
    %3193 = vmatpush.msra.mxu0 %v2771
    %3194 = vmatpush.msra.mxu0 %v2768
    %3195 = vmatpush.msra.mxu0 %v2765
    %3196 = vmatpush.msra.mxu0 %v2762
    %3197 = vmatpush.msra.mxu0 %v2759
    %3198 = vmatpush.msra.mxu0 %v2756
    %3199 = vmatmul.f32.gmra.mxu0 %v2783
    %v3200 = vpop.f32.mrf.mxu0
    %v3201 = vadd.f32 0.0, %v3200
    %3202 = vmatmul.f32.gmra.mxu0 %v2786
    %v3203 = vpop.f32.mrf.mxu0
    %v3204 = vadd.f32 0.0, %v3203
    %3205 = vmatmul.f32.gmra.mxu0 %v2789
    %v3206 = vpop.f32.mrf.mxu0
    %v3207 = vadd.f32 0.0, %v3206
    %3208 = vmatmul.f32.gmra.mxu0 %v2792
    %v3209 = vpop.f32.mrf.mxu0
    %v3210 = vadd.f32 0.0, %v3209
    %3211 = vmatmul.f32.gmra.mxu0 %v2795
    %v3212 = vpop.f32.mrf.mxu0
    %v3213 = vadd.f32 0.0, %v3212
    %3214 = vmatmul.f32.gmra.mxu0 %v2798
    %v3215 = vpop.f32.mrf.mxu0
    %v3216 = vadd.f32 0.0, %v3215
    %3217 = vmatmul.f32.gmra.mxu0 %v2801
    %v3218 = vpop.f32.mrf.mxu0
    %v3219 = vadd.f32 0.0, %v3218
    %3220 = vmatmul.f32.gmra.mxu0 %v2804
    %v3221 = vpop.f32.mrf.mxu0
    %v3222 = vadd.f32 0.0, %v3221
    %3223 = vmatmul.f32.gmra.mxu0 %v2807
    %v3224 = vpop.f32.mrf.mxu0
    %v3225 = vadd.f32 0.0, %v3224
    %3226 = vmatmul.f32.gmra.mxu0 %v2810
    %v3227 = vpop.f32.mrf.mxu0
    %v3228 = vadd.f32 0.0, %v3227
    %3229 = vmatmul.f32.gmra.mxu0 %v2813
    %v3230 = vpop.f32.mrf.mxu0
    %v3231 = vadd.f32 0.0, %v3230
    %3232 = vmatmul.f32.gmra.mxu0 %v2816
    %v3233 = vpop.f32.mrf.mxu0
    %v3234 = vadd.f32 0.0, %v3233
    %3235 = vmatmul.f32.gmra.mxu0 %v2819
    %v3236 = vpop.f32.mrf.mxu0
    %v3237 = vadd.f32 0.0, %v3236
    %3238 = vmatmul.f32.gmra.mxu0 %v2822
    %v3239 = vpop.f32.mrf.mxu0
    %v3240 = vadd.f32 0.0, %v3239
    %3241 = vmatmul.f32.gmra.mxu0 %v2825
    %v3242 = vpop.f32.mrf.mxu0
    %v3243 = vadd.f32 0.0, %v3242
    %3244 = vmatmul.f32.gmra.mxu0 %v2828
    %v3245 = vpop.f32.mrf.mxu0
    %v3246 = vadd.f32 0.0, %v3245
    %3247 = vmatmul.f32.gmra.mxu0 %v2831
    %v3248 = vpop.f32.mrf.mxu0
    %v3249 = vadd.f32 0.0, %v3248
    %3250 = vmatmul.f32.gmra.mxu0 %v2834
    %v3251 = vpop.f32.mrf.mxu0
    %v3252 = vadd.f32 0.0, %v3251
    %3253 = vmatmul.f32.gmra.mxu0 %v2837
    %v3254 = vpop.f32.mrf.mxu0
    %v3255 = vadd.f32 0.0, %v3254
    %3256 = vmatmul.f32.gmra.mxu0 %v2840
    %v3257 = vpop.f32.mrf.mxu0
    %v3258 = vadd.f32 0.0, %v3257
    %3259 = vmatmul.f32.gmra.mxu0 %v2843
    %v3260 = vpop.f32.mrf.mxu0
    %v3261 = vadd.f32 0.0, %v3260
    %3262 = vmatmul.f32.gmra.mxu0 %v2846
    %v3263 = vpop.f32.mrf.mxu0
    %v3264 = vadd.f32 0.0, %v3263
    %3265 = vmatmul.f32.gmra.mxu0 %v2849
    %v3266 = vpop.f32.mrf.mxu0
    %v3267 = vadd.f32 0.0, %v3266
    %3268 = vmatmul.f32.gmra.mxu0 %v2852
    %v3269 = vpop.f32.mrf.mxu0
    %v3270 = vadd.f32 0.0, %v3269
    %3271 = vmatmul.f32.gmra.mxu0 %v2855
    %v3272 = vpop.f32.mrf.mxu0
    %v3273 = vadd.f32 0.0, %v3272
    %3274 = vmatmul.f32.gmra.mxu0 %v2858
    %v3275 = vpop.f32.mrf.mxu0
    %v3276 = vadd.f32 0.0, %v3275
    %3277 = vmatmul.f32.gmra.mxu0 %v2861
    %v3278 = vpop.f32.mrf.mxu0
    %v3279 = vadd.f32 0.0, %v3278
    %3280 = vmatmul.f32.gmra.mxu0 %v2864
    %v3281 = vpop.f32.mrf.mxu0
    %v3282 = vadd.f32 0.0, %v3281
    %3283 = vmatmul.f32.gmra.mxu0 %v2867
    %v3284 = vpop.f32.mrf.mxu0
    %v3285 = vadd.f32 0.0, %v3284
    %3286 = vmatmul.f32.gmra.mxu0 %v2870
    %v3287 = vpop.f32.mrf.mxu0
    %v3288 = vadd.f32 0.0, %v3287
    %3289 = vmatmul.f32.gmra.mxu0 %v2873
    %v3290 = vpop.f32.mrf.mxu0
    %v3291 = vadd.f32 0.0, %v3290
    %3292 = vmatmul.f32.gmra.mxu0 %v2876
    %v3293 = vpop.f32.mrf.mxu0
    %v3294 = vadd.f32 0.0, %v3293
    %3295 = vmatmul.f32.gmra.mxu0 %v2879
    %v3296 = vpop.f32.mrf.mxu0
    %v3297 = vadd.f32 0.0, %v3296
    %3298 = vmatmul.f32.gmra.mxu0 %v2882
    %v3299 = vpop.f32.mrf.mxu0
    %v3300 = vadd.f32 0.0, %v3299
    %3301 = vmatmul.f32.gmra.mxu0 %v2885
    %v3302 = vpop.f32.mrf.mxu0
    %v3303 = vadd.f32 0.0, %v3302
    %3304 = vmatmul.f32.gmra.mxu0 %v2888
    %v3305 = vpop.f32.mrf.mxu0
    %v3306 = vadd.f32 0.0, %v3305
    %3307 = vmatmul.f32.gmra.mxu0 %v2891
    %v3308 = vpop.f32.mrf.mxu0
    %v3309 = vadd.f32 0.0, %v3308
    %3310 = vmatmul.f32.gmra.mxu0 %v2894
    %v3311 = vpop.f32.mrf.mxu0
    %v3312 = vadd.f32 0.0, %v3311
    %3313 = vmatmul.f32.gmra.mxu0 %v2897
    %v3314 = vpop.f32.mrf.mxu0
    %v3315 = vadd.f32 0.0, %v3314
    %3316 = vmatmul.f32.gmra.mxu0 %v2900
    %v3317 = vpop.f32.mrf.mxu0
    %v3318 = vadd.f32 0.0, %v3317
    %3319 = vmatmul.f32.gmra.mxu0 %v2903
    %v3320 = vpop.f32.mrf.mxu0
    %v3321 = vadd.f32 0.0, %v3320
    %3322 = vmatmul.f32.gmra.mxu0 %v2906
    %v3323 = vpop.f32.mrf.mxu0
    %v3324 = vadd.f32 0.0, %v3323
    %3325 = vmatmul.f32.gmra.mxu0 %v2909
    %v3326 = vpop.f32.mrf.mxu0
    %v3327 = vadd.f32 0.0, %v3326
    %3328 = vmatmul.f32.gmra.mxu0 %v2912
    %v3329 = vpop.f32.mrf.mxu0
    %v3330 = vadd.f32 0.0, %v3329
    %3331 = vmatmul.f32.gmra.mxu0 %v2915
    %v3332 = vpop.f32.mrf.mxu0
    %v3333 = vadd.f32 0.0, %v3332
    %3334 = vmatmul.f32.gmra.mxu0 %v2918
    %v3335 = vpop.f32.mrf.mxu0
    %v3336 = vadd.f32 0.0, %v3335
    %3337 = vmatmul.f32.gmra.mxu0 %v2921
    %v3338 = vpop.f32.mrf.mxu0
    %v3339 = vadd.f32 0.0, %v3338
    %3340 = vmatmul.f32.gmra.mxu0 %v2924
    %v3341 = vpop.f32.mrf.mxu0
    %v3342 = vadd.f32 0.0, %v3341
    %3343 = vmatmul.f32.gmra.mxu0 %v2927
    %v3344 = vpop.f32.mrf.mxu0
    %v3345 = vadd.f32 0.0, %v3344
    %3346 = vmatmul.f32.gmra.mxu0 %v2930
    %v3347 = vpop.f32.mrf.mxu0
    %v3348 = vadd.f32 0.0, %v3347
    %3349 = vmatmul.f32.gmra.mxu0 %v2933
    %v3350 = vpop.f32.mrf.mxu0
    %v3351 = vadd.f32 0.0, %v3350
    %3352 = vmatmul.f32.gmra.mxu0 %v2936
    %v3353 = vpop.f32.mrf.mxu0
    %v3354 = vadd.f32 0.0, %v3353
    %3355 = vmatmul.f32.gmra.mxu0 %v2939
    %v3356 = vpop.f32.mrf.mxu0
    %v3357 = vadd.f32 0.0, %v3356
    %3358 = vmatmul.f32.gmra.mxu0 %v2942
    %v3359 = vpop.f32.mrf.mxu0
    %v3360 = vadd.f32 0.0, %v3359
    %3361 = vmatmul.f32.gmra.mxu0 %v2945
    %v3362 = vpop.f32.mrf.mxu0
    %v3363 = vadd.f32 0.0, %v3362
    %3364 = vmatmul.f32.gmra.mxu0 %v2948
    %v3365 = vpop.f32.mrf.mxu0
    %v3366 = vadd.f32 0.0, %v3365
    %3367 = vmatmul.f32.gmra.mxu0 %v2951
    %v3368 = vpop.f32.mrf.mxu0
    %v3369 = vadd.f32 0.0, %v3368
    %3370 = vmatmul.f32.gmra.mxu0 %v2954
    %v3371 = vpop.f32.mrf.mxu0
    %v3372 = vadd.f32 0.0, %v3371
    %3373 = vmatmul.f32.gmra.mxu0 %v2957
    %v3374 = vpop.f32.mrf.mxu0
    %v3375 = vadd.f32 0.0, %v3374
    %3376 = vmatmul.f32.gmra.mxu0 %v2960
    %v3377 = vpop.f32.mrf.mxu0
    %v3378 = vadd.f32 0.0, %v3377
    %3379 = vmatmul.f32.gmra.mxu0 %v2963
    %v3380 = vpop.f32.mrf.mxu0
    %v3381 = vadd.f32 0.0, %v3380
    %3382 = vmatmul.f32.gmra.mxu0 %v2966
    %v3383 = vpop.f32.mrf.mxu0
    %v3384 = vadd.f32 0.0, %v3383
    %3385 = vmatmul.f32.gmra.mxu0 %v2969
    %v3386 = vpop.f32.mrf.mxu0
    %v3387 = vadd.f32 0.0, %v3386
    %3388 = vmatmul.f32.gmra.mxu0 %v2972
    %v3389 = vpop.f32.mrf.mxu0
    %v3390 = vadd.f32 0.0, %v3389
    %3391 = vdwg.mxu0
    %3392 = vmatpush.msra.mxu0 0.0
    %3393 = vmatpush.msra.mxu0 0.0
    %3394 = vmatpush.msra.mxu0 0.0
    %3395 = vmatpush.msra.mxu0 0.0
    %3396 = vmatpush.msra.mxu0 0.0
    %3397 = vmatpush.msra.mxu0 0.0
    %3398 = vmatpush.msra.mxu0 0.0
    %3399 = vmatpush.msra.mxu0 %v2781
    %3400 = vmatpush.msra.mxu0 %v2778
    %3401 = vmatpush.msra.mxu0 %v2775
    %3402 = vmatpush.msra.mxu0 %v2772
    %3403 = vmatpush.msra.mxu0 %v2769
    %3404 = vmatpush.msra.mxu0 %v2766
    %3405 = vmatpush.msra.mxu0 %v2763
    %3406 = vmatpush.msra.mxu0 %v2760
    %3407 = vmatpush.msra.mxu0 %v2757
    %3408 = vmatmul.f32.gmra.mxu0 %v2783
    %v3409 = vpop.f32.mrf.mxu0
    %v3410 = vadd.f32 0.0, %v3409
    %3411 = vmatmul.f32.gmra.mxu0 %v2786
    %v3412 = vpop.f32.mrf.mxu0
    %v3413 = vadd.f32 0.0, %v3412
    %3414 = vmatmul.f32.gmra.mxu0 %v2789
    %v3415 = vpop.f32.mrf.mxu0
    %v3416 = vadd.f32 0.0, %v3415
    %3417 = vmatmul.f32.gmra.mxu0 %v2792
    %v3418 = vpop.f32.mrf.mxu0
    %v3419 = vadd.f32 0.0, %v3418
    %3420 = vmatmul.f32.gmra.mxu0 %v2795
    %v3421 = vpop.f32.mrf.mxu0
    %v3422 = vadd.f32 0.0, %v3421
    %3423 = vmatmul.f32.gmra.mxu0 %v2798
    %v3424 = vpop.f32.mrf.mxu0
    %v3425 = vadd.f32 0.0, %v3424
    %3426 = vmatmul.f32.gmra.mxu0 %v2801
    %v3427 = vpop.f32.mrf.mxu0
    %v3428 = vadd.f32 0.0, %v3427
    %3429 = vmatmul.f32.gmra.mxu0 %v2804
    %v3430 = vpop.f32.mrf.mxu0
    %v3431 = vadd.f32 0.0, %v3430
    %3432 = vmatmul.f32.gmra.mxu0 %v2807
    %v3433 = vpop.f32.mrf.mxu0
    %v3434 = vadd.f32 0.0, %v3433
    %3435 = vmatmul.f32.gmra.mxu0 %v2810
    %v3436 = vpop.f32.mrf.mxu0
    %v3437 = vadd.f32 0.0, %v3436
    %3438 = vmatmul.f32.gmra.mxu0 %v2813
    %v3439 = vpop.f32.mrf.mxu0
    %v3440 = vadd.f32 0.0, %v3439
    %3441 = vmatmul.f32.gmra.mxu0 %v2816
    %v3442 = vpop.f32.mrf.mxu0
    %v3443 = vadd.f32 0.0, %v3442
    %3444 = vmatmul.f32.gmra.mxu0 %v2819
    %v3445 = vpop.f32.mrf.mxu0
    %v3446 = vadd.f32 0.0, %v3445
    %3447 = vmatmul.f32.gmra.mxu0 %v2822
    %v3448 = vpop.f32.mrf.mxu0
    %v3449 = vadd.f32 0.0, %v3448
    %3450 = vmatmul.f32.gmra.mxu0 %v2825
    %v3451 = vpop.f32.mrf.mxu0
    %v3452 = vadd.f32 0.0, %v3451
    %3453 = vmatmul.f32.gmra.mxu0 %v2828
    %v3454 = vpop.f32.mrf.mxu0
    %v3455 = vadd.f32 0.0, %v3454
    %3456 = vmatmul.f32.gmra.mxu0 %v2831
    %v3457 = vpop.f32.mrf.mxu0
    %v3458 = vadd.f32 0.0, %v3457
    %3459 = vmatmul.f32.gmra.mxu0 %v2834
    %v3460 = vpop.f32.mrf.mxu0
    %v3461 = vadd.f32 0.0, %v3460
    %3462 = vmatmul.f32.gmra.mxu0 %v2837
    %v3463 = vpop.f32.mrf.mxu0
    %v3464 = vadd.f32 0.0, %v3463
    %3465 = vmatmul.f32.gmra.mxu0 %v2840
    %v3466 = vpop.f32.mrf.mxu0
    %v3467 = vadd.f32 0.0, %v3466
    %3468 = vmatmul.f32.gmra.mxu0 %v2843
    %v3469 = vpop.f32.mrf.mxu0
    %v3470 = vadd.f32 0.0, %v3469
    %3471 = vmatmul.f32.gmra.mxu0 %v2846
    %v3472 = vpop.f32.mrf.mxu0
    %v3473 = vadd.f32 0.0, %v3472
    %3474 = vmatmul.f32.gmra.mxu0 %v2849
    %v3475 = vpop.f32.mrf.mxu0
    %v3476 = vadd.f32 0.0, %v3475
    %3477 = vmatmul.f32.gmra.mxu0 %v2852
    %v3478 = vpop.f32.mrf.mxu0
    %v3479 = vadd.f32 0.0, %v3478
    %3480 = vmatmul.f32.gmra.mxu0 %v2855
    %v3481 = vpop.f32.mrf.mxu0
    %v3482 = vadd.f32 0.0, %v3481
    %3483 = vmatmul.f32.gmra.mxu0 %v2858
    %v3484 = vpop.f32.mrf.mxu0
    %v3485 = vadd.f32 0.0, %v3484
    %3486 = vmatmul.f32.gmra.mxu0 %v2861
    %v3487 = vpop.f32.mrf.mxu0
    %v3488 = vadd.f32 0.0, %v3487
    %3489 = vmatmul.f32.gmra.mxu0 %v2864
    %v3490 = vpop.f32.mrf.mxu0
    %v3491 = vadd.f32 0.0, %v3490
    %3492 = vmatmul.f32.gmra.mxu0 %v2867
    %v3493 = vpop.f32.mrf.mxu0
    %v3494 = vadd.f32 0.0, %v3493
    %3495 = vmatmul.f32.gmra.mxu0 %v2870
    %v3496 = vpop.f32.mrf.mxu0
    %v3497 = vadd.f32 0.0, %v3496
    %3498 = vmatmul.f32.gmra.mxu0 %v2873
    %v3499 = vpop.f32.mrf.mxu0
    %v3500 = vadd.f32 0.0, %v3499
    %3501 = vmatmul.f32.gmra.mxu0 %v2876
    %v3502 = vpop.f32.mrf.mxu0
    %v3503 = vadd.f32 0.0, %v3502
    %3504 = vmatmul.f32.gmra.mxu0 %v2879
    %v3505 = vpop.f32.mrf.mxu0
    %v3506 = vadd.f32 0.0, %v3505
    %3507 = vmatmul.f32.gmra.mxu0 %v2882
    %v3508 = vpop.f32.mrf.mxu0
    %v3509 = vadd.f32 0.0, %v3508
    %3510 = vmatmul.f32.gmra.mxu0 %v2885
    %v3511 = vpop.f32.mrf.mxu0
    %v3512 = vadd.f32 0.0, %v3511
    %3513 = vmatmul.f32.gmra.mxu0 %v2888
    %v3514 = vpop.f32.mrf.mxu0
    %v3515 = vadd.f32 0.0, %v3514
    %3516 = vmatmul.f32.gmra.mxu0 %v2891
    %v3517 = vpop.f32.mrf.mxu0
    %v3518 = vadd.f32 0.0, %v3517
    %3519 = vmatmul.f32.gmra.mxu0 %v2894
    %v3520 = vpop.f32.mrf.mxu0
    %v3521 = vadd.f32 0.0, %v3520
    %3522 = vmatmul.f32.gmra.mxu0 %v2897
    %v3523 = vpop.f32.mrf.mxu0
    %v3524 = vadd.f32 0.0, %v3523
    %3525 = vmatmul.f32.gmra.mxu0 %v2900
    %v3526 = vpop.f32.mrf.mxu0
    %v3527 = vadd.f32 0.0, %v3526
    %3528 = vmatmul.f32.gmra.mxu0 %v2903
    %v3529 = vpop.f32.mrf.mxu0
    %v3530 = vadd.f32 0.0, %v3529
    %3531 = vmatmul.f32.gmra.mxu0 %v2906
    %v3532 = vpop.f32.mrf.mxu0
    %v3533 = vadd.f32 0.0, %v3532
    %3534 = vmatmul.f32.gmra.mxu0 %v2909
    %v3535 = vpop.f32.mrf.mxu0
    %v3536 = vadd.f32 0.0, %v3535
    %3537 = vmatmul.f32.gmra.mxu0 %v2912
    %v3538 = vpop.f32.mrf.mxu0
    %v3539 = vadd.f32 0.0, %v3538
    %3540 = vmatmul.f32.gmra.mxu0 %v2915
    %v3541 = vpop.f32.mrf.mxu0
    %v3542 = vadd.f32 0.0, %v3541
    %3543 = vmatmul.f32.gmra.mxu0 %v2918
    %v3544 = vpop.f32.mrf.mxu0
    %v3545 = vadd.f32 0.0, %v3544
    %3546 = vmatmul.f32.gmra.mxu0 %v2921
    %v3547 = vpop.f32.mrf.mxu0
    %v3548 = vadd.f32 0.0, %v3547
    %3549 = vmatmul.f32.gmra.mxu0 %v2924
    %v3550 = vpop.f32.mrf.mxu0
    %v3551 = vadd.f32 0.0, %v3550
    %3552 = vmatmul.f32.gmra.mxu0 %v2927
    %v3553 = vpop.f32.mrf.mxu0
    %v3554 = vadd.f32 0.0, %v3553
    %3555 = vmatmul.f32.gmra.mxu0 %v2930
    %v3556 = vpop.f32.mrf.mxu0
    %v3557 = vadd.f32 0.0, %v3556
    %3558 = vmatmul.f32.gmra.mxu0 %v2933
    %v3559 = vpop.f32.mrf.mxu0
    %v3560 = vadd.f32 0.0, %v3559
    %3561 = vmatmul.f32.gmra.mxu0 %v2936
    %v3562 = vpop.f32.mrf.mxu0
    %v3563 = vadd.f32 0.0, %v3562
    %3564 = vmatmul.f32.gmra.mxu0 %v2939
    %v3565 = vpop.f32.mrf.mxu0
    %v3566 = vadd.f32 0.0, %v3565
    %3567 = vmatmul.f32.gmra.mxu0 %v2942
    %v3568 = vpop.f32.mrf.mxu0
    %v3569 = vadd.f32 0.0, %v3568
    %3570 = vmatmul.f32.gmra.mxu0 %v2945
    %v3571 = vpop.f32.mrf.mxu0
    %v3572 = vadd.f32 0.0, %v3571
    %3573 = vmatmul.f32.gmra.mxu0 %v2948
    %v3574 = vpop.f32.mrf.mxu0
    %v3575 = vadd.f32 0.0, %v3574
    %3576 = vmatmul.f32.gmra.mxu0 %v2951
    %v3577 = vpop.f32.mrf.mxu0
    %v3578 = vadd.f32 0.0, %v3577
    %3579 = vmatmul.f32.gmra.mxu0 %v2954
    %v3580 = vpop.f32.mrf.mxu0
    %v3581 = vadd.f32 0.0, %v3580
    %3582 = vmatmul.f32.gmra.mxu0 %v2957
    %v3583 = vpop.f32.mrf.mxu0
    %v3584 = vadd.f32 0.0, %v3583
    %3585 = vmatmul.f32.gmra.mxu0 %v2960
    %v3586 = vpop.f32.mrf.mxu0
    %v3587 = vadd.f32 0.0, %v3586
    %3588 = vmatmul.f32.gmra.mxu0 %v2963
    %v3589 = vpop.f32.mrf.mxu0
    %v3590 = vadd.f32 0.0, %v3589
    %3591 = vmatmul.f32.gmra.mxu0 %v2966
    %v3592 = vpop.f32.mrf.mxu0
    %v3593 = vadd.f32 0.0, %v3592
    %3594 = vmatmul.f32.gmra.mxu0 %v2969
    %v3595 = vpop.f32.mrf.mxu0
    %v3596 = vadd.f32 0.0, %v3595
    %3597 = vmatmul.f32.gmra.mxu0 %v2972
    %v3598 = vpop.f32.mrf.mxu0
    %v3599 = vadd.f32 0.0, %v3598
    %3600 = vdwg.mxu0
    %v3601 = vld [vmem:[%s5] sm:$0x7]
    %v3603 = vperm.slane %v3601, 0
    %v3604 = vperm.slane %v3601, 1
    %v3605 = vperm.slane %v3601, 2
    %v3609 = vmul.f32 %v2992, %v3603
    %v3610 = vmul.f32 %v3201, %v3604
    %v3611 = vmul.f32 %v3410, %v3605
    %v3612 = vmul.f32 %v2995, %v3603
    %v3613 = vmul.f32 %v3204, %v3604
    %v3614 = vmul.f32 %v3413, %v3605
    %v3615 = vmul.f32 %v2998, %v3603
    %v3616 = vmul.f32 %v3207, %v3604
    %v3617 = vmul.f32 %v3416, %v3605
    %v3618 = vmul.f32 %v3001, %v3603
    %v3619 = vmul.f32 %v3210, %v3604
    %v3620 = vmul.f32 %v3419, %v3605
    %v3621 = vmul.f32 %v3004, %v3603
    %v3622 = vmul.f32 %v3213, %v3604
    %v3623 = vmul.f32 %v3422, %v3605
    %v3624 = vmul.f32 %v3007, %v3603
    %v3625 = vmul.f32 %v3216, %v3604
    %v3626 = vmul.f32 %v3425, %v3605
    %v3627 = vmul.f32 %v3010, %v3603
    %v3628 = vmul.f32 %v3219, %v3604
    %v3629 = vmul.f32 %v3428, %v3605
    %v3630 = vmul.f32 %v3013, %v3603
    %v3631 = vmul.f32 %v3222, %v3604
    %v3632 = vmul.f32 %v3431, %v3605
    %v3633 = vmul.f32 %v3016, %v3603
    %v3634 = vmul.f32 %v3225, %v3604
    %v3635 = vmul.f32 %v3434, %v3605
    %v3636 = vmul.f32 %v3019, %v3603
    %v3637 = vmul.f32 %v3228, %v3604
    %v3638 = vmul.f32 %v3437, %v3605
    %v3639 = vmul.f32 %v3022, %v3603
    %v3640 = vmul.f32 %v3231, %v3604
    %v3641 = vmul.f32 %v3440, %v3605
    %v3642 = vmul.f32 %v3025, %v3603
    %v3643 = vmul.f32 %v3234, %v3604
    %v3644 = vmul.f32 %v3443, %v3605
    %v3645 = vmul.f32 %v3028, %v3603
    %v3646 = vmul.f32 %v3237, %v3604
    %v3647 = vmul.f32 %v3446, %v3605
    %v3648 = vmul.f32 %v3031, %v3603
    %v3649 = vmul.f32 %v3240, %v3604
    %v3650 = vmul.f32 %v3449, %v3605
    %v3651 = vmul.f32 %v3034, %v3603
    %v3652 = vmul.f32 %v3243, %v3604
    %v3653 = vmul.f32 %v3452, %v3605
    %v3654 = vmul.f32 %v3037, %v3603
    %v3655 = vmul.f32 %v3246, %v3604
    %v3656 = vmul.f32 %v3455, %v3605
    %v3657 = vmul.f32 %v3040, %v3603
    %v3658 = vmul.f32 %v3249, %v3604
    %v3659 = vmul.f32 %v3458, %v3605
    %v3660 = vmul.f32 %v3043, %v3603
    %v3661 = vmul.f32 %v3252, %v3604
    %v3662 = vmul.f32 %v3461, %v3605
    %v3663 = vmul.f32 %v3046, %v3603
    %v3664 = vmul.f32 %v3255, %v3604
    %v3665 = vmul.f32 %v3464, %v3605
    %v3666 = vmul.f32 %v3049, %v3603
    %v3667 = vmul.f32 %v3258, %v3604
    %v3668 = vmul.f32 %v3467, %v3605
    %v3669 = vmul.f32 %v3052, %v3603
    %v3670 = vmul.f32 %v3261, %v3604
    %v3671 = vmul.f32 %v3470, %v3605
    %v3672 = vmul.f32 %v3055, %v3603
    %v3673 = vmul.f32 %v3264, %v3604
    %v3674 = vmul.f32 %v3473, %v3605
    %v3675 = vmul.f32 %v3058, %v3603
    %v3676 = vmul.f32 %v3267, %v3604
    %v3677 = vmul.f32 %v3476, %v3605
    %v3678 = vmul.f32 %v3061, %v3603
    %v3679 = vmul.f32 %v3270, %v3604
    %v3680 = vmul.f32 %v3479, %v3605
    %v3681 = vmul.f32 %v3064, %v3603
    %v3682 = vmul.f32 %v3273, %v3604
    %v3683 = vmul.f32 %v3482, %v3605
    %v3684 = vmul.f32 %v3067, %v3603
    %v3685 = vmul.f32 %v3276, %v3604
    %v3686 = vmul.f32 %v3485, %v3605
    %v3687 = vmul.f32 %v3070, %v3603
    %v3688 = vmul.f32 %v3279, %v3604
    %v3689 = vmul.f32 %v3488, %v3605
    %v3690 = vmul.f32 %v3073, %v3603
    %v3691 = vmul.f32 %v3282, %v3604
    %v3692 = vmul.f32 %v3491, %v3605
    %v3693 = vmul.f32 %v3076, %v3603
    %v3694 = vmul.f32 %v3285, %v3604
    %v3695 = vmul.f32 %v3494, %v3605
    %v3696 = vmul.f32 %v3079, %v3603
    %v3697 = vmul.f32 %v3288, %v3604
    %v3698 = vmul.f32 %v3497, %v3605
    %v3699 = vmul.f32 %v3082, %v3603
    %v3700 = vmul.f32 %v3291, %v3604
    %v3701 = vmul.f32 %v3500, %v3605
    %v3702 = vmul.f32 %v3085, %v3603
    %v3703 = vmul.f32 %v3294, %v3604
    %v3704 = vmul.f32 %v3503, %v3605
    %v3705 = vmul.f32 %v3088, %v3603
    %v3706 = vmul.f32 %v3297, %v3604
    %v3707 = vmul.f32 %v3506, %v3605
    %v3708 = vmul.f32 %v3091, %v3603
    %v3709 = vmul.f32 %v3300, %v3604
    %v3710 = vmul.f32 %v3509, %v3605
    %v3711 = vmul.f32 %v3094, %v3603
    %v3712 = vmul.f32 %v3303, %v3604
    %v3713 = vmul.f32 %v3512, %v3605
    %v3714 = vmul.f32 %v3097, %v3603
    %v3715 = vmul.f32 %v3306, %v3604
    %v3716 = vmul.f32 %v3515, %v3605
    %v3717 = vmul.f32 %v3100, %v3603
    %v3718 = vmul.f32 %v3309, %v3604
    %v3719 = vmul.f32 %v3518, %v3605
    %v3720 = vmul.f32 %v3103, %v3603
    %v3721 = vmul.f32 %v3312, %v3604
    %v3722 = vmul.f32 %v3521, %v3605
    %v3723 = vmul.f32 %v3106, %v3603
    %v3724 = vmul.f32 %v3315, %v3604
    %v3725 = vmul.f32 %v3524, %v3605
    %v3726 = vmul.f32 %v3109, %v3603
    %v3727 = vmul.f32 %v3318, %v3604
    %v3728 = vmul.f32 %v3527, %v3605
    %v3729 = vmul.f32 %v3112, %v3603
    %v3730 = vmul.f32 %v3321, %v3604
    %v3731 = vmul.f32 %v3530, %v3605
    %v3732 = vmul.f32 %v3115, %v3603
    %v3733 = vmul.f32 %v3324, %v3604
    %v3734 = vmul.f32 %v3533, %v3605
    %v3735 = vmul.f32 %v3118, %v3603
    %v3736 = vmul.f32 %v3327, %v3604
    %v3737 = vmul.f32 %v3536, %v3605
    %v3738 = vmul.f32 %v3121, %v3603
    %v3739 = vmul.f32 %v3330, %v3604
    %v3740 = vmul.f32 %v3539, %v3605
    %v3741 = vmul.f32 %v3124, %v3603
    %v3742 = vmul.f32 %v3333, %v3604
    %v3743 = vmul.f32 %v3542, %v3605
    %v3744 = vmul.f32 %v3127, %v3603
    %v3745 = vmul.f32 %v3336, %v3604
    %v3746 = vmul.f32 %v3545, %v3605
    %v3747 = vmul.f32 %v3130, %v3603
    %v3748 = vmul.f32 %v3339, %v3604
    %v3749 = vmul.f32 %v3548, %v3605
    %v3750 = vmul.f32 %v3133, %v3603
    %v3751 = vmul.f32 %v3342, %v3604
    %v3752 = vmul.f32 %v3551, %v3605
    %v3753 = vmul.f32 %v3136, %v3603
    %v3754 = vmul.f32 %v3345, %v3604
    %v3755 = vmul.f32 %v3554, %v3605
    %v3756 = vmul.f32 %v3139, %v3603
    %v3757 = vmul.f32 %v3348, %v3604
    %v3758 = vmul.f32 %v3557, %v3605
    %v3759 = vmul.f32 %v3142, %v3603
    %v3760 = vmul.f32 %v3351, %v3604
    %v3761 = vmul.f32 %v3560, %v3605
    %v3762 = vmul.f32 %v3145, %v3603
    %v3763 = vmul.f32 %v3354, %v3604
    %v3764 = vmul.f32 %v3563, %v3605
    %v3765 = vmul.f32 %v3148, %v3603
    %v3766 = vmul.f32 %v3357, %v3604
    %v3767 = vmul.f32 %v3566, %v3605
    %v3768 = vmul.f32 %v3151, %v3603
    %v3769 = vmul.f32 %v3360, %v3604
    %v3770 = vmul.f32 %v3569, %v3605
    %v3771 = vmul.f32 %v3154, %v3603
    %v3772 = vmul.f32 %v3363, %v3604
    %v3773 = vmul.f32 %v3572, %v3605
    %v3774 = vmul.f32 %v3157, %v3603
    %v3775 = vmul.f32 %v3366, %v3604
    %v3776 = vmul.f32 %v3575, %v3605
    %v3777 = vmul.f32 %v3160, %v3603
    %v3778 = vmul.f32 %v3369, %v3604
    %v3779 = vmul.f32 %v3578, %v3605
    %v3780 = vmul.f32 %v3163, %v3603
    %v3781 = vmul.f32 %v3372, %v3604
    %v3782 = vmul.f32 %v3581, %v3605
    %v3783 = vmul.f32 %v3166, %v3603
    %v3784 = vmul.f32 %v3375, %v3604
    %v3785 = vmul.f32 %v3584, %v3605
    %v3786 = vmul.f32 %v3169, %v3603
    %v3787 = vmul.f32 %v3378, %v3604
    %v3788 = vmul.f32 %v3587, %v3605
    %v3789 = vmul.f32 %v3172, %v3603
    %v3790 = vmul.f32 %v3381, %v3604
    %v3791 = vmul.f32 %v3590, %v3605
    %v3792 = vmul.f32 %v3175, %v3603
    %v3793 = vmul.f32 %v3384, %v3604
    %v3794 = vmul.f32 %v3593, %v3605
    %v3795 = vmul.f32 %v3178, %v3603
    %v3796 = vmul.f32 %v3387, %v3604
    %v3797 = vmul.f32 %v3596, %v3605
    %v3798 = vmul.f32 %v3181, %v3603
    %v3799 = vmul.f32 %v3390, %v3604
    %v3800 = vmul.f32 %v3599, %v3605
    %v3801 = vld [vmem:[%s6] sm:$0x7]
    %v3803 = vperm.slane %v3801, 0
    %v3804 = vperm.slane %v3801, 1
    %v3805 = vperm.slane %v3801, 2
    %v3809 = vadd.f32 %v3609, %v3803
    %v3810 = vadd.f32 %v3610, %v3804
    %v3811 = vadd.f32 %v3611, %v3805
    %v3812 = vadd.f32 %v3612, %v3803
    %v3813 = vadd.f32 %v3613, %v3804
    %v3814 = vadd.f32 %v3614, %v3805
    %v3815 = vadd.f32 %v3615, %v3803
    %v3816 = vadd.f32 %v3616, %v3804
    %v3817 = vadd.f32 %v3617, %v3805
    %v3818 = vadd.f32 %v3618, %v3803
    %v3819 = vadd.f32 %v3619, %v3804
    %v3820 = vadd.f32 %v3620, %v3805
    %v3821 = vadd.f32 %v3621, %v3803
    %v3822 = vadd.f32 %v3622, %v3804
    %v3823 = vadd.f32 %v3623, %v3805
    %v3824 = vadd.f32 %v3624, %v3803
    %v3825 = vadd.f32 %v3625, %v3804
    %v3826 = vadd.f32 %v3626, %v3805
    %v3827 = vadd.f32 %v3627, %v3803
    %v3828 = vadd.f32 %v3628, %v3804
    %v3829 = vadd.f32 %v3629, %v3805
    %v3830 = vadd.f32 %v3630, %v3803
    %v3831 = vadd.f32 %v3631, %v3804
    %v3832 = vadd.f32 %v3632, %v3805
    %v3833 = vadd.f32 %v3633, %v3803
    %v3834 = vadd.f32 %v3634, %v3804
    %v3835 = vadd.f32 %v3635, %v3805
    %v3836 = vadd.f32 %v3636, %v3803
    %v3837 = vadd.f32 %v3637, %v3804
    %v3838 = vadd.f32 %v3638, %v3805
    %v3839 = vadd.f32 %v3639, %v3803
    %v3840 = vadd.f32 %v3640, %v3804
    %v3841 = vadd.f32 %v3641, %v3805
    %v3842 = vadd.f32 %v3642, %v3803
    %v3843 = vadd.f32 %v3643, %v3804
    %v3844 = vadd.f32 %v3644, %v3805
    %v3845 = vadd.f32 %v3645, %v3803
    %v3846 = vadd.f32 %v3646, %v3804
    %v3847 = vadd.f32 %v3647, %v3805
    %v3848 = vadd.f32 %v3648, %v3803
    %v3849 = vadd.f32 %v3649, %v3804
    %v3850 = vadd.f32 %v3650, %v3805
    %v3851 = vadd.f32 %v3651, %v3803
    %v3852 = vadd.f32 %v3652, %v3804
    %v3853 = vadd.f32 %v3653, %v3805
    %v3854 = vadd.f32 %v3654, %v3803
    %v3855 = vadd.f32 %v3655, %v3804
    %v3856 = vadd.f32 %v3656, %v3805
    %v3857 = vadd.f32 %v3657, %v3803
    %v3858 = vadd.f32 %v3658, %v3804
    %v3859 = vadd.f32 %v3659, %v3805
    %v3860 = vadd.f32 %v3660, %v3803
    %v3861 = vadd.f32 %v3661, %v3804
    %v3862 = vadd.f32 %v3662, %v3805
    %v3863 = vadd.f32 %v3663, %v3803
    %v3864 = vadd.f32 %v3664, %v3804
    %v3865 = vadd.f32 %v3665, %v3805
    %v3866 = vadd.f32 %v3666, %v3803
    %v3867 = vadd.f32 %v3667, %v3804
    %v3868 = vadd.f32 %v3668, %v3805
    %v3869 = vadd.f32 %v3669, %v3803
    %v3870 = vadd.f32 %v3670, %v3804
    %v3871 = vadd.f32 %v3671, %v3805
    %v3872 = vadd.f32 %v3672, %v3803
    %v3873 = vadd.f32 %v3673, %v3804
    %v3874 = vadd.f32 %v3674, %v3805
    %v3875 = vadd.f32 %v3675, %v3803
    %v3876 = vadd.f32 %v3676, %v3804
    %v3877 = vadd.f32 %v3677, %v3805
    %v3878 = vadd.f32 %v3678, %v3803
    %v3879 = vadd.f32 %v3679, %v3804
    %v3880 = vadd.f32 %v3680, %v3805
    %v3881 = vadd.f32 %v3681, %v3803
    %v3882 = vadd.f32 %v3682, %v3804
    %v3883 = vadd.f32 %v3683, %v3805
    %v3884 = vadd.f32 %v3684, %v3803
    %v3885 = vadd.f32 %v3685, %v3804
    %v3886 = vadd.f32 %v3686, %v3805
    %v3887 = vadd.f32 %v3687, %v3803
    %v3888 = vadd.f32 %v3688, %v3804
    %v3889 = vadd.f32 %v3689, %v3805
    %v3890 = vadd.f32 %v3690, %v3803
    %v3891 = vadd.f32 %v3691, %v3804
    %v3892 = vadd.f32 %v3692, %v3805
    %v3893 = vadd.f32 %v3693, %v3803
    %v3894 = vadd.f32 %v3694, %v3804
    %v3895 = vadd.f32 %v3695, %v3805
    %v3896 = vadd.f32 %v3696, %v3803
    %v3897 = vadd.f32 %v3697, %v3804
    %v3898 = vadd.f32 %v3698, %v3805
    %v3899 = vadd.f32 %v3699, %v3803
    %v3900 = vadd.f32 %v3700, %v3804
    %v3901 = vadd.f32 %v3701, %v3805
    %v3902 = vadd.f32 %v3702, %v3803
    %v3903 = vadd.f32 %v3703, %v3804
    %v3904 = vadd.f32 %v3704, %v3805
    %v3905 = vadd.f32 %v3705, %v3803
    %v3906 = vadd.f32 %v3706, %v3804
    %v3907 = vadd.f32 %v3707, %v3805
    %v3908 = vadd.f32 %v3708, %v3803
    %v3909 = vadd.f32 %v3709, %v3804
    %v3910 = vadd.f32 %v3710, %v3805
    %v3911 = vadd.f32 %v3711, %v3803
    %v3912 = vadd.f32 %v3712, %v3804
    %v3913 = vadd.f32 %v3713, %v3805
    %v3914 = vadd.f32 %v3714, %v3803
    %v3915 = vadd.f32 %v3715, %v3804
    %v3916 = vadd.f32 %v3716, %v3805
    %v3917 = vadd.f32 %v3717, %v3803
    %v3918 = vadd.f32 %v3718, %v3804
    %v3919 = vadd.f32 %v3719, %v3805
    %v3920 = vadd.f32 %v3720, %v3803
    %v3921 = vadd.f32 %v3721, %v3804
    %v3922 = vadd.f32 %v3722, %v3805
    %v3923 = vadd.f32 %v3723, %v3803
    %v3924 = vadd.f32 %v3724, %v3804
    %v3925 = vadd.f32 %v3725, %v3805
    %v3926 = vadd.f32 %v3726, %v3803
    %v3927 = vadd.f32 %v3727, %v3804
    %v3928 = vadd.f32 %v3728, %v3805
    %v3929 = vadd.f32 %v3729, %v3803
    %v3930 = vadd.f32 %v3730, %v3804
    %v3931 = vadd.f32 %v3731, %v3805
    %v3932 = vadd.f32 %v3732, %v3803
    %v3933 = vadd.f32 %v3733, %v3804
    %v3934 = vadd.f32 %v3734, %v3805
    %v3935 = vadd.f32 %v3735, %v3803
    %v3936 = vadd.f32 %v3736, %v3804
    %v3937 = vadd.f32 %v3737, %v3805
    %v3938 = vadd.f32 %v3738, %v3803
    %v3939 = vadd.f32 %v3739, %v3804
    %v3940 = vadd.f32 %v3740, %v3805
    %v3941 = vadd.f32 %v3741, %v3803
    %v3942 = vadd.f32 %v3742, %v3804
    %v3943 = vadd.f32 %v3743, %v3805
    %v3944 = vadd.f32 %v3744, %v3803
    %v3945 = vadd.f32 %v3745, %v3804
    %v3946 = vadd.f32 %v3746, %v3805
    %v3947 = vadd.f32 %v3747, %v3803
    %v3948 = vadd.f32 %v3748, %v3804
    %v3949 = vadd.f32 %v3749, %v3805
    %v3950 = vadd.f32 %v3750, %v3803
    %v3951 = vadd.f32 %v3751, %v3804
    %v3952 = vadd.f32 %v3752, %v3805
    %v3953 = vadd.f32 %v3753, %v3803
    %v3954 = vadd.f32 %v3754, %v3804
    %v3955 = vadd.f32 %v3755, %v3805
    %v3956 = vadd.f32 %v3756, %v3803
    %v3957 = vadd.f32 %v3757, %v3804
    %v3958 = vadd.f32 %v3758, %v3805
    %v3959 = vadd.f32 %v3759, %v3803
    %v3960 = vadd.f32 %v3760, %v3804
    %v3961 = vadd.f32 %v3761, %v3805
    %v3962 = vadd.f32 %v3762, %v3803
    %v3963 = vadd.f32 %v3763, %v3804
    %v3964 = vadd.f32 %v3764, %v3805
    %v3965 = vadd.f32 %v3765, %v3803
    %v3966 = vadd.f32 %v3766, %v3804
    %v3967 = vadd.f32 %v3767, %v3805
    %v3968 = vadd.f32 %v3768, %v3803
    %v3969 = vadd.f32 %v3769, %v3804
    %v3970 = vadd.f32 %v3770, %v3805
    %v3971 = vadd.f32 %v3771, %v3803
    %v3972 = vadd.f32 %v3772, %v3804
    %v3973 = vadd.f32 %v3773, %v3805
    %v3974 = vadd.f32 %v3774, %v3803
    %v3975 = vadd.f32 %v3775, %v3804
    %v3976 = vadd.f32 %v3776, %v3805
    %v3977 = vadd.f32 %v3777, %v3803
    %v3978 = vadd.f32 %v3778, %v3804
    %v3979 = vadd.f32 %v3779, %v3805
    %v3980 = vadd.f32 %v3780, %v3803
    %v3981 = vadd.f32 %v3781, %v3804
    %v3982 = vadd.f32 %v3782, %v3805
    %v3983 = vadd.f32 %v3783, %v3803
    %v3984 = vadd.f32 %v3784, %v3804
    %v3985 = vadd.f32 %v3785, %v3805
    %v3986 = vadd.f32 %v3786, %v3803
    %v3987 = vadd.f32 %v3787, %v3804
    %v3988 = vadd.f32 %v3788, %v3805
    %v3989 = vadd.f32 %v3789, %v3803
    %v3990 = vadd.f32 %v3790, %v3804
    %v3991 = vadd.f32 %v3791, %v3805
    %v3992 = vadd.f32 %v3792, %v3803
    %v3993 = vadd.f32 %v3793, %v3804
    %v3994 = vadd.f32 %v3794, %v3805
    %v3995 = vadd.f32 %v3795, %v3803
    %v3996 = vadd.f32 %v3796, %v3804
    %v3997 = vadd.f32 %v3797, %v3805
    %v3998 = vadd.f32 %v3798, %v3803
    %v3999 = vadd.f32 %v3799, %v3804
    %v4000 = vadd.f32 %v3800, %v3805
    %v4001 = vmax.f32 %v3809, 0.0
    %v4002 = vmax.f32 %v3810, 0.0
    %v4003 = vmax.f32 %v3811, 0.0
    %v4004 = vmax.f32 %v3812, 0.0
    %v4005 = vmax.f32 %v3813, 0.0
    %v4006 = vmax.f32 %v3814, 0.0
    %v4007 = vmax.f32 %v3815, 0.0
    %v4008 = vmax.f32 %v3816, 0.0
    %v4009 = vmax.f32 %v3817, 0.0
    %v4010 = vmax.f32 %v3818, 0.0
    %v4011 = vmax.f32 %v3819, 0.0
    %v4012 = vmax.f32 %v3820, 0.0
    %v4013 = vmax.f32 %v3821, 0.0
    %v4014 = vmax.f32 %v3822, 0.0
    %v4015 = vmax.f32 %v3823, 0.0
    %v4016 = vmax.f32 %v3824, 0.0
    %v4017 = vmax.f32 %v3825, 0.0
    %v4018 = vmax.f32 %v3826, 0.0
    %v4019 = vmax.f32 %v3827, 0.0
    %v4020 = vmax.f32 %v3828, 0.0
    %v4021 = vmax.f32 %v3829, 0.0
    %v4022 = vmax.f32 %v3830, 0.0
    %v4023 = vmax.f32 %v3831, 0.0
    %v4024 = vmax.f32 %v3832, 0.0
    %v4025 = vmax.f32 %v3833, 0.0
    %v4026 = vmax.f32 %v3834, 0.0
    %v4027 = vmax.f32 %v3835, 0.0
    %v4028 = vmax.f32 %v3836, 0.0
    %v4029 = vmax.f32 %v3837, 0.0
    %v4030 = vmax.f32 %v3838, 0.0
    %v4031 = vmax.f32 %v3839, 0.0
    %v4032 = vmax.f32 %v3840, 0.0
    %v4033 = vmax.f32 %v3841, 0.0
    %v4034 = vmax.f32 %v3842, 0.0
    %v4035 = vmax.f32 %v3843, 0.0
    %v4036 = vmax.f32 %v3844, 0.0
    %v4037 = vmax.f32 %v3845, 0.0
    %v4038 = vmax.f32 %v3846, 0.0
    %v4039 = vmax.f32 %v3847, 0.0
    %v4040 = vmax.f32 %v3848, 0.0
    %v4041 = vmax.f32 %v3849, 0.0
    %v4042 = vmax.f32 %v3850, 0.0
    %v4043 = vmax.f32 %v3851, 0.0
    %v4044 = vmax.f32 %v3852, 0.0
    %v4045 = vmax.f32 %v3853, 0.0
    %v4046 = vmax.f32 %v3854, 0.0
    %v4047 = vmax.f32 %v3855, 0.0
    %v4048 = vmax.f32 %v3856, 0.0
    %v4049 = vmax.f32 %v3857, 0.0
    %v4050 = vmax.f32 %v3858, 0.0
    %v4051 = vmax.f32 %v3859, 0.0
    %v4052 = vmax.f32 %v3860, 0.0
    %v4053 = vmax.f32 %v3861, 0.0
    %v4054 = vmax.f32 %v3862, 0.0
    %v4055 = vmax.f32 %v3863, 0.0
    %v4056 = vmax.f32 %v3864, 0.0
    %v4057 = vmax.f32 %v3865, 0.0
    %v4058 = vmax.f32 %v3866, 0.0
    %v4059 = vmax.f32 %v3867, 0.0
    %v4060 = vmax.f32 %v3868, 0.0
    %v4061 = vmax.f32 %v3869, 0.0
    %v4062 = vmax.f32 %v3870, 0.0
    %v4063 = vmax.f32 %v3871, 0.0
    %v4064 = vmax.f32 %v3872, 0.0
    %v4065 = vmax.f32 %v3873, 0.0
    %v4066 = vmax.f32 %v3874, 0.0
    %v4067 = vmax.f32 %v3875, 0.0
    %v4068 = vmax.f32 %v3876, 0.0
    %v4069 = vmax.f32 %v3877, 0.0
    %v4070 = vmax.f32 %v3878, 0.0
    %v4071 = vmax.f32 %v3879, 0.0
    %v4072 = vmax.f32 %v3880, 0.0
    %v4073 = vmax.f32 %v3881, 0.0
    %v4074 = vmax.f32 %v3882, 0.0
    %v4075 = vmax.f32 %v3883, 0.0
    %v4076 = vmax.f32 %v3884, 0.0
    %v4077 = vmax.f32 %v3885, 0.0
    %v4078 = vmax.f32 %v3886, 0.0
    %v4079 = vmax.f32 %v3887, 0.0
    %v4080 = vmax.f32 %v3888, 0.0
    %v4081 = vmax.f32 %v3889, 0.0
    %v4082 = vmax.f32 %v3890, 0.0
    %v4083 = vmax.f32 %v3891, 0.0
    %v4084 = vmax.f32 %v3892, 0.0
    %v4085 = vmax.f32 %v3893, 0.0
    %v4086 = vmax.f32 %v3894, 0.0
    %v4087 = vmax.f32 %v3895, 0.0
    %v4088 = vmax.f32 %v3896, 0.0
    %v4089 = vmax.f32 %v3897, 0.0
    %v4090 = vmax.f32 %v3898, 0.0
    %v4091 = vmax.f32 %v3899, 0.0
    %v4092 = vmax.f32 %v3900, 0.0
    %v4093 = vmax.f32 %v3901, 0.0
    %v4094 = vmax.f32 %v3902, 0.0
    %v4095 = vmax.f32 %v3903, 0.0
    %v4096 = vmax.f32 %v3904, 0.0
    %v4097 = vmax.f32 %v3905, 0.0
    %v4098 = vmax.f32 %v3906, 0.0
    %v4099 = vmax.f32 %v3907, 0.0
    %v4100 = vmax.f32 %v3908, 0.0
    %v4101 = vmax.f32 %v3909, 0.0
    %v4102 = vmax.f32 %v3910, 0.0
    %v4103 = vmax.f32 %v3911, 0.0
    %v4104 = vmax.f32 %v3912, 0.0
    %v4105 = vmax.f32 %v3913, 0.0
    %v4106 = vmax.f32 %v3914, 0.0
    %v4107 = vmax.f32 %v3915, 0.0
    %v4108 = vmax.f32 %v3916, 0.0
    %v4109 = vmax.f32 %v3917, 0.0
    %v4110 = vmax.f32 %v3918, 0.0
    %v4111 = vmax.f32 %v3919, 0.0
    %v4112 = vmax.f32 %v3920, 0.0
    %v4113 = vmax.f32 %v3921, 0.0
    %v4114 = vmax.f32 %v3922, 0.0
    %v4115 = vmax.f32 %v3923, 0.0
    %v4116 = vmax.f32 %v3924, 0.0
    %v4117 = vmax.f32 %v3925, 0.0
    %v4118 = vmax.f32 %v3926, 0.0
    %v4119 = vmax.f32 %v3927, 0.0
    %v4120 = vmax.f32 %v3928, 0.0
    %v4121 = vmax.f32 %v3929, 0.0
    %v4122 = vmax.f32 %v3930, 0.0
    %v4123 = vmax.f32 %v3931, 0.0
    %v4124 = vmax.f32 %v3932, 0.0
    %v4125 = vmax.f32 %v3933, 0.0
    %v4126 = vmax.f32 %v3934, 0.0
    %v4127 = vmax.f32 %v3935, 0.0
    %v4128 = vmax.f32 %v3936, 0.0
    %v4129 = vmax.f32 %v3937, 0.0
    %v4130 = vmax.f32 %v3938, 0.0
    %v4131 = vmax.f32 %v3939, 0.0
    %v4132 = vmax.f32 %v3940, 0.0
    %v4133 = vmax.f32 %v3941, 0.0
    %v4134 = vmax.f32 %v3942, 0.0
    %v4135 = vmax.f32 %v3943, 0.0
    %v4136 = vmax.f32 %v3944, 0.0
    %v4137 = vmax.f32 %v3945, 0.0
    %v4138 = vmax.f32 %v3946, 0.0
    %v4139 = vmax.f32 %v3947, 0.0
    %v4140 = vmax.f32 %v3948, 0.0
    %v4141 = vmax.f32 %v3949, 0.0
    %v4142 = vmax.f32 %v3950, 0.0
    %v4143 = vmax.f32 %v3951, 0.0
    %v4144 = vmax.f32 %v3952, 0.0
    %v4145 = vmax.f32 %v3953, 0.0
    %v4146 = vmax.f32 %v3954, 0.0
    %v4147 = vmax.f32 %v3955, 0.0
    %v4148 = vmax.f32 %v3956, 0.0
    %v4149 = vmax.f32 %v3957, 0.0
    %v4150 = vmax.f32 %v3958, 0.0
    %v4151 = vmax.f32 %v3959, 0.0
    %v4152 = vmax.f32 %v3960, 0.0
    %v4153 = vmax.f32 %v3961, 0.0
    %v4154 = vmax.f32 %v3962, 0.0
    %v4155 = vmax.f32 %v3963, 0.0
    %v4156 = vmax.f32 %v3964, 0.0
    %v4157 = vmax.f32 %v3965, 0.0
    %v4158 = vmax.f32 %v3966, 0.0
    %v4159 = vmax.f32 %v3967, 0.0
    %v4160 = vmax.f32 %v3968, 0.0
    %v4161 = vmax.f32 %v3969, 0.0
    %v4162 = vmax.f32 %v3970, 0.0
    %v4163 = vmax.f32 %v3971, 0.0
    %v4164 = vmax.f32 %v3972, 0.0
    %v4165 = vmax.f32 %v3973, 0.0
    %v4166 = vmax.f32 %v3974, 0.0
    %v4167 = vmax.f32 %v3975, 0.0
    %v4168 = vmax.f32 %v3976, 0.0
    %v4169 = vmax.f32 %v3977, 0.0
    %v4170 = vmax.f32 %v3978, 0.0
    %v4171 = vmax.f32 %v3979, 0.0
    %v4172 = vmax.f32 %v3980, 0.0
    %v4173 = vmax.f32 %v3981, 0.0
    %v4174 = vmax.f32 %v3982, 0.0
    %v4175 = vmax.f32 %v3983, 0.0
    %v4176 = vmax.f32 %v3984, 0.0
    %v4177 = vmax.f32 %v3985, 0.0
    %v4178 = vmax.f32 %v3986, 0.0
    %v4179 = vmax.f32 %v3987, 0.0
    %v4180 = vmax.f32 %v3988, 0.0
    %v4181 = vmax.f32 %v3989, 0.0
    %v4182 = vmax.f32 %v3990, 0.0
    %v4183 = vmax.f32 %v3991, 0.0
    %v4184 = vmax.f32 %v3992, 0.0
    %v4185 = vmax.f32 %v3993, 0.0
    %v4186 = vmax.f32 %v3994, 0.0
    %v4187 = vmax.f32 %v3995, 0.0
    %v4188 = vmax.f32 %v3996, 0.0
    %v4189 = vmax.f32 %v3997, 0.0
    %v4190 = vmax.f32 %v3998, 0.0
    %v4191 = vmax.f32 %v3999, 0.0
    %v4192 = vmax.f32 %v4000, 0.0
    %v4193 = vld [vmem:[%s7] sm:$0xff]
    %v4194 = vld [vmem:[%s7 + $0x8] sm:$0xff]
    %v4195 = vld [vmem:[%s7 + $0x10] sm:$0xff]
    %v4196 = vld [vmem:[%s7 + $0x18] sm:$0xff]
    %v4197 = vld [vmem:[%s7 + $0x20] sm:$0xff]
    %v4198 = vld [vmem:[%s7 + $0x28] sm:$0xff]
    %v4199 = vld [vmem:[%s7 + $0x30] sm:$0xff]
    %v4200 = vld [vmem:[%s7 + $0x38] sm:$0xff]
    %v4201 = vld [vmem:[%s7 + $0x40] sm:$0xff]
    %v4202 = vld [vmem:[%s7 + $0x48] sm:$0xff]
    %v4203 = vld [vmem:[%s7 + $0x50] sm:$0xff]
    %v4204 = vld [vmem:[%s7 + $0x58] sm:$0xff]
    %v4205 = vld [vmem:[%s7 + $0x60] sm:$0xff]
    %v4206 = vld [vmem:[%s7 + $0x68] sm:$0xff]
    %v4207 = vld [vmem:[%s7 + $0x70] sm:$0xff]
    %v4208 = vld [vmem:[%s7 + $0x78] sm:$0xff]
    %v4209 = vld [vmem:[%s7 + $0x80] sm:$0xff]
    %v4210 = vld [vmem:[%s7 + $0x88] sm:$0xff]
    %v4211 = vld [vmem:[%s7 + $0x90] sm:$0xff]
    %v4212 = vld [vmem:[%s7 + $0x98] sm:$0xff]
    %v4213 = vld [vmem:[%s7 + $0xa0] sm:$0xff]
    %v4214 = vld [vmem:[%s7 + $0xa8] sm:$0xff]
    %v4215 = vld [vmem:[%s7 + $0xb0] sm:$0xff]
    %v4216 = vld [vmem:[%s7 + $0xb8] sm:$0xff]
    %v4217 = vld [vmem:[%s7 + $0xc0] sm:$0xff]
    %v4218 = vld [vmem:[%s7 + $0xc8] sm:$0xff]
    %v4219 = vld [vmem:[%s7 + $0xd0] sm:$0xff]
    %v4220 = vld [vmem:[%s7 + $0xd8] sm:$0xff]
    %v4221 = vld [vmem:[%s7 + $0xe0] sm:$0xff]
    %v4222 = vld [vmem:[%s7 + $0xe8] sm:$0xff]
    %v4223 = vld [vmem:[%s7 + $0xf0] sm:$0xff]
    %v4224 = vld [vmem:[%s7 + $0xf8] sm:$0xff]
    %v4225 = vld [vmem:[%s7 + $0x100] sm:$0xff]
    %v4226 = vld [vmem:[%s7 + $0x108] sm:$0xff]
    %v4227 = vld [vmem:[%s7 + $0x110] sm:$0xff]
    %v4228 = vld [vmem:[%s7 + $0x118] sm:$0xff]
    %v4229 = vld [vmem:[%s8] sm:$0x1]
    %v4231 = vperm.slane %v4229, 0
    %vm4233 = vcmask 261120
    %v4235 = vsel %vm4233, %v4003, 0
    %v4238 = vsel %vm4233, %v4006, 0
    %v4241 = vsel %vm4233, %v4009, 0
    %v4244 = vsel %vm4233, %v4012, 0
    %v4247 = vsel %vm4233, %v4015, 0
    %v4250 = vsel %vm4233, %v4018, 0
    %v4253 = vsel %vm4233, %v4021, 0
    %v4256 = vsel %vm4233, %v4024, 0
    %v4259 = vsel %vm4233, %v4027, 0
    %v4262 = vsel %vm4233, %v4030, 0
    %v4265 = vsel %vm4233, %v4033, 0
    %v4268 = vsel %vm4233, %v4036, 0
    %v4271 = vsel %vm4233, %v4039, 0
    %v4274 = vsel %vm4233, %v4042, 0
    %v4277 = vsel %vm4233, %v4045, 0
    %v4280 = vsel %vm4233, %v4048, 0
    %v4283 = vsel %vm4233, %v4051, 0
    %v4286 = vsel %vm4233, %v4054, 0
    %v4289 = vsel %vm4233, %v4057, 0
    %v4292 = vsel %vm4233, %v4060, 0
    %v4295 = vsel %vm4233, %v4063, 0
    %v4298 = vsel %vm4233, %v4066, 0
    %v4301 = vsel %vm4233, %v4069, 0
    %v4304 = vsel %vm4233, %v4072, 0
    %v4307 = vsel %vm4233, %v4075, 0
    %v4310 = vsel %vm4233, %v4078, 0
    %v4313 = vsel %vm4233, %v4081, 0
    %v4316 = vsel %vm4233, %v4084, 0
    %v4319 = vsel %vm4233, %v4087, 0
    %v4322 = vsel %vm4233, %v4090, 0
    %v4325 = vsel %vm4233, %v4093, 0
    %v4328 = vsel %vm4233, %v4096, 0
    %v4331 = vsel %vm4233, %v4099, 0
    %v4334 = vsel %vm4233, %v4102, 0
    %v4337 = vsel %vm4233, %v4105, 0
    %v4340 = vsel %vm4233, %v4108, 0
    %v4343 = vsel %vm4233, %v4111, 0
    %v4346 = vsel %vm4233, %v4114, 0
    %v4349 = vsel %vm4233, %v4117, 0
    %v4352 = vsel %vm4233, %v4120, 0
    %v4355 = vsel %vm4233, %v4123, 0
    %v4358 = vsel %vm4233, %v4126, 0
    %v4361 = vsel %vm4233, %v4129, 0
    %v4364 = vsel %vm4233, %v4132, 0
    %v4367 = vsel %vm4233, %v4135, 0
    %v4370 = vsel %vm4233, %v4138, 0
    %v4373 = vsel %vm4233, %v4141, 0
    %v4376 = vsel %vm4233, %v4144, 0
    %v4379 = vsel %vm4233, %v4147, 0
    %v4382 = vsel %vm4233, %v4150, 0
    %v4385 = vsel %vm4233, %v4153, 0
    %v4388 = vsel %vm4233, %v4156, 0
    %v4391 = vsel %vm4233, %v4159, 0
    %v4394 = vsel %vm4233, %v4162, 0
    %v4397 = vsel %vm4233, %v4165, 0
    %v4400 = vsel %vm4233, %v4168, 0
    %v4403 = vsel %vm4233, %v4171, 0
    %v4406 = vsel %vm4233, %v4174, 0
    %v4409 = vsel %vm4233, %v4177, 0
    %v4412 = vsel %vm4233, %v4180, 0
    %v4415 = vsel %vm4233, %v4183, 0
    %v4418 = vsel %vm4233, %v4186, 0
    %v4421 = vsel %vm4233, %v4189, 0
    %v4424 = vsel %vm4233, %v4192, 0
    %4426 = vmatpush.msra.mxu0 %v4208
    %4427 = vmatpush.msra.mxu0 %v4207
    %4428 = vmatpush.msra.mxu0 %v4206
    %4429 = vmatpush.msra.mxu0 %v4205
    %4430 = vmatpush.msra.mxu0 %v4204
    %4431 = vmatpush.msra.mxu0 %v4203
    %4432 = vmatpush.msra.mxu0 %v4202
    %4433 = vmatpush.msra.mxu0 %v4201
    %4434 = vmatpush.msra.mxu0 %v4200
    %4435 = vmatpush.msra.mxu0 %v4199
    %4436 = vmatpush.msra.mxu0 %v4198
    %4437 = vmatpush.msra.mxu0 %v4197
    %4438 = vmatpush.msra.mxu0 %v4196
    %4439 = vmatpush.msra.mxu0 %v4195
    %4440 = vmatpush.msra.mxu0 %v4194
    %4441 = vmatpush.msra.mxu0 %v4193
    %4442 = vmatmul.f32.gmra.mxu0 %v4001
    %v4443 = vpop.f32.mrf.mxu0
    %v4444 = vadd.f32 %v4231, %v4443
    %4445 = vmatmul.f32.gmra.mxu0 %v4004
    %v4446 = vpop.f32.mrf.mxu0
    %v4447 = vadd.f32 %v4231, %v4446
    %4448 = vmatmul.f32.gmra.mxu0 %v4007
    %v4449 = vpop.f32.mrf.mxu0
    %v4450 = vadd.f32 %v4231, %v4449
    %4451 = vmatmul.f32.gmra.mxu0 %v4010
    %v4452 = vpop.f32.mrf.mxu0
    %v4453 = vadd.f32 %v4231, %v4452
    %4454 = vmatmul.f32.gmra.mxu0 %v4013
    %v4455 = vpop.f32.mrf.mxu0
    %v4456 = vadd.f32 %v4231, %v4455
    %4457 = vmatmul.f32.gmra.mxu0 %v4016
    %v4458 = vpop.f32.mrf.mxu0
    %v4459 = vadd.f32 %v4231, %v4458
    %4460 = vmatmul.f32.gmra.mxu0 %v4019
    %v4461 = vpop.f32.mrf.mxu0
    %v4462 = vadd.f32 %v4231, %v4461
    %4463 = vmatmul.f32.gmra.mxu0 %v4022
    %v4464 = vpop.f32.mrf.mxu0
    %v4465 = vadd.f32 %v4231, %v4464
    %4466 = vmatmul.f32.gmra.mxu0 %v4025
    %v4467 = vpop.f32.mrf.mxu0
    %v4468 = vadd.f32 %v4231, %v4467
    %4469 = vmatmul.f32.gmra.mxu0 %v4028
    %v4470 = vpop.f32.mrf.mxu0
    %v4471 = vadd.f32 %v4231, %v4470
    %4472 = vmatmul.f32.gmra.mxu0 %v4031
    %v4473 = vpop.f32.mrf.mxu0
    %v4474 = vadd.f32 %v4231, %v4473
    %4475 = vmatmul.f32.gmra.mxu0 %v4034
    %v4476 = vpop.f32.mrf.mxu0
    %v4477 = vadd.f32 %v4231, %v4476
    %4478 = vmatmul.f32.gmra.mxu0 %v4037
    %v4479 = vpop.f32.mrf.mxu0
    %v4480 = vadd.f32 %v4231, %v4479
    %4481 = vmatmul.f32.gmra.mxu0 %v4040
    %v4482 = vpop.f32.mrf.mxu0
    %v4483 = vadd.f32 %v4231, %v4482
    %4484 = vmatmul.f32.gmra.mxu0 %v4043
    %v4485 = vpop.f32.mrf.mxu0
    %v4486 = vadd.f32 %v4231, %v4485
    %4487 = vmatmul.f32.gmra.mxu0 %v4046
    %v4488 = vpop.f32.mrf.mxu0
    %v4489 = vadd.f32 %v4231, %v4488
    %4490 = vmatmul.f32.gmra.mxu0 %v4049
    %v4491 = vpop.f32.mrf.mxu0
    %v4492 = vadd.f32 %v4231, %v4491
    %4493 = vmatmul.f32.gmra.mxu0 %v4052
    %v4494 = vpop.f32.mrf.mxu0
    %v4495 = vadd.f32 %v4231, %v4494
    %4496 = vmatmul.f32.gmra.mxu0 %v4055
    %v4497 = vpop.f32.mrf.mxu0
    %v4498 = vadd.f32 %v4231, %v4497
    %4499 = vmatmul.f32.gmra.mxu0 %v4058
    %v4500 = vpop.f32.mrf.mxu0
    %v4501 = vadd.f32 %v4231, %v4500
    %4502 = vmatmul.f32.gmra.mxu0 %v4061
    %v4503 = vpop.f32.mrf.mxu0
    %v4504 = vadd.f32 %v4231, %v4503
    %4505 = vmatmul.f32.gmra.mxu0 %v4064
    %v4506 = vpop.f32.mrf.mxu0
    %v4507 = vadd.f32 %v4231, %v4506
    %4508 = vmatmul.f32.gmra.mxu0 %v4067
    %v4509 = vpop.f32.mrf.mxu0
    %v4510 = vadd.f32 %v4231, %v4509
    %4511 = vmatmul.f32.gmra.mxu0 %v4070
    %v4512 = vpop.f32.mrf.mxu0
    %v4513 = vadd.f32 %v4231, %v4512
    %4514 = vmatmul.f32.gmra.mxu0 %v4073
    %v4515 = vpop.f32.mrf.mxu0
    %v4516 = vadd.f32 %v4231, %v4515
    %4517 = vmatmul.f32.gmra.mxu0 %v4076
    %v4518 = vpop.f32.mrf.mxu0
    %v4519 = vadd.f32 %v4231, %v4518
    %4520 = vmatmul.f32.gmra.mxu0 %v4079
    %v4521 = vpop.f32.mrf.mxu0
    %v4522 = vadd.f32 %v4231, %v4521
    %4523 = vmatmul.f32.gmra.mxu0 %v4082
    %v4524 = vpop.f32.mrf.mxu0
    %v4525 = vadd.f32 %v4231, %v4524
    %4526 = vmatmul.f32.gmra.mxu0 %v4085
    %v4527 = vpop.f32.mrf.mxu0
    %v4528 = vadd.f32 %v4231, %v4527
    %4529 = vmatmul.f32.gmra.mxu0 %v4088
    %v4530 = vpop.f32.mrf.mxu0
    %v4531 = vadd.f32 %v4231, %v4530
    %4532 = vmatmul.f32.gmra.mxu0 %v4091
    %v4533 = vpop.f32.mrf.mxu0
    %v4534 = vadd.f32 %v4231, %v4533
    %4535 = vmatmul.f32.gmra.mxu0 %v4094
    %v4536 = vpop.f32.mrf.mxu0
    %v4537 = vadd.f32 %v4231, %v4536
    %4538 = vmatmul.f32.gmra.mxu0 %v4097
    %v4539 = vpop.f32.mrf.mxu0
    %v4540 = vadd.f32 %v4231, %v4539
    %4541 = vmatmul.f32.gmra.mxu0 %v4100
    %v4542 = vpop.f32.mrf.mxu0
    %v4543 = vadd.f32 %v4231, %v4542
    %4544 = vmatmul.f32.gmra.mxu0 %v4103
    %v4545 = vpop.f32.mrf.mxu0
    %v4546 = vadd.f32 %v4231, %v4545
    %4547 = vmatmul.f32.gmra.mxu0 %v4106
    %v4548 = vpop.f32.mrf.mxu0
    %v4549 = vadd.f32 %v4231, %v4548
    %4550 = vmatmul.f32.gmra.mxu0 %v4109
    %v4551 = vpop.f32.mrf.mxu0
    %v4552 = vadd.f32 %v4231, %v4551
    %4553 = vmatmul.f32.gmra.mxu0 %v4112
    %v4554 = vpop.f32.mrf.mxu0
    %v4555 = vadd.f32 %v4231, %v4554
    %4556 = vmatmul.f32.gmra.mxu0 %v4115
    %v4557 = vpop.f32.mrf.mxu0
    %v4558 = vadd.f32 %v4231, %v4557
    %4559 = vmatmul.f32.gmra.mxu0 %v4118
    %v4560 = vpop.f32.mrf.mxu0
    %v4561 = vadd.f32 %v4231, %v4560
    %4562 = vmatmul.f32.gmra.mxu0 %v4121
    %v4563 = vpop.f32.mrf.mxu0
    %v4564 = vadd.f32 %v4231, %v4563
    %4565 = vmatmul.f32.gmra.mxu0 %v4124
    %v4566 = vpop.f32.mrf.mxu0
    %v4567 = vadd.f32 %v4231, %v4566
    %4568 = vmatmul.f32.gmra.mxu0 %v4127
    %v4569 = vpop.f32.mrf.mxu0
    %v4570 = vadd.f32 %v4231, %v4569
    %4571 = vmatmul.f32.gmra.mxu0 %v4130
    %v4572 = vpop.f32.mrf.mxu0
    %v4573 = vadd.f32 %v4231, %v4572
    %4574 = vmatmul.f32.gmra.mxu0 %v4133
    %v4575 = vpop.f32.mrf.mxu0
    %v4576 = vadd.f32 %v4231, %v4575
    %4577 = vmatmul.f32.gmra.mxu0 %v4136
    %v4578 = vpop.f32.mrf.mxu0
    %v4579 = vadd.f32 %v4231, %v4578
    %4580 = vmatmul.f32.gmra.mxu0 %v4139
    %v4581 = vpop.f32.mrf.mxu0
    %v4582 = vadd.f32 %v4231, %v4581
    %4583 = vmatmul.f32.gmra.mxu0 %v4142
    %v4584 = vpop.f32.mrf.mxu0
    %v4585 = vadd.f32 %v4231, %v4584
    %4586 = vmatmul.f32.gmra.mxu0 %v4145
    %v4587 = vpop.f32.mrf.mxu0
    %v4588 = vadd.f32 %v4231, %v4587
    %4589 = vmatmul.f32.gmra.mxu0 %v4148
    %v4590 = vpop.f32.mrf.mxu0
    %v4591 = vadd.f32 %v4231, %v4590
    %4592 = vmatmul.f32.gmra.mxu0 %v4151
    %v4593 = vpop.f32.mrf.mxu0
    %v4594 = vadd.f32 %v4231, %v4593
    %4595 = vmatmul.f32.gmra.mxu0 %v4154
    %v4596 = vpop.f32.mrf.mxu0
    %v4597 = vadd.f32 %v4231, %v4596
    %4598 = vmatmul.f32.gmra.mxu0 %v4157
    %v4599 = vpop.f32.mrf.mxu0
    %v4600 = vadd.f32 %v4231, %v4599
    %4601 = vmatmul.f32.gmra.mxu0 %v4160
    %v4602 = vpop.f32.mrf.mxu0
    %v4603 = vadd.f32 %v4231, %v4602
    %4604 = vmatmul.f32.gmra.mxu0 %v4163
    %v4605 = vpop.f32.mrf.mxu0
    %v4606 = vadd.f32 %v4231, %v4605
    %4607 = vmatmul.f32.gmra.mxu0 %v4166
    %v4608 = vpop.f32.mrf.mxu0
    %v4609 = vadd.f32 %v4231, %v4608
    %4610 = vmatmul.f32.gmra.mxu0 %v4169
    %v4611 = vpop.f32.mrf.mxu0
    %v4612 = vadd.f32 %v4231, %v4611
    %4613 = vmatmul.f32.gmra.mxu0 %v4172
    %v4614 = vpop.f32.mrf.mxu0
    %v4615 = vadd.f32 %v4231, %v4614
    %4616 = vmatmul.f32.gmra.mxu0 %v4175
    %v4617 = vpop.f32.mrf.mxu0
    %v4618 = vadd.f32 %v4231, %v4617
    %4619 = vmatmul.f32.gmra.mxu0 %v4178
    %v4620 = vpop.f32.mrf.mxu0
    %v4621 = vadd.f32 %v4231, %v4620
    %4622 = vmatmul.f32.gmra.mxu0 %v4181
    %v4623 = vpop.f32.mrf.mxu0
    %v4624 = vadd.f32 %v4231, %v4623
    %4625 = vmatmul.f32.gmra.mxu0 %v4184
    %v4626 = vpop.f32.mrf.mxu0
    %v4627 = vadd.f32 %v4231, %v4626
    %4628 = vmatmul.f32.gmra.mxu0 %v4187
    %v4629 = vpop.f32.mrf.mxu0
    %v4630 = vadd.f32 %v4231, %v4629
    %4631 = vmatmul.f32.gmra.mxu0 %v4190
    %v4632 = vpop.f32.mrf.mxu0
    %v4633 = vadd.f32 %v4231, %v4632
    %4634 = vdwg.mxu0
    %4635 = vmatpush.msra.mxu0 %v4224
    %4636 = vmatpush.msra.mxu0 %v4223
    %4637 = vmatpush.msra.mxu0 %v4222
    %4638 = vmatpush.msra.mxu0 %v4221
    %4639 = vmatpush.msra.mxu0 %v4220
    %4640 = vmatpush.msra.mxu0 %v4219
    %4641 = vmatpush.msra.mxu0 %v4218
    %4642 = vmatpush.msra.mxu0 %v4217
    %4643 = vmatpush.msra.mxu0 %v4216
    %4644 = vmatpush.msra.mxu0 %v4215
    %4645 = vmatpush.msra.mxu0 %v4214
    %4646 = vmatpush.msra.mxu0 %v4213
    %4647 = vmatpush.msra.mxu0 %v4212
    %4648 = vmatpush.msra.mxu0 %v4211
    %4649 = vmatpush.msra.mxu0 %v4210
    %4650 = vmatpush.msra.mxu0 %v4209
    %4651 = vmatmul.f32.gmra.mxu0 %v4002
    %v4652 = vpop.f32.mrf.mxu0
    %v4653 = vadd.f32 %v4444, %v4652
    %4654 = vmatmul.f32.gmra.mxu0 %v4005
    %v4655 = vpop.f32.mrf.mxu0
    %v4656 = vadd.f32 %v4447, %v4655
    %4657 = vmatmul.f32.gmra.mxu0 %v4008
    %v4658 = vpop.f32.mrf.mxu0
    %v4659 = vadd.f32 %v4450, %v4658
    %4660 = vmatmul.f32.gmra.mxu0 %v4011
    %v4661 = vpop.f32.mrf.mxu0
    %v4662 = vadd.f32 %v4453, %v4661
    %4663 = vmatmul.f32.gmra.mxu0 %v4014
    %v4664 = vpop.f32.mrf.mxu0
    %v4665 = vadd.f32 %v4456, %v4664
    %4666 = vmatmul.f32.gmra.mxu0 %v4017
    %v4667 = vpop.f32.mrf.mxu0
    %v4668 = vadd.f32 %v4459, %v4667
    %4669 = vmatmul.f32.gmra.mxu0 %v4020
    %v4670 = vpop.f32.mrf.mxu0
    %v4671 = vadd.f32 %v4462, %v4670
    %4672 = vmatmul.f32.gmra.mxu0 %v4023
    %v4673 = vpop.f32.mrf.mxu0
    %v4674 = vadd.f32 %v4465, %v4673
    %4675 = vmatmul.f32.gmra.mxu0 %v4026
    %v4676 = vpop.f32.mrf.mxu0
    %v4677 = vadd.f32 %v4468, %v4676
    %4678 = vmatmul.f32.gmra.mxu0 %v4029
    %v4679 = vpop.f32.mrf.mxu0
    %v4680 = vadd.f32 %v4471, %v4679
    %4681 = vmatmul.f32.gmra.mxu0 %v4032
    %v4682 = vpop.f32.mrf.mxu0
    %v4683 = vadd.f32 %v4474, %v4682
    %4684 = vmatmul.f32.gmra.mxu0 %v4035
    %v4685 = vpop.f32.mrf.mxu0
    %v4686 = vadd.f32 %v4477, %v4685
    %4687 = vmatmul.f32.gmra.mxu0 %v4038
    %v4688 = vpop.f32.mrf.mxu0
    %v4689 = vadd.f32 %v4480, %v4688
    %4690 = vmatmul.f32.gmra.mxu0 %v4041
    %v4691 = vpop.f32.mrf.mxu0
    %v4692 = vadd.f32 %v4483, %v4691
    %4693 = vmatmul.f32.gmra.mxu0 %v4044
    %v4694 = vpop.f32.mrf.mxu0
    %v4695 = vadd.f32 %v4486, %v4694
    %4696 = vmatmul.f32.gmra.mxu0 %v4047
    %v4697 = vpop.f32.mrf.mxu0
    %v4698 = vadd.f32 %v4489, %v4697
    %4699 = vmatmul.f32.gmra.mxu0 %v4050
    %v4700 = vpop.f32.mrf.mxu0
    %v4701 = vadd.f32 %v4492, %v4700
    %4702 = vmatmul.f32.gmra.mxu0 %v4053
    %v4703 = vpop.f32.mrf.mxu0
    %v4704 = vadd.f32 %v4495, %v4703
    %4705 = vmatmul.f32.gmra.mxu0 %v4056
    %v4706 = vpop.f32.mrf.mxu0
    %v4707 = vadd.f32 %v4498, %v4706
    %4708 = vmatmul.f32.gmra.mxu0 %v4059
    %v4709 = vpop.f32.mrf.mxu0
    %v4710 = vadd.f32 %v4501, %v4709
    %4711 = vmatmul.f32.gmra.mxu0 %v4062
    %v4712 = vpop.f32.mrf.mxu0
    %v4713 = vadd.f32 %v4504, %v4712
    %4714 = vmatmul.f32.gmra.mxu0 %v4065
    %v4715 = vpop.f32.mrf.mxu0
    %v4716 = vadd.f32 %v4507, %v4715
    %4717 = vmatmul.f32.gmra.mxu0 %v4068
    %v4718 = vpop.f32.mrf.mxu0
    %v4719 = vadd.f32 %v4510, %v4718
    %4720 = vmatmul.f32.gmra.mxu0 %v4071
    %v4721 = vpop.f32.mrf.mxu0
    %v4722 = vadd.f32 %v4513, %v4721
    %4723 = vmatmul.f32.gmra.mxu0 %v4074
    %v4724 = vpop.f32.mrf.mxu0
    %v4725 = vadd.f32 %v4516, %v4724
    %4726 = vmatmul.f32.gmra.mxu0 %v4077
    %v4727 = vpop.f32.mrf.mxu0
    %v4728 = vadd.f32 %v4519, %v4727
    %4729 = vmatmul.f32.gmra.mxu0 %v4080
    %v4730 = vpop.f32.mrf.mxu0
    %v4731 = vadd.f32 %v4522, %v4730
    %4732 = vmatmul.f32.gmra.mxu0 %v4083
    %v4733 = vpop.f32.mrf.mxu0
    %v4734 = vadd.f32 %v4525, %v4733
    %4735 = vmatmul.f32.gmra.mxu0 %v4086
    %v4736 = vpop.f32.mrf.mxu0
    %v4737 = vadd.f32 %v4528, %v4736
    %4738 = vmatmul.f32.gmra.mxu0 %v4089
    %v4739 = vpop.f32.mrf.mxu0
    %v4740 = vadd.f32 %v4531, %v4739
    %4741 = vmatmul.f32.gmra.mxu0 %v4092
    %v4742 = vpop.f32.mrf.mxu0
    %v4743 = vadd.f32 %v4534, %v4742
    %4744 = vmatmul.f32.gmra.mxu0 %v4095
    %v4745 = vpop.f32.mrf.mxu0
    %v4746 = vadd.f32 %v4537, %v4745
    %4747 = vmatmul.f32.gmra.mxu0 %v4098
    %v4748 = vpop.f32.mrf.mxu0
    %v4749 = vadd.f32 %v4540, %v4748
    %4750 = vmatmul.f32.gmra.mxu0 %v4101
    %v4751 = vpop.f32.mrf.mxu0
    %v4752 = vadd.f32 %v4543, %v4751
    %4753 = vmatmul.f32.gmra.mxu0 %v4104
    %v4754 = vpop.f32.mrf.mxu0
    %v4755 = vadd.f32 %v4546, %v4754
    %4756 = vmatmul.f32.gmra.mxu0 %v4107
    %v4757 = vpop.f32.mrf.mxu0
    %v4758 = vadd.f32 %v4549, %v4757
    %4759 = vmatmul.f32.gmra.mxu0 %v4110
    %v4760 = vpop.f32.mrf.mxu0
    %v4761 = vadd.f32 %v4552, %v4760
    %4762 = vmatmul.f32.gmra.mxu0 %v4113
    %v4763 = vpop.f32.mrf.mxu0
    %v4764 = vadd.f32 %v4555, %v4763
    %4765 = vmatmul.f32.gmra.mxu0 %v4116
    %v4766 = vpop.f32.mrf.mxu0
    %v4767 = vadd.f32 %v4558, %v4766
    %4768 = vmatmul.f32.gmra.mxu0 %v4119
    %v4769 = vpop.f32.mrf.mxu0
    %v4770 = vadd.f32 %v4561, %v4769
    %4771 = vmatmul.f32.gmra.mxu0 %v4122
    %v4772 = vpop.f32.mrf.mxu0
    %v4773 = vadd.f32 %v4564, %v4772
    %4774 = vmatmul.f32.gmra.mxu0 %v4125
    %v4775 = vpop.f32.mrf.mxu0
    %v4776 = vadd.f32 %v4567, %v4775
    %4777 = vmatmul.f32.gmra.mxu0 %v4128
    %v4778 = vpop.f32.mrf.mxu0
    %v4779 = vadd.f32 %v4570, %v4778
    %4780 = vmatmul.f32.gmra.mxu0 %v4131
    %v4781 = vpop.f32.mrf.mxu0
    %v4782 = vadd.f32 %v4573, %v4781
    %4783 = vmatmul.f32.gmra.mxu0 %v4134
    %v4784 = vpop.f32.mrf.mxu0
    %v4785 = vadd.f32 %v4576, %v4784
    %4786 = vmatmul.f32.gmra.mxu0 %v4137
    %v4787 = vpop.f32.mrf.mxu0
    %v4788 = vadd.f32 %v4579, %v4787
    %4789 = vmatmul.f32.gmra.mxu0 %v4140
    %v4790 = vpop.f32.mrf.mxu0
    %v4791 = vadd.f32 %v4582, %v4790
    %4792 = vmatmul.f32.gmra.mxu0 %v4143
    %v4793 = vpop.f32.mrf.mxu0
    %v4794 = vadd.f32 %v4585, %v4793
    %4795 = vmatmul.f32.gmra.mxu0 %v4146
    %v4796 = vpop.f32.mrf.mxu0
    %v4797 = vadd.f32 %v4588, %v4796
    %4798 = vmatmul.f32.gmra.mxu0 %v4149
    %v4799 = vpop.f32.mrf.mxu0
    %v4800 = vadd.f32 %v4591, %v4799
    %4801 = vmatmul.f32.gmra.mxu0 %v4152
    %v4802 = vpop.f32.mrf.mxu0
    %v4803 = vadd.f32 %v4594, %v4802
    %4804 = vmatmul.f32.gmra.mxu0 %v4155
    %v4805 = vpop.f32.mrf.mxu0
    %v4806 = vadd.f32 %v4597, %v4805
    %4807 = vmatmul.f32.gmra.mxu0 %v4158
    %v4808 = vpop.f32.mrf.mxu0
    %v4809 = vadd.f32 %v4600, %v4808
    %4810 = vmatmul.f32.gmra.mxu0 %v4161
    %v4811 = vpop.f32.mrf.mxu0
    %v4812 = vadd.f32 %v4603, %v4811
    %4813 = vmatmul.f32.gmra.mxu0 %v4164
    %v4814 = vpop.f32.mrf.mxu0
    %v4815 = vadd.f32 %v4606, %v4814
    %4816 = vmatmul.f32.gmra.mxu0 %v4167
    %v4817 = vpop.f32.mrf.mxu0
    %v4818 = vadd.f32 %v4609, %v4817
    %4819 = vmatmul.f32.gmra.mxu0 %v4170
    %v4820 = vpop.f32.mrf.mxu0
    %v4821 = vadd.f32 %v4612, %v4820
    %4822 = vmatmul.f32.gmra.mxu0 %v4173
    %v4823 = vpop.f32.mrf.mxu0
    %v4824 = vadd.f32 %v4615, %v4823
    %4825 = vmatmul.f32.gmra.mxu0 %v4176
    %v4826 = vpop.f32.mrf.mxu0
    %v4827 = vadd.f32 %v4618, %v4826
    %4828 = vmatmul.f32.gmra.mxu0 %v4179
    %v4829 = vpop.f32.mrf.mxu0
    %v4830 = vadd.f32 %v4621, %v4829
    %4831 = vmatmul.f32.gmra.mxu0 %v4182
    %v4832 = vpop.f32.mrf.mxu0
    %v4833 = vadd.f32 %v4624, %v4832
    %4834 = vmatmul.f32.gmra.mxu0 %v4185
    %v4835 = vpop.f32.mrf.mxu0
    %v4836 = vadd.f32 %v4627, %v4835
    %4837 = vmatmul.f32.gmra.mxu0 %v4188
    %v4838 = vpop.f32.mrf.mxu0
    %v4839 = vadd.f32 %v4630, %v4838
    %4840 = vmatmul.f32.gmra.mxu0 %v4191
    %v4841 = vpop.f32.mrf.mxu0
    %v4842 = vadd.f32 %v4633, %v4841
    %4843 = vdwg.mxu0
    %4844 = vmatpush.msra.mxu0 0.0
    %4845 = vmatpush.msra.mxu0 0.0
    %4846 = vmatpush.msra.mxu0 0.0
    %4847 = vmatpush.msra.mxu0 0.0
    %4848 = vmatpush.msra.mxu0 0.0
    %4849 = vmatpush.msra.mxu0 0.0
    %4850 = vmatpush.msra.mxu0 0.0
    %4851 = vmatpush.msra.mxu0 0.0
    %4852 = vmatpush.msra.mxu0 0.0
    %4853 = vmatpush.msra.mxu0 0.0
    %4854 = vmatpush.msra.mxu0 0.0
    %4855 = vmatpush.msra.mxu0 0.0
    %4856 = vmatpush.msra.mxu0 %v4228
    %4857 = vmatpush.msra.mxu0 %v4227
    %4858 = vmatpush.msra.mxu0 %v4226
    %4859 = vmatpush.msra.mxu0 %v4225
    %4860 = vmatmul.f32.gmra.mxu0 %v4235
    %v4861 = vpop.f32.mrf.mxu0
    %v4862 = vadd.f32 %v4653, %v4861
    %4863 = vmatmul.f32.gmra.mxu0 %v4238
    %v4864 = vpop.f32.mrf.mxu0
    %v4865 = vadd.f32 %v4656, %v4864
    %4866 = vmatmul.f32.gmra.mxu0 %v4241
    %v4867 = vpop.f32.mrf.mxu0
    %v4868 = vadd.f32 %v4659, %v4867
    %4869 = vmatmul.f32.gmra.mxu0 %v4244
    %v4870 = vpop.f32.mrf.mxu0
    %v4871 = vadd.f32 %v4662, %v4870
    %4872 = vmatmul.f32.gmra.mxu0 %v4247
    %v4873 = vpop.f32.mrf.mxu0
    %v4874 = vadd.f32 %v4665, %v4873
    %4875 = vmatmul.f32.gmra.mxu0 %v4250
    %v4876 = vpop.f32.mrf.mxu0
    %v4877 = vadd.f32 %v4668, %v4876
    %4878 = vmatmul.f32.gmra.mxu0 %v4253
    %v4879 = vpop.f32.mrf.mxu0
    %v4880 = vadd.f32 %v4671, %v4879
    %4881 = vmatmul.f32.gmra.mxu0 %v4256
    %v4882 = vpop.f32.mrf.mxu0
    %v4883 = vadd.f32 %v4674, %v4882
    %4884 = vmatmul.f32.gmra.mxu0 %v4259
    %v4885 = vpop.f32.mrf.mxu0
    %v4886 = vadd.f32 %v4677, %v4885
    %4887 = vmatmul.f32.gmra.mxu0 %v4262
    %v4888 = vpop.f32.mrf.mxu0
    %v4889 = vadd.f32 %v4680, %v4888
    %4890 = vmatmul.f32.gmra.mxu0 %v4265
    %v4891 = vpop.f32.mrf.mxu0
    %v4892 = vadd.f32 %v4683, %v4891
    %4893 = vmatmul.f32.gmra.mxu0 %v4268
    %v4894 = vpop.f32.mrf.mxu0
    %v4895 = vadd.f32 %v4686, %v4894
    %4896 = vmatmul.f32.gmra.mxu0 %v4271
    %v4897 = vpop.f32.mrf.mxu0
    %v4898 = vadd.f32 %v4689, %v4897
    %4899 = vmatmul.f32.gmra.mxu0 %v4274
    %v4900 = vpop.f32.mrf.mxu0
    %v4901 = vadd.f32 %v4692, %v4900
    %4902 = vmatmul.f32.gmra.mxu0 %v4277
    %v4903 = vpop.f32.mrf.mxu0
    %v4904 = vadd.f32 %v4695, %v4903
    %4905 = vmatmul.f32.gmra.mxu0 %v4280
    %v4906 = vpop.f32.mrf.mxu0
    %v4907 = vadd.f32 %v4698, %v4906
    %4908 = vmatmul.f32.gmra.mxu0 %v4283
    %v4909 = vpop.f32.mrf.mxu0
    %v4910 = vadd.f32 %v4701, %v4909
    %4911 = vmatmul.f32.gmra.mxu0 %v4286
    %v4912 = vpop.f32.mrf.mxu0
    %v4913 = vadd.f32 %v4704, %v4912
    %4914 = vmatmul.f32.gmra.mxu0 %v4289
    %v4915 = vpop.f32.mrf.mxu0
    %v4916 = vadd.f32 %v4707, %v4915
    %4917 = vmatmul.f32.gmra.mxu0 %v4292
    %v4918 = vpop.f32.mrf.mxu0
    %v4919 = vadd.f32 %v4710, %v4918
    %4920 = vmatmul.f32.gmra.mxu0 %v4295
    %v4921 = vpop.f32.mrf.mxu0
    %v4922 = vadd.f32 %v4713, %v4921
    %4923 = vmatmul.f32.gmra.mxu0 %v4298
    %v4924 = vpop.f32.mrf.mxu0
    %v4925 = vadd.f32 %v4716, %v4924
    %4926 = vmatmul.f32.gmra.mxu0 %v4301
    %v4927 = vpop.f32.mrf.mxu0
    %v4928 = vadd.f32 %v4719, %v4927
    %4929 = vmatmul.f32.gmra.mxu0 %v4304
    %v4930 = vpop.f32.mrf.mxu0
    %v4931 = vadd.f32 %v4722, %v4930
    %4932 = vmatmul.f32.gmra.mxu0 %v4307
    %v4933 = vpop.f32.mrf.mxu0
    %v4934 = vadd.f32 %v4725, %v4933
    %4935 = vmatmul.f32.gmra.mxu0 %v4310
    %v4936 = vpop.f32.mrf.mxu0
    %v4937 = vadd.f32 %v4728, %v4936
    %4938 = vmatmul.f32.gmra.mxu0 %v4313
    %v4939 = vpop.f32.mrf.mxu0
    %v4940 = vadd.f32 %v4731, %v4939
    %4941 = vmatmul.f32.gmra.mxu0 %v4316
    %v4942 = vpop.f32.mrf.mxu0
    %v4943 = vadd.f32 %v4734, %v4942
    %4944 = vmatmul.f32.gmra.mxu0 %v4319
    %v4945 = vpop.f32.mrf.mxu0
    %v4946 = vadd.f32 %v4737, %v4945
    %4947 = vmatmul.f32.gmra.mxu0 %v4322
    %v4948 = vpop.f32.mrf.mxu0
    %v4949 = vadd.f32 %v4740, %v4948
    %4950 = vmatmul.f32.gmra.mxu0 %v4325
    %v4951 = vpop.f32.mrf.mxu0
    %v4952 = vadd.f32 %v4743, %v4951
    %4953 = vmatmul.f32.gmra.mxu0 %v4328
    %v4954 = vpop.f32.mrf.mxu0
    %v4955 = vadd.f32 %v4746, %v4954
    %4956 = vmatmul.f32.gmra.mxu0 %v4331
    %v4957 = vpop.f32.mrf.mxu0
    %v4958 = vadd.f32 %v4749, %v4957
    %4959 = vmatmul.f32.gmra.mxu0 %v4334
    %v4960 = vpop.f32.mrf.mxu0
    %v4961 = vadd.f32 %v4752, %v4960
    %4962 = vmatmul.f32.gmra.mxu0 %v4337
    %v4963 = vpop.f32.mrf.mxu0
    %v4964 = vadd.f32 %v4755, %v4963
    %4965 = vmatmul.f32.gmra.mxu0 %v4340
    %v4966 = vpop.f32.mrf.mxu0
    %v4967 = vadd.f32 %v4758, %v4966
    %4968 = vmatmul.f32.gmra.mxu0 %v4343
    %v4969 = vpop.f32.mrf.mxu0
    %v4970 = vadd.f32 %v4761, %v4969
    %4971 = vmatmul.f32.gmra.mxu0 %v4346
    %v4972 = vpop.f32.mrf.mxu0
    %v4973 = vadd.f32 %v4764, %v4972
    %4974 = vmatmul.f32.gmra.mxu0 %v4349
    %v4975 = vpop.f32.mrf.mxu0
    %v4976 = vadd.f32 %v4767, %v4975
    %4977 = vmatmul.f32.gmra.mxu0 %v4352
    %v4978 = vpop.f32.mrf.mxu0
    %v4979 = vadd.f32 %v4770, %v4978
    %4980 = vmatmul.f32.gmra.mxu0 %v4355
    %v4981 = vpop.f32.mrf.mxu0
    %v4982 = vadd.f32 %v4773, %v4981
    %4983 = vmatmul.f32.gmra.mxu0 %v4358
    %v4984 = vpop.f32.mrf.mxu0
    %v4985 = vadd.f32 %v4776, %v4984
    %4986 = vmatmul.f32.gmra.mxu0 %v4361
    %v4987 = vpop.f32.mrf.mxu0
    %v4988 = vadd.f32 %v4779, %v4987
    %4989 = vmatmul.f32.gmra.mxu0 %v4364
    %v4990 = vpop.f32.mrf.mxu0
    %v4991 = vadd.f32 %v4782, %v4990
    %4992 = vmatmul.f32.gmra.mxu0 %v4367
    %v4993 = vpop.f32.mrf.mxu0
    %v4994 = vadd.f32 %v4785, %v4993
    %4995 = vmatmul.f32.gmra.mxu0 %v4370
    %v4996 = vpop.f32.mrf.mxu0
    %v4997 = vadd.f32 %v4788, %v4996
    %4998 = vmatmul.f32.gmra.mxu0 %v4373
    %v4999 = vpop.f32.mrf.mxu0
    %v5000 = vadd.f32 %v4791, %v4999
    %5001 = vmatmul.f32.gmra.mxu0 %v4376
    %v5002 = vpop.f32.mrf.mxu0
    %v5003 = vadd.f32 %v4794, %v5002
    %5004 = vmatmul.f32.gmra.mxu0 %v4379
    %v5005 = vpop.f32.mrf.mxu0
    %v5006 = vadd.f32 %v4797, %v5005
    %5007 = vmatmul.f32.gmra.mxu0 %v4382
    %v5008 = vpop.f32.mrf.mxu0
    %v5009 = vadd.f32 %v4800, %v5008
    %5010 = vmatmul.f32.gmra.mxu0 %v4385
    %v5011 = vpop.f32.mrf.mxu0
    %v5012 = vadd.f32 %v4803, %v5011
    %5013 = vmatmul.f32.gmra.mxu0 %v4388
    %v5014 = vpop.f32.mrf.mxu0
    %v5015 = vadd.f32 %v4806, %v5014
    %5016 = vmatmul.f32.gmra.mxu0 %v4391
    %v5017 = vpop.f32.mrf.mxu0
    %v5018 = vadd.f32 %v4809, %v5017
    %5019 = vmatmul.f32.gmra.mxu0 %v4394
    %v5020 = vpop.f32.mrf.mxu0
    %v5021 = vadd.f32 %v4812, %v5020
    %5022 = vmatmul.f32.gmra.mxu0 %v4397
    %v5023 = vpop.f32.mrf.mxu0
    %v5024 = vadd.f32 %v4815, %v5023
    %5025 = vmatmul.f32.gmra.mxu0 %v4400
    %v5026 = vpop.f32.mrf.mxu0
    %v5027 = vadd.f32 %v4818, %v5026
    %5028 = vmatmul.f32.gmra.mxu0 %v4403
    %v5029 = vpop.f32.mrf.mxu0
    %v5030 = vadd.f32 %v4821, %v5029
    %5031 = vmatmul.f32.gmra.mxu0 %v4406
    %v5032 = vpop.f32.mrf.mxu0
    %v5033 = vadd.f32 %v4824, %v5032
    %5034 = vmatmul.f32.gmra.mxu0 %v4409
    %v5035 = vpop.f32.mrf.mxu0
    %v5036 = vadd.f32 %v4827, %v5035
    %5037 = vmatmul.f32.gmra.mxu0 %v4412
    %v5038 = vpop.f32.mrf.mxu0
    %v5039 = vadd.f32 %v4830, %v5038
    %5040 = vmatmul.f32.gmra.mxu0 %v4415
    %v5041 = vpop.f32.mrf.mxu0
    %v5042 = vadd.f32 %v4833, %v5041
    %5043 = vmatmul.f32.gmra.mxu0 %v4418
    %v5044 = vpop.f32.mrf.mxu0
    %v5045 = vadd.f32 %v4836, %v5044
    %5046 = vmatmul.f32.gmra.mxu0 %v4421
    %v5047 = vpop.f32.mrf.mxu0
    %v5048 = vadd.f32 %v4839, %v5047
    %5049 = vmatmul.f32.gmra.mxu0 %v4424
    %v5050 = vpop.f32.mrf.mxu0
    %v5051 = vadd.f32 %v4842, %v5050
    %5052 = vdwg.mxu0
    %v5053 = vlaneseq
    %v5054 = vand.u32 %v5053, 127
    %v5055 = vand.u32 2147483647, %v4862
    %v5056 = vand.u32 2147483647, %v4865
    %v5057 = vand.u32 2147483647, %v4868
    %v5058 = vand.u32 2147483647, %v4871
    %v5059 = vand.u32 2147483647, %v4874
    %v5060 = vand.u32 2147483647, %v4877
    %v5061 = vand.u32 2147483647, %v4880
    %v5062 = vand.u32 2147483647, %v4883
    %v5063 = vand.u32 2147483647, %v4886
    %v5064 = vand.u32 2147483647, %v4889
    %v5065 = vand.u32 2147483647, %v4892
    %v5066 = vand.u32 2147483647, %v4895
    %v5067 = vand.u32 2147483647, %v4898
    %v5068 = vand.u32 2147483647, %v4901
    %v5069 = vand.u32 2147483647, %v4904
    %v5070 = vand.u32 2147483647, %v4907
    %v5071 = vand.u32 2147483647, %v4910
    %v5072 = vand.u32 2147483647, %v4913
    %v5073 = vand.u32 2147483647, %v4916
    %v5074 = vand.u32 2147483647, %v4919
    %v5075 = vand.u32 2147483647, %v4922
    %v5076 = vand.u32 2147483647, %v4925
    %v5077 = vand.u32 2147483647, %v4928
    %v5078 = vand.u32 2147483647, %v4931
    %v5079 = vand.u32 2147483647, %v4934
    %v5080 = vand.u32 2147483647, %v4937
    %v5081 = vand.u32 2147483647, %v4940
    %v5082 = vand.u32 2147483647, %v4943
    %v5083 = vand.u32 2147483647, %v4946
    %v5084 = vand.u32 2147483647, %v4949
    %v5085 = vand.u32 2147483647, %v4952
    %v5086 = vand.u32 2147483647, %v4955
    %v5087 = vand.u32 2147483647, %v4958
    %v5088 = vand.u32 2147483647, %v4961
    %v5089 = vand.u32 2147483647, %v4964
    %v5090 = vand.u32 2147483647, %v4967
    %v5091 = vand.u32 2147483647, %v4970
    %v5092 = vand.u32 2147483647, %v4973
    %v5093 = vand.u32 2147483647, %v4976
    %v5094 = vand.u32 2147483647, %v4979
    %v5095 = vand.u32 2147483647, %v4982
    %v5096 = vand.u32 2147483647, %v4985
    %v5097 = vand.u32 2147483647, %v4988
    %v5098 = vand.u32 2147483647, %v4991
    %v5099 = vand.u32 2147483647, %v4994
    %v5100 = vand.u32 2147483647, %v4997
    %v5101 = vand.u32 2147483647, %v5000
    %v5102 = vand.u32 2147483647, %v5003
    %v5103 = vand.u32 2147483647, %v5006
    %v5104 = vand.u32 2147483647, %v5009
    %v5105 = vand.u32 2147483647, %v5012
    %v5106 = vand.u32 2147483647, %v5015
    %v5107 = vand.u32 2147483647, %v5018
    %v5108 = vand.u32 2147483647, %v5021
    %v5109 = vand.u32 2147483647, %v5024
    %v5110 = vand.u32 2147483647, %v5027
    %v5111 = vand.u32 2147483647, %v5030
    %v5112 = vand.u32 2147483647, %v5033
    %v5113 = vand.u32 2147483647, %v5036
    %v5114 = vand.u32 2147483647, %v5039
    %v5115 = vand.u32 2147483647, %v5042
    %v5116 = vand.u32 2147483647, %v5045
    %v5117 = vand.u32 2147483647, %v5048
    %v5118 = vand.u32 2147483647, %v5051
    %v5119 = vadd.f32 %v5055, 1.0
    %v5120 = vadd.f32 %v5056, 1.0
    %v5121 = vadd.f32 %v5057, 1.0
    %v5122 = vadd.f32 %v5058, 1.0
    %v5123 = vadd.f32 %v5059, 1.0
    %v5124 = vadd.f32 %v5060, 1.0
    %v5125 = vadd.f32 %v5061, 1.0
    %v5126 = vadd.f32 %v5062, 1.0
    %v5127 = vadd.f32 %v5063, 1.0
    %v5128 = vadd.f32 %v5064, 1.0
    %v5129 = vadd.f32 %v5065, 1.0
    %v5130 = vadd.f32 %v5066, 1.0
    %v5131 = vadd.f32 %v5067, 1.0
    %v5132 = vadd.f32 %v5068, 1.0
    %v5133 = vadd.f32 %v5069, 1.0
    %v5134 = vadd.f32 %v5070, 1.0
    %v5135 = vadd.f32 %v5071, 1.0
    %v5136 = vadd.f32 %v5072, 1.0
    %v5137 = vadd.f32 %v5073, 1.0
    %v5138 = vadd.f32 %v5074, 1.0
    %v5139 = vadd.f32 %v5075, 1.0
    %v5140 = vadd.f32 %v5076, 1.0
    %v5141 = vadd.f32 %v5077, 1.0
    %v5142 = vadd.f32 %v5078, 1.0
    %v5143 = vadd.f32 %v5079, 1.0
    %v5144 = vadd.f32 %v5080, 1.0
    %v5145 = vadd.f32 %v5081, 1.0
    %v5146 = vadd.f32 %v5082, 1.0
    %v5147 = vadd.f32 %v5083, 1.0
    %v5148 = vadd.f32 %v5084, 1.0
    %v5149 = vadd.f32 %v5085, 1.0
    %v5150 = vadd.f32 %v5086, 1.0
    %v5151 = vadd.f32 %v5087, 1.0
    %v5152 = vadd.f32 %v5088, 1.0
    %v5153 = vadd.f32 %v5089, 1.0
    %v5154 = vadd.f32 %v5090, 1.0
    %v5155 = vadd.f32 %v5091, 1.0
    %v5156 = vadd.f32 %v5092, 1.0
    %v5157 = vadd.f32 %v5093, 1.0
    %v5158 = vadd.f32 %v5094, 1.0
    %v5159 = vadd.f32 %v5095, 1.0
    %v5160 = vadd.f32 %v5096, 1.0
    %v5161 = vadd.f32 %v5097, 1.0
    %v5162 = vadd.f32 %v5098, 1.0
    %v5163 = vadd.f32 %v5099, 1.0
    %v5164 = vadd.f32 %v5100, 1.0
    %v5165 = vadd.f32 %v5101, 1.0
    %v5166 = vadd.f32 %v5102, 1.0
    %v5167 = vadd.f32 %v5103, 1.0
    %v5168 = vadd.f32 %v5104, 1.0
    %v5169 = vadd.f32 %v5105, 1.0
    %v5170 = vadd.f32 %v5106, 1.0
    %v5171 = vadd.f32 %v5107, 1.0
    %v5172 = vadd.f32 %v5108, 1.0
    %v5173 = vadd.f32 %v5109, 1.0
    %v5174 = vadd.f32 %v5110, 1.0
    %v5175 = vadd.f32 %v5111, 1.0
    %v5176 = vadd.f32 %v5112, 1.0
    %v5177 = vadd.f32 %v5113, 1.0
    %v5178 = vadd.f32 %v5114, 1.0
    %v5179 = vadd.f32 %v5115, 1.0
    %v5180 = vadd.f32 %v5116, 1.0
    %v5181 = vadd.f32 %v5117, 1.0
    %v5182 = vadd.f32 %v5118, 1.0
    %v5183 = vrcp.pop %v5119
    %v5184 = vmul.f32 %v5119, %v5183
    %v5185 = vsub.f32 1.0, %v5184
    %v5186 = vmul.f32 %v5183, %v5185
    %v5187 = vadd.f32 %v5183, %v5186
    %vm5188 = vweird.f32 %v5119
    %vm5189 = vweird.f32 %v5183
    %vm5190 = vmor %vm5188, %vm5189
    %v5191 = vsel %vm5190, %v5183, %v5187
    %v5192 = vand.u32 2147483647, %v5119
    %vm5193 = vcmp.eq.f32.partialorder %v5192, 8.507059e+37
    %v5194 = vand.u32 %v5119, 2147483648
    %v5195 = vor.u32 1.1754944e-38, %v5194
    %v5196 = vsel %vm5193, %v5195, %v5191
    %v5197 = vmul.f32 %v4862, %v5196
    %v5198 = vrcp.pop %v5120
    %v5199 = vmul.f32 %v5120, %v5198
    %v5200 = vsub.f32 1.0, %v5199
    %v5201 = vmul.f32 %v5198, %v5200
    %v5202 = vadd.f32 %v5198, %v5201
    %vm5203 = vweird.f32 %v5120
    %vm5204 = vweird.f32 %v5198
    %vm5205 = vmor %vm5203, %vm5204
    %v5206 = vsel %vm5205, %v5198, %v5202
    %v5207 = vand.u32 2147483647, %v5120
    %vm5208 = vcmp.eq.f32.partialorder %v5207, 8.507059e+37
    %v5209 = vand.u32 %v5120, 2147483648
    %v5210 = vor.u32 1.1754944e-38, %v5209
    %v5211 = vsel %vm5208, %v5210, %v5206
    %v5212 = vmul.f32 %v4865, %v5211
    %v5213 = vrcp.pop %v5121
    %v5214 = vmul.f32 %v5121, %v5213
    %v5215 = vsub.f32 1.0, %v5214
    %v5216 = vmul.f32 %v5213, %v5215
    %v5217 = vadd.f32 %v5213, %v5216
    %vm5218 = vweird.f32 %v5121
    %vm5219 = vweird.f32 %v5213
    %vm5220 = vmor %vm5218, %vm5219
    %v5221 = vsel %vm5220, %v5213, %v5217
    %v5222 = vand.u32 2147483647, %v5121
    %vm5223 = vcmp.eq.f32.partialorder %v5222, 8.507059e+37
    %v5224 = vand.u32 %v5121, 2147483648
    %v5225 = vor.u32 1.1754944e-38, %v5224
    %v5226 = vsel %vm5223, %v5225, %v5221
    %v5227 = vmul.f32 %v4868, %v5226
    %v5228 = vrcp.pop %v5122
    %v5229 = vmul.f32 %v5122, %v5228
    %v5230 = vsub.f32 1.0, %v5229
    %v5231 = vmul.f32 %v5228, %v5230
    %v5232 = vadd.f32 %v5228, %v5231
    %vm5233 = vweird.f32 %v5122
    %vm5234 = vweird.f32 %v5228
    %vm5235 = vmor %vm5233, %vm5234
    %v5236 = vsel %vm5235, %v5228, %v5232
    %v5237 = vand.u32 2147483647, %v5122
    %vm5238 = vcmp.eq.f32.partialorder %v5237, 8.507059e+37
    %v5239 = vand.u32 %v5122, 2147483648
    %v5240 = vor.u32 1.1754944e-38, %v5239
    %v5241 = vsel %vm5238, %v5240, %v5236
    %v5242 = vmul.f32 %v4871, %v5241
    %v5243 = vrcp.pop %v5123
    %v5244 = vmul.f32 %v5123, %v5243
    %v5245 = vsub.f32 1.0, %v5244
    %v5246 = vmul.f32 %v5243, %v5245
    %v5247 = vadd.f32 %v5243, %v5246
    %vm5248 = vweird.f32 %v5123
    %vm5249 = vweird.f32 %v5243
    %vm5250 = vmor %vm5248, %vm5249
    %v5251 = vsel %vm5250, %v5243, %v5247
    %v5252 = vand.u32 2147483647, %v5123
    %vm5253 = vcmp.eq.f32.partialorder %v5252, 8.507059e+37
    %v5254 = vand.u32 %v5123, 2147483648
    %v5255 = vor.u32 1.1754944e-38, %v5254
    %v5256 = vsel %vm5253, %v5255, %v5251
    %v5257 = vmul.f32 %v4874, %v5256
    %v5258 = vrcp.pop %v5124
    %v5259 = vmul.f32 %v5124, %v5258
    %v5260 = vsub.f32 1.0, %v5259
    %v5261 = vmul.f32 %v5258, %v5260
    %v5262 = vadd.f32 %v5258, %v5261
    %vm5263 = vweird.f32 %v5124
    %vm5264 = vweird.f32 %v5258
    %vm5265 = vmor %vm5263, %vm5264
    %v5266 = vsel %vm5265, %v5258, %v5262
    %v5267 = vand.u32 2147483647, %v5124
    %vm5268 = vcmp.eq.f32.partialorder %v5267, 8.507059e+37
    %v5269 = vand.u32 %v5124, 2147483648
    %v5270 = vor.u32 1.1754944e-38, %v5269
    %v5271 = vsel %vm5268, %v5270, %v5266
    %v5272 = vmul.f32 %v4877, %v5271
    %v5273 = vrcp.pop %v5125
    %v5274 = vmul.f32 %v5125, %v5273
    %v5275 = vsub.f32 1.0, %v5274
    %v5276 = vmul.f32 %v5273, %v5275
    %v5277 = vadd.f32 %v5273, %v5276
    %vm5278 = vweird.f32 %v5125
    %vm5279 = vweird.f32 %v5273
    %vm5280 = vmor %vm5278, %vm5279
    %v5281 = vsel %vm5280, %v5273, %v5277
    %v5282 = vand.u32 2147483647, %v5125
    %vm5283 = vcmp.eq.f32.partialorder %v5282, 8.507059e+37
    %v5284 = vand.u32 %v5125, 2147483648
    %v5285 = vor.u32 1.1754944e-38, %v5284
    %v5286 = vsel %vm5283, %v5285, %v5281
    %v5287 = vmul.f32 %v4880, %v5286
    %v5288 = vrcp.pop %v5126
    %v5289 = vmul.f32 %v5126, %v5288
    %v5290 = vsub.f32 1.0, %v5289
    %v5291 = vmul.f32 %v5288, %v5290
    %v5292 = vadd.f32 %v5288, %v5291
    %vm5293 = vweird.f32 %v5126
    %vm5294 = vweird.f32 %v5288
    %vm5295 = vmor %vm5293, %vm5294
    %v5296 = vsel %vm5295, %v5288, %v5292
    %v5297 = vand.u32 2147483647, %v5126
    %vm5298 = vcmp.eq.f32.partialorder %v5297, 8.507059e+37
    %v5299 = vand.u32 %v5126, 2147483648
    %v5300 = vor.u32 1.1754944e-38, %v5299
    %v5301 = vsel %vm5298, %v5300, %v5296
    %v5302 = vmul.f32 %v4883, %v5301
    %v5303 = vrcp.pop %v5127
    %v5304 = vmul.f32 %v5127, %v5303
    %v5305 = vsub.f32 1.0, %v5304
    %v5306 = vmul.f32 %v5303, %v5305
    %v5307 = vadd.f32 %v5303, %v5306
    %vm5308 = vweird.f32 %v5127
    %vm5309 = vweird.f32 %v5303
    %vm5310 = vmor %vm5308, %vm5309
    %v5311 = vsel %vm5310, %v5303, %v5307
    %v5312 = vand.u32 2147483647, %v5127
    %vm5313 = vcmp.eq.f32.partialorder %v5312, 8.507059e+37
    %v5314 = vand.u32 %v5127, 2147483648
    %v5315 = vor.u32 1.1754944e-38, %v5314
    %v5316 = vsel %vm5313, %v5315, %v5311
    %v5317 = vmul.f32 %v4886, %v5316
    %v5318 = vrcp.pop %v5128
    %v5319 = vmul.f32 %v5128, %v5318
    %v5320 = vsub.f32 1.0, %v5319
    %v5321 = vmul.f32 %v5318, %v5320
    %v5322 = vadd.f32 %v5318, %v5321
    %vm5323 = vweird.f32 %v5128
    %vm5324 = vweird.f32 %v5318
    %vm5325 = vmor %vm5323, %vm5324
    %v5326 = vsel %vm5325, %v5318, %v5322
    %v5327 = vand.u32 2147483647, %v5128
    %vm5328 = vcmp.eq.f32.partialorder %v5327, 8.507059e+37
    %v5329 = vand.u32 %v5128, 2147483648
    %v5330 = vor.u32 1.1754944e-38, %v5329
    %v5331 = vsel %vm5328, %v5330, %v5326
    %v5332 = vmul.f32 %v4889, %v5331
    %v5333 = vrcp.pop %v5129
    %v5334 = vmul.f32 %v5129, %v5333
    %v5335 = vsub.f32 1.0, %v5334
    %v5336 = vmul.f32 %v5333, %v5335
    %v5337 = vadd.f32 %v5333, %v5336
    %vm5338 = vweird.f32 %v5129
    %vm5339 = vweird.f32 %v5333
    %vm5340 = vmor %vm5338, %vm5339
    %v5341 = vsel %vm5340, %v5333, %v5337
    %v5342 = vand.u32 2147483647, %v5129
    %vm5343 = vcmp.eq.f32.partialorder %v5342, 8.507059e+37
    %v5344 = vand.u32 %v5129, 2147483648
    %v5345 = vor.u32 1.1754944e-38, %v5344
    %v5346 = vsel %vm5343, %v5345, %v5341
    %v5347 = vmul.f32 %v4892, %v5346
    %v5348 = vrcp.pop %v5130
    %v5349 = vmul.f32 %v5130, %v5348
    %v5350 = vsub.f32 1.0, %v5349
    %v5351 = vmul.f32 %v5348, %v5350
    %v5352 = vadd.f32 %v5348, %v5351
    %vm5353 = vweird.f32 %v5130
    %vm5354 = vweird.f32 %v5348
    %vm5355 = vmor %vm5353, %vm5354
    %v5356 = vsel %vm5355, %v5348, %v5352
    %v5357 = vand.u32 2147483647, %v5130
    %vm5358 = vcmp.eq.f32.partialorder %v5357, 8.507059e+37
    %v5359 = vand.u32 %v5130, 2147483648
    %v5360 = vor.u32 1.1754944e-38, %v5359
    %v5361 = vsel %vm5358, %v5360, %v5356
    %v5362 = vmul.f32 %v4895, %v5361
    %v5363 = vrcp.pop %v5131
    %v5364 = vmul.f32 %v5131, %v5363
    %v5365 = vsub.f32 1.0, %v5364
    %v5366 = vmul.f32 %v5363, %v5365
    %v5367 = vadd.f32 %v5363, %v5366
    %vm5368 = vweird.f32 %v5131
    %vm5369 = vweird.f32 %v5363
    %vm5370 = vmor %vm5368, %vm5369
    %v5371 = vsel %vm5370, %v5363, %v5367
    %v5372 = vand.u32 2147483647, %v5131
    %vm5373 = vcmp.eq.f32.partialorder %v5372, 8.507059e+37
    %v5374 = vand.u32 %v5131, 2147483648
    %v5375 = vor.u32 1.1754944e-38, %v5374
    %v5376 = vsel %vm5373, %v5375, %v5371
    %v5377 = vmul.f32 %v4898, %v5376
    %v5378 = vrcp.pop %v5132
    %v5379 = vmul.f32 %v5132, %v5378
    %v5380 = vsub.f32 1.0, %v5379
    %v5381 = vmul.f32 %v5378, %v5380
    %v5382 = vadd.f32 %v5378, %v5381
    %vm5383 = vweird.f32 %v5132
    %vm5384 = vweird.f32 %v5378
    %vm5385 = vmor %vm5383, %vm5384
    %v5386 = vsel %vm5385, %v5378, %v5382
    %v5387 = vand.u32 2147483647, %v5132
    %vm5388 = vcmp.eq.f32.partialorder %v5387, 8.507059e+37
    %v5389 = vand.u32 %v5132, 2147483648
    %v5390 = vor.u32 1.1754944e-38, %v5389
    %v5391 = vsel %vm5388, %v5390, %v5386
    %v5392 = vmul.f32 %v4901, %v5391
    %v5393 = vrcp.pop %v5133
    %v5394 = vmul.f32 %v5133, %v5393
    %v5395 = vsub.f32 1.0, %v5394
    %v5396 = vmul.f32 %v5393, %v5395
    %v5397 = vadd.f32 %v5393, %v5396
    %vm5398 = vweird.f32 %v5133
    %vm5399 = vweird.f32 %v5393
    %vm5400 = vmor %vm5398, %vm5399
    %v5401 = vsel %vm5400, %v5393, %v5397
    %v5402 = vand.u32 2147483647, %v5133
    %vm5403 = vcmp.eq.f32.partialorder %v5402, 8.507059e+37
    %v5404 = vand.u32 %v5133, 2147483648
    %v5405 = vor.u32 1.1754944e-38, %v5404
    %v5406 = vsel %vm5403, %v5405, %v5401
    %v5407 = vmul.f32 %v4904, %v5406
    %v5408 = vrcp.pop %v5134
    %v5409 = vmul.f32 %v5134, %v5408
    %v5410 = vsub.f32 1.0, %v5409
    %v5411 = vmul.f32 %v5408, %v5410
    %v5412 = vadd.f32 %v5408, %v5411
    %vm5413 = vweird.f32 %v5134
    %vm5414 = vweird.f32 %v5408
    %vm5415 = vmor %vm5413, %vm5414
    %v5416 = vsel %vm5415, %v5408, %v5412
    %v5417 = vand.u32 2147483647, %v5134
    %vm5418 = vcmp.eq.f32.partialorder %v5417, 8.507059e+37
    %v5419 = vand.u32 %v5134, 2147483648
    %v5420 = vor.u32 1.1754944e-38, %v5419
    %v5421 = vsel %vm5418, %v5420, %v5416
    %v5422 = vmul.f32 %v4907, %v5421
    %v5423 = vrcp.pop %v5135
    %v5424 = vmul.f32 %v5135, %v5423
    %v5425 = vsub.f32 1.0, %v5424
    %v5426 = vmul.f32 %v5423, %v5425
    %v5427 = vadd.f32 %v5423, %v5426
    %vm5428 = vweird.f32 %v5135
    %vm5429 = vweird.f32 %v5423
    %vm5430 = vmor %vm5428, %vm5429
    %v5431 = vsel %vm5430, %v5423, %v5427
    %v5432 = vand.u32 2147483647, %v5135
    %vm5433 = vcmp.eq.f32.partialorder %v5432, 8.507059e+37
    %v5434 = vand.u32 %v5135, 2147483648
    %v5435 = vor.u32 1.1754944e-38, %v5434
    %v5436 = vsel %vm5433, %v5435, %v5431
    %v5437 = vmul.f32 %v4910, %v5436
    %v5438 = vrcp.pop %v5136
    %v5439 = vmul.f32 %v5136, %v5438
    %v5440 = vsub.f32 1.0, %v5439
    %v5441 = vmul.f32 %v5438, %v5440
    %v5442 = vadd.f32 %v5438, %v5441
    %vm5443 = vweird.f32 %v5136
    %vm5444 = vweird.f32 %v5438
    %vm5445 = vmor %vm5443, %vm5444
    %v5446 = vsel %vm5445, %v5438, %v5442
    %v5447 = vand.u32 2147483647, %v5136
    %vm5448 = vcmp.eq.f32.partialorder %v5447, 8.507059e+37
    %v5449 = vand.u32 %v5136, 2147483648
    %v5450 = vor.u32 1.1754944e-38, %v5449
    %v5451 = vsel %vm5448, %v5450, %v5446
    %v5452 = vmul.f32 %v4913, %v5451
    %v5453 = vrcp.pop %v5137
    %v5454 = vmul.f32 %v5137, %v5453
    %v5455 = vsub.f32 1.0, %v5454
    %v5456 = vmul.f32 %v5453, %v5455
    %v5457 = vadd.f32 %v5453, %v5456
    %vm5458 = vweird.f32 %v5137
    %vm5459 = vweird.f32 %v5453
    %vm5460 = vmor %vm5458, %vm5459
    %v5461 = vsel %vm5460, %v5453, %v5457
    %v5462 = vand.u32 2147483647, %v5137
    %vm5463 = vcmp.eq.f32.partialorder %v5462, 8.507059e+37
    %v5464 = vand.u32 %v5137, 2147483648
    %v5465 = vor.u32 1.1754944e-38, %v5464
    %v5466 = vsel %vm5463, %v5465, %v5461
    %v5467 = vmul.f32 %v4916, %v5466
    %v5468 = vrcp.pop %v5138
    %v5469 = vmul.f32 %v5138, %v5468
    %v5470 = vsub.f32 1.0, %v5469
    %v5471 = vmul.f32 %v5468, %v5470
    %v5472 = vadd.f32 %v5468, %v5471
    %vm5473 = vweird.f32 %v5138
    %vm5474 = vweird.f32 %v5468
    %vm5475 = vmor %vm5473, %vm5474
    %v5476 = vsel %vm5475, %v5468, %v5472
    %v5477 = vand.u32 2147483647, %v5138
    %vm5478 = vcmp.eq.f32.partialorder %v5477, 8.507059e+37
    %v5479 = vand.u32 %v5138, 2147483648
    %v5480 = vor.u32 1.1754944e-38, %v5479
    %v5481 = vsel %vm5478, %v5480, %v5476
    %v5482 = vmul.f32 %v4919, %v5481
    %v5483 = vrcp.pop %v5139
    %v5484 = vmul.f32 %v5139, %v5483
    %v5485 = vsub.f32 1.0, %v5484
    %v5486 = vmul.f32 %v5483, %v5485
    %v5487 = vadd.f32 %v5483, %v5486
    %vm5488 = vweird.f32 %v5139
    %vm5489 = vweird.f32 %v5483
    %vm5490 = vmor %vm5488, %vm5489
    %v5491 = vsel %vm5490, %v5483, %v5487
    %v5492 = vand.u32 2147483647, %v5139
    %vm5493 = vcmp.eq.f32.partialorder %v5492, 8.507059e+37
    %v5494 = vand.u32 %v5139, 2147483648
    %v5495 = vor.u32 1.1754944e-38, %v5494
    %v5496 = vsel %vm5493, %v5495, %v5491
    %v5497 = vmul.f32 %v4922, %v5496
    %v5498 = vrcp.pop %v5140
    %v5499 = vmul.f32 %v5140, %v5498
    %v5500 = vsub.f32 1.0, %v5499
    %v5501 = vmul.f32 %v5498, %v5500
    %v5502 = vadd.f32 %v5498, %v5501
    %vm5503 = vweird.f32 %v5140
    %vm5504 = vweird.f32 %v5498
    %vm5505 = vmor %vm5503, %vm5504
    %v5506 = vsel %vm5505, %v5498, %v5502
    %v5507 = vand.u32 2147483647, %v5140
    %vm5508 = vcmp.eq.f32.partialorder %v5507, 8.507059e+37
    %v5509 = vand.u32 %v5140, 2147483648
    %v5510 = vor.u32 1.1754944e-38, %v5509
    %v5511 = vsel %vm5508, %v5510, %v5506
    %v5512 = vmul.f32 %v4925, %v5511
    %v5513 = vrcp.pop %v5141
    %v5514 = vmul.f32 %v5141, %v5513
    %v5515 = vsub.f32 1.0, %v5514
    %v5516 = vmul.f32 %v5513, %v5515
    %v5517 = vadd.f32 %v5513, %v5516
    %vm5518 = vweird.f32 %v5141
    %vm5519 = vweird.f32 %v5513
    %vm5520 = vmor %vm5518, %vm5519
    %v5521 = vsel %vm5520, %v5513, %v5517
    %v5522 = vand.u32 2147483647, %v5141
    %vm5523 = vcmp.eq.f32.partialorder %v5522, 8.507059e+37
    %v5524 = vand.u32 %v5141, 2147483648
    %v5525 = vor.u32 1.1754944e-38, %v5524
    %v5526 = vsel %vm5523, %v5525, %v5521
    %v5527 = vmul.f32 %v4928, %v5526
    %v5528 = vrcp.pop %v5142
    %v5529 = vmul.f32 %v5142, %v5528
    %v5530 = vsub.f32 1.0, %v5529
    %v5531 = vmul.f32 %v5528, %v5530
    %v5532 = vadd.f32 %v5528, %v5531
    %vm5533 = vweird.f32 %v5142
    %vm5534 = vweird.f32 %v5528
    %vm5535 = vmor %vm5533, %vm5534
    %v5536 = vsel %vm5535, %v5528, %v5532
    %v5537 = vand.u32 2147483647, %v5142
    %vm5538 = vcmp.eq.f32.partialorder %v5537, 8.507059e+37
    %v5539 = vand.u32 %v5142, 2147483648
    %v5540 = vor.u32 1.1754944e-38, %v5539
    %v5541 = vsel %vm5538, %v5540, %v5536
    %v5542 = vmul.f32 %v4931, %v5541
    %v5543 = vrcp.pop %v5143
    %v5544 = vmul.f32 %v5143, %v5543
    %v5545 = vsub.f32 1.0, %v5544
    %v5546 = vmul.f32 %v5543, %v5545
    %v5547 = vadd.f32 %v5543, %v5546
    %vm5548 = vweird.f32 %v5143
    %vm5549 = vweird.f32 %v5543
    %vm5550 = vmor %vm5548, %vm5549
    %v5551 = vsel %vm5550, %v5543, %v5547
    %v5552 = vand.u32 2147483647, %v5143
    %vm5553 = vcmp.eq.f32.partialorder %v5552, 8.507059e+37
    %v5554 = vand.u32 %v5143, 2147483648
    %v5555 = vor.u32 1.1754944e-38, %v5554
    %v5556 = vsel %vm5553, %v5555, %v5551
    %v5557 = vmul.f32 %v4934, %v5556
    %v5558 = vrcp.pop %v5144
    %v5559 = vmul.f32 %v5144, %v5558
    %v5560 = vsub.f32 1.0, %v5559
    %v5561 = vmul.f32 %v5558, %v5560
    %v5562 = vadd.f32 %v5558, %v5561
    %vm5563 = vweird.f32 %v5144
    %vm5564 = vweird.f32 %v5558
    %vm5565 = vmor %vm5563, %vm5564
    %v5566 = vsel %vm5565, %v5558, %v5562
    %v5567 = vand.u32 2147483647, %v5144
    %vm5568 = vcmp.eq.f32.partialorder %v5567, 8.507059e+37
    %v5569 = vand.u32 %v5144, 2147483648
    %v5570 = vor.u32 1.1754944e-38, %v5569
    %v5571 = vsel %vm5568, %v5570, %v5566
    %v5572 = vmul.f32 %v4937, %v5571
    %v5573 = vrcp.pop %v5145
    %v5574 = vmul.f32 %v5145, %v5573
    %v5575 = vsub.f32 1.0, %v5574
    %v5576 = vmul.f32 %v5573, %v5575
    %v5577 = vadd.f32 %v5573, %v5576
    %vm5578 = vweird.f32 %v5145
    %vm5579 = vweird.f32 %v5573
    %vm5580 = vmor %vm5578, %vm5579
    %v5581 = vsel %vm5580, %v5573, %v5577
    %v5582 = vand.u32 2147483647, %v5145
    %vm5583 = vcmp.eq.f32.partialorder %v5582, 8.507059e+37
    %v5584 = vand.u32 %v5145, 2147483648
    %v5585 = vor.u32 1.1754944e-38, %v5584
    %v5586 = vsel %vm5583, %v5585, %v5581
    %v5587 = vmul.f32 %v4940, %v5586
    %v5588 = vrcp.pop %v5146
    %v5589 = vmul.f32 %v5146, %v5588
    %v5590 = vsub.f32 1.0, %v5589
    %v5591 = vmul.f32 %v5588, %v5590
    %v5592 = vadd.f32 %v5588, %v5591
    %vm5593 = vweird.f32 %v5146
    %vm5594 = vweird.f32 %v5588
    %vm5595 = vmor %vm5593, %vm5594
    %v5596 = vsel %vm5595, %v5588, %v5592
    %v5597 = vand.u32 2147483647, %v5146
    %vm5598 = vcmp.eq.f32.partialorder %v5597, 8.507059e+37
    %v5599 = vand.u32 %v5146, 2147483648
    %v5600 = vor.u32 1.1754944e-38, %v5599
    %v5601 = vsel %vm5598, %v5600, %v5596
    %v5602 = vmul.f32 %v4943, %v5601
    %v5603 = vrcp.pop %v5147
    %v5604 = vmul.f32 %v5147, %v5603
    %v5605 = vsub.f32 1.0, %v5604
    %v5606 = vmul.f32 %v5603, %v5605
    %v5607 = vadd.f32 %v5603, %v5606
    %vm5608 = vweird.f32 %v5147
    %vm5609 = vweird.f32 %v5603
    %vm5610 = vmor %vm5608, %vm5609
    %v5611 = vsel %vm5610, %v5603, %v5607
    %v5612 = vand.u32 2147483647, %v5147
    %vm5613 = vcmp.eq.f32.partialorder %v5612, 8.507059e+37
    %v5614 = vand.u32 %v5147, 2147483648
    %v5615 = vor.u32 1.1754944e-38, %v5614
    %v5616 = vsel %vm5613, %v5615, %v5611
    %v5617 = vmul.f32 %v4946, %v5616
    %v5618 = vrcp.pop %v5148
    %v5619 = vmul.f32 %v5148, %v5618
    %v5620 = vsub.f32 1.0, %v5619
    %v5621 = vmul.f32 %v5618, %v5620
    %v5622 = vadd.f32 %v5618, %v5621
    %vm5623 = vweird.f32 %v5148
    %vm5624 = vweird.f32 %v5618
    %vm5625 = vmor %vm5623, %vm5624
    %v5626 = vsel %vm5625, %v5618, %v5622
    %v5627 = vand.u32 2147483647, %v5148
    %vm5628 = vcmp.eq.f32.partialorder %v5627, 8.507059e+37
    %v5629 = vand.u32 %v5148, 2147483648
    %v5630 = vor.u32 1.1754944e-38, %v5629
    %v5631 = vsel %vm5628, %v5630, %v5626
    %v5632 = vmul.f32 %v4949, %v5631
    %v5633 = vrcp.pop %v5149
    %v5634 = vmul.f32 %v5149, %v5633
    %v5635 = vsub.f32 1.0, %v5634
    %v5636 = vmul.f32 %v5633, %v5635
    %v5637 = vadd.f32 %v5633, %v5636
    %vm5638 = vweird.f32 %v5149
    %vm5639 = vweird.f32 %v5633
    %vm5640 = vmor %vm5638, %vm5639
    %v5641 = vsel %vm5640, %v5633, %v5637
    %v5642 = vand.u32 2147483647, %v5149
    %vm5643 = vcmp.eq.f32.partialorder %v5642, 8.507059e+37
    %v5644 = vand.u32 %v5149, 2147483648
    %v5645 = vor.u32 1.1754944e-38, %v5644
    %v5646 = vsel %vm5643, %v5645, %v5641
    %v5647 = vmul.f32 %v4952, %v5646
    %v5648 = vrcp.pop %v5150
    %v5649 = vmul.f32 %v5150, %v5648
    %v5650 = vsub.f32 1.0, %v5649
    %v5651 = vmul.f32 %v5648, %v5650
    %v5652 = vadd.f32 %v5648, %v5651
    %vm5653 = vweird.f32 %v5150
    %vm5654 = vweird.f32 %v5648
    %vm5655 = vmor %vm5653, %vm5654
    %v5656 = vsel %vm5655, %v5648, %v5652
    %v5657 = vand.u32 2147483647, %v5150
    %vm5658 = vcmp.eq.f32.partialorder %v5657, 8.507059e+37
    %v5659 = vand.u32 %v5150, 2147483648
    %v5660 = vor.u32 1.1754944e-38, %v5659
    %v5661 = vsel %vm5658, %v5660, %v5656
    %v5662 = vmul.f32 %v4955, %v5661
    %v5663 = vrcp.pop %v5151
    %v5664 = vmul.f32 %v5151, %v5663
    %v5665 = vsub.f32 1.0, %v5664
    %v5666 = vmul.f32 %v5663, %v5665
    %v5667 = vadd.f32 %v5663, %v5666
    %vm5668 = vweird.f32 %v5151
    %vm5669 = vweird.f32 %v5663
    %vm5670 = vmor %vm5668, %vm5669
    %v5671 = vsel %vm5670, %v5663, %v5667
    %v5672 = vand.u32 2147483647, %v5151
    %vm5673 = vcmp.eq.f32.partialorder %v5672, 8.507059e+37
    %v5674 = vand.u32 %v5151, 2147483648
    %v5675 = vor.u32 1.1754944e-38, %v5674
    %v5676 = vsel %vm5673, %v5675, %v5671
    %v5677 = vmul.f32 %v4958, %v5676
    %v5678 = vrcp.pop %v5152
    %v5679 = vmul.f32 %v5152, %v5678
    %v5680 = vsub.f32 1.0, %v5679
    %v5681 = vmul.f32 %v5678, %v5680
    %v5682 = vadd.f32 %v5678, %v5681
    %vm5683 = vweird.f32 %v5152
    %vm5684 = vweird.f32 %v5678
    %vm5685 = vmor %vm5683, %vm5684
    %v5686 = vsel %vm5685, %v5678, %v5682
    %v5687 = vand.u32 2147483647, %v5152
    %vm5688 = vcmp.eq.f32.partialorder %v5687, 8.507059e+37
    %v5689 = vand.u32 %v5152, 2147483648
    %v5690 = vor.u32 1.1754944e-38, %v5689
    %v5691 = vsel %vm5688, %v5690, %v5686
    %v5692 = vmul.f32 %v4961, %v5691
    %v5693 = vrcp.pop %v5153
    %v5694 = vmul.f32 %v5153, %v5693
    %v5695 = vsub.f32 1.0, %v5694
    %v5696 = vmul.f32 %v5693, %v5695
    %v5697 = vadd.f32 %v5693, %v5696
    %vm5698 = vweird.f32 %v5153
    %vm5699 = vweird.f32 %v5693
    %vm5700 = vmor %vm5698, %vm5699
    %v5701 = vsel %vm5700, %v5693, %v5697
    %v5702 = vand.u32 2147483647, %v5153
    %vm5703 = vcmp.eq.f32.partialorder %v5702, 8.507059e+37
    %v5704 = vand.u32 %v5153, 2147483648
    %v5705 = vor.u32 1.1754944e-38, %v5704
    %v5706 = vsel %vm5703, %v5705, %v5701
    %v5707 = vmul.f32 %v4964, %v5706
    %v5708 = vrcp.pop %v5154
    %v5709 = vmul.f32 %v5154, %v5708
    %v5710 = vsub.f32 1.0, %v5709
    %v5711 = vmul.f32 %v5708, %v5710
    %v5712 = vadd.f32 %v5708, %v5711
    %vm5713 = vweird.f32 %v5154
    %vm5714 = vweird.f32 %v5708
    %vm5715 = vmor %vm5713, %vm5714
    %v5716 = vsel %vm5715, %v5708, %v5712
    %v5717 = vand.u32 2147483647, %v5154
    %vm5718 = vcmp.eq.f32.partialorder %v5717, 8.507059e+37
    %v5719 = vand.u32 %v5154, 2147483648
    %v5720 = vor.u32 1.1754944e-38, %v5719
    %v5721 = vsel %vm5718, %v5720, %v5716
    %v5722 = vmul.f32 %v4967, %v5721
    %v5723 = vrcp.pop %v5155
    %v5724 = vmul.f32 %v5155, %v5723
    %v5725 = vsub.f32 1.0, %v5724
    %v5726 = vmul.f32 %v5723, %v5725
    %v5727 = vadd.f32 %v5723, %v5726
    %vm5728 = vweird.f32 %v5155
    %vm5729 = vweird.f32 %v5723
    %vm5730 = vmor %vm5728, %vm5729
    %v5731 = vsel %vm5730, %v5723, %v5727
    %v5732 = vand.u32 2147483647, %v5155
    %vm5733 = vcmp.eq.f32.partialorder %v5732, 8.507059e+37
    %v5734 = vand.u32 %v5155, 2147483648
    %v5735 = vor.u32 1.1754944e-38, %v5734
    %v5736 = vsel %vm5733, %v5735, %v5731
    %v5737 = vmul.f32 %v4970, %v5736
    %v5738 = vrcp.pop %v5156
    %v5739 = vmul.f32 %v5156, %v5738
    %v5740 = vsub.f32 1.0, %v5739
    %v5741 = vmul.f32 %v5738, %v5740
    %v5742 = vadd.f32 %v5738, %v5741
    %vm5743 = vweird.f32 %v5156
    %vm5744 = vweird.f32 %v5738
    %vm5745 = vmor %vm5743, %vm5744
    %v5746 = vsel %vm5745, %v5738, %v5742
    %v5747 = vand.u32 2147483647, %v5156
    %vm5748 = vcmp.eq.f32.partialorder %v5747, 8.507059e+37
    %v5749 = vand.u32 %v5156, 2147483648
    %v5750 = vor.u32 1.1754944e-38, %v5749
    %v5751 = vsel %vm5748, %v5750, %v5746
    %v5752 = vmul.f32 %v4973, %v5751
    %v5753 = vrcp.pop %v5157
    %v5754 = vmul.f32 %v5157, %v5753
    %v5755 = vsub.f32 1.0, %v5754
    %v5756 = vmul.f32 %v5753, %v5755
    %v5757 = vadd.f32 %v5753, %v5756
    %vm5758 = vweird.f32 %v5157
    %vm5759 = vweird.f32 %v5753
    %vm5760 = vmor %vm5758, %vm5759
    %v5761 = vsel %vm5760, %v5753, %v5757
    %v5762 = vand.u32 2147483647, %v5157
    %vm5763 = vcmp.eq.f32.partialorder %v5762, 8.507059e+37
    %v5764 = vand.u32 %v5157, 2147483648
    %v5765 = vor.u32 1.1754944e-38, %v5764
    %v5766 = vsel %vm5763, %v5765, %v5761
    %v5767 = vmul.f32 %v4976, %v5766
    %v5768 = vrcp.pop %v5158
    %v5769 = vmul.f32 %v5158, %v5768
    %v5770 = vsub.f32 1.0, %v5769
    %v5771 = vmul.f32 %v5768, %v5770
    %v5772 = vadd.f32 %v5768, %v5771
    %vm5773 = vweird.f32 %v5158
    %vm5774 = vweird.f32 %v5768
    %vm5775 = vmor %vm5773, %vm5774
    %v5776 = vsel %vm5775, %v5768, %v5772
    %v5777 = vand.u32 2147483647, %v5158
    %vm5778 = vcmp.eq.f32.partialorder %v5777, 8.507059e+37
    %v5779 = vand.u32 %v5158, 2147483648
    %v5780 = vor.u32 1.1754944e-38, %v5779
    %v5781 = vsel %vm5778, %v5780, %v5776
    %v5782 = vmul.f32 %v4979, %v5781
    %v5783 = vrcp.pop %v5159
    %v5784 = vmul.f32 %v5159, %v5783
    %v5785 = vsub.f32 1.0, %v5784
    %v5786 = vmul.f32 %v5783, %v5785
    %v5787 = vadd.f32 %v5783, %v5786
    %vm5788 = vweird.f32 %v5159
    %vm5789 = vweird.f32 %v5783
    %vm5790 = vmor %vm5788, %vm5789
    %v5791 = vsel %vm5790, %v5783, %v5787
    %v5792 = vand.u32 2147483647, %v5159
    %vm5793 = vcmp.eq.f32.partialorder %v5792, 8.507059e+37
    %v5794 = vand.u32 %v5159, 2147483648
    %v5795 = vor.u32 1.1754944e-38, %v5794
    %v5796 = vsel %vm5793, %v5795, %v5791
    %v5797 = vmul.f32 %v4982, %v5796
    %v5798 = vrcp.pop %v5160
    %v5799 = vmul.f32 %v5160, %v5798
    %v5800 = vsub.f32 1.0, %v5799
    %v5801 = vmul.f32 %v5798, %v5800
    %v5802 = vadd.f32 %v5798, %v5801
    %vm5803 = vweird.f32 %v5160
    %vm5804 = vweird.f32 %v5798
    %vm5805 = vmor %vm5803, %vm5804
    %v5806 = vsel %vm5805, %v5798, %v5802
    %v5807 = vand.u32 2147483647, %v5160
    %vm5808 = vcmp.eq.f32.partialorder %v5807, 8.507059e+37
    %v5809 = vand.u32 %v5160, 2147483648
    %v5810 = vor.u32 1.1754944e-38, %v5809
    %v5811 = vsel %vm5808, %v5810, %v5806
    %v5812 = vmul.f32 %v4985, %v5811
    %v5813 = vrcp.pop %v5161
    %v5814 = vmul.f32 %v5161, %v5813
    %v5815 = vsub.f32 1.0, %v5814
    %v5816 = vmul.f32 %v5813, %v5815
    %v5817 = vadd.f32 %v5813, %v5816
    %vm5818 = vweird.f32 %v5161
    %vm5819 = vweird.f32 %v5813
    %vm5820 = vmor %vm5818, %vm5819
    %v5821 = vsel %vm5820, %v5813, %v5817
    %v5822 = vand.u32 2147483647, %v5161
    %vm5823 = vcmp.eq.f32.partialorder %v5822, 8.507059e+37
    %v5824 = vand.u32 %v5161, 2147483648
    %v5825 = vor.u32 1.1754944e-38, %v5824
    %v5826 = vsel %vm5823, %v5825, %v5821
    %v5827 = vmul.f32 %v4988, %v5826
    %v5828 = vrcp.pop %v5162
    %v5829 = vmul.f32 %v5162, %v5828
    %v5830 = vsub.f32 1.0, %v5829
    %v5831 = vmul.f32 %v5828, %v5830
    %v5832 = vadd.f32 %v5828, %v5831
    %vm5833 = vweird.f32 %v5162
    %vm5834 = vweird.f32 %v5828
    %vm5835 = vmor %vm5833, %vm5834
    %v5836 = vsel %vm5835, %v5828, %v5832
    %v5837 = vand.u32 2147483647, %v5162
    %vm5838 = vcmp.eq.f32.partialorder %v5837, 8.507059e+37
    %v5839 = vand.u32 %v5162, 2147483648
    %v5840 = vor.u32 1.1754944e-38, %v5839
    %v5841 = vsel %vm5838, %v5840, %v5836
    %v5842 = vmul.f32 %v4991, %v5841
    %v5843 = vrcp.pop %v5163
    %v5844 = vmul.f32 %v5163, %v5843
    %v5845 = vsub.f32 1.0, %v5844
    %v5846 = vmul.f32 %v5843, %v5845
    %v5847 = vadd.f32 %v5843, %v5846
    %vm5848 = vweird.f32 %v5163
    %vm5849 = vweird.f32 %v5843
    %vm5850 = vmor %vm5848, %vm5849
    %v5851 = vsel %vm5850, %v5843, %v5847
    %v5852 = vand.u32 2147483647, %v5163
    %vm5853 = vcmp.eq.f32.partialorder %v5852, 8.507059e+37
    %v5854 = vand.u32 %v5163, 2147483648
    %v5855 = vor.u32 1.1754944e-38, %v5854
    %v5856 = vsel %vm5853, %v5855, %v5851
    %v5857 = vmul.f32 %v4994, %v5856
    %v5858 = vrcp.pop %v5164
    %v5859 = vmul.f32 %v5164, %v5858
    %v5860 = vsub.f32 1.0, %v5859
    %v5861 = vmul.f32 %v5858, %v5860
    %v5862 = vadd.f32 %v5858, %v5861
    %vm5863 = vweird.f32 %v5164
    %vm5864 = vweird.f32 %v5858
    %vm5865 = vmor %vm5863, %vm5864
    %v5866 = vsel %vm5865, %v5858, %v5862
    %v5867 = vand.u32 2147483647, %v5164
    %vm5868 = vcmp.eq.f32.partialorder %v5867, 8.507059e+37
    %v5869 = vand.u32 %v5164, 2147483648
    %v5870 = vor.u32 1.1754944e-38, %v5869
    %v5871 = vsel %vm5868, %v5870, %v5866
    %v5872 = vmul.f32 %v4997, %v5871
    %v5873 = vrcp.pop %v5165
    %v5874 = vmul.f32 %v5165, %v5873
    %v5875 = vsub.f32 1.0, %v5874
    %v5876 = vmul.f32 %v5873, %v5875
    %v5877 = vadd.f32 %v5873, %v5876
    %vm5878 = vweird.f32 %v5165
    %vm5879 = vweird.f32 %v5873
    %vm5880 = vmor %vm5878, %vm5879
    %v5881 = vsel %vm5880, %v5873, %v5877
    %v5882 = vand.u32 2147483647, %v5165
    %vm5883 = vcmp.eq.f32.partialorder %v5882, 8.507059e+37
    %v5884 = vand.u32 %v5165, 2147483648
    %v5885 = vor.u32 1.1754944e-38, %v5884
    %v5886 = vsel %vm5883, %v5885, %v5881
    %v5887 = vmul.f32 %v5000, %v5886
    %v5888 = vrcp.pop %v5166
    %v5889 = vmul.f32 %v5166, %v5888
    %v5890 = vsub.f32 1.0, %v5889
    %v5891 = vmul.f32 %v5888, %v5890
    %v5892 = vadd.f32 %v5888, %v5891
    %vm5893 = vweird.f32 %v5166
    %vm5894 = vweird.f32 %v5888
    %vm5895 = vmor %vm5893, %vm5894
    %v5896 = vsel %vm5895, %v5888, %v5892
    %v5897 = vand.u32 2147483647, %v5166
    %vm5898 = vcmp.eq.f32.partialorder %v5897, 8.507059e+37
    %v5899 = vand.u32 %v5166, 2147483648
    %v5900 = vor.u32 1.1754944e-38, %v5899
    %v5901 = vsel %vm5898, %v5900, %v5896
    %v5902 = vmul.f32 %v5003, %v5901
    %v5903 = vrcp.pop %v5167
    %v5904 = vmul.f32 %v5167, %v5903
    %v5905 = vsub.f32 1.0, %v5904
    %v5906 = vmul.f32 %v5903, %v5905
    %v5907 = vadd.f32 %v5903, %v5906
    %vm5908 = vweird.f32 %v5167
    %vm5909 = vweird.f32 %v5903
    %vm5910 = vmor %vm5908, %vm5909
    %v5911 = vsel %vm5910, %v5903, %v5907
    %v5912 = vand.u32 2147483647, %v5167
    %vm5913 = vcmp.eq.f32.partialorder %v5912, 8.507059e+37
    %v5914 = vand.u32 %v5167, 2147483648
    %v5915 = vor.u32 1.1754944e-38, %v5914
    %v5916 = vsel %vm5913, %v5915, %v5911
    %v5917 = vmul.f32 %v5006, %v5916
    %v5918 = vrcp.pop %v5168
    %v5919 = vmul.f32 %v5168, %v5918
    %v5920 = vsub.f32 1.0, %v5919
    %v5921 = vmul.f32 %v5918, %v5920
    %v5922 = vadd.f32 %v5918, %v5921
    %vm5923 = vweird.f32 %v5168
    %vm5924 = vweird.f32 %v5918
    %vm5925 = vmor %vm5923, %vm5924
    %v5926 = vsel %vm5925, %v5918, %v5922
    %v5927 = vand.u32 2147483647, %v5168
    %vm5928 = vcmp.eq.f32.partialorder %v5927, 8.507059e+37
    %v5929 = vand.u32 %v5168, 2147483648
    %v5930 = vor.u32 1.1754944e-38, %v5929
    %v5931 = vsel %vm5928, %v5930, %v5926
    %v5932 = vmul.f32 %v5009, %v5931
    %v5933 = vrcp.pop %v5169
    %v5934 = vmul.f32 %v5169, %v5933
    %v5935 = vsub.f32 1.0, %v5934
    %v5936 = vmul.f32 %v5933, %v5935
    %v5937 = vadd.f32 %v5933, %v5936
    %vm5938 = vweird.f32 %v5169
    %vm5939 = vweird.f32 %v5933
    %vm5940 = vmor %vm5938, %vm5939
    %v5941 = vsel %vm5940, %v5933, %v5937
    %v5942 = vand.u32 2147483647, %v5169
    %vm5943 = vcmp.eq.f32.partialorder %v5942, 8.507059e+37
    %v5944 = vand.u32 %v5169, 2147483648
    %v5945 = vor.u32 1.1754944e-38, %v5944
    %v5946 = vsel %vm5943, %v5945, %v5941
    %v5947 = vmul.f32 %v5012, %v5946
    %v5948 = vrcp.pop %v5170
    %v5949 = vmul.f32 %v5170, %v5948
    %v5950 = vsub.f32 1.0, %v5949
    %v5951 = vmul.f32 %v5948, %v5950
    %v5952 = vadd.f32 %v5948, %v5951
    %vm5953 = vweird.f32 %v5170
    %vm5954 = vweird.f32 %v5948
    %vm5955 = vmor %vm5953, %vm5954
    %v5956 = vsel %vm5955, %v5948, %v5952
    %v5957 = vand.u32 2147483647, %v5170
    %vm5958 = vcmp.eq.f32.partialorder %v5957, 8.507059e+37
    %v5959 = vand.u32 %v5170, 2147483648
    %v5960 = vor.u32 1.1754944e-38, %v5959
    %v5961 = vsel %vm5958, %v5960, %v5956
    %v5962 = vmul.f32 %v5015, %v5961
    %v5963 = vrcp.pop %v5171
    %v5964 = vmul.f32 %v5171, %v5963
    %v5965 = vsub.f32 1.0, %v5964
    %v5966 = vmul.f32 %v5963, %v5965
    %v5967 = vadd.f32 %v5963, %v5966
    %vm5968 = vweird.f32 %v5171
    %vm5969 = vweird.f32 %v5963
    %vm5970 = vmor %vm5968, %vm5969
    %v5971 = vsel %vm5970, %v5963, %v5967
    %v5972 = vand.u32 2147483647, %v5171
    %vm5973 = vcmp.eq.f32.partialorder %v5972, 8.507059e+37
    %v5974 = vand.u32 %v5171, 2147483648
    %v5975 = vor.u32 1.1754944e-38, %v5974
    %v5976 = vsel %vm5973, %v5975, %v5971
    %v5977 = vmul.f32 %v5018, %v5976
    %v5978 = vrcp.pop %v5172
    %v5979 = vmul.f32 %v5172, %v5978
    %v5980 = vsub.f32 1.0, %v5979
    %v5981 = vmul.f32 %v5978, %v5980
    %v5982 = vadd.f32 %v5978, %v5981
    %vm5983 = vweird.f32 %v5172
    %vm5984 = vweird.f32 %v5978
    %vm5985 = vmor %vm5983, %vm5984
    %v5986 = vsel %vm5985, %v5978, %v5982
    %v5987 = vand.u32 2147483647, %v5172
    %vm5988 = vcmp.eq.f32.partialorder %v5987, 8.507059e+37
    %v5989 = vand.u32 %v5172, 2147483648
    %v5990 = vor.u32 1.1754944e-38, %v5989
    %v5991 = vsel %vm5988, %v5990, %v5986
    %v5992 = vmul.f32 %v5021, %v5991
    %v5993 = vrcp.pop %v5173
    %v5994 = vmul.f32 %v5173, %v5993
    %v5995 = vsub.f32 1.0, %v5994
    %v5996 = vmul.f32 %v5993, %v5995
    %v5997 = vadd.f32 %v5993, %v5996
    %vm5998 = vweird.f32 %v5173
    %vm5999 = vweird.f32 %v5993
    %vm6000 = vmor %vm5998, %vm5999
    %v6001 = vsel %vm6000, %v5993, %v5997
    %v6002 = vand.u32 2147483647, %v5173
    %vm6003 = vcmp.eq.f32.partialorder %v6002, 8.507059e+37
    %v6004 = vand.u32 %v5173, 2147483648
    %v6005 = vor.u32 1.1754944e-38, %v6004
    %v6006 = vsel %vm6003, %v6005, %v6001
    %v6007 = vmul.f32 %v5024, %v6006
    %v6008 = vrcp.pop %v5174
    %v6009 = vmul.f32 %v5174, %v6008
    %v6010 = vsub.f32 1.0, %v6009
    %v6011 = vmul.f32 %v6008, %v6010
    %v6012 = vadd.f32 %v6008, %v6011
    %vm6013 = vweird.f32 %v5174
    %vm6014 = vweird.f32 %v6008
    %vm6015 = vmor %vm6013, %vm6014
    %v6016 = vsel %vm6015, %v6008, %v6012
    %v6017 = vand.u32 2147483647, %v5174
    %vm6018 = vcmp.eq.f32.partialorder %v6017, 8.507059e+37
    %v6019 = vand.u32 %v5174, 2147483648
    %v6020 = vor.u32 1.1754944e-38, %v6019
    %v6021 = vsel %vm6018, %v6020, %v6016
    %v6022 = vmul.f32 %v5027, %v6021
    %v6023 = vrcp.pop %v5175
    %v6024 = vmul.f32 %v5175, %v6023
    %v6025 = vsub.f32 1.0, %v6024
    %v6026 = vmul.f32 %v6023, %v6025
    %v6027 = vadd.f32 %v6023, %v6026
    %vm6028 = vweird.f32 %v5175
    %vm6029 = vweird.f32 %v6023
    %vm6030 = vmor %vm6028, %vm6029
    %v6031 = vsel %vm6030, %v6023, %v6027
    %v6032 = vand.u32 2147483647, %v5175
    %vm6033 = vcmp.eq.f32.partialorder %v6032, 8.507059e+37
    %v6034 = vand.u32 %v5175, 2147483648
    %v6035 = vor.u32 1.1754944e-38, %v6034
    %v6036 = vsel %vm6033, %v6035, %v6031
    %v6037 = vmul.f32 %v5030, %v6036
    %v6038 = vrcp.pop %v5176
    %v6039 = vmul.f32 %v5176, %v6038
    %v6040 = vsub.f32 1.0, %v6039
    %v6041 = vmul.f32 %v6038, %v6040
    %v6042 = vadd.f32 %v6038, %v6041
    %vm6043 = vweird.f32 %v5176
    %vm6044 = vweird.f32 %v6038
    %vm6045 = vmor %vm6043, %vm6044
    %v6046 = vsel %vm6045, %v6038, %v6042
    %v6047 = vand.u32 2147483647, %v5176
    %vm6048 = vcmp.eq.f32.partialorder %v6047, 8.507059e+37
    %v6049 = vand.u32 %v5176, 2147483648
    %v6050 = vor.u32 1.1754944e-38, %v6049
    %v6051 = vsel %vm6048, %v6050, %v6046
    %v6052 = vmul.f32 %v5033, %v6051
    %v6053 = vrcp.pop %v5177
    %v6054 = vmul.f32 %v5177, %v6053
    %v6055 = vsub.f32 1.0, %v6054
    %v6056 = vmul.f32 %v6053, %v6055
    %v6057 = vadd.f32 %v6053, %v6056
    %vm6058 = vweird.f32 %v5177
    %vm6059 = vweird.f32 %v6053
    %vm6060 = vmor %vm6058, %vm6059
    %v6061 = vsel %vm6060, %v6053, %v6057
    %v6062 = vand.u32 2147483647, %v5177
    %vm6063 = vcmp.eq.f32.partialorder %v6062, 8.507059e+37
    %v6064 = vand.u32 %v5177, 2147483648
    %v6065 = vor.u32 1.1754944e-38, %v6064
    %v6066 = vsel %vm6063, %v6065, %v6061
    %v6067 = vmul.f32 %v5036, %v6066
    %v6068 = vrcp.pop %v5178
    %v6069 = vmul.f32 %v5178, %v6068
    %v6070 = vsub.f32 1.0, %v6069
    %v6071 = vmul.f32 %v6068, %v6070
    %v6072 = vadd.f32 %v6068, %v6071
    %vm6073 = vweird.f32 %v5178
    %vm6074 = vweird.f32 %v6068
    %vm6075 = vmor %vm6073, %vm6074
    %v6076 = vsel %vm6075, %v6068, %v6072
    %v6077 = vand.u32 2147483647, %v5178
    %vm6078 = vcmp.eq.f32.partialorder %v6077, 8.507059e+37
    %v6079 = vand.u32 %v5178, 2147483648
    %v6080 = vor.u32 1.1754944e-38, %v6079
    %v6081 = vsel %vm6078, %v6080, %v6076
    %v6082 = vmul.f32 %v5039, %v6081
    %v6083 = vrcp.pop %v5179
    %v6084 = vmul.f32 %v5179, %v6083
    %v6085 = vsub.f32 1.0, %v6084
    %v6086 = vmul.f32 %v6083, %v6085
    %v6087 = vadd.f32 %v6083, %v6086
    %vm6088 = vweird.f32 %v5179
    %vm6089 = vweird.f32 %v6083
    %vm6090 = vmor %vm6088, %vm6089
    %v6091 = vsel %vm6090, %v6083, %v6087
    %v6092 = vand.u32 2147483647, %v5179
    %vm6093 = vcmp.eq.f32.partialorder %v6092, 8.507059e+37
    %v6094 = vand.u32 %v5179, 2147483648
    %v6095 = vor.u32 1.1754944e-38, %v6094
    %v6096 = vsel %vm6093, %v6095, %v6091
    %v6097 = vmul.f32 %v5042, %v6096
    %v6098 = vrcp.pop %v5180
    %v6099 = vmul.f32 %v5180, %v6098
    %v6100 = vsub.f32 1.0, %v6099
    %v6101 = vmul.f32 %v6098, %v6100
    %v6102 = vadd.f32 %v6098, %v6101
    %vm6103 = vweird.f32 %v5180
    %vm6104 = vweird.f32 %v6098
    %vm6105 = vmor %vm6103, %vm6104
    %v6106 = vsel %vm6105, %v6098, %v6102
    %v6107 = vand.u32 2147483647, %v5180
    %vm6108 = vcmp.eq.f32.partialorder %v6107, 8.507059e+37
    %v6109 = vand.u32 %v5180, 2147483648
    %v6110 = vor.u32 1.1754944e-38, %v6109
    %v6111 = vsel %vm6108, %v6110, %v6106
    %v6112 = vmul.f32 %v5045, %v6111
    %v6113 = vrcp.pop %v5181
    %v6114 = vmul.f32 %v5181, %v6113
    %v6115 = vsub.f32 1.0, %v6114
    %v6116 = vmul.f32 %v6113, %v6115
    %v6117 = vadd.f32 %v6113, %v6116
    %vm6118 = vweird.f32 %v5181
    %vm6119 = vweird.f32 %v6113
    %vm6120 = vmor %vm6118, %vm6119
    %v6121 = vsel %vm6120, %v6113, %v6117
    %v6122 = vand.u32 2147483647, %v5181
    %vm6123 = vcmp.eq.f32.partialorder %v6122, 8.507059e+37
    %v6124 = vand.u32 %v5181, 2147483648
    %v6125 = vor.u32 1.1754944e-38, %v6124
    %v6126 = vsel %vm6123, %v6125, %v6121
    %v6127 = vmul.f32 %v5048, %v6126
    %v6128 = vrcp.pop %v5182
    %v6129 = vmul.f32 %v5182, %v6128
    %v6130 = vsub.f32 1.0, %v6129
    %v6131 = vmul.f32 %v6128, %v6130
    %v6132 = vadd.f32 %v6128, %v6131
    %vm6133 = vweird.f32 %v5182
    %vm6134 = vweird.f32 %v6128
    %vm6135 = vmor %vm6133, %vm6134
    %v6136 = vsel %vm6135, %v6128, %v6132
    %v6137 = vand.u32 2147483647, %v5182
    %vm6138 = vcmp.eq.f32.partialorder %v6137, 8.507059e+37
    %v6139 = vand.u32 %v5182, 2147483648
    %v6140 = vor.u32 1.1754944e-38, %v6139
    %v6141 = vsel %vm6138, %v6140, %v6136
    %v6142 = vmul.f32 %v5051, %v6141
    %v6143 = vmul.f32 %v5197, 0.5
    %v6144 = vmul.f32 %v5212, 0.5
    %v6145 = vmul.f32 %v5227, 0.5
    %v6146 = vmul.f32 %v5242, 0.5
    %v6147 = vmul.f32 %v5257, 0.5
    %v6148 = vmul.f32 %v5272, 0.5
    %v6149 = vmul.f32 %v5287, 0.5
    %v6150 = vmul.f32 %v5302, 0.5
    %v6151 = vmul.f32 %v5317, 0.5
    %v6152 = vmul.f32 %v5332, 0.5
    %v6153 = vmul.f32 %v5347, 0.5
    %v6154 = vmul.f32 %v5362, 0.5
    %v6155 = vmul.f32 %v5377, 0.5
    %v6156 = vmul.f32 %v5392, 0.5
    %v6157 = vmul.f32 %v5407, 0.5
    %v6158 = vmul.f32 %v5422, 0.5
    %v6159 = vmul.f32 %v5437, 0.5
    %v6160 = vmul.f32 %v5452, 0.5
    %v6161 = vmul.f32 %v5467, 0.5
    %v6162 = vmul.f32 %v5482, 0.5
    %v6163 = vmul.f32 %v5497, 0.5
    %v6164 = vmul.f32 %v5512, 0.5
    %v6165 = vmul.f32 %v5527, 0.5
    %v6166 = vmul.f32 %v5542, 0.5
    %v6167 = vmul.f32 %v5557, 0.5
    %v6168 = vmul.f32 %v5572, 0.5
    %v6169 = vmul.f32 %v5587, 0.5
    %v6170 = vmul.f32 %v5602, 0.5
    %v6171 = vmul.f32 %v5617, 0.5
    %v6172 = vmul.f32 %v5632, 0.5
    %v6173 = vmul.f32 %v5647, 0.5
    %v6174 = vmul.f32 %v5662, 0.5
    %v6175 = vmul.f32 %v5677, 0.5
    %v6176 = vmul.f32 %v5692, 0.5
    %v6177 = vmul.f32 %v5707, 0.5
    %v6178 = vmul.f32 %v5722, 0.5
    %v6179 = vmul.f32 %v5737, 0.5
    %v6180 = vmul.f32 %v5752, 0.5
    %v6181 = vmul.f32 %v5767, 0.5
    %v6182 = vmul.f32 %v5782, 0.5
    %v6183 = vmul.f32 %v5797, 0.5
    %v6184 = vmul.f32 %v5812, 0.5
    %v6185 = vmul.f32 %v5827, 0.5
    %v6186 = vmul.f32 %v5842, 0.5
    %v6187 = vmul.f32 %v5857, 0.5
    %v6188 = vmul.f32 %v5872, 0.5
    %v6189 = vmul.f32 %v5887, 0.5
    %v6190 = vmul.f32 %v5902, 0.5
    %v6191 = vmul.f32 %v5917, 0.5
    %v6192 = vmul.f32 %v5932, 0.5
    %v6193 = vmul.f32 %v5947, 0.5
    %v6194 = vmul.f32 %v5962, 0.5
    %v6195 = vmul.f32 %v5977, 0.5
    %v6196 = vmul.f32 %v5992, 0.5
    %v6197 = vmul.f32 %v6007, 0.5
    %v6198 = vmul.f32 %v6022, 0.5
    %v6199 = vmul.f32 %v6037, 0.5
    %v6200 = vmul.f32 %v6052, 0.5
    %v6201 = vmul.f32 %v6067, 0.5
    %v6202 = vmul.f32 %v6082, 0.5
    %v6203 = vmul.f32 %v6097, 0.5
    %v6204 = vmul.f32 %v6112, 0.5
    %v6205 = vmul.f32 %v6127, 0.5
    %v6206 = vmul.f32 %v6142, 0.5
    %v6207 = vadd.f32 %v6143, 0.5
    %v6208 = vadd.f32 %v6144, 0.5
    %v6209 = vadd.f32 %v6145, 0.5
    %v6210 = vadd.f32 %v6146, 0.5
    %v6211 = vadd.f32 %v6147, 0.5
    %v6212 = vadd.f32 %v6148, 0.5
    %v6213 = vadd.f32 %v6149, 0.5
    %v6214 = vadd.f32 %v6150, 0.5
    %v6215 = vadd.f32 %v6151, 0.5
    %v6216 = vadd.f32 %v6152, 0.5
    %v6217 = vadd.f32 %v6153, 0.5
    %v6218 = vadd.f32 %v6154, 0.5
    %v6219 = vadd.f32 %v6155, 0.5
    %v6220 = vadd.f32 %v6156, 0.5
    %v6221 = vadd.f32 %v6157, 0.5
    %v6222 = vadd.f32 %v6158, 0.5
    %v6223 = vadd.f32 %v6159, 0.5
    %v6224 = vadd.f32 %v6160, 0.5
    %v6225 = vadd.f32 %v6161, 0.5
    %v6226 = vadd.f32 %v6162, 0.5
    %v6227 = vadd.f32 %v6163, 0.5
    %v6228 = vadd.f32 %v6164, 0.5
    %v6229 = vadd.f32 %v6165, 0.5
    %v6230 = vadd.f32 %v6166, 0.5
    %v6231 = vadd.f32 %v6167, 0.5
    %v6232 = vadd.f32 %v6168, 0.5
    %v6233 = vadd.f32 %v6169, 0.5
    %v6234 = vadd.f32 %v6170, 0.5
    %v6235 = vadd.f32 %v6171, 0.5
    %v6236 = vadd.f32 %v6172, 0.5
    %v6237 = vadd.f32 %v6173, 0.5
    %v6238 = vadd.f32 %v6174, 0.5
    %v6239 = vadd.f32 %v6175, 0.5
    %v6240 = vadd.f32 %v6176, 0.5
    %v6241 = vadd.f32 %v6177, 0.5
    %v6242 = vadd.f32 %v6178, 0.5
    %v6243 = vadd.f32 %v6179, 0.5
    %v6244 = vadd.f32 %v6180, 0.5
    %v6245 = vadd.f32 %v6181, 0.5
    %v6246 = vadd.f32 %v6182, 0.5
    %v6247 = vadd.f32 %v6183, 0.5
    %v6248 = vadd.f32 %v6184, 0.5
    %v6249 = vadd.f32 %v6185, 0.5
    %v6250 = vadd.f32 %v6186, 0.5
    %v6251 = vadd.f32 %v6187, 0.5
    %v6252 = vadd.f32 %v6188, 0.5
    %v6253 = vadd.f32 %v6189, 0.5
    %v6254 = vadd.f32 %v6190, 0.5
    %v6255 = vadd.f32 %v6191, 0.5
    %v6256 = vadd.f32 %v6192, 0.5
    %v6257 = vadd.f32 %v6193, 0.5
    %v6258 = vadd.f32 %v6194, 0.5
    %v6259 = vadd.f32 %v6195, 0.5
    %v6260 = vadd.f32 %v6196, 0.5
    %v6261 = vadd.f32 %v6197, 0.5
    %v6262 = vadd.f32 %v6198, 0.5
    %v6263 = vadd.f32 %v6199, 0.5
    %v6264 = vadd.f32 %v6200, 0.5
    %v6265 = vadd.f32 %v6201, 0.5
    %v6266 = vadd.f32 %v6202, 0.5
    %v6267 = vadd.f32 %v6203, 0.5
    %v6268 = vadd.f32 %v6204, 0.5
    %v6269 = vadd.f32 %v6205, 0.5
    %v6270 = vadd.f32 %v6206, 0.5
    %vm6271 = vcmp.lt.s32.totalorder %v5054, 2
    %v6272 = vtanh.pop %v4862
    %v6273 = vtanh.pop %v4865
    %v6274 = vtanh.pop %v4868
    %v6275 = vtanh.pop %v4871
    %v6276 = vtanh.pop %v4874
    %v6277 = vtanh.pop %v4877
    %v6278 = vtanh.pop %v4880
    %v6279 = vtanh.pop %v4883
    %v6280 = vtanh.pop %v4886
    %v6281 = vtanh.pop %v4889
    %v6282 = vtanh.pop %v4892
    %v6283 = vtanh.pop %v4895
    %v6284 = vtanh.pop %v4898
    %v6285 = vtanh.pop %v4901
    %v6286 = vtanh.pop %v4904
    %v6287 = vtanh.pop %v4907
    %v6288 = vtanh.pop %v4910
    %v6289 = vtanh.pop %v4913
    %v6290 = vtanh.pop %v4916
    %v6291 = vtanh.pop %v4919
    %v6292 = vtanh.pop %v4922
    %v6293 = vtanh.pop %v4925
    %v6294 = vtanh.pop %v4928
    %v6295 = vtanh.pop %v4931
    %v6296 = vtanh.pop %v4934
    %v6297 = vtanh.pop %v4937
    %v6298 = vtanh.pop %v4940
    %v6299 = vtanh.pop %v4943
    %v6300 = vtanh.pop %v4946
    %v6301 = vtanh.pop %v4949
    %v6302 = vtanh.pop %v4952
    %v6303 = vtanh.pop %v4955
    %v6304 = vtanh.pop %v4958
    %v6305 = vtanh.pop %v4961
    %v6306 = vtanh.pop %v4964
    %v6307 = vtanh.pop %v4967
    %v6308 = vtanh.pop %v4970
    %v6309 = vtanh.pop %v4973
    %v6310 = vtanh.pop %v4976
    %v6311 = vtanh.pop %v4979
    %v6312 = vtanh.pop %v4982
    %v6313 = vtanh.pop %v4985
    %v6314 = vtanh.pop %v4988
    %v6315 = vtanh.pop %v4991
    %v6316 = vtanh.pop %v4994
    %v6317 = vtanh.pop %v4997
    %v6318 = vtanh.pop %v5000
    %v6319 = vtanh.pop %v5003
    %v6320 = vtanh.pop %v5006
    %v6321 = vtanh.pop %v5009
    %v6322 = vtanh.pop %v5012
    %v6323 = vtanh.pop %v5015
    %v6324 = vtanh.pop %v5018
    %v6325 = vtanh.pop %v5021
    %v6326 = vtanh.pop %v5024
    %v6327 = vtanh.pop %v5027
    %v6328 = vtanh.pop %v5030
    %v6329 = vtanh.pop %v5033
    %v6330 = vtanh.pop %v5036
    %v6331 = vtanh.pop %v5039
    %v6332 = vtanh.pop %v5042
    %v6333 = vtanh.pop %v5045
    %v6334 = vtanh.pop %v5048
    %v6335 = vtanh.pop %v5051
    %v6336 = vsel %vm6271, %v6207, %v6272
    %v6337 = vsel %vm6271, %v6208, %v6273
    %v6338 = vsel %vm6271, %v6209, %v6274
    %v6339 = vsel %vm6271, %v6210, %v6275
    %v6340 = vsel %vm6271, %v6211, %v6276
    %v6341 = vsel %vm6271, %v6212, %v6277
    %v6342 = vsel %vm6271, %v6213, %v6278
    %v6343 = vsel %vm6271, %v6214, %v6279
    %v6344 = vsel %vm6271, %v6215, %v6280
    %v6345 = vsel %vm6271, %v6216, %v6281
    %v6346 = vsel %vm6271, %v6217, %v6282
    %v6347 = vsel %vm6271, %v6218, %v6283
    %v6348 = vsel %vm6271, %v6219, %v6284
    %v6349 = vsel %vm6271, %v6220, %v6285
    %v6350 = vsel %vm6271, %v6221, %v6286
    %v6351 = vsel %vm6271, %v6222, %v6287
    %v6352 = vsel %vm6271, %v6223, %v6288
    %v6353 = vsel %vm6271, %v6224, %v6289
    %v6354 = vsel %vm6271, %v6225, %v6290
    %v6355 = vsel %vm6271, %v6226, %v6291
    %v6356 = vsel %vm6271, %v6227, %v6292
    %v6357 = vsel %vm6271, %v6228, %v6293
    %v6358 = vsel %vm6271, %v6229, %v6294
    %v6359 = vsel %vm6271, %v6230, %v6295
    %v6360 = vsel %vm6271, %v6231, %v6296
    %v6361 = vsel %vm6271, %v6232, %v6297
    %v6362 = vsel %vm6271, %v6233, %v6298
    %v6363 = vsel %vm6271, %v6234, %v6299
    %v6364 = vsel %vm6271, %v6235, %v6300
    %v6365 = vsel %vm6271, %v6236, %v6301
    %v6366 = vsel %vm6271, %v6237, %v6302
    %v6367 = vsel %vm6271, %v6238, %v6303
    %v6368 = vsel %vm6271, %v6239, %v6304
    %v6369 = vsel %vm6271, %v6240, %v6305
    %v6370 = vsel %vm6271, %v6241, %v6306
    %v6371 = vsel %vm6271, %v6242, %v6307
    %v6372 = vsel %vm6271, %v6243, %v6308
    %v6373 = vsel %vm6271, %v6244, %v6309
    %v6374 = vsel %vm6271, %v6245, %v6310
    %v6375 = vsel %vm6271, %v6246, %v6311
    %v6376 = vsel %vm6271, %v6247, %v6312
    %v6377 = vsel %vm6271, %v6248, %v6313
    %v6378 = vsel %vm6271, %v6249, %v6314
    %v6379 = vsel %vm6271, %v6250, %v6315
    %v6380 = vsel %vm6271, %v6251, %v6316
    %v6381 = vsel %vm6271, %v6252, %v6317
    %v6382 = vsel %vm6271, %v6253, %v6318
    %v6383 = vsel %vm6271, %v6254, %v6319
    %v6384 = vsel %vm6271, %v6255, %v6320
    %v6385 = vsel %vm6271, %v6256, %v6321
    %v6386 = vsel %vm6271, %v6257, %v6322
    %v6387 = vsel %vm6271, %v6258, %v6323
    %v6388 = vsel %vm6271, %v6259, %v6324
    %v6389 = vsel %vm6271, %v6260, %v6325
    %v6390 = vsel %vm6271, %v6261, %v6326
    %v6391 = vsel %vm6271, %v6262, %v6327
    %v6392 = vsel %vm6271, %v6263, %v6328
    %v6393 = vsel %vm6271, %v6264, %v6329
    %v6394 = vsel %vm6271, %v6265, %v6330
    %v6395 = vsel %vm6271, %v6266, %v6331
    %v6396 = vsel %vm6271, %v6267, %v6332
    %v6397 = vsel %vm6271, %v6268, %v6333
    %v6398 = vsel %vm6271, %v6269, %v6334
    %v6399 = vsel %vm6271, %v6270, %v6335
    %6400 = vxpose.xlu0.b32.start [1/16] %v6336, 128
    %6401 = vxpose.xlu0.b32.cont [2/16] %v6337, 128
    %6402 = vxpose.xlu0.b32.cont [3/16] %v6338, 128
    %6403 = vxpose.xlu0.b32.cont [4/16] %v6339, 128
    %6404 = vxpose.xlu0.b32.cont [5/16] %v6340, 128
    %6405 = vxpose.xlu0.b32.cont [6/16] %v6341, 128
    %6406 = vxpose.xlu0.b32.cont [7/16] %v6342, 128
    %6407 = vxpose.xlu0.b32.cont [8/16] %v6343, 128
    %6408 = vxpose.xlu0.b32.cont [9/16] %v6344, 128
    %6409 = vxpose.xlu0.b32.cont [10/16] %v6345, 128
    %6410 = vxpose.xlu0.b32.cont [11/16] %v6346, 128
    %6411 = vxpose.xlu0.b32.cont [12/16] %v6347, 128
    %6412 = vxpose.xlu0.b32.cont [13/16] %v6348, 128
    %6413 = vxpose.xlu0.b32.cont [14/16] %v6349, 128
    %6414 = vxpose.xlu0.b32.cont [15/16] %v6350, 128
    %6415 = vxpose.xlu0.b32.end [16/16] %v6351, 128
    %v6416 = vpop.trf.xlu0
    %v6417 = vpop.trf.xlu0
    %v6418 = vpop.trf.xlu0
    %v6419 = vpop.trf.xlu0
    %v6420 = vpop.trf.xlu0
    %v6421 = vpop.trf.xlu0
    %v6422 = vpop.trf.xlu0
    %v6423 = vpop.trf.xlu0
    %v6424 = vpop.trf.xlu0
    %v6425 = vpop.trf.xlu0
    %v6426 = vpop.trf.xlu0
    %v6427 = vpop.trf.xlu0
    %v6428 = vpop.trf.xlu0
    %v6429 = vpop.trf.xlu0
    %v6430 = vpop.trf.xlu0
    %v6431 = vpop.trf.xlu0
    %6432 = vxpose.xlu0.b32.start [1/16] %v6352, 128
    %6433 = vxpose.xlu0.b32.cont [2/16] %v6353, 128
    %6434 = vxpose.xlu0.b32.cont [3/16] %v6354, 128
    %6435 = vxpose.xlu0.b32.cont [4/16] %v6355, 128
    %6436 = vxpose.xlu0.b32.cont [5/16] %v6356, 128
    %6437 = vxpose.xlu0.b32.cont [6/16] %v6357, 128
    %6438 = vxpose.xlu0.b32.cont [7/16] %v6358, 128
    %6439 = vxpose.xlu0.b32.cont [8/16] %v6359, 128
    %6440 = vxpose.xlu0.b32.cont [9/16] %v6360, 128
    %6441 = vxpose.xlu0.b32.cont [10/16] %v6361, 128
    %6442 = vxpose.xlu0.b32.cont [11/16] %v6362, 128
    %6443 = vxpose.xlu0.b32.cont [12/16] %v6363, 128
    %6444 = vxpose.xlu0.b32.cont [13/16] %v6364, 128
    %6445 = vxpose.xlu0.b32.cont [14/16] %v6365, 128
    %6446 = vxpose.xlu0.b32.cont [15/16] %v6366, 128
    %6447 = vxpose.xlu0.b32.end [16/16] %v6367, 128
    %v6448 = vpop.trf.xlu0
    %v6449 = vpop.trf.xlu0
    %v6450 = vpop.trf.xlu0
    %v6451 = vpop.trf.xlu0
    %v6452 = vpop.trf.xlu0
    %v6453 = vpop.trf.xlu0
    %v6454 = vpop.trf.xlu0
    %v6455 = vpop.trf.xlu0
    %v6456 = vpop.trf.xlu0
    %v6457 = vpop.trf.xlu0
    %v6458 = vpop.trf.xlu0
    %v6459 = vpop.trf.xlu0
    %v6460 = vpop.trf.xlu0
    %v6461 = vpop.trf.xlu0
    %v6462 = vpop.trf.xlu0
    %v6463 = vpop.trf.xlu0
    %v6466 = vrot.slane %v6448, 4
    %vm6467 = vcmask 1043456
    %v6468 = vsel %vm6467, %v6416, %v6466
    %6470 = vst [vmem:[#allocation6] sm:$0xff] %v6468
    %6471 = vxpose.xlu0.b32.start [1/16] %v6368, 128
    %6472 = vxpose.xlu0.b32.cont [2/16] %v6369, 128
    %6473 = vxpose.xlu0.b32.cont [3/16] %v6370, 128
    %6474 = vxpose.xlu0.b32.cont [4/16] %v6371, 128
    %6475 = vxpose.xlu0.b32.cont [5/16] %v6372, 128
    %6476 = vxpose.xlu0.b32.cont [6/16] %v6373, 128
    %6477 = vxpose.xlu0.b32.cont [7/16] %v6374, 128
    %6478 = vxpose.xlu0.b32.cont [8/16] %v6375, 128
    %6479 = vxpose.xlu0.b32.cont [9/16] %v6376, 128
    %6480 = vxpose.xlu0.b32.cont [10/16] %v6377, 128
    %6481 = vxpose.xlu0.b32.cont [11/16] %v6378, 128
    %6482 = vxpose.xlu0.b32.cont [12/16] %v6379, 128
    %6483 = vxpose.xlu0.b32.cont [13/16] %v6380, 128
    %6484 = vxpose.xlu0.b32.cont [14/16] %v6381, 128
    %6485 = vxpose.xlu0.b32.cont [15/16] %v6382, 128
    %6486 = vxpose.xlu0.b32.end [16/16] %v6383, 128
    %v6487 = vpop.trf.xlu0
    %v6488 = vpop.trf.xlu0
    %v6489 = vpop.trf.xlu0
    %v6490 = vpop.trf.xlu0
    %v6491 = vpop.trf.xlu0
    %v6492 = vpop.trf.xlu0
    %v6493 = vpop.trf.xlu0
    %v6494 = vpop.trf.xlu0
    %v6495 = vpop.trf.xlu0
    %v6496 = vpop.trf.xlu0
    %v6497 = vpop.trf.xlu0
    %v6498 = vpop.trf.xlu0
    %v6499 = vpop.trf.xlu0
    %v6500 = vpop.trf.xlu0
    %v6501 = vpop.trf.xlu0
    %v6502 = vpop.trf.xlu0
    %6503 = vxpose.xlu0.b32.start [1/16] %v6384, 128
    %6504 = vxpose.xlu0.b32.cont [2/16] %v6385, 128
    %6505 = vxpose.xlu0.b32.cont [3/16] %v6386, 128
    %6506 = vxpose.xlu0.b32.cont [4/16] %v6387, 128
    %6507 = vxpose.xlu0.b32.cont [5/16] %v6388, 128
    %6508 = vxpose.xlu0.b32.cont [6/16] %v6389, 128
    %6509 = vxpose.xlu0.b32.cont [7/16] %v6390, 128
    %6510 = vxpose.xlu0.b32.cont [8/16] %v6391, 128
    %6511 = vxpose.xlu0.b32.cont [9/16] %v6392, 128
    %6512 = vxpose.xlu0.b32.cont [10/16] %v6393, 128
    %6513 = vxpose.xlu0.b32.cont [11/16] %v6394, 128
    %6514 = vxpose.xlu0.b32.cont [12/16] %v6395, 128
    %6515 = vxpose.xlu0.b32.cont [13/16] %v6396, 128
    %6516 = vxpose.xlu0.b32.cont [14/16] %v6397, 128
    %6517 = vxpose.xlu0.b32.cont [15/16] %v6398, 128
    %6518 = vxpose.xlu0.b32.end [16/16] %v6399, 128
    %v6519 = vpop.trf.xlu0
    %v6520 = vpop.trf.xlu0
    %v6521 = vpop.trf.xlu0
    %v6522 = vpop.trf.xlu0
    %v6523 = vpop.trf.xlu0
    %v6524 = vpop.trf.xlu0
    %v6525 = vpop.trf.xlu0
    %v6526 = vpop.trf.xlu0
    %v6527 = vpop.trf.xlu0
    %v6528 = vpop.trf.xlu0
    %v6529 = vpop.trf.xlu0
    %v6530 = vpop.trf.xlu0
    %v6531 = vpop.trf.xlu0
    %v6532 = vpop.trf.xlu0
    %v6533 = vpop.trf.xlu0
    %v6534 = vpop.trf.xlu0
    %v6537 = vrot.slane %v6519, 4
    %v6538 = vsel %vm6467, %v6487, %v6537
    %s6540 = scalar_lea.vmem [#allocation6], 8
    %6541 = vst [vmem:[%s6540] sm:$0xff] %v6538
    // Predicated region
    $region42: #{tpu_custom_call.1} parent=1 // pred_check
      _
    $region43: #{tpu_custom_call.1} parent=1 // pred_check_branch
      %6543 = sbr.rel (0) target = $region45
    $region44: #{tpu_custom_call.1} parent=1 // pred_region
      %6545 = vsyncadd [#allocation5], 0
      %s6546 = sshll.u32 [#allocation6], 4
      %s6547 = int_to_ptr.vmem [resolvable:$true] %s6546
      %s6548 = sshll.u32 %s9, 4
      %s6549 = int_to_ptr.hbm [resolvable:$true] %s6548
      %6554 = dma.vmem_to_hbm [thread:$0]  %s6547, 256, %s6549, [#allocation5], 128, 128, 8
    $region45: #{tpu_custom_call.1} parent=1 // pred_fallthru
      _
    // Predicated region
    $region46: #{tpu_custom_call.1} parent=1 // pred_check
      _
    $region47: #{tpu_custom_call.1} parent=1 // pred_check_branch
      %6556 = sbr.rel (0) target = $region49
    $region48: #{tpu_custom_call.1} parent=1 // pred_region
      %6558 = dma.done [#allocation5], 256
    $region49: #{tpu_custom_call.1} parent=1 // pred_fallthru
      _
    %6559 = vsyncpa [#allocation4], 1
    %6560 = vsyncpa [#allocation5], 1

</llo_original>
